<compile_context>
chip_gen: v5e
topology: v5e:2x2
jax: 0.10.0
libtpu: 0.0.40
codegen_flags: <defaults>
</compile_context>

<pallas_src>
import functools

import jax
import jax.numpy as jnp
import numpy as np
from jax.experimental import pallas as pl
from jax.experimental.pallas import tpu as pltpu

F_PAD = 128           # lane-dense padded feature width for every layer
NEG_BIG = -1e30       # additive "no edge" bias for the max-reduce


def _jet_ae_kernel(x_ref, neg_ref, wcat_ref, b1_ref, w2_ref, b2_ref, out_ref):
    """All 4 EdgeConv('max') layers + trailing ReLUs for one batch of G graphs.

    For edge (j -> i) the first-linear pre-activation is
        x_i @ W1a + (x_j - x_i) @ W1b + b1 = P[i] + Q[j]
    with  P = x @ (W1a - W1b) + b1   and   Q = x @ W1b,
    both produced by ONE matmul against W_cat = [W1a - W1b | W1b].
    """
    m, npg = neg_ref.shape                 # m = G * npg rows in this grid step
    g = m // npg                           # graphs in this step
    num_layers = wcat_ref.shape[0]
    mm_dtype = w2_ref.dtype                # bf16 (fast path) or f32 (exact path)

    h = x_ref[...]                         # (m, 128) f32
    neg = neg_ref[...][:, :, None]         # (m, npg, 1): 0 if edge j->i, else -1e30

    for l in range(num_layers):            # static unroll: 4 layers
        wcat = wcat_ref[l]                 # (128, 256) = [W1a - W1b | W1b] padded
        b1 = b1_ref[l]                     # (1, 128)
        w2 = w2_ref[l]                     # (128, 128)
        b2 = b2_ref[l]                     # (1, 128)

        # Fused first linear: one (m,128)@(128,256) MXU push gives both P and Q.
        pq = jnp.dot(h, wcat, preferred_element_type=jnp.float32)        # (m, 256)
        p = (pq[:, :F_PAD] + b1).reshape(g, npg, 1, F_PAD)               # target i
        q = pq[:, F_PAD:].reshape(g, 1, npg, F_PAD)                      # source j

        # Edge pre-activations for every (i, j) pair inside each graph, then
        # ONE big lane-dense MXU matmul over all G*npg^2 edge rows.
        edge = jnp.maximum(p + q, 0.0).reshape(m * npg, F_PAD)
        msgs = jnp.dot(edge.astype(mm_dtype), w2,
                       preferred_element_type=jnp.float32)               # (m*npg, 128)
        msgs = msgs.reshape(m, npg, F_PAD)

        # Additive -inf bias (no compare/select), max over source j,
        # b2 hoisted past the max (max(msg) + b2 == max(msg + b2)).
        agg = jnp.max(msgs + neg, axis=1)                                # (m, 128)
        h = jnp.maximum(agg + b2, 0.0)     # EdgeConv bias + module-level ReLU

    out_ref[...] = h


def _pad2(a, rows, cols):
    r, c = a.shape
    return jnp.pad(a, ((0, rows - r), (0, cols - c)))


def jet_autoencoder_forward(x, neg_bias, params, *, nodes_per_graph,
                            graphs_per_step=None, mxu_bf16=True,
                            vmem_limit_mb=48):
    """Fused forward pass of all four EdgeConv layers.

    x:        (N, num_features), N = n_graphs * nodes_per_graph.
    neg_bias: (N, nodes_per_graph) f32; 0.0 where edge
              (graph(i)*npg + j_local) -> i exists, -1e30 otherwise
              (graphs are block-diagonal and equally sized).
    params:   list of 4 tuples (w1a, w1b, b1, w2, b2).
    """
    n, f = x.shape
    npg = nodes_per_graph
    assert n % npg == 0, "N must be n_graphs * nodes_per_graph"
    assert npg % 8 == 0, "nodes_per_graph must be a multiple of 8 (sublane tiling)"
    n_graphs = n // npg

    if graphs_per_step is None:
        # Aim for >= 1024 rows in the big edge matmul, but keep >= 2 grid steps
        # so v7x's two TensorCores both get work; must divide n_graphs evenly.
        target = max(1, -(-1024 // (npg * npg)))
        if n_graphs >= 2:
            target = min(target, max(1, n_graphs // 2))
        target = min(target, n_graphs)
        while n_graphs % target:
            target -= 1
        graphs_per_step = target
    assert n_graphs % graphs_per_step == 0
    steps = n_graphs // graphs_per_step
    m = graphs_per_step * npg
    num_layers = len(params)
    out_features = params[-1][3].shape[1]

    # Pack everything into a lane-dense 128/256-wide layout (padded lanes stay
    # exactly 0 through every layer and are sliced off at the end).
    x_pad = jnp.pad(x.astype(jnp.float32), ((0, 0), (0, F_PAD - f)))
    wcat, b1s, w2s, b2s = [], [], [], []
    for (w1a, w1b, b1, w2, b2) in params:
        wcat.append(jnp.concatenate(
            [_pad2(w1a - w1b, F_PAD, F_PAD), _pad2(w1b, F_PAD, F_PAD)], axis=1))
        b1s.append(_pad2(b1, 1, F_PAD))
        w2s.append(_pad2(w2, F_PAD, F_PAD))
        b2s.append(_pad2(b2, 1, F_PAD))
    wcat = jnp.stack(wcat)                               # (L, 128, 256) f32
    b1s = jnp.stack(b1s)                                 # (L, 1, 128)   f32
    w2s = jnp.stack(w2s)                                 # (L, 128, 128)
    b2s = jnp.stack(b2s)                                 # (L, 1, 128)   f32
    if mxu_bf16:
        # edge @ W2 is ~95% of MXU flops: run it natively in bf16 (f32 acc).
        w2s = w2s.astype(jnp.bfloat16)

    flops = steps * num_layers * (
        2 * m * F_PAD * (2 * F_PAD) + 2 * (m * npg) * F_PAD * F_PAD)
    bytes_accessed = int(
        x_pad.size * 4 + n * F_PAD * 4 + neg_bias.size * 4 + wcat.size * 4 +
        b1s.size * 4 + b2s.size * 4 + w2s.size * w2s.dtype.itemsize)

    # Weights: whole arrays resident in VMEM (constant across the grid: single
    # buffer, no per-step re-DMA, no double-buffering).
    wspec = pl.BlockSpec(memory_space=pltpu.MemorySpace.VMEM)

    out = pl.pallas_call(
        _jet_ae_kernel,
        out_shape=jax.ShapeDtypeStruct((n, F_PAD), jnp.float32),
        grid=(steps,),
        in_specs=[
            pl.BlockSpec((m, F_PAD), lambda s: (s, 0)),   # x: G graphs per step
            pl.BlockSpec((m, npg), lambda s: (s, 0)),     # additive adjacency bias
            wspec, wspec, wspec, wspec,                   # W_cat, b1, W2, b2
        ],
        out_specs=pl.BlockSpec((m, F_PAD), lambda s: (s, 0)),
        compiler_params=pltpu.CompilerParams(
            dimension_semantics=("parallel",),            # graph batches across TCs
            vmem_limit_bytes=vmem_limit_mb << 20),
        cost_estimate=pl.CostEstimate(flops=flops, transcendentals=0,
                                      bytes_accessed=bytes_accessed),
    )(x_pad, neg_bias.astype(jnp.float32), wcat, b1s, w2s, b2s)

    return out[:, :out_features]


# ------------------------- pure-JAX reference -------------------------------
def edgeconv_ref(x, w1a, w1b, b1, w2, b2, adjt):
    n, fin = x.shape
    xi = jnp.broadcast_to(x[:, None, :], (n, n, fin))   # target i
    xj = jnp.broadcast_to(x[None, :, :], (n, n, fin))   # source j
    cat = jnp.concatenate([xi, xj - xi], axis=-1)       # (N, N, 2F)
    w1 = jnp.concatenate([w1a, w1b], axis=0)            # (2F, H1)
    e = jax.nn.relu(jnp.einsum("ijc,ch->ijh", cat, w1) + b1)
    msgs = jnp.einsum("ijh,hk->ijk", e, w2) + b2        # (N, N, H2)
    mask = (adjt.T > 0.5)[:, :, None]                   # mask[i, j] = edge j->i
    masked = jnp.where(mask, msgs, -1e30)
    return jax.nn.relu(jnp.max(masked, axis=1))


def forward_ref(x, adjt, params):
    h = x
    for layer in params:
        h = edgeconv_ref(h, *layer, adjt)
    return h


# ------------------------- deterministic parameters -------------------------
def init_params(key, num_features=3, smallest_dim=8):
    # (Fin, H1, H2) per EdgeConv MLP: Linear(2*Fin, H1) -> ReLU -> Linear(H1, H2)
    dims = [
        (num_features,      2 * smallest_dim, 2 * smallest_dim),  # conv1
        (2 * smallest_dim,  smallest_dim,     2 * smallest_dim),  # conv2
        (2 * smallest_dim,  smallest_dim,     smallest_dim),      # conv3
        (smallest_dim,      2 * smallest_dim, num_features),      # conv4
    ]
    params = []
    for (fin, h1, h2) in dims:
        key, k1, k2, k3, k4, k5 = jax.random.split(key, 6)
        s1 = 1.0 / np.sqrt(2.0 * fin)
        s2 = 1.0 / np.sqrt(float(h1))
        w1a = jax.random.uniform(k1, (fin, h1), jnp.float32, -s1, s1)
        w1b = jax.random.uniform(k2, (fin, h1), jnp.float32, -s1, s1)
        b1 = jax.random.uniform(k3, (1, h1), jnp.float32, -s1, s1)
        w2 = jax.random.uniform(k4, (h1, h2), jnp.float32, -s2, s2)
        b2 = jax.random.uniform(k5, (1, h2), jnp.float32, -s2, s2)
        params.append((w1a, w1b, b1, w2, b2))
    return params


if __name__ == "__main__":
    key = jax.random.PRNGKey(0)
    num_features, smallest_dim = 3, 8
    n_graphs, nodes_per_graph = 8, 16          # 128 nodes total, small demo size
    n = n_graphs * nodes_per_graph

    kx, kp = jax.random.split(key)
    x = jax.random.normal(kx, (n, num_features), jnp.float32)          # data.x

    # data.edge_index: fully connected within each jet graph, no self loops
    src, dst = [], []
    for g in range(n_graphs):
        lo = g * nodes_per_graph
        for i in range(nodes_per_graph):
            for j in range(nodes_per_graph):
                if i != j:
                    src.append(lo + j)   # source
                    dst.append(lo + i)   # target
    edge_index = jnp.array([src, dst], dtype=jnp.int32)

    # localized adjacency -> additive max bias: 0 where edge j->i exists, -1e30 else
    adj_local = jnp.zeros((n, nodes_per_graph), jnp.float32).at[
        edge_index[1], edge_index[0] % nodes_per_graph].set(1.0)
    neg_bias = jnp.where(adj_local > 0.5, 0.0, NEG_BIG).astype(jnp.float32)

    # reference dense adjacency: adjt[src, dst] = 1
    adjt = jnp.zeros((n, n), jnp.float32).at[edge_index[0], edge_index[1]].set(1.0)

    params = init_params(kp, num_features, smallest_dim)
    ref = forward_ref(x, adjt, params)

    # 4 graphs per grid step -> edge matmul has 4*16*16 = 1024 rows, grid = 2
    fwd_f32 = jax.jit(functools.partial(
        jet_autoencoder_forward, nodes_per_graph=nodes_per_graph,
        graphs_per_step=4, mxu_bf16=False))
    fwd_bf16 = jax.jit(functools.partial(
        jet_autoencoder_forward, nodes_per_graph=nodes_per_graph,
        graphs_per_step=4, mxu_bf16=True))

    # Exact path (f32 MXU): must match the module forward to f32 rounding.
    out_f32 = jax.block_until_ready(fwd_f32(x, neg_bias, params))
    assert out_f32.shape == (n, num_features)
    np.testing.assert_allclose(np.asarray(out_f32), np.asarray(ref),
                               rtol=1e-3, atol=1e-3)

    # Fast path (bf16 edge@W2, f32 accumulation): bf16 input rounding at O(1)
    # magnitudes gives ~1e-2-scale absolute deviations over 4 layers.
    out_bf16 = jax.block_until_ready(fwd_bf16(x, neg_bias, params))
    assert out_bf16.shape == (n, num_features)
    np.testing.assert_allclose(np.asarray(out_bf16), np.asarray(ref),
                               rtol=5e-2, atol=5e-2)

    print("KERNEL_OK")
</pallas_src>

<mosaic_0001>
module attributes {stable_mosaic.version = 11 : i64} {
  func.func @_jet_ae_kernel(%arg0: i32, %arg1: memref<64x128xf32, #tpu.memory_space<vmem>>, %arg2: memref<64x16xf32, #tpu.memory_space<vmem>>, %arg3: memref<4x128x256xf32, #tpu.memory_space<vmem>>, %arg4: memref<4x1x128xf32, #tpu.memory_space<vmem>>, %arg5: memref<4x128x128xf32, #tpu.memory_space<vmem>>, %arg6: memref<4x1x128xf32, #tpu.memory_space<vmem>>, %arg7: memref<64x128xf32, #tpu.memory_space<vmem>>) attributes {dimension_semantics = [#tpu.dimension_semantics<parallel>], iteration_bounds = array<i64: 2>, scalar_prefetch = 0 : i64, scratch_operands = 0 : i64, tpu.core_type = #tpu.core_type<tc>, window_params = [{transform_indices = @transform_0, window_bounds = array<i64: 64, 128>}, {transform_indices = @transform_1, window_bounds = array<i64: 64, 16>}, {pipeline_mode = #tpu.pipeline_mode<synchronous>, transform_indices = @transform_2, window_bounds = array<i64: 4, 128, 256>}, {pipeline_mode = #tpu.pipeline_mode<synchronous>, transform_indices = @transform_3, window_bounds = array<i64: 4, 1, 128>}, {pipeline_mode = #tpu.pipeline_mode<synchronous>, transform_indices = @transform_4, window_bounds = array<i64: 4, 128, 128>}, {pipeline_mode = #tpu.pipeline_mode<synchronous>, transform_indices = @transform_5, window_bounds = array<i64: 4, 1, 128>}, {transform_indices = @transform_6, window_bounds = array<i64: 64, 128>}]} {
    %c0 = arith.constant 0 : index
    %c0_0 = arith.constant 0 : index
    %0 = vector.load %arg1[%c0, %c0_0] : memref<64x128xf32, #tpu.memory_space<vmem>>, vector<64x128xf32>
    %c0_1 = arith.constant 0 : index
    %c0_2 = arith.constant 0 : index
    %1 = vector.load %arg2[%c0_1, %c0_2] : memref<64x16xf32, #tpu.memory_space<vmem>>, vector<64x16xf32>
    %2 = vector.shape_cast %1 : vector<64x16xf32> to vector<64x16x1xf32>
    %c0_3 = arith.constant 0 : index
    %c0_4 = arith.constant 0 : index
    %c0_5 = arith.constant 0 : index
    %3 = vector.load %arg3[%c0_3, %c0_4, %c0_5] : memref<4x128x256xf32, #tpu.memory_space<vmem>>, vector<1x128x256xf32>
    %4 = vector.shape_cast %3 : vector<1x128x256xf32> to vector<128x256xf32>
    %c0_6 = arith.constant 0 : index
    %c0_7 = arith.constant 0 : index
    %c0_8 = arith.constant 0 : index
    %5 = vector.load %arg4[%c0_6, %c0_7, %c0_8] : memref<4x1x128xf32, #tpu.memory_space<vmem>>, vector<1x1x128xf32>
    %6 = vector.shape_cast %5 : vector<1x1x128xf32> to vector<1x128xf32>
    %c0_9 = arith.constant 0 : index
    %c0_10 = arith.constant 0 : index
    %c0_11 = arith.constant 0 : index
    %7 = vector.load %arg5[%c0_9, %c0_10, %c0_11] : memref<4x128x128xf32, #tpu.memory_space<vmem>>, vector<1x128x128xf32>
    %8 = vector.shape_cast %7 : vector<1x128x128xf32> to vector<128x128xf32>
    %c0_12 = arith.constant 0 : index
    %c0_13 = arith.constant 0 : index
    %c0_14 = arith.constant 0 : index
    %9 = vector.load %arg6[%c0_12, %c0_13, %c0_14] : memref<4x1x128xf32, #tpu.memory_space<vmem>>, vector<1x1x128xf32>
    %10 = vector.shape_cast %9 : vector<1x1x128xf32> to vector<1x128xf32>
    %cst = arith.constant dense<0.000000e+00> : vector<64x256xf32>
    %11 = tpu.matmul %0, %4, %cst {dimension_numbers = #tpu.dot_dimension_numbers<[1], [0], [0], [1], [0, 0, 1, 1], [], []>} : vector<64x128xf32>, vector<128x256xf32>, vector<64x256xf32> -> vector<64x256xf32>
    %12 = vector.extract_strided_slice %11 {offsets = [0, 0], sizes = [64, 128], strides = [1, 1]} : vector<64x256xf32> to vector<64x128xf32>
    %13 = vector.broadcast %6 : vector<1x128xf32> to vector<64x128xf32>
    %14 = arith.addf %12, %13 : vector<64x128xf32>
    %15 = vector.shape_cast %14 : vector<64x128xf32> to vector<4x16x1x128xf32>
    %16 = vector.extract_strided_slice %11 {offsets = [0, 128], sizes = [64, 128], strides = [1, 1]} : vector<64x256xf32> to vector<64x128xf32>
    %17 = vector.shape_cast %16 : vector<64x128xf32> to vector<4x1x16x128xf32>
    %18 = vector.broadcast %15 : vector<4x16x1x128xf32> to vector<4x16x16x128xf32>
    %19 = vector.broadcast %17 : vector<4x1x16x128xf32> to vector<4x16x16x128xf32>
    %20 = arith.addf %18, %19 : vector<4x16x16x128xf32>
    %cst_15 = arith.constant 0.000000e+00 : f32
    %21 = vector.broadcast %cst_15 : f32 to vector<4x16x16x128xf32>
    %22 = arith.maximumf %20, %21 : vector<4x16x16x128xf32>
    %23 = vector.shape_cast %22 : vector<4x16x16x128xf32> to vector<1024x128xf32>
    %cst_16 = arith.constant dense<0.000000e+00> : vector<1024x128xf32>
    %24 = tpu.matmul %23, %8, %cst_16 {dimension_numbers = #tpu.dot_dimension_numbers<[1], [0], [0], [1], [0, 0, 1, 1], [], []>} : vector<1024x128xf32>, vector<128x128xf32>, vector<1024x128xf32> -> vector<1024x128xf32>
    %25 = vector.shape_cast %24 : vector<1024x128xf32> to vector<64x16x128xf32>
    %26 = vector.broadcast %2 : vector<64x16x1xf32> to vector<64x16x128xf32>
    %27 = arith.addf %25, %26 : vector<64x16x128xf32>
    %cst_17 = arith.constant dense<0xFF800000> : vector<64x128xf32>
    %28 = vector.multi_reduction <maximumf>, %27, %cst_17 [1] : vector<64x16x128xf32> to vector<64x128xf32>
    %29 = vector.broadcast %10 : vector<1x128xf32> to vector<64x128xf32>
    %30 = arith.addf %28, %29 : vector<64x128xf32>
    %cst_18 = arith.constant 0.000000e+00 : f32
    %31 = vector.broadcast %cst_18 : f32 to vector<64x128xf32>
    %32 = arith.maximumf %30, %31 : vector<64x128xf32>
    %c1 = arith.constant 1 : index
    %c0_19 = arith.constant 0 : index
    %c0_20 = arith.constant 0 : index
    %33 = vector.load %arg3[%c1, %c0_19, %c0_20] : memref<4x128x256xf32, #tpu.memory_space<vmem>>, vector<1x128x256xf32>
    %34 = vector.shape_cast %33 : vector<1x128x256xf32> to vector<128x256xf32>
    %c1_21 = arith.constant 1 : index
    %c0_22 = arith.constant 0 : index
    %c0_23 = arith.constant 0 : index
    %35 = vector.load %arg4[%c1_21, %c0_22, %c0_23] : memref<4x1x128xf32, #tpu.memory_space<vmem>>, vector<1x1x128xf32>
    %36 = vector.shape_cast %35 : vector<1x1x128xf32> to vector<1x128xf32>
    %c1_24 = arith.constant 1 : index
    %c0_25 = arith.constant 0 : index
    %c0_26 = arith.constant 0 : index
    %37 = vector.load %arg5[%c1_24, %c0_25, %c0_26] : memref<4x128x128xf32, #tpu.memory_space<vmem>>, vector<1x128x128xf32>
    %38 = vector.shape_cast %37 : vector<1x128x128xf32> to vector<128x128xf32>
    %c1_27 = arith.constant 1 : index
    %c0_28 = arith.constant 0 : index
    %c0_29 = arith.constant 0 : index
    %39 = vector.load %arg6[%c1_27, %c0_28, %c0_29] : memref<4x1x128xf32, #tpu.memory_space<vmem>>, vector<1x1x128xf32>
    %40 = vector.shape_cast %39 : vector<1x1x128xf32> to vector<1x128xf32>
    %cst_30 = arith.constant dense<0.000000e+00> : vector<64x256xf32>
    %41 = tpu.matmul %32, %34, %cst_30 {dimension_numbers = #tpu.dot_dimension_numbers<[1], [0], [0], [1], [0, 0, 1, 1], [], []>} : vector<64x128xf32>, vector<128x256xf32>, vector<64x256xf32> -> vector<64x256xf32>
    %42 = vector.extract_strided_slice %41 {offsets = [0, 0], sizes = [64, 128], strides = [1, 1]} : vector<64x256xf32> to vector<64x128xf32>
    %43 = vector.broadcast %36 : vector<1x128xf32> to vector<64x128xf32>
    %44 = arith.addf %42, %43 : vector<64x128xf32>
    %45 = vector.shape_cast %44 : vector<64x128xf32> to vector<4x16x1x128xf32>
    %46 = vector.extract_strided_slice %41 {offsets = [0, 128], sizes = [64, 128], strides = [1, 1]} : vector<64x256xf32> to vector<64x128xf32>
    %47 = vector.shape_cast %46 : vector<64x128xf32> to vector<4x1x16x128xf32>
    %48 = vector.broadcast %45 : vector<4x16x1x128xf32> to vector<4x16x16x128xf32>
    %49 = vector.broadcast %47 : vector<4x1x16x128xf32> to vector<4x16x16x128xf32>
    %50 = arith.addf %48, %49 : vector<4x16x16x128xf32>
    %cst_31 = arith.constant 0.000000e+00 : f32
    %51 = vector.broadcast %cst_31 : f32 to vector<4x16x16x128xf32>
    %52 = arith.maximumf %50, %51 : vector<4x16x16x128xf32>
    %53 = vector.shape_cast %52 : vector<4x16x16x128xf32> to vector<1024x128xf32>
    %cst_32 = arith.constant dense<0.000000e+00> : vector<1024x128xf32>
    %54 = tpu.matmul %53, %38, %cst_32 {dimension_numbers = #tpu.dot_dimension_numbers<[1], [0], [0], [1], [0, 0, 1, 1], [], []>} : vector<1024x128xf32>, vector<128x128xf32>, vector<1024x128xf32> -> vector<1024x128xf32>
    %55 = vector.shape_cast %54 : vector<1024x128xf32> to vector<64x16x128xf32>
    %56 = vector.broadcast %2 : vector<64x16x1xf32> to vector<64x16x128xf32>
    %57 = arith.addf %55, %56 : vector<64x16x128xf32>
    %cst_33 = arith.constant dense<0xFF800000> : vector<64x128xf32>
    %58 = vector.multi_reduction <maximumf>, %57, %cst_33 [1] : vector<64x16x128xf32> to vector<64x128xf32>
    %59 = vector.broadcast %40 : vector<1x128xf32> to vector<64x128xf32>
    %60 = arith.addf %58, %59 : vector<64x128xf32>
    %cst_34 = arith.constant 0.000000e+00 : f32
    %61 = vector.broadcast %cst_34 : f32 to vector<64x128xf32>
    %62 = arith.maximumf %60, %61 : vector<64x128xf32>
    %c2 = arith.constant 2 : index
    %c0_35 = arith.constant 0 : index
    %c0_36 = arith.constant 0 : index
    %63 = vector.load %arg3[%c2, %c0_35, %c0_36] : memref<4x128x256xf32, #tpu.memory_space<vmem>>, vector<1x128x256xf32>
    %64 = vector.shape_cast %63 : vector<1x128x256xf32> to vector<128x256xf32>
    %c2_37 = arith.constant 2 : index
    %c0_38 = arith.constant 0 : index
    %c0_39 = arith.constant 0 : index
    %65 = vector.load %arg4[%c2_37, %c0_38, %c0_39] : memref<4x1x128xf32, #tpu.memory_space<vmem>>, vector<1x1x128xf32>
    %66 = vector.shape_cast %65 : vector<1x1x128xf32> to vector<1x128xf32>
    %c2_40 = arith.constant 2 : index
    %c0_41 = arith.constant 0 : index
    %c0_42 = arith.constant 0 : index
    %67 = vector.load %arg5[%c2_40, %c0_41, %c0_42] : memref<4x128x128xf32, #tpu.memory_space<vmem>>, vector<1x128x128xf32>
    %68 = vector.shape_cast %67 : vector<1x128x128xf32> to vector<128x128xf32>
    %c2_43 = arith.constant 2 : index
    %c0_44 = arith.constant 0 : index
    %c0_45 = arith.constant 0 : index
    %69 = vector.load %arg6[%c2_43, %c0_44, %c0_45] : memref<4x1x128xf32, #tpu.memory_space<vmem>>, vector<1x1x128xf32>
    %70 = vector.shape_cast %69 : vector<1x1x128xf32> to vector<1x128xf32>
    %cst_46 = arith.constant dense<0.000000e+00> : vector<64x256xf32>
    %71 = tpu.matmul %62, %64, %cst_46 {dimension_numbers = #tpu.dot_dimension_numbers<[1], [0], [0], [1], [0, 0, 1, 1], [], []>} : vector<64x128xf32>, vector<128x256xf32>, vector<64x256xf32> -> vector<64x256xf32>
    %72 = vector.extract_strided_slice %71 {offsets = [0, 0], sizes = [64, 128], strides = [1, 1]} : vector<64x256xf32> to vector<64x128xf32>
    %73 = vector.broadcast %66 : vector<1x128xf32> to vector<64x128xf32>
    %74 = arith.addf %72, %73 : vector<64x128xf32>
    %75 = vector.shape_cast %74 : vector<64x128xf32> to vector<4x16x1x128xf32>
    %76 = vector.extract_strided_slice %71 {offsets = [0, 128], sizes = [64, 128], strides = [1, 1]} : vector<64x256xf32> to vector<64x128xf32>
    %77 = vector.shape_cast %76 : vector<64x128xf32> to vector<4x1x16x128xf32>
    %78 = vector.broadcast %75 : vector<4x16x1x128xf32> to vector<4x16x16x128xf32>
    %79 = vector.broadcast %77 : vector<4x1x16x128xf32> to vector<4x16x16x128xf32>
    %80 = arith.addf %78, %79 : vector<4x16x16x128xf32>
    %cst_47 = arith.constant 0.000000e+00 : f32
    %81 = vector.broadcast %cst_47 : f32 to vector<4x16x16x128xf32>
    %82 = arith.maximumf %80, %81 : vector<4x16x16x128xf32>
    %83 = vector.shape_cast %82 : vector<4x16x16x128xf32> to vector<1024x128xf32>
    %cst_48 = arith.constant dense<0.000000e+00> : vector<1024x128xf32>
    %84 = tpu.matmul %83, %68, %cst_48 {dimension_numbers = #tpu.dot_dimension_numbers<[1], [0], [0], [1], [0, 0, 1, 1], [], []>} : vector<1024x128xf32>, vector<128x128xf32>, vector<1024x128xf32> -> vector<1024x128xf32>
    %85 = vector.shape_cast %84 : vector<1024x128xf32> to vector<64x16x128xf32>
    %86 = vector.broadcast %2 : vector<64x16x1xf32> to vector<64x16x128xf32>
    %87 = arith.addf %85, %86 : vector<64x16x128xf32>
    %cst_49 = arith.constant dense<0xFF800000> : vector<64x128xf32>
    %88 = vector.multi_reduction <maximumf>, %87, %cst_49 [1] : vector<64x16x128xf32> to vector<64x128xf32>
    %89 = vector.broadcast %70 : vector<1x128xf32> to vector<64x128xf32>
    %90 = arith.addf %88, %89 : vector<64x128xf32>
    %cst_50 = arith.constant 0.000000e+00 : f32
    %91 = vector.broadcast %cst_50 : f32 to vector<64x128xf32>
    %92 = arith.maximumf %90, %91 : vector<64x128xf32>
    %c3 = arith.constant 3 : index
    %c0_51 = arith.constant 0 : index
    %c0_52 = arith.constant 0 : index
    %93 = vector.load %arg3[%c3, %c0_51, %c0_52] : memref<4x128x256xf32, #tpu.memory_space<vmem>>, vector<1x128x256xf32>
    %94 = vector.shape_cast %93 : vector<1x128x256xf32> to vector<128x256xf32>
    %c3_53 = arith.constant 3 : index
    %c0_54 = arith.constant 0 : index
    %c0_55 = arith.constant 0 : index
    %95 = vector.load %arg4[%c3_53, %c0_54, %c0_55] : memref<4x1x128xf32, #tpu.memory_space<vmem>>, vector<1x1x128xf32>
    %96 = vector.shape_cast %95 : vector<1x1x128xf32> to vector<1x128xf32>
    %c3_56 = arith.constant 3 : index
    %c0_57 = arith.constant 0 : index
    %c0_58 = arith.constant 0 : index
    %97 = vector.load %arg5[%c3_56, %c0_57, %c0_58] : memref<4x128x128xf32, #tpu.memory_space<vmem>>, vector<1x128x128xf32>
    %98 = vector.shape_cast %97 : vector<1x128x128xf32> to vector<128x128xf32>
    %c3_59 = arith.constant 3 : index
    %c0_60 = arith.constant 0 : index
    %c0_61 = arith.constant 0 : index
    %99 = vector.load %arg6[%c3_59, %c0_60, %c0_61] : memref<4x1x128xf32, #tpu.memory_space<vmem>>, vector<1x1x128xf32>
    %100 = vector.shape_cast %99 : vector<1x1x128xf32> to vector<1x128xf32>
    %cst_62 = arith.constant dense<0.000000e+00> : vector<64x256xf32>
    %101 = tpu.matmul %92, %94, %cst_62 {dimension_numbers = #tpu.dot_dimension_numbers<[1], [0], [0], [1], [0, 0, 1, 1], [], []>} : vector<64x128xf32>, vector<128x256xf32>, vector<64x256xf32> -> vector<64x256xf32>
    %102 = vector.extract_strided_slice %101 {offsets = [0, 0], sizes = [64, 128], strides = [1, 1]} : vector<64x256xf32> to vector<64x128xf32>
    %103 = vector.broadcast %96 : vector<1x128xf32> to vector<64x128xf32>
    %104 = arith.addf %102, %103 : vector<64x128xf32>
    %105 = vector.shape_cast %104 : vector<64x128xf32> to vector<4x16x1x128xf32>
    %106 = vector.extract_strided_slice %101 {offsets = [0, 128], sizes = [64, 128], strides = [1, 1]} : vector<64x256xf32> to vector<64x128xf32>
    %107 = vector.shape_cast %106 : vector<64x128xf32> to vector<4x1x16x128xf32>
    %108 = vector.broadcast %105 : vector<4x16x1x128xf32> to vector<4x16x16x128xf32>
    %109 = vector.broadcast %107 : vector<4x1x16x128xf32> to vector<4x16x16x128xf32>
    %110 = arith.addf %108, %109 : vector<4x16x16x128xf32>
    %cst_63 = arith.constant 0.000000e+00 : f32
    %111 = vector.broadcast %cst_63 : f32 to vector<4x16x16x128xf32>
    %112 = arith.maximumf %110, %111 : vector<4x16x16x128xf32>
    %113 = vector.shape_cast %112 : vector<4x16x16x128xf32> to vector<1024x128xf32>
    %cst_64 = arith.constant dense<0.000000e+00> : vector<1024x128xf32>
    %114 = tpu.matmul %113, %98, %cst_64 {dimension_numbers = #tpu.dot_dimension_numbers<[1], [0], [0], [1], [0, 0, 1, 1], [], []>} : vector<1024x128xf32>, vector<128x128xf32>, vector<1024x128xf32> -> vector<1024x128xf32>
    %115 = vector.shape_cast %114 : vector<1024x128xf32> to vector<64x16x128xf32>
    %116 = vector.broadcast %2 : vector<64x16x1xf32> to vector<64x16x128xf32>
    %117 = arith.addf %115, %116 : vector<64x16x128xf32>
    %cst_65 = arith.constant dense<0xFF800000> : vector<64x128xf32>
    %118 = vector.multi_reduction <maximumf>, %117, %cst_65 [1] : vector<64x16x128xf32> to vector<64x128xf32>
    %119 = vector.broadcast %100 : vector<1x128xf32> to vector<64x128xf32>
    %120 = arith.addf %118, %119 : vector<64x128xf32>
    %cst_66 = arith.constant 0.000000e+00 : f32
    %121 = vector.broadcast %cst_66 : f32 to vector<64x128xf32>
    %122 = arith.maximumf %120, %121 : vector<64x128xf32>
    %c0_67 = arith.constant 0 : index
    %c0_68 = arith.constant 0 : index
    %123 = vector.load %arg7[%c0_67, %c0_68] : memref<64x128xf32, #tpu.memory_space<vmem>>, vector<64x128xf32>
    tpu.vector_store %arg7[%c0_67, %c0_68], %122 {strides = array<i32>} : memref<64x128xf32, #tpu.memory_space<vmem>>, vector<64x128xf32>,
    return
  }
  func.func @transform_0(%arg0: i32) -> (i32, i32) {
    %c0_i32 = arith.constant 0 : i32
    %c0_i32_0 = arith.constant 0 : i32
    return %arg0, %c0_i32 : i32, i32
  }
  func.func @transform_1(%arg0: i32) -> (i32, i32) {
    %c0_i32 = arith.constant 0 : i32
    %c0_i32_0 = arith.constant 0 : i32
    return %arg0, %c0_i32 : i32, i32
  }
  func.func @transform_2(%arg0: i32) -> (i32, i32, i32) {
    %c0_i32 = arith.constant 0 : i32
    %c0_i32_0 = arith.constant 0 : i32
    %c0_i32_1 = arith.constant 0 : i32
    %c0_i32_2 = arith.constant 0 : i32
    return %c0_i32, %c0_i32_0, %c0_i32_1 : i32, i32, i32
  }
  func.func @transform_3(%arg0: i32) -> (i32, i32, i32) {
    %c0_i32 = arith.constant 0 : i32
    %c0_i32_0 = arith.constant 0 : i32
    %c0_i32_1 = arith.constant 0 : i32
    %c0_i32_2 = arith.constant 0 : i32
    return %c0_i32, %c0_i32_0, %c0_i32_1 : i32, i32, i32
  }
  func.func @transform_4(%arg0: i32) -> (i32, i32, i32) {
    %c0_i32 = arith.constant 0 : i32
    %c0_i32_0 = arith.constant 0 : i32
    %c0_i32_1 = arith.constant 0 : i32
    %c0_i32_2 = arith.constant 0 : i32
    return %c0_i32, %c0_i32_0, %c0_i32_1 : i32, i32, i32
  }
  func.func @transform_5(%arg0: i32) -> (i32, i32, i32) {
    %c0_i32 = arith.constant 0 : i32
    %c0_i32_0 = arith.constant 0 : i32
    %c0_i32_1 = arith.constant 0 : i32
    %c0_i32_2 = arith.constant 0 : i32
    return %c0_i32, %c0_i32_0, %c0_i32_1 : i32, i32, i32
  }
  func.func @transform_6(%arg0: i32) -> (i32, i32) {
    %c0_i32 = arith.constant 0 : i32
    %c0_i32_0 = arith.constant 0 : i32
    return %arg0, %c0_i32 : i32, i32
  }
}

</mosaic_0001>

<llo_original>
// kernel: sub.6
$region0: #{sub.6}
  #allocation0 [shape = 's32[1]{0}', space=sflag, size = 0x4, scoped, tag = 'scoped memory for sub.6']
  %s0 = inlined_call_operand.vmem [shape: f32[16,8], index: 0, kind: input, shape index: {}]
  %s1 = inlined_call_operand.vmem [shape: f32[16,8], index: 1, kind: input, shape index: {}]
  %s2 = inlined_call_operand.vmem [shape: f32[16,8], index: 2, kind: output, shape index: {}]
  %v3 = vld [vmem:[%s0] sm:$0xff]
  %v4 = vld [vmem:[%s1] sm:$0xff]
  %5 = xla_tuple %v3, %v4
  %6 = xla_tuple %5
  %v7 = vsub.f32 %v3, %v4
  %8 = xla_tuple %v7
  %9 = vst [vmem:[%s2] sm:$0xff] %v7

// kernel: sub.7
$region0: #{sub.7}
  #allocation0 [shape = 's32[1]{0}', space=sflag, size = 0x4, scoped, tag = 'scoped memory for sub.7']
  %s0 = inlined_call_operand.vmem [shape: f32[8,16], index: 0, kind: input, shape index: {}]
  %s1 = inlined_call_operand.vmem [shape: f32[8,16], index: 1, kind: input, shape index: {}]
  %s2 = inlined_call_operand.vmem [shape: f32[8,16], index: 2, kind: output, shape index: {}]
  %v3 = vld [vmem:[%s0] sm:$0xff]
  %v4 = vld [vmem:[%s1] sm:$0xff]
  %5 = xla_tuple %v3, %v4
  %6 = xla_tuple %5
  %v7 = vsub.f32 %v3, %v4
  %8 = xla_tuple %v7
  %9 = vst [vmem:[%s2] sm:$0xff] %v7

// kernel: sub.4
$region0: #{sub.4}
  #allocation0 [shape = 's32[1]{0}', space=sflag, size = 0x4, scoped, tag = 'scoped memory for sub.4']
  %s0 = inlined_call_operand.vmem [shape: f32[3,16], index: 0, kind: input, shape index: {}]
  %s1 = inlined_call_operand.vmem [shape: f32[3,16], index: 1, kind: input, shape index: {}]
  %s2 = inlined_call_operand.vmem [shape: f32[3,16], index: 2, kind: output, shape index: {}]
  %v3 = vld [vmem:[%s0] sm:$0x7]
  %v4 = vld [vmem:[%s1] sm:$0x7]
  %5 = xla_tuple %v3, %v4
  %6 = xla_tuple %5
  %v7 = vsub.f32 %v3, %v4
  %8 = xla_tuple %v7
  %9 = vst [vmem:[%s2] sm:$0xf] %v7

// kernel: jet_autoencoder_forward.1
$region0: #{jet_autoencoder_forward.1}
  #allocation0 [shape = 'u32[]', space=smem, size = 0x4, offset = 0x4, fixed_abs, tag = 'smem constant byte address 0x4 - core index']
  #allocation1 [shape = 'u32[72,128]{1,0:T(1,128)}', space=vmem, size = 0x9000, scoped, tag = 'internal scratch']
  %s0 = inlined_call_operand.vmem [shape: f32[128,128], index: 0, kind: input, shape index: {}]
  %s1 = inlined_call_operand.vmem [shape: f32[128,16], index: 1, kind: input, shape index: {}]
  %s2 = inlined_call_operand.vmem [shape: f32[4,128,256], index: 2, kind: input, shape index: {}]
  %s3 = inlined_call_operand.vmem [shape: f32[4,1,128], index: 3, kind: input, shape index: {}]
  %s4 = inlined_call_operand.vmem [shape: f32[4,128,128], index: 4, kind: input, shape index: {}]
  %s5 = inlined_call_operand.vmem [shape: f32[4,1,128], index: 5, kind: input, shape index: {}]
  %s6 = inlined_call_operand.vmem [shape: f32[128,128], index: 6, kind: output, shape index: {}]
  %s7 = sld [smem:[#allocation0]]
  $region57: #{jet_autoencoder_forward.1} parent=0
    _
  %s9 = ssub.s32 1, %s7
  %s10 = scalar_select 0, %s9, %s7
  loop: start=0, step=1, limit=4
  $region2: #{jet_autoencoder_forward.1} parent=0 // loop_pre_header
    _
  $region3: #{jet_autoencoder_forward.1} parent=0 // loop_header
    %s12 = sphi 0, %s16
    %p13 = scmp.ge.s32.totalorder %s12, 4
    %s22 = sphi 0, %s24
    %s25 = sphi 0, %s22
    %s26 = sphi 0, %s25
    %s42 = sphi 0, %s26
    %s48 = sphi 0, %s50
    %s51 = sphi 0, %s48
    %s52 = sphi 0, %s51
    %s68 = sphi 0, %s52
    %s72 = sphi 0, %s72
    %s74 = sphi 0, %s72
    %s75 = sphi 0, %s74
    %s89 = sphi 0, %s75
    %s93 = sphi 0, %s93
    %s95 = sphi 0, %s93
    %s96 = sphi 0, %s95
    %s110 = sphi 0, %s96
    %s114 = sphi 0, %s114
    %s116 = sphi 0, %s114
    %s117 = sphi 0, %s116
    %s131 = sphi 0, %s117
    %s135 = sphi 0, %s135
    %s137 = sphi 0, %s135
    %s138 = sphi 0, %s137
    %s152 = sphi 0, %s138
    %s158 = sphi 0, %s160
    %s161 = sphi 0, %s158
    %s162 = sphi 0, %s161
    %s178 = sphi 0, %s162
  $region4: #{jet_autoencoder_forward.1} parent=0 // loop_header_branch
    %15 = sbr.rel (%p13) target = $region8
  $region5: #{jet_autoencoder_forward.1} parent=0 // loop_body
    %s17 = ssub.s32 %s12, 1
    %s18 = ssub.s32 %s12, 2
    %s19 = sadd.s32 %s12, 1
    %s20 = ssub.s32 %s12, %s19
    %p21 = scmp.eq.s32.totalorder %s20, 0
    %s23 = sadd.s32 %s22, 1
    %s24 = scalar_select %p21, %s22, %s23
    %p27 = pneg %p21
    %p28 = scmp.eq.s32.totalorder %s12, 1
    %p29 = por %p27, %p28
    %p30 = scmp.ne.s32.totalorder %s22, %s25
    %p31 = scmp.eq.s32.totalorder %s12, 0
    %p32 = por %p30, %p31
    %p33 = scmp.ne.s32.totalorder %s22, %s25
    %p34 = scmp.eq.s32.totalorder %s17, 1
    %p35 = por %p33, %p34
    %p36 = scmp.ne.s32.totalorder %s25, %s26
    %p37 = scmp.eq.s32.totalorder %s17, 0
    %p38 = por %p36, %p37
    %p39 = scmp.ne.s32.totalorder %s25, %s26
    %p40 = scmp.eq.s32.totalorder %s18, 1
    %p41 = por %p39, %p40
    %p43 = scmp.ne.s32.totalorder %s26, %s42
    %p44 = scmp.eq.s32.totalorder %s18, 0
    %p45 = por %p43, %p44
    %s46 = ssub.s32 %s12, %s19
    %p47 = scmp.eq.s32.totalorder %s46, 0
    %s49 = sadd.s32 %s48, 1
    %s50 = scalar_select %p47, %s48, %s49
    %p53 = pneg %p47
    %p54 = scmp.eq.s32.totalorder %s12, 1
    %p55 = por %p53, %p54
    %p56 = scmp.ne.s32.totalorder %s48, %s51
    %p57 = scmp.eq.s32.totalorder %s12, 0
    %p58 = por %p56, %p57
    %p59 = scmp.ne.s32.totalorder %s48, %s51
    %p60 = scmp.eq.s32.totalorder %s17, 1
    %p61 = por %p59, %p60
    %p62 = scmp.ne.s32.totalorder %s51, %s52
    %p63 = scmp.eq.s32.totalorder %s17, 0
    %p64 = por %p62, %p63
    %p65 = scmp.ne.s32.totalorder %s51, %s52
    %p66 = scmp.eq.s32.totalorder %s18, 1
    %p67 = por %p65, %p66
    %p69 = scmp.ne.s32.totalorder %s52, %s68
    %p70 = scmp.eq.s32.totalorder %s18, 0
    %p71 = por %p69, %p70
    %s73 = sadd.s32 %s72, 1
    %p76 = scmp.eq.s32.totalorder %s12, 1
    %p77 = scmp.ne.s32.totalorder %s72, %s74
    %p78 = scmp.eq.s32.totalorder %s12, 0
    %p79 = por %p77, %p78
    %p80 = scmp.ne.s32.totalorder %s72, %s74
    %p81 = scmp.eq.s32.totalorder %s17, 1
    %p82 = por %p80, %p81
    %p83 = scmp.ne.s32.totalorder %s74, %s75
    %p84 = scmp.eq.s32.totalorder %s17, 0
    %p85 = por %p83, %p84
    %p86 = scmp.ne.s32.totalorder %s74, %s75
    %p87 = scmp.eq.s32.totalorder %s18, 1
    %p88 = por %p86, %p87
    %p90 = scmp.ne.s32.totalorder %s75, %s89
    %p91 = scmp.eq.s32.totalorder %s18, 0
    %p92 = por %p90, %p91
    %s94 = sadd.s32 %s93, 1
    %p97 = scmp.eq.s32.totalorder %s12, 1
    %p98 = scmp.ne.s32.totalorder %s93, %s95
    %p99 = scmp.eq.s32.totalorder %s12, 0
    %p100 = por %p98, %p99
    %p101 = scmp.ne.s32.totalorder %s93, %s95
    %p102 = scmp.eq.s32.totalorder %s17, 1
    %p103 = por %p101, %p102
    %p104 = scmp.ne.s32.totalorder %s95, %s96
    %p105 = scmp.eq.s32.totalorder %s17, 0
    %p106 = por %p104, %p105
    %p107 = scmp.ne.s32.totalorder %s95, %s96
    %p108 = scmp.eq.s32.totalorder %s18, 1
    %p109 = por %p107, %p108
    %p111 = scmp.ne.s32.totalorder %s96, %s110
    %p112 = scmp.eq.s32.totalorder %s18, 0
    %p113 = por %p111, %p112
    %s115 = sadd.s32 %s114, 1
    %p118 = scmp.eq.s32.totalorder %s12, 1
    %p119 = scmp.ne.s32.totalorder %s114, %s116
    %p120 = scmp.eq.s32.totalorder %s12, 0
    %p121 = por %p119, %p120
    %p122 = scmp.ne.s32.totalorder %s114, %s116
    %p123 = scmp.eq.s32.totalorder %s17, 1
    %p124 = por %p122, %p123
    %p125 = scmp.ne.s32.totalorder %s116, %s117
    %p126 = scmp.eq.s32.totalorder %s17, 0
    %p127 = por %p125, %p126
    %p128 = scmp.ne.s32.totalorder %s116, %s117
    %p129 = scmp.eq.s32.totalorder %s18, 1
    %p130 = por %p128, %p129
    %p132 = scmp.ne.s32.totalorder %s117, %s131
    %p133 = scmp.eq.s32.totalorder %s18, 0
    %p134 = por %p132, %p133
    %s136 = sadd.s32 %s135, 1
    %p139 = scmp.eq.s32.totalorder %s12, 1
    %p140 = scmp.ne.s32.totalorder %s135, %s137
    %p141 = scmp.eq.s32.totalorder %s12, 0
    %p142 = por %p140, %p141
    %p143 = scmp.ne.s32.totalorder %s135, %s137
    %p144 = scmp.eq.s32.totalorder %s17, 1
    %p145 = por %p143, %p144
    %p146 = scmp.ne.s32.totalorder %s137, %s138
    %p147 = scmp.eq.s32.totalorder %s17, 0
    %p148 = por %p146, %p147
    %p149 = scmp.ne.s32.totalorder %s137, %s138
    %p150 = scmp.eq.s32.totalorder %s18, 1
    %p151 = por %p149, %p150
    %p153 = scmp.ne.s32.totalorder %s138, %s152
    %p154 = scmp.eq.s32.totalorder %s18, 0
    %p155 = por %p153, %p154
    %s156 = ssub.s32 %s12, %s19
    %p157 = scmp.eq.s32.totalorder %s156, 0
    %s159 = sadd.s32 %s158, 1
    %s160 = scalar_select %p157, %s158, %s159
    %p163 = pneg %p157
    %p164 = scmp.eq.s32.totalorder %s12, 1
    %p165 = por %p163, %p164
    %p166 = scmp.ne.s32.totalorder %s158, %s161
    %p167 = scmp.eq.s32.totalorder %s12, 0
    %p168 = por %p166, %p167
    %p169 = scmp.ne.s32.totalorder %s158, %s161
    %p170 = scmp.eq.s32.totalorder %s17, 1
    %p171 = por %p169, %p170
    %p172 = scmp.ne.s32.totalorder %s161, %s162
    %p173 = scmp.eq.s32.totalorder %s17, 0
    %p174 = por %p172, %p173
    %p175 = scmp.ne.s32.totalorder %s161, %s162
    %p176 = scmp.eq.s32.totalorder %s18, 1
    %p177 = por %p175, %p176
    %p179 = scmp.ne.s32.totalorder %s162, %s178
    %p180 = scmp.eq.s32.totalorder %s18, 0
    %p181 = por %p179, %p180
    %p182 = scmp.le.s32.totalorder 1, %s12
    %p183 = scmp.lt.s32.totalorder %s12, 3
    %p184 = pnand %p182, %p183
    %p185 = pneg %p184
    // Predicated region
    $region9: #{jet_autoencoder_forward.1} parent=5 // pred_check
      _
    $region10: #{jet_autoencoder_forward.1} parent=5 // pred_check_branch
      %187 = sbr.rel (%p184) target = $region12
    $region11: #{jet_autoencoder_forward.1} parent=5 // pred_region
      %s188 = ssub.s32 %s12, 1
      // Predicated region
      $region13: #{jet_autoencoder_forward.1} parent=11 // pred_check
        %p189 = pneg %p85
      $region14: #{jet_autoencoder_forward.1} parent=11 // pred_check_branch
        %191 = sbr.rel (%p189) target = $region16
      $region15: #{jet_autoencoder_forward.1} parent=11 // pred_region
        _
      $region16: #{jet_autoencoder_forward.1} parent=11 // pred_fallthru
        _
      // Predicated region
      $region17: #{jet_autoencoder_forward.1} parent=11 // pred_check
        %p192 = pneg %p106
      $region18: #{jet_autoencoder_forward.1} parent=11 // pred_check_branch
        %194 = sbr.rel (%p192) target = $region20
      $region19: #{jet_autoencoder_forward.1} parent=11 // pred_region
        _
      $region20: #{jet_autoencoder_forward.1} parent=11 // pred_fallthru
        _
      // Predicated region
      $region21: #{jet_autoencoder_forward.1} parent=11 // pred_check
        %p195 = pneg %p127
      $region22: #{jet_autoencoder_forward.1} parent=11 // pred_check_branch
        %197 = sbr.rel (%p195) target = $region24
      $region23: #{jet_autoencoder_forward.1} parent=11 // pred_region
        _
      $region24: #{jet_autoencoder_forward.1} parent=11 // pred_fallthru
        _
      // Predicated region
      $region25: #{jet_autoencoder_forward.1} parent=11 // pred_check
        %p198 = pneg %p148
      $region26: #{jet_autoencoder_forward.1} parent=11 // pred_check_branch
        %200 = sbr.rel (%p198) target = $region28
      $region27: #{jet_autoencoder_forward.1} parent=11 // pred_region
        _
      $region28: #{jet_autoencoder_forward.1} parent=11 // pred_fallthru
        _
    $region12: #{jet_autoencoder_forward.1} parent=5 // pred_fallthru
      _
    %p201 = scmp.lt.s32.totalorder %s12, 2
    // Predicated region
    $region29: #{jet_autoencoder_forward.1} parent=5 // pred_check
      %p202 = pneg %p201
    $region30: #{jet_autoencoder_forward.1} parent=5 // pred_check_branch
      %204 = sbr.rel (%p202) target = $region32
    $region31: #{jet_autoencoder_forward.1} parent=5 // pred_region
      // Predicated region
      $region33: #{jet_autoencoder_forward.1} parent=31 // pred_check
        %p205 = pneg %p32
      $region34: #{jet_autoencoder_forward.1} parent=31 // pred_check_branch
        %207 = sbr.rel (%p205) target = $region36
      $region35: #{jet_autoencoder_forward.1} parent=31 // pred_region
        %s208 = smul.u32 8, %s12
        %p209 = scmp.lt.s32.totalorder %s208, 15
        %s210 = scalar_select %p209, %s208, 15
        %s211 = smul.addr %s210, 8
        %s212 = scalar_lea.vmem %s0, %s211
        %s213 = smul.u32 8, %s12
      $region36: #{jet_autoencoder_forward.1} parent=31 // pred_fallthru
        _
      // Predicated region
      $region37: #{jet_autoencoder_forward.1} parent=31 // pred_check
        %p214 = pneg %p58
      $region38: #{jet_autoencoder_forward.1} parent=31 // pred_check_branch
        %216 = sbr.rel (%p214) target = $region40
      $region39: #{jet_autoencoder_forward.1} parent=31 // pred_region
        %s217 = smul.u32 8, %s12
        %p218 = scmp.lt.s32.totalorder %s217, 15
        %s219 = scalar_select %p218, %s217, 15
        %s220 = smul.addr %s219, 8
        %s221 = scalar_lea.vmem %s1, %s220
        %s222 = smul.u32 8, %s12
      $region40: #{jet_autoencoder_forward.1} parent=31 // pred_fallthru
        _
    $region32: #{jet_autoencoder_forward.1} parent=5 // pred_fallthru
      _
    %p223 = scmp.le.s32.totalorder 1, %s12
    %p224 = scmp.lt.s32.totalorder %s12, 3
    %p225 = pnand %p223, %p224
    %p226 = pneg %p225
    // Predicated region
    $region41: #{jet_autoencoder_forward.1} parent=5 // pred_check
      _
    $region42: #{jet_autoencoder_forward.1} parent=5 // pred_check_branch
      %228 = sbr.rel (%p225) target = $region44
    $region43: #{jet_autoencoder_forward.1} parent=5 // pred_region
      %s229 = ssub.s32 %s12, 1
      %s230 = smul.u32 8, %s17
      %p231 = scmp.lt.s32.totalorder %s230, 15
      %s232 = scalar_select %p231, %s230, 15
      %s233 = smul.addr %s232, 8
      %s234 = scalar_lea.vmem %s0, %s233
      %p235 = pneg %p38
      %p236 = pneg %p35
      %s237 = smul.u32 8, %s17
      %p238 = scmp.lt.s32.totalorder %s237, 15
      %s239 = scalar_select %p238, %s237, 15
      %s240 = smul.addr %s239, 8
      %s241 = scalar_lea.vmem %s1, %s240
      %p242 = pneg %p64
      %p243 = pneg %p61
      %p244 = pneg %p85
      %p245 = pneg %p82
      %p246 = pneg %p106
      %p247 = pneg %p103
      %p248 = pneg %p127
      %p249 = pneg %p124
      %p250 = pneg %p148
      %p251 = pneg %p145
      %p252 = pneg %p174
      %p253 = pneg %p171
      %s254 = smul.u32 8, %s17
      %p255 = scmp.lt.s32.totalorder %s254, 15
      %s256 = scalar_select %p255, %s254, 15
      %s257 = smul.addr %s256, 8
      %s258 = scalar_lea.vmem %s6, %s257
      %s259 = smul.u32 8, %s17
      %p260 = scmp.lt.s32.totalorder %s259, 15
      %s261 = scalar_select %p260, %s259, 15
      %s262 = smul.addr %s261, 8
      %s263 = scalar_lea.vmem %s0, %s262
      %s264 = smul.u32 8, %s17
      %s265 = smul.u32 8, %s17
      %p266 = scmp.lt.s32.totalorder %s265, 15
      %s267 = scalar_select %p266, %s265, 15
      %s268 = smul.addr %s267, 8
      %s269 = scalar_lea.vmem %s1, %s268
      %s270 = smul.u32 8, %s17
      %s271 = smul.u32 8, %s17
      %p272 = scmp.lt.s32.totalorder %s271, 15
      %s273 = scalar_select %p272, %s271, 15
      %s274 = smul.addr %s273, 8
      %s275 = scalar_lea.vmem %s6, %s274
      %s276 = smul.u32 8, %s17
      %v277 = vld [vmem:[%s263] sm:$0xff]
      %v278 = vld [vmem:[%s263 + $0x8] sm:$0xff]
      %v279 = vld [vmem:[%s263 + $0x10] sm:$0xff]
      %v280 = vld [vmem:[%s263 + $0x18] sm:$0xff]
      %v281 = vld [vmem:[%s263 + $0x20] sm:$0xff]
      %v282 = vld [vmem:[%s263 + $0x28] sm:$0xff]
      %v283 = vld [vmem:[%s263 + $0x30] sm:$0xff]
      %v284 = vld [vmem:[%s263 + $0x38] sm:$0xff]
      %v285 = vld [vmem:[%s269] sm:$0xff]
      %v286 = vld [vmem:[%s269 + $0x8] sm:$0xff]
      %v287 = vld [vmem:[%s269 + $0x10] sm:$0xff]
      %v288 = vld [vmem:[%s269 + $0x18] sm:$0xff]
      %v289 = vld [vmem:[%s269 + $0x20] sm:$0xff]
      %v290 = vld [vmem:[%s269 + $0x28] sm:$0xff]
      %v291 = vld [vmem:[%s269 + $0x30] sm:$0xff]
      %v292 = vld [vmem:[%s269 + $0x38] sm:$0xff]
      %v293 = vperm.slane %v285, 0
      %v294 = vlaneseq
      %v295 = vshrl.u32 %v294, 7
      %297 = vset.pattern.permute.xlu0 %v295
      %298 = vperm.xlu0 %297, %v293
      %v299 = vpop.permute.xlu0 %298
      %v300 = vlaneseq
      %v301 = vshrl.u32 %v300, 7
      %v302 = vadd.s32 %v301, 8
      %303 = vset.pattern.permute.xlu0 %v302
      %304 = vperm.xlu0 %303, %v293
      %v305 = vpop.permute.xlu0 %304
      %v306 = vperm.slane %v285, 1
      %v307 = vlaneseq
      %v308 = vshrl.u32 %v307, 7
      %310 = vset.pattern.permute.xlu0 %v308
      %311 = vperm.xlu0 %310, %v306
      %v312 = vpop.permute.xlu0 %311
      %v313 = vlaneseq
      %v314 = vshrl.u32 %v313, 7
      %v315 = vadd.s32 %v314, 8
      %316 = vset.pattern.permute.xlu0 %v315
      %317 = vperm.xlu0 %316, %v306
      %v318 = vpop.permute.xlu0 %317
      %v319 = vperm.slane %v285, 2
      %v320 = vlaneseq
      %v321 = vshrl.u32 %v320, 7
      %323 = vset.pattern.permute.xlu0 %v321
      %324 = vperm.xlu0 %323, %v319
      %v325 = vpop.permute.xlu0 %324
      %v326 = vlaneseq
      %v327 = vshrl.u32 %v326, 7
      %v328 = vadd.s32 %v327, 8
      %329 = vset.pattern.permute.xlu0 %v328
      %330 = vperm.xlu0 %329, %v319
      %v331 = vpop.permute.xlu0 %330
      %v332 = vperm.slane %v285, 3
      %v333 = vlaneseq
      %v334 = vshrl.u32 %v333, 7
      %336 = vset.pattern.permute.xlu0 %v334
      %337 = vperm.xlu0 %336, %v332
      %v338 = vpop.permute.xlu0 %337
      %v339 = vlaneseq
      %v340 = vshrl.u32 %v339, 7
      %v341 = vadd.s32 %v340, 8
      %342 = vset.pattern.permute.xlu0 %v341
      %343 = vperm.xlu0 %342, %v332
      %v344 = vpop.permute.xlu0 %343
      %v345 = vperm.slane %v285, 4
      %v346 = vlaneseq
      %v347 = vshrl.u32 %v346, 7
      %349 = vset.pattern.permute.xlu0 %v347
      %350 = vperm.xlu0 %349, %v345
      %v351 = vpop.permute.xlu0 %350
      %v352 = vlaneseq
      %v353 = vshrl.u32 %v352, 7
      %v354 = vadd.s32 %v353, 8
      %355 = vset.pattern.permute.xlu0 %v354
      %356 = vperm.xlu0 %355, %v345
      %v357 = vpop.permute.xlu0 %356
      %v358 = vperm.slane %v285, 5
      %v359 = vlaneseq
      %v360 = vshrl.u32 %v359, 7
      %362 = vset.pattern.permute.xlu0 %v360
      %363 = vperm.xlu0 %362, %v358
      %v364 = vpop.permute.xlu0 %363
      %v365 = vlaneseq
      %v366 = vshrl.u32 %v365, 7
      %v367 = vadd.s32 %v366, 8
      %368 = vset.pattern.permute.xlu0 %v367
      %369 = vperm.xlu0 %368, %v358
      %v370 = vpop.permute.xlu0 %369
      %v371 = vperm.slane %v285, 6
      %v372 = vlaneseq
      %v373 = vshrl.u32 %v372, 7
      %375 = vset.pattern.permute.xlu0 %v373
      %376 = vperm.xlu0 %375, %v371
      %v377 = vpop.permute.xlu0 %376
      %v378 = vlaneseq
      %v379 = vshrl.u32 %v378, 7
      %v380 = vadd.s32 %v379, 8
      %381 = vset.pattern.permute.xlu0 %v380
      %382 = vperm.xlu0 %381, %v371
      %v383 = vpop.permute.xlu0 %382
      %v384 = vperm.slane %v285, 7
      %v385 = vlaneseq
      %v386 = vshrl.u32 %v385, 7
      %388 = vset.pattern.permute.xlu0 %v386
      %389 = vperm.xlu0 %388, %v384
      %v390 = vpop.permute.xlu0 %389
      %v391 = vlaneseq
      %v392 = vshrl.u32 %v391, 7
      %v393 = vadd.s32 %v392, 8
      %394 = vset.pattern.permute.xlu0 %v393
      %395 = vperm.xlu0 %394, %v384
      %v396 = vpop.permute.xlu0 %395
      %v397 = vperm.slane %v286, 0
      %v398 = vlaneseq
      %v399 = vshrl.u32 %v398, 7
      %401 = vset.pattern.permute.xlu0 %v399
      %402 = vperm.xlu0 %401, %v397
      %v403 = vpop.permute.xlu0 %402
      %v404 = vlaneseq
      %v405 = vshrl.u32 %v404, 7
      %v406 = vadd.s32 %v405, 8
      %407 = vset.pattern.permute.xlu0 %v406
      %408 = vperm.xlu0 %407, %v397
      %v409 = vpop.permute.xlu0 %408
      %v410 = vperm.slane %v286, 1
      %v411 = vlaneseq
      %v412 = vshrl.u32 %v411, 7
      %414 = vset.pattern.permute.xlu0 %v412
      %415 = vperm.xlu0 %414, %v410
      %v416 = vpop.permute.xlu0 %415
      %v417 = vlaneseq
      %v418 = vshrl.u32 %v417, 7
      %v419 = vadd.s32 %v418, 8
      %420 = vset.pattern.permute.xlu0 %v419
      %421 = vperm.xlu0 %420, %v410
      %v422 = vpop.permute.xlu0 %421
      %v423 = vperm.slane %v286, 2
      %v424 = vlaneseq
      %v425 = vshrl.u32 %v424, 7
      %427 = vset.pattern.permute.xlu0 %v425
      %428 = vperm.xlu0 %427, %v423
      %v429 = vpop.permute.xlu0 %428
      %v430 = vlaneseq
      %v431 = vshrl.u32 %v430, 7
      %v432 = vadd.s32 %v431, 8
      %433 = vset.pattern.permute.xlu0 %v432
      %434 = vperm.xlu0 %433, %v423
      %v435 = vpop.permute.xlu0 %434
      %v436 = vperm.slane %v286, 3
      %v437 = vlaneseq
      %v438 = vshrl.u32 %v437, 7
      %440 = vset.pattern.permute.xlu0 %v438
      %441 = vperm.xlu0 %440, %v436
      %v442 = vpop.permute.xlu0 %441
      %v443 = vlaneseq
      %v444 = vshrl.u32 %v443, 7
      %v445 = vadd.s32 %v444, 8
      %446 = vset.pattern.permute.xlu0 %v445
      %447 = vperm.xlu0 %446, %v436
      %v448 = vpop.permute.xlu0 %447
      %v449 = vperm.slane %v286, 4
      %v450 = vlaneseq
      %v451 = vshrl.u32 %v450, 7
      %453 = vset.pattern.permute.xlu0 %v451
      %454 = vperm.xlu0 %453, %v449
      %v455 = vpop.permute.xlu0 %454
      %v456 = vlaneseq
      %v457 = vshrl.u32 %v456, 7
      %v458 = vadd.s32 %v457, 8
      %459 = vset.pattern.permute.xlu0 %v458
      %460 = vperm.xlu0 %459, %v449
      %v461 = vpop.permute.xlu0 %460
      %v462 = vperm.slane %v286, 5
      %v463 = vlaneseq
      %v464 = vshrl.u32 %v463, 7
      %466 = vset.pattern.permute.xlu0 %v464
      %467 = vperm.xlu0 %466, %v462
      %v468 = vpop.permute.xlu0 %467
      %v469 = vlaneseq
      %v470 = vshrl.u32 %v469, 7
      %v471 = vadd.s32 %v470, 8
      %472 = vset.pattern.permute.xlu0 %v471
      %473 = vperm.xlu0 %472, %v462
      %v474 = vpop.permute.xlu0 %473
      %v475 = vperm.slane %v286, 6
      %v476 = vlaneseq
      %v477 = vshrl.u32 %v476, 7
      %479 = vset.pattern.permute.xlu0 %v477
      %480 = vperm.xlu0 %479, %v475
      %v481 = vpop.permute.xlu0 %480
      %v482 = vlaneseq
      %v483 = vshrl.u32 %v482, 7
      %v484 = vadd.s32 %v483, 8
      %485 = vset.pattern.permute.xlu0 %v484
      %486 = vperm.xlu0 %485, %v475
      %v487 = vpop.permute.xlu0 %486
      %v488 = vperm.slane %v286, 7
      %v489 = vlaneseq
      %v490 = vshrl.u32 %v489, 7
      %492 = vset.pattern.permute.xlu0 %v490
      %493 = vperm.xlu0 %492, %v488
      %v494 = vpop.permute.xlu0 %493
      %v495 = vlaneseq
      %v496 = vshrl.u32 %v495, 7
      %v497 = vadd.s32 %v496, 8
      %498 = vset.pattern.permute.xlu0 %v497
      %499 = vperm.xlu0 %498, %v488
      %v500 = vpop.permute.xlu0 %499
      %v501 = vperm.slane %v287, 0
      %v502 = vlaneseq
      %v503 = vshrl.u32 %v502, 7
      %505 = vset.pattern.permute.xlu0 %v503
      %506 = vperm.xlu0 %505, %v501
      %v507 = vpop.permute.xlu0 %506
      %v508 = vlaneseq
      %v509 = vshrl.u32 %v508, 7
      %v510 = vadd.s32 %v509, 8
      %511 = vset.pattern.permute.xlu0 %v510
      %512 = vperm.xlu0 %511, %v501
      %v513 = vpop.permute.xlu0 %512
      %v514 = vperm.slane %v287, 1
      %v515 = vlaneseq
      %v516 = vshrl.u32 %v515, 7
      %518 = vset.pattern.permute.xlu0 %v516
      %519 = vperm.xlu0 %518, %v514
      %v520 = vpop.permute.xlu0 %519
      %v521 = vlaneseq
      %v522 = vshrl.u32 %v521, 7
      %v523 = vadd.s32 %v522, 8
      %524 = vset.pattern.permute.xlu0 %v523
      %525 = vperm.xlu0 %524, %v514
      %v526 = vpop.permute.xlu0 %525
      %v527 = vperm.slane %v287, 2
      %v528 = vlaneseq
      %v529 = vshrl.u32 %v528, 7
      %531 = vset.pattern.permute.xlu0 %v529
      %532 = vperm.xlu0 %531, %v527
      %v533 = vpop.permute.xlu0 %532
      %v534 = vlaneseq
      %v535 = vshrl.u32 %v534, 7
      %v536 = vadd.s32 %v535, 8
      %537 = vset.pattern.permute.xlu0 %v536
      %538 = vperm.xlu0 %537, %v527
      %v539 = vpop.permute.xlu0 %538
      %v540 = vperm.slane %v287, 3
      %v541 = vlaneseq
      %v542 = vshrl.u32 %v541, 7
      %544 = vset.pattern.permute.xlu0 %v542
      %545 = vperm.xlu0 %544, %v540
      %v546 = vpop.permute.xlu0 %545
      %v547 = vlaneseq
      %v548 = vshrl.u32 %v547, 7
      %v549 = vadd.s32 %v548, 8
      %550 = vset.pattern.permute.xlu0 %v549
      %551 = vperm.xlu0 %550, %v540
      %v552 = vpop.permute.xlu0 %551
      %v553 = vperm.slane %v287, 4
      %v554 = vlaneseq
      %v555 = vshrl.u32 %v554, 7
      %557 = vset.pattern.permute.xlu0 %v555
      %558 = vperm.xlu0 %557, %v553
      %v559 = vpop.permute.xlu0 %558
      %v560 = vlaneseq
      %v561 = vshrl.u32 %v560, 7
      %v562 = vadd.s32 %v561, 8
      %563 = vset.pattern.permute.xlu0 %v562
      %564 = vperm.xlu0 %563, %v553
      %v565 = vpop.permute.xlu0 %564
      %v566 = vperm.slane %v287, 5
      %v567 = vlaneseq
      %v568 = vshrl.u32 %v567, 7
      %570 = vset.pattern.permute.xlu0 %v568
      %571 = vperm.xlu0 %570, %v566
      %v572 = vpop.permute.xlu0 %571
      %v573 = vlaneseq
      %v574 = vshrl.u32 %v573, 7
      %v575 = vadd.s32 %v574, 8
      %576 = vset.pattern.permute.xlu0 %v575
      %577 = vperm.xlu0 %576, %v566
      %v578 = vpop.permute.xlu0 %577
      %v579 = vperm.slane %v287, 6
      %v580 = vlaneseq
      %v581 = vshrl.u32 %v580, 7
      %583 = vset.pattern.permute.xlu0 %v581
      %584 = vperm.xlu0 %583, %v579
      %v585 = vpop.permute.xlu0 %584
      %v586 = vlaneseq
      %v587 = vshrl.u32 %v586, 7
      %v588 = vadd.s32 %v587, 8
      %589 = vset.pattern.permute.xlu0 %v588
      %590 = vperm.xlu0 %589, %v579
      %v591 = vpop.permute.xlu0 %590
      %v592 = vperm.slane %v287, 7
      %v593 = vlaneseq
      %v594 = vshrl.u32 %v593, 7
      %596 = vset.pattern.permute.xlu0 %v594
      %597 = vperm.xlu0 %596, %v592
      %v598 = vpop.permute.xlu0 %597
      %v599 = vlaneseq
      %v600 = vshrl.u32 %v599, 7
      %v601 = vadd.s32 %v600, 8
      %602 = vset.pattern.permute.xlu0 %v601
      %603 = vperm.xlu0 %602, %v592
      %v604 = vpop.permute.xlu0 %603
      %v605 = vperm.slane %v288, 0
      %v606 = vlaneseq
      %v607 = vshrl.u32 %v606, 7
      %609 = vset.pattern.permute.xlu0 %v607
      %610 = vperm.xlu0 %609, %v605
      %v611 = vpop.permute.xlu0 %610
      %v612 = vlaneseq
      %v613 = vshrl.u32 %v612, 7
      %v614 = vadd.s32 %v613, 8
      %615 = vset.pattern.permute.xlu0 %v614
      %616 = vperm.xlu0 %615, %v605
      %v617 = vpop.permute.xlu0 %616
      %v618 = vperm.slane %v288, 1
      %v619 = vlaneseq
      %v620 = vshrl.u32 %v619, 7
      %622 = vset.pattern.permute.xlu0 %v620
      %623 = vperm.xlu0 %622, %v618
      %v624 = vpop.permute.xlu0 %623
      %v625 = vlaneseq
      %v626 = vshrl.u32 %v625, 7
      %v627 = vadd.s32 %v626, 8
      %628 = vset.pattern.permute.xlu0 %v627
      %629 = vperm.xlu0 %628, %v618
      %v630 = vpop.permute.xlu0 %629
      %v631 = vperm.slane %v288, 2
      %v632 = vlaneseq
      %v633 = vshrl.u32 %v632, 7
      %635 = vset.pattern.permute.xlu0 %v633
      %636 = vperm.xlu0 %635, %v631
      %v637 = vpop.permute.xlu0 %636
      %v638 = vlaneseq
      %v639 = vshrl.u32 %v638, 7
      %v640 = vadd.s32 %v639, 8
      %641 = vset.pattern.permute.xlu0 %v640
      %642 = vperm.xlu0 %641, %v631
      %v643 = vpop.permute.xlu0 %642
      %v644 = vperm.slane %v288, 3
      %v645 = vlaneseq
      %v646 = vshrl.u32 %v645, 7
      %648 = vset.pattern.permute.xlu0 %v646
      %649 = vperm.xlu0 %648, %v644
      %v650 = vpop.permute.xlu0 %649
      %v651 = vlaneseq
      %v652 = vshrl.u32 %v651, 7
      %v653 = vadd.s32 %v652, 8
      %654 = vset.pattern.permute.xlu0 %v653
      %655 = vperm.xlu0 %654, %v644
      %v656 = vpop.permute.xlu0 %655
      %v657 = vperm.slane %v288, 4
      %v658 = vlaneseq
      %v659 = vshrl.u32 %v658, 7
      %661 = vset.pattern.permute.xlu0 %v659
      %662 = vperm.xlu0 %661, %v657
      %v663 = vpop.permute.xlu0 %662
      %v664 = vlaneseq
      %v665 = vshrl.u32 %v664, 7
      %v666 = vadd.s32 %v665, 8
      %667 = vset.pattern.permute.xlu0 %v666
      %668 = vperm.xlu0 %667, %v657
      %v669 = vpop.permute.xlu0 %668
      %v670 = vperm.slane %v288, 5
      %v671 = vlaneseq
      %v672 = vshrl.u32 %v671, 7
      %674 = vset.pattern.permute.xlu0 %v672
      %675 = vperm.xlu0 %674, %v670
      %v676 = vpop.permute.xlu0 %675
      %v677 = vlaneseq
      %v678 = vshrl.u32 %v677, 7
      %v679 = vadd.s32 %v678, 8
      %680 = vset.pattern.permute.xlu0 %v679
      %681 = vperm.xlu0 %680, %v670
      %v682 = vpop.permute.xlu0 %681
      %v683 = vperm.slane %v288, 6
      %v684 = vlaneseq
      %v685 = vshrl.u32 %v684, 7
      %687 = vset.pattern.permute.xlu0 %v685
      %688 = vperm.xlu0 %687, %v683
      %v689 = vpop.permute.xlu0 %688
      %v690 = vlaneseq
      %v691 = vshrl.u32 %v690, 7
      %v692 = vadd.s32 %v691, 8
      %693 = vset.pattern.permute.xlu0 %v692
      %694 = vperm.xlu0 %693, %v683
      %v695 = vpop.permute.xlu0 %694
      %v696 = vperm.slane %v288, 7
      %v697 = vlaneseq
      %v698 = vshrl.u32 %v697, 7
      %700 = vset.pattern.permute.xlu0 %v698
      %701 = vperm.xlu0 %700, %v696
      %v702 = vpop.permute.xlu0 %701
      %v703 = vlaneseq
      %v704 = vshrl.u32 %v703, 7
      %v705 = vadd.s32 %v704, 8
      %706 = vset.pattern.permute.xlu0 %v705
      %707 = vperm.xlu0 %706, %v696
      %v708 = vpop.permute.xlu0 %707
      %v709 = vperm.slane %v289, 0
      %v710 = vlaneseq
      %v711 = vshrl.u32 %v710, 7
      %713 = vset.pattern.permute.xlu0 %v711
      %714 = vperm.xlu0 %713, %v709
      %v715 = vpop.permute.xlu0 %714
      %v716 = vlaneseq
      %v717 = vshrl.u32 %v716, 7
      %v718 = vadd.s32 %v717, 8
      %719 = vset.pattern.permute.xlu0 %v718
      %720 = vperm.xlu0 %719, %v709
      %v721 = vpop.permute.xlu0 %720
      %v722 = vperm.slane %v289, 1
      %v723 = vlaneseq
      %v724 = vshrl.u32 %v723, 7
      %726 = vset.pattern.permute.xlu0 %v724
      %727 = vperm.xlu0 %726, %v722
      %v728 = vpop.permute.xlu0 %727
      %v729 = vlaneseq
      %v730 = vshrl.u32 %v729, 7
      %v731 = vadd.s32 %v730, 8
      %732 = vset.pattern.permute.xlu0 %v731
      %733 = vperm.xlu0 %732, %v722
      %v734 = vpop.permute.xlu0 %733
      %v735 = vperm.slane %v289, 2
      %v736 = vlaneseq
      %v737 = vshrl.u32 %v736, 7
      %739 = vset.pattern.permute.xlu0 %v737
      %740 = vperm.xlu0 %739, %v735
      %v741 = vpop.permute.xlu0 %740
      %v742 = vlaneseq
      %v743 = vshrl.u32 %v742, 7
      %v744 = vadd.s32 %v743, 8
      %745 = vset.pattern.permute.xlu0 %v744
      %746 = vperm.xlu0 %745, %v735
      %v747 = vpop.permute.xlu0 %746
      %v748 = vperm.slane %v289, 3
      %v749 = vlaneseq
      %v750 = vshrl.u32 %v749, 7
      %752 = vset.pattern.permute.xlu0 %v750
      %753 = vperm.xlu0 %752, %v748
      %v754 = vpop.permute.xlu0 %753
      %v755 = vlaneseq
      %v756 = vshrl.u32 %v755, 7
      %v757 = vadd.s32 %v756, 8
      %758 = vset.pattern.permute.xlu0 %v757
      %759 = vperm.xlu0 %758, %v748
      %v760 = vpop.permute.xlu0 %759
      %v761 = vperm.slane %v289, 4
      %v762 = vlaneseq
      %v763 = vshrl.u32 %v762, 7
      %765 = vset.pattern.permute.xlu0 %v763
      %766 = vperm.xlu0 %765, %v761
      %v767 = vpop.permute.xlu0 %766
      %v768 = vlaneseq
      %v769 = vshrl.u32 %v768, 7
      %v770 = vadd.s32 %v769, 8
      %771 = vset.pattern.permute.xlu0 %v770
      %772 = vperm.xlu0 %771, %v761
      %v773 = vpop.permute.xlu0 %772
      %v774 = vperm.slane %v289, 5
      %v775 = vlaneseq
      %v776 = vshrl.u32 %v775, 7
      %778 = vset.pattern.permute.xlu0 %v776
      %779 = vperm.xlu0 %778, %v774
      %v780 = vpop.permute.xlu0 %779
      %v781 = vlaneseq
      %v782 = vshrl.u32 %v781, 7
      %v783 = vadd.s32 %v782, 8
      %784 = vset.pattern.permute.xlu0 %v783
      %785 = vperm.xlu0 %784, %v774
      %v786 = vpop.permute.xlu0 %785
      %v787 = vperm.slane %v289, 6
      %v788 = vlaneseq
      %v789 = vshrl.u32 %v788, 7
      %791 = vset.pattern.permute.xlu0 %v789
      %792 = vperm.xlu0 %791, %v787
      %v793 = vpop.permute.xlu0 %792
      %v794 = vlaneseq
      %v795 = vshrl.u32 %v794, 7
      %v796 = vadd.s32 %v795, 8
      %797 = vset.pattern.permute.xlu0 %v796
      %798 = vperm.xlu0 %797, %v787
      %v799 = vpop.permute.xlu0 %798
      %v800 = vperm.slane %v289, 7
      %v801 = vlaneseq
      %v802 = vshrl.u32 %v801, 7
      %804 = vset.pattern.permute.xlu0 %v802
      %805 = vperm.xlu0 %804, %v800
      %v806 = vpop.permute.xlu0 %805
      %v807 = vlaneseq
      %v808 = vshrl.u32 %v807, 7
      %v809 = vadd.s32 %v808, 8
      %810 = vset.pattern.permute.xlu0 %v809
      %811 = vperm.xlu0 %810, %v800
      %v812 = vpop.permute.xlu0 %811
      %v813 = vperm.slane %v290, 0
      %v814 = vlaneseq
      %v815 = vshrl.u32 %v814, 7
      %817 = vset.pattern.permute.xlu0 %v815
      %818 = vperm.xlu0 %817, %v813
      %v819 = vpop.permute.xlu0 %818
      %v820 = vlaneseq
      %v821 = vshrl.u32 %v820, 7
      %v822 = vadd.s32 %v821, 8
      %823 = vset.pattern.permute.xlu0 %v822
      %824 = vperm.xlu0 %823, %v813
      %v825 = vpop.permute.xlu0 %824
      %v826 = vperm.slane %v290, 1
      %v827 = vlaneseq
      %v828 = vshrl.u32 %v827, 7
      %830 = vset.pattern.permute.xlu0 %v828
      %831 = vperm.xlu0 %830, %v826
      %v832 = vpop.permute.xlu0 %831
      %v833 = vlaneseq
      %v834 = vshrl.u32 %v833, 7
      %v835 = vadd.s32 %v834, 8
      %836 = vset.pattern.permute.xlu0 %v835
      %837 = vperm.xlu0 %836, %v826
      %v838 = vpop.permute.xlu0 %837
      %v839 = vperm.slane %v290, 2
      %v840 = vlaneseq
      %v841 = vshrl.u32 %v840, 7
      %843 = vset.pattern.permute.xlu0 %v841
      %844 = vperm.xlu0 %843, %v839
      %v845 = vpop.permute.xlu0 %844
      %v846 = vlaneseq
      %v847 = vshrl.u32 %v846, 7
      %v848 = vadd.s32 %v847, 8
      %849 = vset.pattern.permute.xlu0 %v848
      %850 = vperm.xlu0 %849, %v839
      %v851 = vpop.permute.xlu0 %850
      %v852 = vperm.slane %v290, 3
      %v853 = vlaneseq
      %v854 = vshrl.u32 %v853, 7
      %856 = vset.pattern.permute.xlu0 %v854
      %857 = vperm.xlu0 %856, %v852
      %v858 = vpop.permute.xlu0 %857
      %v859 = vlaneseq
      %v860 = vshrl.u32 %v859, 7
      %v861 = vadd.s32 %v860, 8
      %862 = vset.pattern.permute.xlu0 %v861
      %863 = vperm.xlu0 %862, %v852
      %v864 = vpop.permute.xlu0 %863
      %v865 = vperm.slane %v290, 4
      %v866 = vlaneseq
      %v867 = vshrl.u32 %v866, 7
      %869 = vset.pattern.permute.xlu0 %v867
      %870 = vperm.xlu0 %869, %v865
      %v871 = vpop.permute.xlu0 %870
      %v872 = vlaneseq
      %v873 = vshrl.u32 %v872, 7
      %v874 = vadd.s32 %v873, 8
      %875 = vset.pattern.permute.xlu0 %v874
      %876 = vperm.xlu0 %875, %v865
      %v877 = vpop.permute.xlu0 %876
      %v878 = vperm.slane %v290, 5
      %v879 = vlaneseq
      %v880 = vshrl.u32 %v879, 7
      %882 = vset.pattern.permute.xlu0 %v880
      %883 = vperm.xlu0 %882, %v878
      %v884 = vpop.permute.xlu0 %883
      %v885 = vlaneseq
      %v886 = vshrl.u32 %v885, 7
      %v887 = vadd.s32 %v886, 8
      %888 = vset.pattern.permute.xlu0 %v887
      %889 = vperm.xlu0 %888, %v878
      %v890 = vpop.permute.xlu0 %889
      %v891 = vperm.slane %v290, 6
      %v892 = vlaneseq
      %v893 = vshrl.u32 %v892, 7
      %895 = vset.pattern.permute.xlu0 %v893
      %896 = vperm.xlu0 %895, %v891
      %v897 = vpop.permute.xlu0 %896
      %v898 = vlaneseq
      %v899 = vshrl.u32 %v898, 7
      %v900 = vadd.s32 %v899, 8
      %901 = vset.pattern.permute.xlu0 %v900
      %902 = vperm.xlu0 %901, %v891
      %v903 = vpop.permute.xlu0 %902
      %v904 = vperm.slane %v290, 7
      %v905 = vlaneseq
      %v906 = vshrl.u32 %v905, 7
      %908 = vset.pattern.permute.xlu0 %v906
      %909 = vperm.xlu0 %908, %v904
      %v910 = vpop.permute.xlu0 %909
      %v911 = vlaneseq
      %v912 = vshrl.u32 %v911, 7
      %v913 = vadd.s32 %v912, 8
      %914 = vset.pattern.permute.xlu0 %v913
      %915 = vperm.xlu0 %914, %v904
      %v916 = vpop.permute.xlu0 %915
      %v917 = vperm.slane %v291, 0
      %v918 = vlaneseq
      %v919 = vshrl.u32 %v918, 7
      %921 = vset.pattern.permute.xlu0 %v919
      %922 = vperm.xlu0 %921, %v917
      %v923 = vpop.permute.xlu0 %922
      %v924 = vlaneseq
      %v925 = vshrl.u32 %v924, 7
      %v926 = vadd.s32 %v925, 8
      %927 = vset.pattern.permute.xlu0 %v926
      %928 = vperm.xlu0 %927, %v917
      %v929 = vpop.permute.xlu0 %928
      %v930 = vperm.slane %v291, 1
      %v931 = vlaneseq
      %v932 = vshrl.u32 %v931, 7
      %934 = vset.pattern.permute.xlu0 %v932
      %935 = vperm.xlu0 %934, %v930
      %v936 = vpop.permute.xlu0 %935
      %v937 = vlaneseq
      %v938 = vshrl.u32 %v937, 7
      %v939 = vadd.s32 %v938, 8
      %940 = vset.pattern.permute.xlu0 %v939
      %941 = vperm.xlu0 %940, %v930
      %v942 = vpop.permute.xlu0 %941
      %v943 = vperm.slane %v291, 2
      %v944 = vlaneseq
      %v945 = vshrl.u32 %v944, 7
      %947 = vset.pattern.permute.xlu0 %v945
      %948 = vperm.xlu0 %947, %v943
      %v949 = vpop.permute.xlu0 %948
      %v950 = vlaneseq
      %v951 = vshrl.u32 %v950, 7
      %v952 = vadd.s32 %v951, 8
      %953 = vset.pattern.permute.xlu0 %v952
      %954 = vperm.xlu0 %953, %v943
      %v955 = vpop.permute.xlu0 %954
      %v956 = vperm.slane %v291, 3
      %v957 = vlaneseq
      %v958 = vshrl.u32 %v957, 7
      %960 = vset.pattern.permute.xlu0 %v958
      %961 = vperm.xlu0 %960, %v956
      %v962 = vpop.permute.xlu0 %961
      %v963 = vlaneseq
      %v964 = vshrl.u32 %v963, 7
      %v965 = vadd.s32 %v964, 8
      %966 = vset.pattern.permute.xlu0 %v965
      %967 = vperm.xlu0 %966, %v956
      %v968 = vpop.permute.xlu0 %967
      %v969 = vperm.slane %v291, 4
      %v970 = vlaneseq
      %v971 = vshrl.u32 %v970, 7
      %973 = vset.pattern.permute.xlu0 %v971
      %974 = vperm.xlu0 %973, %v969
      %v975 = vpop.permute.xlu0 %974
      %v976 = vlaneseq
      %v977 = vshrl.u32 %v976, 7
      %v978 = vadd.s32 %v977, 8
      %979 = vset.pattern.permute.xlu0 %v978
      %980 = vperm.xlu0 %979, %v969
      %v981 = vpop.permute.xlu0 %980
      %v982 = vperm.slane %v291, 5
      %v983 = vlaneseq
      %v984 = vshrl.u32 %v983, 7
      %986 = vset.pattern.permute.xlu0 %v984
      %987 = vperm.xlu0 %986, %v982
      %v988 = vpop.permute.xlu0 %987
      %v989 = vlaneseq
      %v990 = vshrl.u32 %v989, 7
      %v991 = vadd.s32 %v990, 8
      %992 = vset.pattern.permute.xlu0 %v991
      %993 = vperm.xlu0 %992, %v982
      %v994 = vpop.permute.xlu0 %993
      %v995 = vperm.slane %v291, 6
      %v996 = vlaneseq
      %v997 = vshrl.u32 %v996, 7
      %999 = vset.pattern.permute.xlu0 %v997
      %1000 = vperm.xlu0 %999, %v995
      %v1001 = vpop.permute.xlu0 %1000
      %v1002 = vlaneseq
      %v1003 = vshrl.u32 %v1002, 7
      %v1004 = vadd.s32 %v1003, 8
      %1005 = vset.pattern.permute.xlu0 %v1004
      %1006 = vperm.xlu0 %1005, %v995
      %v1007 = vpop.permute.xlu0 %1006
      %v1008 = vperm.slane %v291, 7
      %v1009 = vlaneseq
      %v1010 = vshrl.u32 %v1009, 7
      %1012 = vset.pattern.permute.xlu0 %v1010
      %1013 = vperm.xlu0 %1012, %v1008
      %v1014 = vpop.permute.xlu0 %1013
      %v1015 = vlaneseq
      %v1016 = vshrl.u32 %v1015, 7
      %v1017 = vadd.s32 %v1016, 8
      %1018 = vset.pattern.permute.xlu0 %v1017
      %1019 = vperm.xlu0 %1018, %v1008
      %v1020 = vpop.permute.xlu0 %1019
      %v1021 = vperm.slane %v292, 0
      %v1022 = vlaneseq
      %v1023 = vshrl.u32 %v1022, 7
      %1025 = vset.pattern.permute.xlu0 %v1023
      %1026 = vperm.xlu0 %1025, %v1021
      %v1027 = vpop.permute.xlu0 %1026
      %v1028 = vlaneseq
      %v1029 = vshrl.u32 %v1028, 7
      %v1030 = vadd.s32 %v1029, 8
      %1031 = vset.pattern.permute.xlu0 %v1030
      %1032 = vperm.xlu0 %1031, %v1021
      %v1033 = vpop.permute.xlu0 %1032
      %v1034 = vperm.slane %v292, 1
      %v1035 = vlaneseq
      %v1036 = vshrl.u32 %v1035, 7
      %1038 = vset.pattern.permute.xlu0 %v1036
      %1039 = vperm.xlu0 %1038, %v1034
      %v1040 = vpop.permute.xlu0 %1039
      %v1041 = vlaneseq
      %v1042 = vshrl.u32 %v1041, 7
      %v1043 = vadd.s32 %v1042, 8
      %1044 = vset.pattern.permute.xlu0 %v1043
      %1045 = vperm.xlu0 %1044, %v1034
      %v1046 = vpop.permute.xlu0 %1045
      %v1047 = vperm.slane %v292, 2
      %v1048 = vlaneseq
      %v1049 = vshrl.u32 %v1048, 7
      %1051 = vset.pattern.permute.xlu0 %v1049
      %1052 = vperm.xlu0 %1051, %v1047
      %v1053 = vpop.permute.xlu0 %1052
      %v1054 = vlaneseq
      %v1055 = vshrl.u32 %v1054, 7
      %v1056 = vadd.s32 %v1055, 8
      %1057 = vset.pattern.permute.xlu0 %v1056
      %1058 = vperm.xlu0 %1057, %v1047
      %v1059 = vpop.permute.xlu0 %1058
      %v1060 = vperm.slane %v292, 3
      %v1061 = vlaneseq
      %v1062 = vshrl.u32 %v1061, 7
      %1064 = vset.pattern.permute.xlu0 %v1062
      %1065 = vperm.xlu0 %1064, %v1060
      %v1066 = vpop.permute.xlu0 %1065
      %v1067 = vlaneseq
      %v1068 = vshrl.u32 %v1067, 7
      %v1069 = vadd.s32 %v1068, 8
      %1070 = vset.pattern.permute.xlu0 %v1069
      %1071 = vperm.xlu0 %1070, %v1060
      %v1072 = vpop.permute.xlu0 %1071
      %v1073 = vperm.slane %v292, 4
      %v1074 = vlaneseq
      %v1075 = vshrl.u32 %v1074, 7
      %1077 = vset.pattern.permute.xlu0 %v1075
      %1078 = vperm.xlu0 %1077, %v1073
      %v1079 = vpop.permute.xlu0 %1078
      %v1080 = vlaneseq
      %v1081 = vshrl.u32 %v1080, 7
      %v1082 = vadd.s32 %v1081, 8
      %1083 = vset.pattern.permute.xlu0 %v1082
      %1084 = vperm.xlu0 %1083, %v1073
      %v1085 = vpop.permute.xlu0 %1084
      %v1086 = vperm.slane %v292, 5
      %v1087 = vlaneseq
      %v1088 = vshrl.u32 %v1087, 7
      %1090 = vset.pattern.permute.xlu0 %v1088
      %1091 = vperm.xlu0 %1090, %v1086
      %v1092 = vpop.permute.xlu0 %1091
      %v1093 = vlaneseq
      %v1094 = vshrl.u32 %v1093, 7
      %v1095 = vadd.s32 %v1094, 8
      %1096 = vset.pattern.permute.xlu0 %v1095
      %1097 = vperm.xlu0 %1096, %v1086
      %v1098 = vpop.permute.xlu0 %1097
      %v1099 = vperm.slane %v292, 6
      %v1100 = vlaneseq
      %v1101 = vshrl.u32 %v1100, 7
      %1103 = vset.pattern.permute.xlu0 %v1101
      %1104 = vperm.xlu0 %1103, %v1099
      %v1105 = vpop.permute.xlu0 %1104
      %v1106 = vlaneseq
      %v1107 = vshrl.u32 %v1106, 7
      %v1108 = vadd.s32 %v1107, 8
      %1109 = vset.pattern.permute.xlu0 %v1108
      %1110 = vperm.xlu0 %1109, %v1099
      %v1111 = vpop.permute.xlu0 %1110
      %v1112 = vperm.slane %v292, 7
      %v1113 = vlaneseq
      %v1114 = vshrl.u32 %v1113, 7
      %1116 = vset.pattern.permute.xlu0 %v1114
      %1117 = vperm.xlu0 %1116, %v1112
      %v1118 = vpop.permute.xlu0 %1117
      %v1119 = vlaneseq
      %v1120 = vshrl.u32 %v1119, 7
      %v1121 = vadd.s32 %v1120, 8
      %1122 = vset.pattern.permute.xlu0 %v1121
      %1123 = vperm.xlu0 %1122, %v1112
      %v1124 = vpop.permute.xlu0 %1123
      %v1125 = vld [vmem:[%s2] sm:$0xff]
      %v1126 = vld [vmem:[%s2 + $0x8] sm:$0xff]
      %v1127 = vld [vmem:[%s2 + $0x10] sm:$0xff]
      %v1128 = vld [vmem:[%s2 + $0x18] sm:$0xff]
      %v1129 = vld [vmem:[%s2 + $0x20] sm:$0xff]
      %v1130 = vld [vmem:[%s2 + $0x28] sm:$0xff]
      %v1131 = vld [vmem:[%s2 + $0x30] sm:$0xff]
      %v1132 = vld [vmem:[%s2 + $0x38] sm:$0xff]
      %v1133 = vld [vmem:[%s2 + $0x40] sm:$0xff]
      %v1134 = vld [vmem:[%s2 + $0x48] sm:$0xff]
      %v1135 = vld [vmem:[%s2 + $0x50] sm:$0xff]
      %v1136 = vld [vmem:[%s2 + $0x58] sm:$0xff]
      %v1137 = vld [vmem:[%s2 + $0x60] sm:$0xff]
      %v1138 = vld [vmem:[%s2 + $0x68] sm:$0xff]
      %v1139 = vld [vmem:[%s2 + $0x70] sm:$0xff]
      %v1140 = vld [vmem:[%s2 + $0x78] sm:$0xff]
      %v1141 = vld [vmem:[%s2 + $0x80] sm:$0xff]
      %v1142 = vld [vmem:[%s2 + $0x88] sm:$0xff]
      %v1143 = vld [vmem:[%s2 + $0x90] sm:$0xff]
      %v1144 = vld [vmem:[%s2 + $0x98] sm:$0xff]
      %v1145 = vld [vmem:[%s2 + $0xa0] sm:$0xff]
      %v1146 = vld [vmem:[%s2 + $0xa8] sm:$0xff]
      %v1147 = vld [vmem:[%s2 + $0xb0] sm:$0xff]
      %v1148 = vld [vmem:[%s2 + $0xb8] sm:$0xff]
      %v1149 = vld [vmem:[%s2 + $0xc0] sm:$0xff]
      %v1150 = vld [vmem:[%s2 + $0xc8] sm:$0xff]
      %v1151 = vld [vmem:[%s2 + $0xd0] sm:$0xff]
      %v1152 = vld [vmem:[%s2 + $0xd8] sm:$0xff]
      %v1153 = vld [vmem:[%s2 + $0xe0] sm:$0xff]
      %v1154 = vld [vmem:[%s2 + $0xe8] sm:$0xff]
      %v1155 = vld [vmem:[%s2 + $0xf0] sm:$0xff]
      %v1156 = vld [vmem:[%s2 + $0xf8] sm:$0xff]
      %v1157 = vld [vmem:[%s3] sm:$0x1]
      %v1158 = vld [vmem:[%s4] sm:$0xff]
      %v1159 = vld [vmem:[%s4 + $0x8] sm:$0xff]
      %v1160 = vld [vmem:[%s4 + $0x10] sm:$0xff]
      %v1161 = vld [vmem:[%s4 + $0x18] sm:$0xff]
      %v1162 = vld [vmem:[%s4 + $0x20] sm:$0xff]
      %v1163 = vld [vmem:[%s4 + $0x28] sm:$0xff]
      %v1164 = vld [vmem:[%s4 + $0x30] sm:$0xff]
      %v1165 = vld [vmem:[%s4 + $0x38] sm:$0xff]
      %v1166 = vld [vmem:[%s4 + $0x40] sm:$0xff]
      %v1167 = vld [vmem:[%s4 + $0x48] sm:$0xff]
      %v1168 = vld [vmem:[%s4 + $0x50] sm:$0xff]
      %v1169 = vld [vmem:[%s4 + $0x58] sm:$0xff]
      %v1170 = vld [vmem:[%s4 + $0x60] sm:$0xff]
      %v1171 = vld [vmem:[%s4 + $0x68] sm:$0xff]
      %v1172 = vld [vmem:[%s4 + $0x70] sm:$0xff]
      %v1173 = vld [vmem:[%s4 + $0x78] sm:$0xff]
      %v1174 = vld [vmem:[%s5] sm:$0x1]
      %1175 = vmatpush.msra.mxu0 %v1155
      %1176 = vmatpush.msra.mxu0 %v1153
      %1177 = vmatpush.msra.mxu0 %v1151
      %1178 = vmatpush.msra.mxu0 %v1149
      %1179 = vmatpush.msra.mxu0 %v1147
      %1180 = vmatpush.msra.mxu0 %v1145
      %1181 = vmatpush.msra.mxu0 %v1143
      %1182 = vmatpush.msra.mxu0 %v1141
      %1183 = vmatpush.msra.mxu0 %v1139
      %1184 = vmatpush.msra.mxu0 %v1137
      %1185 = vmatpush.msra.mxu0 %v1135
      %1186 = vmatpush.msra.mxu0 %v1133
      %1187 = vmatpush.msra.mxu0 %v1131
      %1188 = vmatpush.msra.mxu0 %v1129
      %1189 = vmatpush.msra.mxu0 %v1127
      %1190 = vmatpush.msra.mxu0 %v1125
      %1191 = vmatmul.f32.gmra.mxu0 %v277
      %v1192 = vpop.f32.mrf.mxu0
      %v1193 = vadd.f32 0.0, %v1192
      %1194 = vmatmul.f32.gmra.mxu0 %v278
      %v1195 = vpop.f32.mrf.mxu0
      %v1196 = vadd.f32 0.0, %v1195
      %1197 = vmatmul.f32.gmra.mxu0 %v279
      %v1198 = vpop.f32.mrf.mxu0
      %v1199 = vadd.f32 0.0, %v1198
      %1200 = vmatmul.f32.gmra.mxu0 %v280
      %v1201 = vpop.f32.mrf.mxu0
      %v1202 = vadd.f32 0.0, %v1201
      %1203 = vmatmul.f32.gmra.mxu0 %v281
      %v1204 = vpop.f32.mrf.mxu0
      %v1205 = vadd.f32 0.0, %v1204
      %1206 = vmatmul.f32.gmra.mxu0 %v282
      %v1207 = vpop.f32.mrf.mxu0
      %v1208 = vadd.f32 0.0, %v1207
      %1209 = vmatmul.f32.gmra.mxu0 %v283
      %v1210 = vpop.f32.mrf.mxu0
      %v1211 = vadd.f32 0.0, %v1210
      %1212 = vmatmul.f32.gmra.mxu0 %v284
      %v1213 = vpop.f32.mrf.mxu0
      %v1214 = vadd.f32 0.0, %v1213
      %1215 = vdwg.mxu0
      %1216 = vmatpush.msra.mxu0 %v1156
      %1217 = vmatpush.msra.mxu0 %v1154
      %1218 = vmatpush.msra.mxu0 %v1152
      %1219 = vmatpush.msra.mxu0 %v1150
      %1220 = vmatpush.msra.mxu0 %v1148
      %1221 = vmatpush.msra.mxu0 %v1146
      %1222 = vmatpush.msra.mxu0 %v1144
      %1223 = vmatpush.msra.mxu0 %v1142
      %1224 = vmatpush.msra.mxu0 %v1140
      %1225 = vmatpush.msra.mxu0 %v1138
      %1226 = vmatpush.msra.mxu0 %v1136
      %1227 = vmatpush.msra.mxu0 %v1134
      %1228 = vmatpush.msra.mxu0 %v1132
      %1229 = vmatpush.msra.mxu0 %v1130
      %1230 = vmatpush.msra.mxu0 %v1128
      %1231 = vmatpush.msra.mxu0 %v1126
      %1232 = vmatmul.f32.gmra.mxu0 %v277
      %v1233 = vpop.f32.mrf.mxu0
      %v1234 = vadd.f32 0.0, %v1233
      %1235 = vmatmul.f32.gmra.mxu0 %v278
      %v1236 = vpop.f32.mrf.mxu0
      %v1237 = vadd.f32 0.0, %v1236
      %1238 = vmatmul.f32.gmra.mxu0 %v279
      %v1239 = vpop.f32.mrf.mxu0
      %v1240 = vadd.f32 0.0, %v1239
      %1241 = vmatmul.f32.gmra.mxu0 %v280
      %v1242 = vpop.f32.mrf.mxu0
      %v1243 = vadd.f32 0.0, %v1242
      %1244 = vmatmul.f32.gmra.mxu0 %v281
      %v1245 = vpop.f32.mrf.mxu0
      %v1246 = vadd.f32 0.0, %v1245
      %1247 = vmatmul.f32.gmra.mxu0 %v282
      %v1248 = vpop.f32.mrf.mxu0
      %v1249 = vadd.f32 0.0, %v1248
      %1250 = vmatmul.f32.gmra.mxu0 %v283
      %v1251 = vpop.f32.mrf.mxu0
      %v1252 = vadd.f32 0.0, %v1251
      %1253 = vmatmul.f32.gmra.mxu0 %v284
      %v1254 = vpop.f32.mrf.mxu0
      %v1255 = vadd.f32 0.0, %v1254
      %1256 = vdwg.mxu0
      %v1258 = vperm.slane %v1157, 0
      %v1260 = vadd.f32 %v1193, %v1258
      %v1261 = vadd.f32 %v1196, %v1258
      %v1262 = vadd.f32 %v1199, %v1258
      %v1263 = vadd.f32 %v1202, %v1258
      %v1264 = vadd.f32 %v1205, %v1258
      %v1265 = vadd.f32 %v1208, %v1258
      %v1266 = vadd.f32 %v1211, %v1258
      %v1267 = vadd.f32 %v1214, %v1258
      %v1276 = vrot.slane %v1260, 1
      %v1277 = vrot.slane %v1260, 2
      %v1278 = vrot.slane %v1260, 3
      %v1279 = vrot.slane %v1260, 4
      %v1280 = vrot.slane %v1260, 5
      %v1281 = vrot.slane %v1260, 6
      %v1282 = vrot.slane %v1260, 7
      %v1283 = vrot.slane %v1261, 1
      %v1284 = vrot.slane %v1261, 2
      %v1285 = vrot.slane %v1261, 3
      %v1286 = vrot.slane %v1261, 4
      %v1287 = vrot.slane %v1261, 5
      %v1288 = vrot.slane %v1261, 6
      %v1289 = vrot.slane %v1261, 7
      %v1290 = vrot.slane %v1262, 1
      %v1291 = vrot.slane %v1262, 2
      %v1292 = vrot.slane %v1262, 3
      %v1293 = vrot.slane %v1262, 4
      %v1294 = vrot.slane %v1262, 5
      %v1295 = vrot.slane %v1262, 6
      %v1296 = vrot.slane %v1262, 7
      %v1297 = vrot.slane %v1263, 1
      %v1298 = vrot.slane %v1263, 2
      %v1299 = vrot.slane %v1263, 3
      %v1300 = vrot.slane %v1263, 4
      %v1301 = vrot.slane %v1263, 5
      %v1302 = vrot.slane %v1263, 6
      %v1303 = vrot.slane %v1263, 7
      %v1304 = vrot.slane %v1264, 1
      %v1305 = vrot.slane %v1264, 2
      %v1306 = vrot.slane %v1264, 3
      %v1307 = vrot.slane %v1264, 4
      %v1308 = vrot.slane %v1264, 5
      %v1309 = vrot.slane %v1264, 6
      %v1310 = vrot.slane %v1264, 7
      %v1311 = vrot.slane %v1265, 1
      %v1312 = vrot.slane %v1265, 2
      %v1313 = vrot.slane %v1265, 3
      %v1314 = vrot.slane %v1265, 4
      %v1315 = vrot.slane %v1265, 5
      %v1316 = vrot.slane %v1265, 6
      %v1317 = vrot.slane %v1265, 7
      %v1318 = vrot.slane %v1266, 1
      %v1319 = vrot.slane %v1266, 2
      %v1320 = vrot.slane %v1266, 3
      %v1321 = vrot.slane %v1266, 4
      %v1322 = vrot.slane %v1266, 5
      %v1323 = vrot.slane %v1266, 6
      %v1324 = vrot.slane %v1266, 7
      %v1325 = vrot.slane %v1267, 1
      %v1326 = vrot.slane %v1267, 2
      %v1327 = vrot.slane %v1267, 3
      %v1328 = vrot.slane %v1267, 4
      %v1329 = vrot.slane %v1267, 5
      %v1330 = vrot.slane %v1267, 6
      %v1331 = vrot.slane %v1267, 7
      %v1332 = vperm.slane %v1260, 0
      %v1333 = vperm.slane %v1276, 0
      %v1334 = vperm.slane %v1277, 0
      %v1335 = vperm.slane %v1278, 0
      %v1336 = vperm.slane %v1279, 0
      %v1337 = vperm.slane %v1280, 0
      %v1338 = vperm.slane %v1281, 0
      %v1339 = vperm.slane %v1282, 0
      %v1340 = vperm.slane %v1261, 0
      %v1341 = vperm.slane %v1283, 0
      %v1342 = vperm.slane %v1284, 0
      %v1343 = vperm.slane %v1285, 0
      %v1344 = vperm.slane %v1286, 0
      %v1345 = vperm.slane %v1287, 0
      %v1346 = vperm.slane %v1288, 0
      %v1347 = vperm.slane %v1289, 0
      %v1348 = vperm.slane %v1262, 0
      %v1349 = vperm.slane %v1290, 0
      %v1350 = vperm.slane %v1291, 0
      %v1351 = vperm.slane %v1292, 0
      %v1352 = vperm.slane %v1293, 0
      %v1353 = vperm.slane %v1294, 0
      %v1354 = vperm.slane %v1295, 0
      %v1355 = vperm.slane %v1296, 0
      %v1356 = vperm.slane %v1263, 0
      %v1357 = vperm.slane %v1297, 0
      %v1358 = vperm.slane %v1298, 0
      %v1359 = vperm.slane %v1299, 0
      %v1360 = vperm.slane %v1300, 0
      %v1361 = vperm.slane %v1301, 0
      %v1362 = vperm.slane %v1302, 0
      %v1363 = vperm.slane %v1303, 0
      %v1364 = vperm.slane %v1264, 0
      %v1365 = vperm.slane %v1304, 0
      %v1366 = vperm.slane %v1305, 0
      %v1367 = vperm.slane %v1306, 0
      %v1368 = vperm.slane %v1307, 0
      %v1369 = vperm.slane %v1308, 0
      %v1370 = vperm.slane %v1309, 0
      %v1371 = vperm.slane %v1310, 0
      %v1372 = vperm.slane %v1265, 0
      %v1373 = vperm.slane %v1311, 0
      %v1374 = vperm.slane %v1312, 0
      %v1375 = vperm.slane %v1313, 0
      %v1376 = vperm.slane %v1314, 0
      %v1377 = vperm.slane %v1315, 0
      %v1378 = vperm.slane %v1316, 0
      %v1379 = vperm.slane %v1317, 0
      %v1380 = vperm.slane %v1266, 0
      %v1381 = vperm.slane %v1318, 0
      %v1382 = vperm.slane %v1319, 0
      %v1383 = vperm.slane %v1320, 0
      %v1384 = vperm.slane %v1321, 0
      %v1385 = vperm.slane %v1322, 0
      %v1386 = vperm.slane %v1323, 0
      %v1387 = vperm.slane %v1324, 0
      %v1388 = vperm.slane %v1267, 0
      %v1389 = vperm.slane %v1325, 0
      %v1390 = vperm.slane %v1326, 0
      %v1391 = vperm.slane %v1327, 0
      %v1392 = vperm.slane %v1328, 0
      %v1393 = vperm.slane %v1329, 0
      %v1394 = vperm.slane %v1330, 0
      %v1395 = vperm.slane %v1331, 0
      %v1460 = vadd.f32 %v1332, %v1234
      %v1461 = vadd.f32 %v1332, %v1237
      %v1462 = vadd.f32 %v1333, %v1234
      %v1463 = vadd.f32 %v1333, %v1237
      %v1464 = vadd.f32 %v1334, %v1234
      %v1465 = vadd.f32 %v1334, %v1237
      %v1466 = vadd.f32 %v1335, %v1234
      %v1467 = vadd.f32 %v1335, %v1237
      %v1468 = vadd.f32 %v1336, %v1234
      %v1469 = vadd.f32 %v1336, %v1237
      %v1470 = vadd.f32 %v1337, %v1234
      %v1471 = vadd.f32 %v1337, %v1237
      %v1472 = vadd.f32 %v1338, %v1234
      %v1473 = vadd.f32 %v1338, %v1237
      %v1474 = vadd.f32 %v1339, %v1234
      %v1475 = vadd.f32 %v1339, %v1237
      %v1476 = vadd.f32 %v1340, %v1234
      %v1477 = vadd.f32 %v1340, %v1237
      %v1478 = vadd.f32 %v1341, %v1234
      %v1479 = vadd.f32 %v1341, %v1237
      %v1480 = vadd.f32 %v1342, %v1234
      %v1481 = vadd.f32 %v1342, %v1237
      %v1482 = vadd.f32 %v1343, %v1234
      %v1483 = vadd.f32 %v1343, %v1237
      %v1484 = vadd.f32 %v1344, %v1234
      %v1485 = vadd.f32 %v1344, %v1237
      %v1486 = vadd.f32 %v1345, %v1234
      %v1487 = vadd.f32 %v1345, %v1237
      %v1488 = vadd.f32 %v1346, %v1234
      %v1489 = vadd.f32 %v1346, %v1237
      %v1490 = vadd.f32 %v1347, %v1234
      %v1491 = vadd.f32 %v1347, %v1237
      %v1492 = vadd.f32 %v1348, %v1240
      %v1493 = vadd.f32 %v1348, %v1243
      %v1494 = vadd.f32 %v1349, %v1240
      %v1495 = vadd.f32 %v1349, %v1243
      %v1496 = vadd.f32 %v1350, %v1240
      %v1497 = vadd.f32 %v1350, %v1243
      %v1498 = vadd.f32 %v1351, %v1240
      %v1499 = vadd.f32 %v1351, %v1243
      %v1500 = vadd.f32 %v1352, %v1240
      %v1501 = vadd.f32 %v1352, %v1243
      %v1502 = vadd.f32 %v1353, %v1240
      %v1503 = vadd.f32 %v1353, %v1243
      %v1504 = vadd.f32 %v1354, %v1240
      %v1505 = vadd.f32 %v1354, %v1243
      %v1506 = vadd.f32 %v1355, %v1240
      %v1507 = vadd.f32 %v1355, %v1243
      %v1508 = vadd.f32 %v1356, %v1240
      %v1509 = vadd.f32 %v1356, %v1243
      %v1510 = vadd.f32 %v1357, %v1240
      %v1511 = vadd.f32 %v1357, %v1243
      %v1512 = vadd.f32 %v1358, %v1240
      %v1513 = vadd.f32 %v1358, %v1243
      %v1514 = vadd.f32 %v1359, %v1240
      %v1515 = vadd.f32 %v1359, %v1243
      %v1516 = vadd.f32 %v1360, %v1240
      %v1517 = vadd.f32 %v1360, %v1243
      %v1518 = vadd.f32 %v1361, %v1240
      %v1519 = vadd.f32 %v1361, %v1243
      %v1520 = vadd.f32 %v1362, %v1240
      %v1521 = vadd.f32 %v1362, %v1243
      %v1522 = vadd.f32 %v1363, %v1240
      %v1523 = vadd.f32 %v1363, %v1243
      %v1524 = vadd.f32 %v1364, %v1246
      %v1525 = vadd.f32 %v1364, %v1249
      %v1526 = vadd.f32 %v1365, %v1246
      %v1527 = vadd.f32 %v1365, %v1249
      %v1528 = vadd.f32 %v1366, %v1246
      %v1529 = vadd.f32 %v1366, %v1249
      %v1530 = vadd.f32 %v1367, %v1246
      %v1531 = vadd.f32 %v1367, %v1249
      %v1532 = vadd.f32 %v1368, %v1246
      %v1533 = vadd.f32 %v1368, %v1249
      %v1534 = vadd.f32 %v1369, %v1246
      %v1535 = vadd.f32 %v1369, %v1249
      %v1536 = vadd.f32 %v1370, %v1246
      %v1537 = vadd.f32 %v1370, %v1249
      %v1538 = vadd.f32 %v1371, %v1246
      %v1539 = vadd.f32 %v1371, %v1249
      %v1540 = vadd.f32 %v1372, %v1246
      %v1541 = vadd.f32 %v1372, %v1249
      %v1542 = vadd.f32 %v1373, %v1246
      %v1543 = vadd.f32 %v1373, %v1249
      %v1544 = vadd.f32 %v1374, %v1246
      %v1545 = vadd.f32 %v1374, %v1249
      %v1546 = vadd.f32 %v1375, %v1246
      %v1547 = vadd.f32 %v1375, %v1249
      %v1548 = vadd.f32 %v1376, %v1246
      %v1549 = vadd.f32 %v1376, %v1249
      %v1550 = vadd.f32 %v1377, %v1246
      %v1551 = vadd.f32 %v1377, %v1249
      %v1552 = vadd.f32 %v1378, %v1246
      %v1553 = vadd.f32 %v1378, %v1249
      %v1554 = vadd.f32 %v1379, %v1246
      %v1555 = vadd.f32 %v1379, %v1249
      %v1556 = vadd.f32 %v1380, %v1252
      %v1557 = vadd.f32 %v1380, %v1255
      %v1558 = vadd.f32 %v1381, %v1252
      %v1559 = vadd.f32 %v1381, %v1255
      %v1560 = vadd.f32 %v1382, %v1252
      %v1561 = vadd.f32 %v1382, %v1255
      %v1562 = vadd.f32 %v1383, %v1252
      %v1563 = vadd.f32 %v1383, %v1255
      %v1564 = vadd.f32 %v1384, %v1252
      %v1565 = vadd.f32 %v1384, %v1255
      %v1566 = vadd.f32 %v1385, %v1252
      %v1567 = vadd.f32 %v1385, %v1255
      %v1568 = vadd.f32 %v1386, %v1252
      %v1569 = vadd.f32 %v1386, %v1255
      %v1570 = vadd.f32 %v1387, %v1252
      %v1571 = vadd.f32 %v1387, %v1255
      %v1572 = vadd.f32 %v1388, %v1252
      %v1573 = vadd.f32 %v1388, %v1255
      %v1574 = vadd.f32 %v1389, %v1252
      %v1575 = vadd.f32 %v1389, %v1255
      %v1576 = vadd.f32 %v1390, %v1252
      %v1577 = vadd.f32 %v1390, %v1255
      %v1578 = vadd.f32 %v1391, %v1252
      %v1579 = vadd.f32 %v1391, %v1255
      %v1580 = vadd.f32 %v1392, %v1252
      %v1581 = vadd.f32 %v1392, %v1255
      %v1582 = vadd.f32 %v1393, %v1252
      %v1583 = vadd.f32 %v1393, %v1255
      %v1584 = vadd.f32 %v1394, %v1252
      %v1585 = vadd.f32 %v1394, %v1255
      %v1586 = vadd.f32 %v1395, %v1252
      %v1587 = vadd.f32 %v1395, %v1255
      %v1588 = vmax.f32 %v1460, 0.0
      %v1589 = vmax.f32 %v1461, 0.0
      %v1590 = vmax.f32 %v1462, 0.0
      %v1591 = vmax.f32 %v1463, 0.0
      %v1592 = vmax.f32 %v1464, 0.0
      %v1593 = vmax.f32 %v1465, 0.0
      %v1594 = vmax.f32 %v1466, 0.0
      %v1595 = vmax.f32 %v1467, 0.0
      %v1596 = vmax.f32 %v1468, 0.0
      %v1597 = vmax.f32 %v1469, 0.0
      %v1598 = vmax.f32 %v1470, 0.0
      %v1599 = vmax.f32 %v1471, 0.0
      %v1600 = vmax.f32 %v1472, 0.0
      %v1601 = vmax.f32 %v1473, 0.0
      %v1602 = vmax.f32 %v1474, 0.0
      %v1603 = vmax.f32 %v1475, 0.0
      %v1604 = vmax.f32 %v1476, 0.0
      %v1605 = vmax.f32 %v1477, 0.0
      %v1606 = vmax.f32 %v1478, 0.0
      %v1607 = vmax.f32 %v1479, 0.0
      %v1608 = vmax.f32 %v1480, 0.0
      %v1609 = vmax.f32 %v1481, 0.0
      %v1610 = vmax.f32 %v1482, 0.0
      %v1611 = vmax.f32 %v1483, 0.0
      %v1612 = vmax.f32 %v1484, 0.0
      %v1613 = vmax.f32 %v1485, 0.0
      %v1614 = vmax.f32 %v1486, 0.0
      %v1615 = vmax.f32 %v1487, 0.0
      %v1616 = vmax.f32 %v1488, 0.0
      %v1617 = vmax.f32 %v1489, 0.0
      %v1618 = vmax.f32 %v1490, 0.0
      %v1619 = vmax.f32 %v1491, 0.0
      %v1620 = vmax.f32 %v1492, 0.0
      %v1621 = vmax.f32 %v1493, 0.0
      %v1622 = vmax.f32 %v1494, 0.0
      %v1623 = vmax.f32 %v1495, 0.0
      %v1624 = vmax.f32 %v1496, 0.0
      %v1625 = vmax.f32 %v1497, 0.0
      %v1626 = vmax.f32 %v1498, 0.0
      %v1627 = vmax.f32 %v1499, 0.0
      %v1628 = vmax.f32 %v1500, 0.0
      %v1629 = vmax.f32 %v1501, 0.0
      %v1630 = vmax.f32 %v1502, 0.0
      %v1631 = vmax.f32 %v1503, 0.0
      %v1632 = vmax.f32 %v1504, 0.0
      %v1633 = vmax.f32 %v1505, 0.0
      %v1634 = vmax.f32 %v1506, 0.0
      %v1635 = vmax.f32 %v1507, 0.0
      %v1636 = vmax.f32 %v1508, 0.0
      %v1637 = vmax.f32 %v1509, 0.0
      %v1638 = vmax.f32 %v1510, 0.0
      %v1639 = vmax.f32 %v1511, 0.0
      %v1640 = vmax.f32 %v1512, 0.0
      %v1641 = vmax.f32 %v1513, 0.0
      %v1642 = vmax.f32 %v1514, 0.0
      %v1643 = vmax.f32 %v1515, 0.0
      %v1644 = vmax.f32 %v1516, 0.0
      %v1645 = vmax.f32 %v1517, 0.0
      %v1646 = vmax.f32 %v1518, 0.0
      %v1647 = vmax.f32 %v1519, 0.0
      %v1648 = vmax.f32 %v1520, 0.0
      %v1649 = vmax.f32 %v1521, 0.0
      %v1650 = vmax.f32 %v1522, 0.0
      %v1651 = vmax.f32 %v1523, 0.0
      %v1652 = vmax.f32 %v1524, 0.0
      %v1653 = vmax.f32 %v1525, 0.0
      %v1654 = vmax.f32 %v1526, 0.0
      %v1655 = vmax.f32 %v1527, 0.0
      %v1656 = vmax.f32 %v1528, 0.0
      %v1657 = vmax.f32 %v1529, 0.0
      %v1658 = vmax.f32 %v1530, 0.0
      %v1659 = vmax.f32 %v1531, 0.0
      %v1660 = vmax.f32 %v1532, 0.0
      %v1661 = vmax.f32 %v1533, 0.0
      %v1662 = vmax.f32 %v1534, 0.0
      %v1663 = vmax.f32 %v1535, 0.0
      %v1664 = vmax.f32 %v1536, 0.0
      %v1665 = vmax.f32 %v1537, 0.0
      %v1666 = vmax.f32 %v1538, 0.0
      %v1667 = vmax.f32 %v1539, 0.0
      %v1668 = vmax.f32 %v1540, 0.0
      %v1669 = vmax.f32 %v1541, 0.0
      %v1670 = vmax.f32 %v1542, 0.0
      %v1671 = vmax.f32 %v1543, 0.0
      %v1672 = vmax.f32 %v1544, 0.0
      %v1673 = vmax.f32 %v1545, 0.0
      %v1674 = vmax.f32 %v1546, 0.0
      %v1675 = vmax.f32 %v1547, 0.0
      %v1676 = vmax.f32 %v1548, 0.0
      %v1677 = vmax.f32 %v1549, 0.0
      %v1678 = vmax.f32 %v1550, 0.0
      %v1679 = vmax.f32 %v1551, 0.0
      %v1680 = vmax.f32 %v1552, 0.0
      %v1681 = vmax.f32 %v1553, 0.0
      %v1682 = vmax.f32 %v1554, 0.0
      %v1683 = vmax.f32 %v1555, 0.0
      %v1684 = vmax.f32 %v1556, 0.0
      %v1685 = vmax.f32 %v1557, 0.0
      %v1686 = vmax.f32 %v1558, 0.0
      %v1687 = vmax.f32 %v1559, 0.0
      %v1688 = vmax.f32 %v1560, 0.0
      %v1689 = vmax.f32 %v1561, 0.0
      %v1690 = vmax.f32 %v1562, 0.0
      %v1691 = vmax.f32 %v1563, 0.0
      %v1692 = vmax.f32 %v1564, 0.0
      %v1693 = vmax.f32 %v1565, 0.0
      %v1694 = vmax.f32 %v1566, 0.0
      %v1695 = vmax.f32 %v1567, 0.0
      %v1696 = vmax.f32 %v1568, 0.0
      %v1697 = vmax.f32 %v1569, 0.0
      %v1698 = vmax.f32 %v1570, 0.0
      %v1699 = vmax.f32 %v1571, 0.0
      %v1700 = vmax.f32 %v1572, 0.0
      %v1701 = vmax.f32 %v1573, 0.0
      %v1702 = vmax.f32 %v1574, 0.0
      %v1703 = vmax.f32 %v1575, 0.0
      %v1704 = vmax.f32 %v1576, 0.0
      %v1705 = vmax.f32 %v1577, 0.0
      %v1706 = vmax.f32 %v1578, 0.0
      %v1707 = vmax.f32 %v1579, 0.0
      %v1708 = vmax.f32 %v1580, 0.0
      %v1709 = vmax.f32 %v1581, 0.0
      %v1710 = vmax.f32 %v1582, 0.0
      %v1711 = vmax.f32 %v1583, 0.0
      %v1712 = vmax.f32 %v1584, 0.0
      %v1713 = vmax.f32 %v1585, 0.0
      %v1714 = vmax.f32 %v1586, 0.0
      %v1715 = vmax.f32 %v1587, 0.0
      %1716 = vmatpush.msra.mxu0 %v1173
      %1717 = vmatpush.msra.mxu0 %v1172
      %1718 = vmatpush.msra.mxu0 %v1171
      %1719 = vmatpush.msra.mxu0 %v1170
      %1720 = vmatpush.msra.mxu0 %v1169
      %1721 = vmatpush.msra.mxu0 %v1168
      %1722 = vmatpush.msra.mxu0 %v1167
      %1723 = vmatpush.msra.mxu0 %v1166
      %1724 = vmatpush.msra.mxu0 %v1165
      %1725 = vmatpush.msra.mxu0 %v1164
      %1726 = vmatpush.msra.mxu0 %v1163
      %1727 = vmatpush.msra.mxu0 %v1162
      %1728 = vmatpush.msra.mxu0 %v1161
      %1729 = vmatpush.msra.mxu0 %v1160
      %1730 = vmatpush.msra.mxu0 %v1159
      %1731 = vmatpush.msra.mxu0 %v1158
      %1732 = vmatmul.f32.gmra.mxu0 %v1588
      %v1733 = vpop.f32.mrf.mxu0
      %v1734 = vadd.f32 0.0, %v1733
      %1735 = vmatmul.f32.gmra.mxu0 %v1589
      %v1736 = vpop.f32.mrf.mxu0
      %v1737 = vadd.f32 0.0, %v1736
      %1738 = vmatmul.f32.gmra.mxu0 %v1590
      %v1739 = vpop.f32.mrf.mxu0
      %v1740 = vadd.f32 0.0, %v1739
      %1741 = vmatmul.f32.gmra.mxu0 %v1591
      %v1742 = vpop.f32.mrf.mxu0
      %v1743 = vadd.f32 0.0, %v1742
      %1744 = vmatmul.f32.gmra.mxu0 %v1592
      %v1745 = vpop.f32.mrf.mxu0
      %v1746 = vadd.f32 0.0, %v1745
      %1747 = vmatmul.f32.gmra.mxu0 %v1593
      %v1748 = vpop.f32.mrf.mxu0
      %v1749 = vadd.f32 0.0, %v1748
      %1750 = vmatmul.f32.gmra.mxu0 %v1594
      %v1751 = vpop.f32.mrf.mxu0
      %v1752 = vadd.f32 0.0, %v1751
      %1753 = vmatmul.f32.gmra.mxu0 %v1595
      %v1754 = vpop.f32.mrf.mxu0
      %v1755 = vadd.f32 0.0, %v1754
      %1756 = vmatmul.f32.gmra.mxu0 %v1596
      %v1757 = vpop.f32.mrf.mxu0
      %v1758 = vadd.f32 0.0, %v1757
      %1759 = vmatmul.f32.gmra.mxu0 %v1597
      %v1760 = vpop.f32.mrf.mxu0
      %v1761 = vadd.f32 0.0, %v1760
      %1762 = vmatmul.f32.gmra.mxu0 %v1598
      %v1763 = vpop.f32.mrf.mxu0
      %v1764 = vadd.f32 0.0, %v1763
      %1765 = vmatmul.f32.gmra.mxu0 %v1599
      %v1766 = vpop.f32.mrf.mxu0
      %v1767 = vadd.f32 0.0, %v1766
      %1768 = vmatmul.f32.gmra.mxu0 %v1600
      %v1769 = vpop.f32.mrf.mxu0
      %v1770 = vadd.f32 0.0, %v1769
      %1771 = vmatmul.f32.gmra.mxu0 %v1601
      %v1772 = vpop.f32.mrf.mxu0
      %v1773 = vadd.f32 0.0, %v1772
      %1774 = vmatmul.f32.gmra.mxu0 %v1602
      %v1775 = vpop.f32.mrf.mxu0
      %v1776 = vadd.f32 0.0, %v1775
      %1777 = vmatmul.f32.gmra.mxu0 %v1603
      %v1778 = vpop.f32.mrf.mxu0
      %v1779 = vadd.f32 0.0, %v1778
      %1780 = vmatmul.f32.gmra.mxu0 %v1604
      %v1781 = vpop.f32.mrf.mxu0
      %v1782 = vadd.f32 0.0, %v1781
      %1783 = vmatmul.f32.gmra.mxu0 %v1605
      %v1784 = vpop.f32.mrf.mxu0
      %v1785 = vadd.f32 0.0, %v1784
      %1786 = vmatmul.f32.gmra.mxu0 %v1606
      %v1787 = vpop.f32.mrf.mxu0
      %v1788 = vadd.f32 0.0, %v1787
      %1789 = vmatmul.f32.gmra.mxu0 %v1607
      %v1790 = vpop.f32.mrf.mxu0
      %v1791 = vadd.f32 0.0, %v1790
      %1792 = vmatmul.f32.gmra.mxu0 %v1608
      %v1793 = vpop.f32.mrf.mxu0
      %v1794 = vadd.f32 0.0, %v1793
      %1795 = vmatmul.f32.gmra.mxu0 %v1609
      %v1796 = vpop.f32.mrf.mxu0
      %v1797 = vadd.f32 0.0, %v1796
      %1798 = vmatmul.f32.gmra.mxu0 %v1610
      %v1799 = vpop.f32.mrf.mxu0
      %v1800 = vadd.f32 0.0, %v1799
      %1801 = vmatmul.f32.gmra.mxu0 %v1611
      %v1802 = vpop.f32.mrf.mxu0
      %v1803 = vadd.f32 0.0, %v1802
      %1804 = vmatmul.f32.gmra.mxu0 %v1612
      %v1805 = vpop.f32.mrf.mxu0
      %v1806 = vadd.f32 0.0, %v1805
      %1807 = vmatmul.f32.gmra.mxu0 %v1613
      %v1808 = vpop.f32.mrf.mxu0
      %v1809 = vadd.f32 0.0, %v1808
      %1810 = vmatmul.f32.gmra.mxu0 %v1614
      %v1811 = vpop.f32.mrf.mxu0
      %v1812 = vadd.f32 0.0, %v1811
      %1813 = vmatmul.f32.gmra.mxu0 %v1615
      %v1814 = vpop.f32.mrf.mxu0
      %v1815 = vadd.f32 0.0, %v1814
      %1816 = vmatmul.f32.gmra.mxu0 %v1616
      %v1817 = vpop.f32.mrf.mxu0
      %v1818 = vadd.f32 0.0, %v1817
      %1819 = vmatmul.f32.gmra.mxu0 %v1617
      %v1820 = vpop.f32.mrf.mxu0
      %v1821 = vadd.f32 0.0, %v1820
      %1822 = vmatmul.f32.gmra.mxu0 %v1618
      %v1823 = vpop.f32.mrf.mxu0
      %v1824 = vadd.f32 0.0, %v1823
      %1825 = vmatmul.f32.gmra.mxu0 %v1619
      %v1826 = vpop.f32.mrf.mxu0
      %v1827 = vadd.f32 0.0, %v1826
      %1828 = vmatmul.f32.gmra.mxu0 %v1620
      %v1829 = vpop.f32.mrf.mxu0
      %v1830 = vadd.f32 0.0, %v1829
      %1831 = vmatmul.f32.gmra.mxu0 %v1621
      %v1832 = vpop.f32.mrf.mxu0
      %v1833 = vadd.f32 0.0, %v1832
      %1834 = vmatmul.f32.gmra.mxu0 %v1622
      %v1835 = vpop.f32.mrf.mxu0
      %v1836 = vadd.f32 0.0, %v1835
      %1837 = vmatmul.f32.gmra.mxu0 %v1623
      %v1838 = vpop.f32.mrf.mxu0
      %v1839 = vadd.f32 0.0, %v1838
      %1840 = vmatmul.f32.gmra.mxu0 %v1624
      %v1841 = vpop.f32.mrf.mxu0
      %v1842 = vadd.f32 0.0, %v1841
      %1843 = vmatmul.f32.gmra.mxu0 %v1625
      %v1844 = vpop.f32.mrf.mxu0
      %v1845 = vadd.f32 0.0, %v1844
      %1846 = vmatmul.f32.gmra.mxu0 %v1626
      %v1847 = vpop.f32.mrf.mxu0
      %v1848 = vadd.f32 0.0, %v1847
      %1849 = vmatmul.f32.gmra.mxu0 %v1627
      %v1850 = vpop.f32.mrf.mxu0
      %v1851 = vadd.f32 0.0, %v1850
      %1852 = vmatmul.f32.gmra.mxu0 %v1628
      %v1853 = vpop.f32.mrf.mxu0
      %v1854 = vadd.f32 0.0, %v1853
      %1855 = vmatmul.f32.gmra.mxu0 %v1629
      %v1856 = vpop.f32.mrf.mxu0
      %v1857 = vadd.f32 0.0, %v1856
      %1858 = vmatmul.f32.gmra.mxu0 %v1630
      %v1859 = vpop.f32.mrf.mxu0
      %v1860 = vadd.f32 0.0, %v1859
      %1861 = vmatmul.f32.gmra.mxu0 %v1631
      %v1862 = vpop.f32.mrf.mxu0
      %v1863 = vadd.f32 0.0, %v1862
      %1864 = vmatmul.f32.gmra.mxu0 %v1632
      %v1865 = vpop.f32.mrf.mxu0
      %v1866 = vadd.f32 0.0, %v1865
      %1867 = vmatmul.f32.gmra.mxu0 %v1633
      %v1868 = vpop.f32.mrf.mxu0
      %v1869 = vadd.f32 0.0, %v1868
      %1870 = vmatmul.f32.gmra.mxu0 %v1634
      %v1871 = vpop.f32.mrf.mxu0
      %v1872 = vadd.f32 0.0, %v1871
      %1873 = vmatmul.f32.gmra.mxu0 %v1635
      %v1874 = vpop.f32.mrf.mxu0
      %v1875 = vadd.f32 0.0, %v1874
      %1876 = vmatmul.f32.gmra.mxu0 %v1636
      %v1877 = vpop.f32.mrf.mxu0
      %v1878 = vadd.f32 0.0, %v1877
      %1879 = vmatmul.f32.gmra.mxu0 %v1637
      %v1880 = vpop.f32.mrf.mxu0
      %v1881 = vadd.f32 0.0, %v1880
      %1882 = vmatmul.f32.gmra.mxu0 %v1638
      %v1883 = vpop.f32.mrf.mxu0
      %v1884 = vadd.f32 0.0, %v1883
      %1885 = vmatmul.f32.gmra.mxu0 %v1639
      %v1886 = vpop.f32.mrf.mxu0
      %v1887 = vadd.f32 0.0, %v1886
      %1888 = vmatmul.f32.gmra.mxu0 %v1640
      %v1889 = vpop.f32.mrf.mxu0
      %v1890 = vadd.f32 0.0, %v1889
      %1891 = vmatmul.f32.gmra.mxu0 %v1641
      %v1892 = vpop.f32.mrf.mxu0
      %v1893 = vadd.f32 0.0, %v1892
      %1894 = vmatmul.f32.gmra.mxu0 %v1642
      %v1895 = vpop.f32.mrf.mxu0
      %v1896 = vadd.f32 0.0, %v1895
      %1897 = vmatmul.f32.gmra.mxu0 %v1643
      %v1898 = vpop.f32.mrf.mxu0
      %v1899 = vadd.f32 0.0, %v1898
      %1900 = vmatmul.f32.gmra.mxu0 %v1644
      %v1901 = vpop.f32.mrf.mxu0
      %v1902 = vadd.f32 0.0, %v1901
      %1903 = vmatmul.f32.gmra.mxu0 %v1645
      %v1904 = vpop.f32.mrf.mxu0
      %v1905 = vadd.f32 0.0, %v1904
      %1906 = vmatmul.f32.gmra.mxu0 %v1646
      %v1907 = vpop.f32.mrf.mxu0
      %v1908 = vadd.f32 0.0, %v1907
      %1909 = vmatmul.f32.gmra.mxu0 %v1647
      %v1910 = vpop.f32.mrf.mxu0
      %v1911 = vadd.f32 0.0, %v1910
      %1912 = vmatmul.f32.gmra.mxu0 %v1648
      %v1913 = vpop.f32.mrf.mxu0
      %v1914 = vadd.f32 0.0, %v1913
      %1915 = vmatmul.f32.gmra.mxu0 %v1649
      %v1916 = vpop.f32.mrf.mxu0
      %v1917 = vadd.f32 0.0, %v1916
      %1918 = vmatmul.f32.gmra.mxu0 %v1650
      %v1919 = vpop.f32.mrf.mxu0
      %v1920 = vadd.f32 0.0, %v1919
      %1921 = vmatmul.f32.gmra.mxu0 %v1651
      %v1922 = vpop.f32.mrf.mxu0
      %v1923 = vadd.f32 0.0, %v1922
      %1924 = vmatmul.f32.gmra.mxu0 %v1652
      %v1925 = vpop.f32.mrf.mxu0
      %v1926 = vadd.f32 0.0, %v1925
      %1927 = vmatmul.f32.gmra.mxu0 %v1653
      %v1928 = vpop.f32.mrf.mxu0
      %v1929 = vadd.f32 0.0, %v1928
      %1930 = vmatmul.f32.gmra.mxu0 %v1654
      %v1931 = vpop.f32.mrf.mxu0
      %v1932 = vadd.f32 0.0, %v1931
      %1933 = vmatmul.f32.gmra.mxu0 %v1655
      %v1934 = vpop.f32.mrf.mxu0
      %v1935 = vadd.f32 0.0, %v1934
      %1936 = vmatmul.f32.gmra.mxu0 %v1656
      %v1937 = vpop.f32.mrf.mxu0
      %v1938 = vadd.f32 0.0, %v1937
      %1939 = vmatmul.f32.gmra.mxu0 %v1657
      %v1940 = vpop.f32.mrf.mxu0
      %v1941 = vadd.f32 0.0, %v1940
      %1942 = vmatmul.f32.gmra.mxu0 %v1658
      %v1943 = vpop.f32.mrf.mxu0
      %v1944 = vadd.f32 0.0, %v1943
      %1945 = vmatmul.f32.gmra.mxu0 %v1659
      %v1946 = vpop.f32.mrf.mxu0
      %v1947 = vadd.f32 0.0, %v1946
      %1948 = vmatmul.f32.gmra.mxu0 %v1660
      %v1949 = vpop.f32.mrf.mxu0
      %v1950 = vadd.f32 0.0, %v1949
      %1951 = vmatmul.f32.gmra.mxu0 %v1661
      %v1952 = vpop.f32.mrf.mxu0
      %v1953 = vadd.f32 0.0, %v1952
      %1954 = vmatmul.f32.gmra.mxu0 %v1662
      %v1955 = vpop.f32.mrf.mxu0
      %v1956 = vadd.f32 0.0, %v1955
      %1957 = vmatmul.f32.gmra.mxu0 %v1663
      %v1958 = vpop.f32.mrf.mxu0
      %v1959 = vadd.f32 0.0, %v1958
      %1960 = vmatmul.f32.gmra.mxu0 %v1664
      %v1961 = vpop.f32.mrf.mxu0
      %v1962 = vadd.f32 0.0, %v1961
      %1963 = vmatmul.f32.gmra.mxu0 %v1665
      %v1964 = vpop.f32.mrf.mxu0
      %v1965 = vadd.f32 0.0, %v1964
      %1966 = vmatmul.f32.gmra.mxu0 %v1666
      %v1967 = vpop.f32.mrf.mxu0
      %v1968 = vadd.f32 0.0, %v1967
      %1969 = vmatmul.f32.gmra.mxu0 %v1667
      %v1970 = vpop.f32.mrf.mxu0
      %v1971 = vadd.f32 0.0, %v1970
      %1972 = vmatmul.f32.gmra.mxu0 %v1668
      %v1973 = vpop.f32.mrf.mxu0
      %v1974 = vadd.f32 0.0, %v1973
      %1975 = vmatmul.f32.gmra.mxu0 %v1669
      %v1976 = vpop.f32.mrf.mxu0
      %v1977 = vadd.f32 0.0, %v1976
      %1978 = vmatmul.f32.gmra.mxu0 %v1670
      %v1979 = vpop.f32.mrf.mxu0
      %v1980 = vadd.f32 0.0, %v1979
      %1981 = vmatmul.f32.gmra.mxu0 %v1671
      %v1982 = vpop.f32.mrf.mxu0
      %v1983 = vadd.f32 0.0, %v1982
      %1984 = vmatmul.f32.gmra.mxu0 %v1672
      %v1985 = vpop.f32.mrf.mxu0
      %v1986 = vadd.f32 0.0, %v1985
      %1987 = vmatmul.f32.gmra.mxu0 %v1673
      %v1988 = vpop.f32.mrf.mxu0
      %v1989 = vadd.f32 0.0, %v1988
      %1990 = vmatmul.f32.gmra.mxu0 %v1674
      %v1991 = vpop.f32.mrf.mxu0
      %v1992 = vadd.f32 0.0, %v1991
      %1993 = vmatmul.f32.gmra.mxu0 %v1675
      %v1994 = vpop.f32.mrf.mxu0
      %v1995 = vadd.f32 0.0, %v1994
      %1996 = vmatmul.f32.gmra.mxu0 %v1676
      %v1997 = vpop.f32.mrf.mxu0
      %v1998 = vadd.f32 0.0, %v1997
      %1999 = vmatmul.f32.gmra.mxu0 %v1677
      %v2000 = vpop.f32.mrf.mxu0
      %v2001 = vadd.f32 0.0, %v2000
      %2002 = vmatmul.f32.gmra.mxu0 %v1678
      %v2003 = vpop.f32.mrf.mxu0
      %v2004 = vadd.f32 0.0, %v2003
      %2005 = vmatmul.f32.gmra.mxu0 %v1679
      %v2006 = vpop.f32.mrf.mxu0
      %v2007 = vadd.f32 0.0, %v2006
      %2008 = vmatmul.f32.gmra.mxu0 %v1680
      %v2009 = vpop.f32.mrf.mxu0
      %v2010 = vadd.f32 0.0, %v2009
      %2011 = vmatmul.f32.gmra.mxu0 %v1681
      %v2012 = vpop.f32.mrf.mxu0
      %v2013 = vadd.f32 0.0, %v2012
      %2014 = vmatmul.f32.gmra.mxu0 %v1682
      %v2015 = vpop.f32.mrf.mxu0
      %v2016 = vadd.f32 0.0, %v2015
      %2017 = vmatmul.f32.gmra.mxu0 %v1683
      %v2018 = vpop.f32.mrf.mxu0
      %v2019 = vadd.f32 0.0, %v2018
      %2020 = vmatmul.f32.gmra.mxu0 %v1684
      %v2021 = vpop.f32.mrf.mxu0
      %v2022 = vadd.f32 0.0, %v2021
      %2023 = vmatmul.f32.gmra.mxu0 %v1685
      %v2024 = vpop.f32.mrf.mxu0
      %v2025 = vadd.f32 0.0, %v2024
      %2026 = vmatmul.f32.gmra.mxu0 %v1686
      %v2027 = vpop.f32.mrf.mxu0
      %v2028 = vadd.f32 0.0, %v2027
      %2029 = vmatmul.f32.gmra.mxu0 %v1687
      %v2030 = vpop.f32.mrf.mxu0
      %v2031 = vadd.f32 0.0, %v2030
      %2032 = vmatmul.f32.gmra.mxu0 %v1688
      %v2033 = vpop.f32.mrf.mxu0
      %v2034 = vadd.f32 0.0, %v2033
      %2035 = vmatmul.f32.gmra.mxu0 %v1689
      %v2036 = vpop.f32.mrf.mxu0
      %v2037 = vadd.f32 0.0, %v2036
      %2038 = vmatmul.f32.gmra.mxu0 %v1690
      %v2039 = vpop.f32.mrf.mxu0
      %v2040 = vadd.f32 0.0, %v2039
      %2041 = vmatmul.f32.gmra.mxu0 %v1691
      %v2042 = vpop.f32.mrf.mxu0
      %v2043 = vadd.f32 0.0, %v2042
      %2044 = vmatmul.f32.gmra.mxu0 %v1692
      %v2045 = vpop.f32.mrf.mxu0
      %v2046 = vadd.f32 0.0, %v2045
      %2047 = vmatmul.f32.gmra.mxu0 %v1693
      %v2048 = vpop.f32.mrf.mxu0
      %v2049 = vadd.f32 0.0, %v2048
      %2050 = vmatmul.f32.gmra.mxu0 %v1694
      %v2051 = vpop.f32.mrf.mxu0
      %v2052 = vadd.f32 0.0, %v2051
      %2053 = vmatmul.f32.gmra.mxu0 %v1695
      %v2054 = vpop.f32.mrf.mxu0
      %v2055 = vadd.f32 0.0, %v2054
      %2056 = vmatmul.f32.gmra.mxu0 %v1696
      %v2057 = vpop.f32.mrf.mxu0
      %v2058 = vadd.f32 0.0, %v2057
      %2059 = vmatmul.f32.gmra.mxu0 %v1697
      %v2060 = vpop.f32.mrf.mxu0
      %v2061 = vadd.f32 0.0, %v2060
      %2062 = vmatmul.f32.gmra.mxu0 %v1698
      %v2063 = vpop.f32.mrf.mxu0
      %v2064 = vadd.f32 0.0, %v2063
      %2065 = vmatmul.f32.gmra.mxu0 %v1699
      %v2066 = vpop.f32.mrf.mxu0
      %v2067 = vadd.f32 0.0, %v2066
      %2068 = vmatmul.f32.gmra.mxu0 %v1700
      %v2069 = vpop.f32.mrf.mxu0
      %v2070 = vadd.f32 0.0, %v2069
      %2071 = vmatmul.f32.gmra.mxu0 %v1701
      %v2072 = vpop.f32.mrf.mxu0
      %v2073 = vadd.f32 0.0, %v2072
      %2074 = vmatmul.f32.gmra.mxu0 %v1702
      %v2075 = vpop.f32.mrf.mxu0
      %v2076 = vadd.f32 0.0, %v2075
      %2077 = vmatmul.f32.gmra.mxu0 %v1703
      %v2078 = vpop.f32.mrf.mxu0
      %v2079 = vadd.f32 0.0, %v2078
      %2080 = vmatmul.f32.gmra.mxu0 %v1704
      %v2081 = vpop.f32.mrf.mxu0
      %v2082 = vadd.f32 0.0, %v2081
      %2083 = vmatmul.f32.gmra.mxu0 %v1705
      %v2084 = vpop.f32.mrf.mxu0
      %v2085 = vadd.f32 0.0, %v2084
      %2086 = vmatmul.f32.gmra.mxu0 %v1706
      %v2087 = vpop.f32.mrf.mxu0
      %v2088 = vadd.f32 0.0, %v2087
      %2089 = vmatmul.f32.gmra.mxu0 %v1707
      %v2090 = vpop.f32.mrf.mxu0
      %v2091 = vadd.f32 0.0, %v2090
      %2092 = vmatmul.f32.gmra.mxu0 %v1708
      %v2093 = vpop.f32.mrf.mxu0
      %v2094 = vadd.f32 0.0, %v2093
      %2095 = vmatmul.f32.gmra.mxu0 %v1709
      %v2096 = vpop.f32.mrf.mxu0
      %v2097 = vadd.f32 0.0, %v2096
      %2098 = vmatmul.f32.gmra.mxu0 %v1710
      %v2099 = vpop.f32.mrf.mxu0
      %v2100 = vadd.f32 0.0, %v2099
      %2101 = vmatmul.f32.gmra.mxu0 %v1711
      %v2102 = vpop.f32.mrf.mxu0
      %v2103 = vadd.f32 0.0, %v2102
      %2104 = vmatmul.f32.gmra.mxu0 %v1712
      %v2105 = vpop.f32.mrf.mxu0
      %v2106 = vadd.f32 0.0, %v2105
      %2107 = vmatmul.f32.gmra.mxu0 %v1713
      %v2108 = vpop.f32.mrf.mxu0
      %v2109 = vadd.f32 0.0, %v2108
      %2110 = vmatmul.f32.gmra.mxu0 %v1714
      %v2111 = vpop.f32.mrf.mxu0
      %v2112 = vadd.f32 0.0, %v2111
      %2113 = vmatmul.f32.gmra.mxu0 %v1715
      %v2114 = vpop.f32.mrf.mxu0
      %v2115 = vadd.f32 0.0, %v2114
      %2116 = vdwg.mxu0
      %v2117 = vadd.f32 %v1734, %v299
      %v2118 = vadd.f32 %v1737, %v305
      %v2119 = vadd.f32 %v1740, %v312
      %v2120 = vadd.f32 %v1743, %v318
      %v2121 = vadd.f32 %v1746, %v325
      %v2122 = vadd.f32 %v1749, %v331
      %v2123 = vadd.f32 %v1752, %v338
      %v2124 = vadd.f32 %v1755, %v344
      %v2125 = vadd.f32 %v1758, %v351
      %v2126 = vadd.f32 %v1761, %v357
      %v2127 = vadd.f32 %v1764, %v364
      %v2128 = vadd.f32 %v1767, %v370
      %v2129 = vadd.f32 %v1770, %v377
      %v2130 = vadd.f32 %v1773, %v383
      %v2131 = vadd.f32 %v1776, %v390
      %v2132 = vadd.f32 %v1779, %v396
      %v2133 = vadd.f32 %v1782, %v403
      %v2134 = vadd.f32 %v1785, %v409
      %v2135 = vadd.f32 %v1788, %v416
      %v2136 = vadd.f32 %v1791, %v422
      %v2137 = vadd.f32 %v1794, %v429
      %v2138 = vadd.f32 %v1797, %v435
      %v2139 = vadd.f32 %v1800, %v442
      %v2140 = vadd.f32 %v1803, %v448
      %v2141 = vadd.f32 %v1806, %v455
      %v2142 = vadd.f32 %v1809, %v461
      %v2143 = vadd.f32 %v1812, %v468
      %v2144 = vadd.f32 %v1815, %v474
      %v2145 = vadd.f32 %v1818, %v481
      %v2146 = vadd.f32 %v1821, %v487
      %v2147 = vadd.f32 %v1824, %v494
      %v2148 = vadd.f32 %v1827, %v500
      %v2149 = vadd.f32 %v1830, %v507
      %v2150 = vadd.f32 %v1833, %v513
      %v2151 = vadd.f32 %v1836, %v520
      %v2152 = vadd.f32 %v1839, %v526
      %v2153 = vadd.f32 %v1842, %v533
      %v2154 = vadd.f32 %v1845, %v539
      %v2155 = vadd.f32 %v1848, %v546
      %v2156 = vadd.f32 %v1851, %v552
      %v2157 = vadd.f32 %v1854, %v559
      %v2158 = vadd.f32 %v1857, %v565
      %v2159 = vadd.f32 %v1860, %v572
      %v2160 = vadd.f32 %v1863, %v578
      %v2161 = vadd.f32 %v1866, %v585
      %v2162 = vadd.f32 %v1869, %v591
      %v2163 = vadd.f32 %v1872, %v598
      %v2164 = vadd.f32 %v1875, %v604
      %v2165 = vadd.f32 %v1878, %v611
      %v2166 = vadd.f32 %v1881, %v617
      %v2167 = vadd.f32 %v1884, %v624
      %v2168 = vadd.f32 %v1887, %v630
      %v2169 = vadd.f32 %v1890, %v637
      %v2170 = vadd.f32 %v1893, %v643
      %v2171 = vadd.f32 %v1896, %v650
      %v2172 = vadd.f32 %v1899, %v656
      %v2173 = vadd.f32 %v1902, %v663
      %v2174 = vadd.f32 %v1905, %v669
      %v2175 = vadd.f32 %v1908, %v676
      %v2176 = vadd.f32 %v1911, %v682
      %v2177 = vadd.f32 %v1914, %v689
      %v2178 = vadd.f32 %v1917, %v695
      %v2179 = vadd.f32 %v1920, %v702
      %v2180 = vadd.f32 %v1923, %v708
      %v2181 = vadd.f32 %v1926, %v715
      %v2182 = vadd.f32 %v1929, %v721
      %v2183 = vadd.f32 %v1932, %v728
      %v2184 = vadd.f32 %v1935, %v734
      %v2185 = vadd.f32 %v1938, %v741
      %v2186 = vadd.f32 %v1941, %v747
      %v2187 = vadd.f32 %v1944, %v754
      %v2188 = vadd.f32 %v1947, %v760
      %v2189 = vadd.f32 %v1950, %v767
      %v2190 = vadd.f32 %v1953, %v773
      %v2191 = vadd.f32 %v1956, %v780
      %v2192 = vadd.f32 %v1959, %v786
      %v2193 = vadd.f32 %v1962, %v793
      %v2194 = vadd.f32 %v1965, %v799
      %v2195 = vadd.f32 %v1968, %v806
      %v2196 = vadd.f32 %v1971, %v812
      %v2197 = vadd.f32 %v1974, %v819
      %v2198 = vadd.f32 %v1977, %v825
      %v2199 = vadd.f32 %v1980, %v832
      %v2200 = vadd.f32 %v1983, %v838
      %v2201 = vadd.f32 %v1986, %v845
      %v2202 = vadd.f32 %v1989, %v851
      %v2203 = vadd.f32 %v1992, %v858
      %v2204 = vadd.f32 %v1995, %v864
      %v2205 = vadd.f32 %v1998, %v871
      %v2206 = vadd.f32 %v2001, %v877
      %v2207 = vadd.f32 %v2004, %v884
      %v2208 = vadd.f32 %v2007, %v890
      %v2209 = vadd.f32 %v2010, %v897
      %v2210 = vadd.f32 %v2013, %v903
      %v2211 = vadd.f32 %v2016, %v910
      %v2212 = vadd.f32 %v2019, %v916
      %v2213 = vadd.f32 %v2022, %v923
      %v2214 = vadd.f32 %v2025, %v929
      %v2215 = vadd.f32 %v2028, %v936
      %v2216 = vadd.f32 %v2031, %v942
      %v2217 = vadd.f32 %v2034, %v949
      %v2218 = vadd.f32 %v2037, %v955
      %v2219 = vadd.f32 %v2040, %v962
      %v2220 = vadd.f32 %v2043, %v968
      %v2221 = vadd.f32 %v2046, %v975
      %v2222 = vadd.f32 %v2049, %v981
      %v2223 = vadd.f32 %v2052, %v988
      %v2224 = vadd.f32 %v2055, %v994
      %v2225 = vadd.f32 %v2058, %v1001
      %v2226 = vadd.f32 %v2061, %v1007
      %v2227 = vadd.f32 %v2064, %v1014
      %v2228 = vadd.f32 %v2067, %v1020
      %v2229 = vadd.f32 %v2070, %v1027
      %v2230 = vadd.f32 %v2073, %v1033
      %v2231 = vadd.f32 %v2076, %v1040
      %v2232 = vadd.f32 %v2079, %v1046
      %v2233 = vadd.f32 %v2082, %v1053
      %v2234 = vadd.f32 %v2085, %v1059
      %v2235 = vadd.f32 %v2088, %v1066
      %v2236 = vadd.f32 %v2091, %v1072
      %v2237 = vadd.f32 %v2094, %v1079
      %v2238 = vadd.f32 %v2097, %v1085
      %v2239 = vadd.f32 %v2100, %v1092
      %v2240 = vadd.f32 %v2103, %v1098
      %v2241 = vadd.f32 %v2106, %v1105
      %v2242 = vadd.f32 %v2109, %v1111
      %v2243 = vadd.f32 %v2112, %v1118
      %v2244 = vadd.f32 %v2115, %v1124
      %v2245 = vmax.f32 %v2117, %v2118
      %v2246 = vrot.slane %v2245, 4
      %v2247 = vmax.f32 %v2245, %v2246
      %v2248 = vrot.slane %v2247, 2
      %v2249 = vmax.f32 %v2247, %v2248
      %v2250 = vrot.slane %v2249, 1
      %v2251 = vmax.f32 %v2249, %v2250
      %v2252 = vmax.f32 %v2119, %v2120
      %v2253 = vrot.slane %v2252, 4
      %v2254 = vmax.f32 %v2252, %v2253
      %v2255 = vrot.slane %v2254, 2
      %v2256 = vmax.f32 %v2254, %v2255
      %v2257 = vrot.slane %v2256, 1
      %v2258 = vmax.f32 %v2256, %v2257
      %v2259 = vmax.f32 %v2121, %v2122
      %v2260 = vrot.slane %v2259, 4
      %v2261 = vmax.f32 %v2259, %v2260
      %v2262 = vrot.slane %v2261, 2
      %v2263 = vmax.f32 %v2261, %v2262
      %v2264 = vrot.slane %v2263, 1
      %v2265 = vmax.f32 %v2263, %v2264
      %v2266 = vmax.f32 %v2123, %v2124
      %v2267 = vrot.slane %v2266, 4
      %v2268 = vmax.f32 %v2266, %v2267
      %v2269 = vrot.slane %v2268, 2
      %v2270 = vmax.f32 %v2268, %v2269
      %v2271 = vrot.slane %v2270, 1
      %v2272 = vmax.f32 %v2270, %v2271
      %v2273 = vmax.f32 %v2125, %v2126
      %v2274 = vrot.slane %v2273, 4
      %v2275 = vmax.f32 %v2273, %v2274
      %v2276 = vrot.slane %v2275, 2
      %v2277 = vmax.f32 %v2275, %v2276
      %v2278 = vrot.slane %v2277, 1
      %v2279 = vmax.f32 %v2277, %v2278
      %v2280 = vmax.f32 %v2127, %v2128
      %v2281 = vrot.slane %v2280, 4
      %v2282 = vmax.f32 %v2280, %v2281
      %v2283 = vrot.slane %v2282, 2
      %v2284 = vmax.f32 %v2282, %v2283
      %v2285 = vrot.slane %v2284, 1
      %v2286 = vmax.f32 %v2284, %v2285
      %v2287 = vmax.f32 %v2129, %v2130
      %v2288 = vrot.slane %v2287, 4
      %v2289 = vmax.f32 %v2287, %v2288
      %v2290 = vrot.slane %v2289, 2
      %v2291 = vmax.f32 %v2289, %v2290
      %v2292 = vrot.slane %v2291, 1
      %v2293 = vmax.f32 %v2291, %v2292
      %v2294 = vmax.f32 %v2131, %v2132
      %v2295 = vrot.slane %v2294, 4
      %v2296 = vmax.f32 %v2294, %v2295
      %v2297 = vrot.slane %v2296, 2
      %v2298 = vmax.f32 %v2296, %v2297
      %v2299 = vrot.slane %v2298, 1
      %v2300 = vmax.f32 %v2298, %v2299
      %v2301 = vmax.f32 %v2133, %v2134
      %v2302 = vrot.slane %v2301, 4
      %v2303 = vmax.f32 %v2301, %v2302
      %v2304 = vrot.slane %v2303, 2
      %v2305 = vmax.f32 %v2303, %v2304
      %v2306 = vrot.slane %v2305, 1
      %v2307 = vmax.f32 %v2305, %v2306
      %v2308 = vmax.f32 %v2135, %v2136
      %v2309 = vrot.slane %v2308, 4
      %v2310 = vmax.f32 %v2308, %v2309
      %v2311 = vrot.slane %v2310, 2
      %v2312 = vmax.f32 %v2310, %v2311
      %v2313 = vrot.slane %v2312, 1
      %v2314 = vmax.f32 %v2312, %v2313
      %v2315 = vmax.f32 %v2137, %v2138
      %v2316 = vrot.slane %v2315, 4
      %v2317 = vmax.f32 %v2315, %v2316
      %v2318 = vrot.slane %v2317, 2
      %v2319 = vmax.f32 %v2317, %v2318
      %v2320 = vrot.slane %v2319, 1
      %v2321 = vmax.f32 %v2319, %v2320
      %v2322 = vmax.f32 %v2139, %v2140
      %v2323 = vrot.slane %v2322, 4
      %v2324 = vmax.f32 %v2322, %v2323
      %v2325 = vrot.slane %v2324, 2
      %v2326 = vmax.f32 %v2324, %v2325
      %v2327 = vrot.slane %v2326, 1
      %v2328 = vmax.f32 %v2326, %v2327
      %v2329 = vmax.f32 %v2141, %v2142
      %v2330 = vrot.slane %v2329, 4
      %v2331 = vmax.f32 %v2329, %v2330
      %v2332 = vrot.slane %v2331, 2
      %v2333 = vmax.f32 %v2331, %v2332
      %v2334 = vrot.slane %v2333, 1
      %v2335 = vmax.f32 %v2333, %v2334
      %v2336 = vmax.f32 %v2143, %v2144
      %v2337 = vrot.slane %v2336, 4
      %v2338 = vmax.f32 %v2336, %v2337
      %v2339 = vrot.slane %v2338, 2
      %v2340 = vmax.f32 %v2338, %v2339
      %v2341 = vrot.slane %v2340, 1
      %v2342 = vmax.f32 %v2340, %v2341
      %v2343 = vmax.f32 %v2145, %v2146
      %v2344 = vrot.slane %v2343, 4
      %v2345 = vmax.f32 %v2343, %v2344
      %v2346 = vrot.slane %v2345, 2
      %v2347 = vmax.f32 %v2345, %v2346
      %v2348 = vrot.slane %v2347, 1
      %v2349 = vmax.f32 %v2347, %v2348
      %v2350 = vmax.f32 %v2147, %v2148
      %v2351 = vrot.slane %v2350, 4
      %v2352 = vmax.f32 %v2350, %v2351
      %v2353 = vrot.slane %v2352, 2
      %v2354 = vmax.f32 %v2352, %v2353
      %v2355 = vrot.slane %v2354, 1
      %v2356 = vmax.f32 %v2354, %v2355
      %v2357 = vmax.f32 %v2149, %v2150
      %v2358 = vrot.slane %v2357, 4
      %v2359 = vmax.f32 %v2357, %v2358
      %v2360 = vrot.slane %v2359, 2
      %v2361 = vmax.f32 %v2359, %v2360
      %v2362 = vrot.slane %v2361, 1
      %v2363 = vmax.f32 %v2361, %v2362
      %v2364 = vmax.f32 %v2151, %v2152
      %v2365 = vrot.slane %v2364, 4
      %v2366 = vmax.f32 %v2364, %v2365
      %v2367 = vrot.slane %v2366, 2
      %v2368 = vmax.f32 %v2366, %v2367
      %v2369 = vrot.slane %v2368, 1
      %v2370 = vmax.f32 %v2368, %v2369
      %v2371 = vmax.f32 %v2153, %v2154
      %v2372 = vrot.slane %v2371, 4
      %v2373 = vmax.f32 %v2371, %v2372
      %v2374 = vrot.slane %v2373, 2
      %v2375 = vmax.f32 %v2373, %v2374
      %v2376 = vrot.slane %v2375, 1
      %v2377 = vmax.f32 %v2375, %v2376
      %v2378 = vmax.f32 %v2155, %v2156
      %v2379 = vrot.slane %v2378, 4
      %v2380 = vmax.f32 %v2378, %v2379
      %v2381 = vrot.slane %v2380, 2
      %v2382 = vmax.f32 %v2380, %v2381
      %v2383 = vrot.slane %v2382, 1
      %v2384 = vmax.f32 %v2382, %v2383
      %v2385 = vmax.f32 %v2157, %v2158
      %v2386 = vrot.slane %v2385, 4
      %v2387 = vmax.f32 %v2385, %v2386
      %v2388 = vrot.slane %v2387, 2
      %v2389 = vmax.f32 %v2387, %v2388
      %v2390 = vrot.slane %v2389, 1
      %v2391 = vmax.f32 %v2389, %v2390
      %v2392 = vmax.f32 %v2159, %v2160
      %v2393 = vrot.slane %v2392, 4
      %v2394 = vmax.f32 %v2392, %v2393
      %v2395 = vrot.slane %v2394, 2
      %v2396 = vmax.f32 %v2394, %v2395
      %v2397 = vrot.slane %v2396, 1
      %v2398 = vmax.f32 %v2396, %v2397
      %v2399 = vmax.f32 %v2161, %v2162
      %v2400 = vrot.slane %v2399, 4
      %v2401 = vmax.f32 %v2399, %v2400
      %v2402 = vrot.slane %v2401, 2
      %v2403 = vmax.f32 %v2401, %v2402
      %v2404 = vrot.slane %v2403, 1
      %v2405 = vmax.f32 %v2403, %v2404
      %v2406 = vmax.f32 %v2163, %v2164
      %v2407 = vrot.slane %v2406, 4
      %v2408 = vmax.f32 %v2406, %v2407
      %v2409 = vrot.slane %v2408, 2
      %v2410 = vmax.f32 %v2408, %v2409
      %v2411 = vrot.slane %v2410, 1
      %v2412 = vmax.f32 %v2410, %v2411
      %v2413 = vmax.f32 %v2165, %v2166
      %v2414 = vrot.slane %v2413, 4
      %v2415 = vmax.f32 %v2413, %v2414
      %v2416 = vrot.slane %v2415, 2
      %v2417 = vmax.f32 %v2415, %v2416
      %v2418 = vrot.slane %v2417, 1
      %v2419 = vmax.f32 %v2417, %v2418
      %v2420 = vmax.f32 %v2167, %v2168
      %v2421 = vrot.slane %v2420, 4
      %v2422 = vmax.f32 %v2420, %v2421
      %v2423 = vrot.slane %v2422, 2
      %v2424 = vmax.f32 %v2422, %v2423
      %v2425 = vrot.slane %v2424, 1
      %v2426 = vmax.f32 %v2424, %v2425
      %v2427 = vmax.f32 %v2169, %v2170
      %v2428 = vrot.slane %v2427, 4
      %v2429 = vmax.f32 %v2427, %v2428
      %v2430 = vrot.slane %v2429, 2
      %v2431 = vmax.f32 %v2429, %v2430
      %v2432 = vrot.slane %v2431, 1
      %v2433 = vmax.f32 %v2431, %v2432
      %v2434 = vmax.f32 %v2171, %v2172
      %v2435 = vrot.slane %v2434, 4
      %v2436 = vmax.f32 %v2434, %v2435
      %v2437 = vrot.slane %v2436, 2
      %v2438 = vmax.f32 %v2436, %v2437
      %v2439 = vrot.slane %v2438, 1
      %v2440 = vmax.f32 %v2438, %v2439
      %v2441 = vmax.f32 %v2173, %v2174
      %v2442 = vrot.slane %v2441, 4
      %v2443 = vmax.f32 %v2441, %v2442
      %v2444 = vrot.slane %v2443, 2
      %v2445 = vmax.f32 %v2443, %v2444
      %v2446 = vrot.slane %v2445, 1
      %v2447 = vmax.f32 %v2445, %v2446
      %v2448 = vmax.f32 %v2175, %v2176
      %v2449 = vrot.slane %v2448, 4
      %v2450 = vmax.f32 %v2448, %v2449
      %v2451 = vrot.slane %v2450, 2
      %v2452 = vmax.f32 %v2450, %v2451
      %v2453 = vrot.slane %v2452, 1
      %v2454 = vmax.f32 %v2452, %v2453
      %v2455 = vmax.f32 %v2177, %v2178
      %v2456 = vrot.slane %v2455, 4
      %v2457 = vmax.f32 %v2455, %v2456
      %v2458 = vrot.slane %v2457, 2
      %v2459 = vmax.f32 %v2457, %v2458
      %v2460 = vrot.slane %v2459, 1
      %v2461 = vmax.f32 %v2459, %v2460
      %v2462 = vmax.f32 %v2179, %v2180
      %v2463 = vrot.slane %v2462, 4
      %v2464 = vmax.f32 %v2462, %v2463
      %v2465 = vrot.slane %v2464, 2
      %v2466 = vmax.f32 %v2464, %v2465
      %v2467 = vrot.slane %v2466, 1
      %v2468 = vmax.f32 %v2466, %v2467
      %v2469 = vmax.f32 %v2181, %v2182
      %v2470 = vrot.slane %v2469, 4
      %v2471 = vmax.f32 %v2469, %v2470
      %v2472 = vrot.slane %v2471, 2
      %v2473 = vmax.f32 %v2471, %v2472
      %v2474 = vrot.slane %v2473, 1
      %v2475 = vmax.f32 %v2473, %v2474
      %v2476 = vmax.f32 %v2183, %v2184
      %v2477 = vrot.slane %v2476, 4
      %v2478 = vmax.f32 %v2476, %v2477
      %v2479 = vrot.slane %v2478, 2
      %v2480 = vmax.f32 %v2478, %v2479
      %v2481 = vrot.slane %v2480, 1
      %v2482 = vmax.f32 %v2480, %v2481
      %v2483 = vmax.f32 %v2185, %v2186
      %v2484 = vrot.slane %v2483, 4
      %v2485 = vmax.f32 %v2483, %v2484
      %v2486 = vrot.slane %v2485, 2
      %v2487 = vmax.f32 %v2485, %v2486
      %v2488 = vrot.slane %v2487, 1
      %v2489 = vmax.f32 %v2487, %v2488
      %v2490 = vmax.f32 %v2187, %v2188
      %v2491 = vrot.slane %v2490, 4
      %v2492 = vmax.f32 %v2490, %v2491
      %v2493 = vrot.slane %v2492, 2
      %v2494 = vmax.f32 %v2492, %v2493
      %v2495 = vrot.slane %v2494, 1
      %v2496 = vmax.f32 %v2494, %v2495
      %v2497 = vmax.f32 %v2189, %v2190
      %v2498 = vrot.slane %v2497, 4
      %v2499 = vmax.f32 %v2497, %v2498
      %v2500 = vrot.slane %v2499, 2
      %v2501 = vmax.f32 %v2499, %v2500
      %v2502 = vrot.slane %v2501, 1
      %v2503 = vmax.f32 %v2501, %v2502
      %v2504 = vmax.f32 %v2191, %v2192
      %v2505 = vrot.slane %v2504, 4
      %v2506 = vmax.f32 %v2504, %v2505
      %v2507 = vrot.slane %v2506, 2
      %v2508 = vmax.f32 %v2506, %v2507
      %v2509 = vrot.slane %v2508, 1
      %v2510 = vmax.f32 %v2508, %v2509
      %v2511 = vmax.f32 %v2193, %v2194
      %v2512 = vrot.slane %v2511, 4
      %v2513 = vmax.f32 %v2511, %v2512
      %v2514 = vrot.slane %v2513, 2
      %v2515 = vmax.f32 %v2513, %v2514
      %v2516 = vrot.slane %v2515, 1
      %v2517 = vmax.f32 %v2515, %v2516
      %v2518 = vmax.f32 %v2195, %v2196
      %v2519 = vrot.slane %v2518, 4
      %v2520 = vmax.f32 %v2518, %v2519
      %v2521 = vrot.slane %v2520, 2
      %v2522 = vmax.f32 %v2520, %v2521
      %v2523 = vrot.slane %v2522, 1
      %v2524 = vmax.f32 %v2522, %v2523
      %v2525 = vmax.f32 %v2197, %v2198
      %v2526 = vrot.slane %v2525, 4
      %v2527 = vmax.f32 %v2525, %v2526
      %v2528 = vrot.slane %v2527, 2
      %v2529 = vmax.f32 %v2527, %v2528
      %v2530 = vrot.slane %v2529, 1
      %v2531 = vmax.f32 %v2529, %v2530
      %v2532 = vmax.f32 %v2199, %v2200
      %v2533 = vrot.slane %v2532, 4
      %v2534 = vmax.f32 %v2532, %v2533
      %v2535 = vrot.slane %v2534, 2
      %v2536 = vmax.f32 %v2534, %v2535
      %v2537 = vrot.slane %v2536, 1
      %v2538 = vmax.f32 %v2536, %v2537
      %v2539 = vmax.f32 %v2201, %v2202
      %v2540 = vrot.slane %v2539, 4
      %v2541 = vmax.f32 %v2539, %v2540
      %v2542 = vrot.slane %v2541, 2
      %v2543 = vmax.f32 %v2541, %v2542
      %v2544 = vrot.slane %v2543, 1
      %v2545 = vmax.f32 %v2543, %v2544
      %v2546 = vmax.f32 %v2203, %v2204
      %v2547 = vrot.slane %v2546, 4
      %v2548 = vmax.f32 %v2546, %v2547
      %v2549 = vrot.slane %v2548, 2
      %v2550 = vmax.f32 %v2548, %v2549
      %v2551 = vrot.slane %v2550, 1
      %v2552 = vmax.f32 %v2550, %v2551
      %v2553 = vmax.f32 %v2205, %v2206
      %v2554 = vrot.slane %v2553, 4
      %v2555 = vmax.f32 %v2553, %v2554
      %v2556 = vrot.slane %v2555, 2
      %v2557 = vmax.f32 %v2555, %v2556
      %v2558 = vrot.slane %v2557, 1
      %v2559 = vmax.f32 %v2557, %v2558
      %v2560 = vmax.f32 %v2207, %v2208
      %v2561 = vrot.slane %v2560, 4
      %v2562 = vmax.f32 %v2560, %v2561
      %v2563 = vrot.slane %v2562, 2
      %v2564 = vmax.f32 %v2562, %v2563
      %v2565 = vrot.slane %v2564, 1
      %v2566 = vmax.f32 %v2564, %v2565
      %v2567 = vmax.f32 %v2209, %v2210
      %v2568 = vrot.slane %v2567, 4
      %v2569 = vmax.f32 %v2567, %v2568
      %v2570 = vrot.slane %v2569, 2
      %v2571 = vmax.f32 %v2569, %v2570
      %v2572 = vrot.slane %v2571, 1
      %v2573 = vmax.f32 %v2571, %v2572
      %v2574 = vmax.f32 %v2211, %v2212
      %v2575 = vrot.slane %v2574, 4
      %v2576 = vmax.f32 %v2574, %v2575
      %v2577 = vrot.slane %v2576, 2
      %v2578 = vmax.f32 %v2576, %v2577
      %v2579 = vrot.slane %v2578, 1
      %v2580 = vmax.f32 %v2578, %v2579
      %v2581 = vmax.f32 %v2213, %v2214
      %v2582 = vrot.slane %v2581, 4
      %v2583 = vmax.f32 %v2581, %v2582
      %v2584 = vrot.slane %v2583, 2
      %v2585 = vmax.f32 %v2583, %v2584
      %v2586 = vrot.slane %v2585, 1
      %v2587 = vmax.f32 %v2585, %v2586
      %v2588 = vmax.f32 %v2215, %v2216
      %v2589 = vrot.slane %v2588, 4
      %v2590 = vmax.f32 %v2588, %v2589
      %v2591 = vrot.slane %v2590, 2
      %v2592 = vmax.f32 %v2590, %v2591
      %v2593 = vrot.slane %v2592, 1
      %v2594 = vmax.f32 %v2592, %v2593
      %v2595 = vmax.f32 %v2217, %v2218
      %v2596 = vrot.slane %v2595, 4
      %v2597 = vmax.f32 %v2595, %v2596
      %v2598 = vrot.slane %v2597, 2
      %v2599 = vmax.f32 %v2597, %v2598
      %v2600 = vrot.slane %v2599, 1
      %v2601 = vmax.f32 %v2599, %v2600
      %v2602 = vmax.f32 %v2219, %v2220
      %v2603 = vrot.slane %v2602, 4
      %v2604 = vmax.f32 %v2602, %v2603
      %v2605 = vrot.slane %v2604, 2
      %v2606 = vmax.f32 %v2604, %v2605
      %v2607 = vrot.slane %v2606, 1
      %v2608 = vmax.f32 %v2606, %v2607
      %v2609 = vmax.f32 %v2221, %v2222
      %v2610 = vrot.slane %v2609, 4
      %v2611 = vmax.f32 %v2609, %v2610
      %v2612 = vrot.slane %v2611, 2
      %v2613 = vmax.f32 %v2611, %v2612
      %v2614 = vrot.slane %v2613, 1
      %v2615 = vmax.f32 %v2613, %v2614
      %v2616 = vmax.f32 %v2223, %v2224
      %v2617 = vrot.slane %v2616, 4
      %v2618 = vmax.f32 %v2616, %v2617
      %v2619 = vrot.slane %v2618, 2
      %v2620 = vmax.f32 %v2618, %v2619
      %v2621 = vrot.slane %v2620, 1
      %v2622 = vmax.f32 %v2620, %v2621
      %v2623 = vmax.f32 %v2225, %v2226
      %v2624 = vrot.slane %v2623, 4
      %v2625 = vmax.f32 %v2623, %v2624
      %v2626 = vrot.slane %v2625, 2
      %v2627 = vmax.f32 %v2625, %v2626
      %v2628 = vrot.slane %v2627, 1
      %v2629 = vmax.f32 %v2627, %v2628
      %v2630 = vmax.f32 %v2227, %v2228
      %v2631 = vrot.slane %v2630, 4
      %v2632 = vmax.f32 %v2630, %v2631
      %v2633 = vrot.slane %v2632, 2
      %v2634 = vmax.f32 %v2632, %v2633
      %v2635 = vrot.slane %v2634, 1
      %v2636 = vmax.f32 %v2634, %v2635
      %v2637 = vmax.f32 %v2229, %v2230
      %v2638 = vrot.slane %v2637, 4
      %v2639 = vmax.f32 %v2637, %v2638
      %v2640 = vrot.slane %v2639, 2
      %v2641 = vmax.f32 %v2639, %v2640
      %v2642 = vrot.slane %v2641, 1
      %v2643 = vmax.f32 %v2641, %v2642
      %v2644 = vmax.f32 %v2231, %v2232
      %v2645 = vrot.slane %v2644, 4
      %v2646 = vmax.f32 %v2644, %v2645
      %v2647 = vrot.slane %v2646, 2
      %v2648 = vmax.f32 %v2646, %v2647
      %v2649 = vrot.slane %v2648, 1
      %v2650 = vmax.f32 %v2648, %v2649
      %v2651 = vmax.f32 %v2233, %v2234
      %v2652 = vrot.slane %v2651, 4
      %v2653 = vmax.f32 %v2651, %v2652
      %v2654 = vrot.slane %v2653, 2
      %v2655 = vmax.f32 %v2653, %v2654
      %v2656 = vrot.slane %v2655, 1
      %v2657 = vmax.f32 %v2655, %v2656
      %v2658 = vmax.f32 %v2235, %v2236
      %v2659 = vrot.slane %v2658, 4
      %v2660 = vmax.f32 %v2658, %v2659
      %v2661 = vrot.slane %v2660, 2
      %v2662 = vmax.f32 %v2660, %v2661
      %v2663 = vrot.slane %v2662, 1
      %v2664 = vmax.f32 %v2662, %v2663
      %v2665 = vmax.f32 %v2237, %v2238
      %v2666 = vrot.slane %v2665, 4
      %v2667 = vmax.f32 %v2665, %v2666
      %v2668 = vrot.slane %v2667, 2
      %v2669 = vmax.f32 %v2667, %v2668
      %v2670 = vrot.slane %v2669, 1
      %v2671 = vmax.f32 %v2669, %v2670
      %v2672 = vmax.f32 %v2239, %v2240
      %v2673 = vrot.slane %v2672, 4
      %v2674 = vmax.f32 %v2672, %v2673
      %v2675 = vrot.slane %v2674, 2
      %v2676 = vmax.f32 %v2674, %v2675
      %v2677 = vrot.slane %v2676, 1
      %v2678 = vmax.f32 %v2676, %v2677
      %v2679 = vmax.f32 %v2241, %v2242
      %v2680 = vrot.slane %v2679, 4
      %v2681 = vmax.f32 %v2679, %v2680
      %v2682 = vrot.slane %v2681, 2
      %v2683 = vmax.f32 %v2681, %v2682
      %v2684 = vrot.slane %v2683, 1
      %v2685 = vmax.f32 %v2683, %v2684
      %v2686 = vmax.f32 %v2243, %v2244
      %v2687 = vrot.slane %v2686, 4
      %v2688 = vmax.f32 %v2686, %v2687
      %v2689 = vrot.slane %v2688, 2
      %v2690 = vmax.f32 %v2688, %v2689
      %v2691 = vrot.slane %v2690, 1
      %v2692 = vmax.f32 %v2690, %v2691
      %v2694 = vperm.slane %v1174, 0
      %v2696 = vadd.f32 %v2251, %v2694
      %v2697 = vadd.f32 %v2258, %v2694
      %v2698 = vadd.f32 %v2265, %v2694
      %v2699 = vadd.f32 %v2272, %v2694
      %v2700 = vadd.f32 %v2279, %v2694
      %v2701 = vadd.f32 %v2286, %v2694
      %v2702 = vadd.f32 %v2293, %v2694
      %v2703 = vadd.f32 %v2300, %v2694
      %v2704 = vadd.f32 %v2307, %v2694
      %v2705 = vadd.f32 %v2314, %v2694
      %v2706 = vadd.f32 %v2321, %v2694
      %v2707 = vadd.f32 %v2328, %v2694
      %v2708 = vadd.f32 %v2335, %v2694
      %v2709 = vadd.f32 %v2342, %v2694
      %v2710 = vadd.f32 %v2349, %v2694
      %v2711 = vadd.f32 %v2356, %v2694
      %v2712 = vadd.f32 %v2363, %v2694
      %v2713 = vadd.f32 %v2370, %v2694
      %v2714 = vadd.f32 %v2377, %v2694
      %v2715 = vadd.f32 %v2384, %v2694
      %v2716 = vadd.f32 %v2391, %v2694
      %v2717 = vadd.f32 %v2398, %v2694
      %v2718 = vadd.f32 %v2405, %v2694
      %v2719 = vadd.f32 %v2412, %v2694
      %v2720 = vadd.f32 %v2419, %v2694
      %v2721 = vadd.f32 %v2426, %v2694
      %v2722 = vadd.f32 %v2433, %v2694
      %v2723 = vadd.f32 %v2440, %v2694
      %v2724 = vadd.f32 %v2447, %v2694
      %v2725 = vadd.f32 %v2454, %v2694
      %v2726 = vadd.f32 %v2461, %v2694
      %v2727 = vadd.f32 %v2468, %v2694
      %v2728 = vadd.f32 %v2475, %v2694
      %v2729 = vadd.f32 %v2482, %v2694
      %v2730 = vadd.f32 %v2489, %v2694
      %v2731 = vadd.f32 %v2496, %v2694
      %v2732 = vadd.f32 %v2503, %v2694
      %v2733 = vadd.f32 %v2510, %v2694
      %v2734 = vadd.f32 %v2517, %v2694
      %v2735 = vadd.f32 %v2524, %v2694
      %v2736 = vadd.f32 %v2531, %v2694
      %v2737 = vadd.f32 %v2538, %v2694
      %v2738 = vadd.f32 %v2545, %v2694
      %v2739 = vadd.f32 %v2552, %v2694
      %v2740 = vadd.f32 %v2559, %v2694
      %v2741 = vadd.f32 %v2566, %v2694
      %v2742 = vadd.f32 %v2573, %v2694
      %v2743 = vadd.f32 %v2580, %v2694
      %v2744 = vadd.f32 %v2587, %v2694
      %v2745 = vadd.f32 %v2594, %v2694
      %v2746 = vadd.f32 %v2601, %v2694
      %v2747 = vadd.f32 %v2608, %v2694
      %v2748 = vadd.f32 %v2615, %v2694
      %v2749 = vadd.f32 %v2622, %v2694
      %v2750 = vadd.f32 %v2629, %v2694
      %v2751 = vadd.f32 %v2636, %v2694
      %v2752 = vadd.f32 %v2643, %v2694
      %v2753 = vadd.f32 %v2650, %v2694
      %v2754 = vadd.f32 %v2657, %v2694
      %v2755 = vadd.f32 %v2664, %v2694
      %v2756 = vadd.f32 %v2671, %v2694
      %v2757 = vadd.f32 %v2678, %v2694
      %v2758 = vadd.f32 %v2685, %v2694
      %v2759 = vadd.f32 %v2692, %v2694
      %v2760 = vmax.f32 %v2696, 0.0
      %v2761 = vmax.f32 %v2697, 0.0
      %v2762 = vmax.f32 %v2698, 0.0
      %v2763 = vmax.f32 %v2699, 0.0
      %v2764 = vmax.f32 %v2700, 0.0
      %v2765 = vmax.f32 %v2701, 0.0
      %v2766 = vmax.f32 %v2702, 0.0
      %v2767 = vmax.f32 %v2703, 0.0
      %v2768 = vmax.f32 %v2704, 0.0
      %v2769 = vmax.f32 %v2705, 0.0
      %v2770 = vmax.f32 %v2706, 0.0
      %v2771 = vmax.f32 %v2707, 0.0
      %v2772 = vmax.f32 %v2708, 0.0
      %v2773 = vmax.f32 %v2709, 0.0
      %v2774 = vmax.f32 %v2710, 0.0
      %v2775 = vmax.f32 %v2711, 0.0
      %v2776 = vmax.f32 %v2712, 0.0
      %v2777 = vmax.f32 %v2713, 0.0
      %v2778 = vmax.f32 %v2714, 0.0
      %v2779 = vmax.f32 %v2715, 0.0
      %v2780 = vmax.f32 %v2716, 0.0
      %v2781 = vmax.f32 %v2717, 0.0
      %v2782 = vmax.f32 %v2718, 0.0
      %v2783 = vmax.f32 %v2719, 0.0
      %v2784 = vmax.f32 %v2720, 0.0
      %v2785 = vmax.f32 %v2721, 0.0
      %v2786 = vmax.f32 %v2722, 0.0
      %v2787 = vmax.f32 %v2723, 0.0
      %v2788 = vmax.f32 %v2724, 0.0
      %v2789 = vmax.f32 %v2725, 0.0
      %v2790 = vmax.f32 %v2726, 0.0
      %v2791 = vmax.f32 %v2727, 0.0
      %v2792 = vmax.f32 %v2728, 0.0
      %v2793 = vmax.f32 %v2729, 0.0
      %v2794 = vmax.f32 %v2730, 0.0
      %v2795 = vmax.f32 %v2731, 0.0
      %v2796 = vmax.f32 %v2732, 0.0
      %v2797 = vmax.f32 %v2733, 0.0
      %v2798 = vmax.f32 %v2734, 0.0
      %v2799 = vmax.f32 %v2735, 0.0
      %v2800 = vmax.f32 %v2736, 0.0
      %v2801 = vmax.f32 %v2737, 0.0
      %v2802 = vmax.f32 %v2738, 0.0
      %v2803 = vmax.f32 %v2739, 0.0
      %v2804 = vmax.f32 %v2740, 0.0
      %v2805 = vmax.f32 %v2741, 0.0
      %v2806 = vmax.f32 %v2742, 0.0
      %v2807 = vmax.f32 %v2743, 0.0
      %v2808 = vmax.f32 %v2744, 0.0
      %v2809 = vmax.f32 %v2745, 0.0
      %v2810 = vmax.f32 %v2746, 0.0
      %v2811 = vmax.f32 %v2747, 0.0
      %v2812 = vmax.f32 %v2748, 0.0
      %v2813 = vmax.f32 %v2749, 0.0
      %v2814 = vmax.f32 %v2750, 0.0
      %v2815 = vmax.f32 %v2751, 0.0
      %v2816 = vmax.f32 %v2752, 0.0
      %v2817 = vmax.f32 %v2753, 0.0
      %v2818 = vmax.f32 %v2754, 0.0
      %v2819 = vmax.f32 %v2755, 0.0
      %v2820 = vmax.f32 %v2756, 0.0
      %v2821 = vmax.f32 %v2757, 0.0
      %v2822 = vmax.f32 %v2758, 0.0
      %v2823 = vmax.f32 %v2759, 0.0
      %s2824 = scalar_lea.vmem %s2, 256
      %v2825 = vld [vmem:[%s2824] sm:$0xff]
      %v2826 = vld [vmem:[%s2824 + $0x8] sm:$0xff]
      %v2827 = vld [vmem:[%s2824 + $0x10] sm:$0xff]
      %v2828 = vld [vmem:[%s2824 + $0x18] sm:$0xff]
      %v2829 = vld [vmem:[%s2824 + $0x20] sm:$0xff]
      %v2830 = vld [vmem:[%s2824 + $0x28] sm:$0xff]
      %v2831 = vld [vmem:[%s2824 + $0x30] sm:$0xff]
      %v2832 = vld [vmem:[%s2824 + $0x38] sm:$0xff]
      %v2833 = vld [vmem:[%s2824 + $0x40] sm:$0xff]
      %v2834 = vld [vmem:[%s2824 + $0x48] sm:$0xff]
      %v2835 = vld [vmem:[%s2824 + $0x50] sm:$0xff]
      %v2836 = vld [vmem:[%s2824 + $0x58] sm:$0xff]
      %v2837 = vld [vmem:[%s2824 + $0x60] sm:$0xff]
      %v2838 = vld [vmem:[%s2824 + $0x68] sm:$0xff]
      %v2839 = vld [vmem:[%s2824 + $0x70] sm:$0xff]
      %v2840 = vld [vmem:[%s2824 + $0x78] sm:$0xff]
      %v2841 = vld [vmem:[%s2824 + $0x80] sm:$0xff]
      %v2842 = vld [vmem:[%s2824 + $0x88] sm:$0xff]
      %v2843 = vld [vmem:[%s2824 + $0x90] sm:$0xff]
      %v2844 = vld [vmem:[%s2824 + $0x98] sm:$0xff]
      %v2845 = vld [vmem:[%s2824 + $0xa0] sm:$0xff]
      %v2846 = vld [vmem:[%s2824 + $0xa8] sm:$0xff]
      %v2847 = vld [vmem:[%s2824 + $0xb0] sm:$0xff]
      %v2848 = vld [vmem:[%s2824 + $0xb8] sm:$0xff]
      %v2849 = vld [vmem:[%s2824 + $0xc0] sm:$0xff]
      %v2850 = vld [vmem:[%s2824 + $0xc8] sm:$0xff]
      %v2851 = vld [vmem:[%s2824 + $0xd0] sm:$0xff]
      %v2852 = vld [vmem:[%s2824 + $0xd8] sm:$0xff]
      %v2853 = vld [vmem:[%s2824 + $0xe0] sm:$0xff]
      %v2854 = vld [vmem:[%s2824 + $0xe8] sm:$0xff]
      %v2855 = vld [vmem:[%s2824 + $0xf0] sm:$0xff]
      %v2856 = vld [vmem:[%s2824 + $0xf8] sm:$0xff]
      %s2857 = scalar_lea.vmem %s3, 1
      %v2858 = vld [vmem:[%s2857] sm:$0x1]
      %s2859 = scalar_lea.vmem %s4, 128
      %v2860 = vld [vmem:[%s2859] sm:$0xff]
      %v2861 = vld [vmem:[%s2859 + $0x8] sm:$0xff]
      %v2862 = vld [vmem:[%s2859 + $0x10] sm:$0xff]
      %v2863 = vld [vmem:[%s2859 + $0x18] sm:$0xff]
      %v2864 = vld [vmem:[%s2859 + $0x20] sm:$0xff]
      %v2865 = vld [vmem:[%s2859 + $0x28] sm:$0xff]
      %v2866 = vld [vmem:[%s2859 + $0x30] sm:$0xff]
      %v2867 = vld [vmem:[%s2859 + $0x38] sm:$0xff]
      %v2868 = vld [vmem:[%s2859 + $0x40] sm:$0xff]
      %v2869 = vld [vmem:[%s2859 + $0x48] sm:$0xff]
      %v2870 = vld [vmem:[%s2859 + $0x50] sm:$0xff]
      %v2871 = vld [vmem:[%s2859 + $0x58] sm:$0xff]
      %v2872 = vld [vmem:[%s2859 + $0x60] sm:$0xff]
      %v2873 = vld [vmem:[%s2859 + $0x68] sm:$0xff]
      %v2874 = vld [vmem:[%s2859 + $0x70] sm:$0xff]
      %v2875 = vld [vmem:[%s2859 + $0x78] sm:$0xff]
      %s2876 = scalar_lea.vmem %s5, 1
      %v2877 = vld [vmem:[%s2876] sm:$0x1]
      %v2942 = vrot.slane %v2761, 7
      %vm2943 = vcmask 1041409
      %v2944 = vsel %vm2943, %v2942, %v2760
      %v2945 = vrot.slane %v2762, 6
      %vm2946 = vcmask 1042434
      %v2947 = vsel %vm2946, %v2945, %v2944
      %v2948 = vrot.slane %v2763, 5
      %vm2949 = vcmask 1043459
      %v2950 = vsel %vm2949, %v2948, %v2947
      %v2951 = vrot.slane %v2764, 4
      %vm2952 = vcmask 1044484
      %v2953 = vsel %vm2952, %v2951, %v2950
      %v2954 = vrot.slane %v2765, 3
      %vm2955 = vcmask 1045509
      %v2956 = vsel %vm2955, %v2954, %v2953
      %v2957 = vrot.slane %v2766, 2
      %vm2958 = vcmask 1046534
      %v2959 = vsel %vm2958, %v2957, %v2956
      %v2960 = vrot.slane %v2767, 1
      %vm2961 = vcmask 1047559
      %v2962 = vsel %vm2961, %v2960, %v2959
      %v2963 = vrot.slane %v2769, 7
      %v2964 = vsel %vm2943, %v2963, %v2768
      %v2965 = vrot.slane %v2770, 6
      %v2966 = vsel %vm2946, %v2965, %v2964
      %v2967 = vrot.slane %v2771, 5
      %v2968 = vsel %vm2949, %v2967, %v2966
      %v2969 = vrot.slane %v2772, 4
      %v2970 = vsel %vm2952, %v2969, %v2968
      %v2971 = vrot.slane %v2773, 3
      %v2972 = vsel %vm2955, %v2971, %v2970
      %v2973 = vrot.slane %v2774, 2
      %v2974 = vsel %vm2958, %v2973, %v2972
      %v2975 = vrot.slane %v2775, 1
      %v2976 = vsel %vm2961, %v2975, %v2974
      %v2977 = vrot.slane %v2777, 7
      %v2978 = vsel %vm2943, %v2977, %v2776
      %v2979 = vrot.slane %v2778, 6
      %v2980 = vsel %vm2946, %v2979, %v2978
      %v2981 = vrot.slane %v2779, 5
      %v2982 = vsel %vm2949, %v2981, %v2980
      %v2983 = vrot.slane %v2780, 4
      %v2984 = vsel %vm2952, %v2983, %v2982
      %v2985 = vrot.slane %v2781, 3
      %v2986 = vsel %vm2955, %v2985, %v2984
      %v2987 = vrot.slane %v2782, 2
      %v2988 = vsel %vm2958, %v2987, %v2986
      %v2989 = vrot.slane %v2783, 1
      %v2990 = vsel %vm2961, %v2989, %v2988
      %v2991 = vrot.slane %v2785, 7
      %v2992 = vsel %vm2943, %v2991, %v2784
      %v2993 = vrot.slane %v2786, 6
      %v2994 = vsel %vm2946, %v2993, %v2992
      %v2995 = vrot.slane %v2787, 5
      %v2996 = vsel %vm2949, %v2995, %v2994
      %v2997 = vrot.slane %v2788, 4
      %v2998 = vsel %vm2952, %v2997, %v2996
      %v2999 = vrot.slane %v2789, 3
      %v3000 = vsel %vm2955, %v2999, %v2998
      %v3001 = vrot.slane %v2790, 2
      %v3002 = vsel %vm2958, %v3001, %v3000
      %v3003 = vrot.slane %v2791, 1
      %v3004 = vsel %vm2961, %v3003, %v3002
      %v3005 = vrot.slane %v2793, 7
      %v3006 = vsel %vm2943, %v3005, %v2792
      %v3007 = vrot.slane %v2794, 6
      %v3008 = vsel %vm2946, %v3007, %v3006
      %v3009 = vrot.slane %v2795, 5
      %v3010 = vsel %vm2949, %v3009, %v3008
      %v3011 = vrot.slane %v2796, 4
      %v3012 = vsel %vm2952, %v3011, %v3010
      %v3013 = vrot.slane %v2797, 3
      %v3014 = vsel %vm2955, %v3013, %v3012
      %v3015 = vrot.slane %v2798, 2
      %v3016 = vsel %vm2958, %v3015, %v3014
      %v3017 = vrot.slane %v2799, 1
      %v3018 = vsel %vm2961, %v3017, %v3016
      %v3019 = vrot.slane %v2801, 7
      %v3020 = vsel %vm2943, %v3019, %v2800
      %v3021 = vrot.slane %v2802, 6
      %v3022 = vsel %vm2946, %v3021, %v3020
      %v3023 = vrot.slane %v2803, 5
      %v3024 = vsel %vm2949, %v3023, %v3022
      %v3025 = vrot.slane %v2804, 4
      %v3026 = vsel %vm2952, %v3025, %v3024
      %v3027 = vrot.slane %v2805, 3
      %v3028 = vsel %vm2955, %v3027, %v3026
      %v3029 = vrot.slane %v2806, 2
      %v3030 = vsel %vm2958, %v3029, %v3028
      %v3031 = vrot.slane %v2807, 1
      %v3032 = vsel %vm2961, %v3031, %v3030
      %v3033 = vrot.slane %v2809, 7
      %v3034 = vsel %vm2943, %v3033, %v2808
      %v3035 = vrot.slane %v2810, 6
      %v3036 = vsel %vm2946, %v3035, %v3034
      %v3037 = vrot.slane %v2811, 5
      %v3038 = vsel %vm2949, %v3037, %v3036
      %v3039 = vrot.slane %v2812, 4
      %v3040 = vsel %vm2952, %v3039, %v3038
      %v3041 = vrot.slane %v2813, 3
      %v3042 = vsel %vm2955, %v3041, %v3040
      %v3043 = vrot.slane %v2814, 2
      %v3044 = vsel %vm2958, %v3043, %v3042
      %v3045 = vrot.slane %v2815, 1
      %v3046 = vsel %vm2961, %v3045, %v3044
      %v3047 = vrot.slane %v2817, 7
      %v3048 = vsel %vm2943, %v3047, %v2816
      %v3049 = vrot.slane %v2818, 6
      %v3050 = vsel %vm2946, %v3049, %v3048
      %v3051 = vrot.slane %v2819, 5
      %v3052 = vsel %vm2949, %v3051, %v3050
      %v3053 = vrot.slane %v2820, 4
      %v3054 = vsel %vm2952, %v3053, %v3052
      %v3055 = vrot.slane %v2821, 3
      %v3056 = vsel %vm2955, %v3055, %v3054
      %v3057 = vrot.slane %v2822, 2
      %v3058 = vsel %vm2958, %v3057, %v3056
      %v3059 = vrot.slane %v2823, 1
      %v3060 = vsel %vm2961, %v3059, %v3058
      %3069 = vmatpush.msra.mxu0 %v2855
      %3070 = vmatpush.msra.mxu0 %v2853
      %3071 = vmatpush.msra.mxu0 %v2851
      %3072 = vmatpush.msra.mxu0 %v2849
      %3073 = vmatpush.msra.mxu0 %v2847
      %3074 = vmatpush.msra.mxu0 %v2845
      %3075 = vmatpush.msra.mxu0 %v2843
      %3076 = vmatpush.msra.mxu0 %v2841
      %3077 = vmatpush.msra.mxu0 %v2839
      %3078 = vmatpush.msra.mxu0 %v2837
      %3079 = vmatpush.msra.mxu0 %v2835
      %3080 = vmatpush.msra.mxu0 %v2833
      %3081 = vmatpush.msra.mxu0 %v2831
      %3082 = vmatpush.msra.mxu0 %v2829
      %3083 = vmatpush.msra.mxu0 %v2827
      %3084 = vmatpush.msra.mxu0 %v2825
      %3085 = vmatmul.f32.gmra.mxu0 %v2962
      %v3086 = vpop.f32.mrf.mxu0
      %v3087 = vadd.f32 0.0, %v3086
      %3088 = vmatmul.f32.gmra.mxu0 %v2976
      %v3089 = vpop.f32.mrf.mxu0
      %v3090 = vadd.f32 0.0, %v3089
      %3091 = vmatmul.f32.gmra.mxu0 %v2990
      %v3092 = vpop.f32.mrf.mxu0
      %v3093 = vadd.f32 0.0, %v3092
      %3094 = vmatmul.f32.gmra.mxu0 %v3004
      %v3095 = vpop.f32.mrf.mxu0
      %v3096 = vadd.f32 0.0, %v3095
      %3097 = vmatmul.f32.gmra.mxu0 %v3018
      %v3098 = vpop.f32.mrf.mxu0
      %v3099 = vadd.f32 0.0, %v3098
      %3100 = vmatmul.f32.gmra.mxu0 %v3032
      %v3101 = vpop.f32.mrf.mxu0
      %v3102 = vadd.f32 0.0, %v3101
      %3103 = vmatmul.f32.gmra.mxu0 %v3046
      %v3104 = vpop.f32.mrf.mxu0
      %v3105 = vadd.f32 0.0, %v3104
      %3106 = vmatmul.f32.gmra.mxu0 %v3060
      %v3107 = vpop.f32.mrf.mxu0
      %v3108 = vadd.f32 0.0, %v3107
      %3109 = vdwg.mxu0
      %3110 = vmatpush.msra.mxu0 %v2856
      %3111 = vmatpush.msra.mxu0 %v2854
      %3112 = vmatpush.msra.mxu0 %v2852
      %3113 = vmatpush.msra.mxu0 %v2850
      %3114 = vmatpush.msra.mxu0 %v2848
      %3115 = vmatpush.msra.mxu0 %v2846
      %3116 = vmatpush.msra.mxu0 %v2844
      %3117 = vmatpush.msra.mxu0 %v2842
      %3118 = vmatpush.msra.mxu0 %v2840
      %3119 = vmatpush.msra.mxu0 %v2838
      %3120 = vmatpush.msra.mxu0 %v2836
      %3121 = vmatpush.msra.mxu0 %v2834
      %3122 = vmatpush.msra.mxu0 %v2832
      %3123 = vmatpush.msra.mxu0 %v2830
      %3124 = vmatpush.msra.mxu0 %v2828
      %3125 = vmatpush.msra.mxu0 %v2826
      %3126 = vmatmul.f32.gmra.mxu0 %v2962
      %v3127 = vpop.f32.mrf.mxu0
      %v3128 = vadd.f32 0.0, %v3127
      %3129 = vmatmul.f32.gmra.mxu0 %v2976
      %v3130 = vpop.f32.mrf.mxu0
      %v3131 = vadd.f32 0.0, %v3130
      %3132 = vmatmul.f32.gmra.mxu0 %v2990
      %v3133 = vpop.f32.mrf.mxu0
      %v3134 = vadd.f32 0.0, %v3133
      %3135 = vmatmul.f32.gmra.mxu0 %v3004
      %v3136 = vpop.f32.mrf.mxu0
      %v3137 = vadd.f32 0.0, %v3136
      %3138 = vmatmul.f32.gmra.mxu0 %v3018
      %v3139 = vpop.f32.mrf.mxu0
      %v3140 = vadd.f32 0.0, %v3139
      %3141 = vmatmul.f32.gmra.mxu0 %v3032
      %v3142 = vpop.f32.mrf.mxu0
      %v3143 = vadd.f32 0.0, %v3142
      %3144 = vmatmul.f32.gmra.mxu0 %v3046
      %v3145 = vpop.f32.mrf.mxu0
      %v3146 = vadd.f32 0.0, %v3145
      %3147 = vmatmul.f32.gmra.mxu0 %v3060
      %v3148 = vpop.f32.mrf.mxu0
      %v3149 = vadd.f32 0.0, %v3148
      %3150 = vdwg.mxu0
      %v3152 = vperm.slane %v2858, 0
      %v3154 = vadd.f32 %v3087, %v3152
      %v3155 = vadd.f32 %v3090, %v3152
      %v3156 = vadd.f32 %v3093, %v3152
      %v3157 = vadd.f32 %v3096, %v3152
      %v3158 = vadd.f32 %v3099, %v3152
      %v3159 = vadd.f32 %v3102, %v3152
      %v3160 = vadd.f32 %v3105, %v3152
      %v3161 = vadd.f32 %v3108, %v3152
      %v3170 = vrot.slane %v3154, 1
      %v3171 = vrot.slane %v3154, 2
      %v3172 = vrot.slane %v3154, 3
      %v3173 = vrot.slane %v3154, 4
      %v3174 = vrot.slane %v3154, 5
      %v3175 = vrot.slane %v3154, 6
      %v3176 = vrot.slane %v3154, 7
      %v3177 = vrot.slane %v3155, 1
      %v3178 = vrot.slane %v3155, 2
      %v3179 = vrot.slane %v3155, 3
      %v3180 = vrot.slane %v3155, 4
      %v3181 = vrot.slane %v3155, 5
      %v3182 = vrot.slane %v3155, 6
      %v3183 = vrot.slane %v3155, 7
      %v3184 = vrot.slane %v3156, 1
      %v3185 = vrot.slane %v3156, 2
      %v3186 = vrot.slane %v3156, 3
      %v3187 = vrot.slane %v3156, 4
      %v3188 = vrot.slane %v3156, 5
      %v3189 = vrot.slane %v3156, 6
      %v3190 = vrot.slane %v3156, 7
      %v3191 = vrot.slane %v3157, 1
      %v3192 = vrot.slane %v3157, 2
      %v3193 = vrot.slane %v3157, 3
      %v3194 = vrot.slane %v3157, 4
      %v3195 = vrot.slane %v3157, 5
      %v3196 = vrot.slane %v3157, 6
      %v3197 = vrot.slane %v3157, 7
      %v3198 = vrot.slane %v3158, 1
      %v3199 = vrot.slane %v3158, 2
      %v3200 = vrot.slane %v3158, 3
      %v3201 = vrot.slane %v3158, 4
      %v3202 = vrot.slane %v3158, 5
      %v3203 = vrot.slane %v3158, 6
      %v3204 = vrot.slane %v3158, 7
      %v3205 = vrot.slane %v3159, 1
      %v3206 = vrot.slane %v3159, 2
      %v3207 = vrot.slane %v3159, 3
      %v3208 = vrot.slane %v3159, 4
      %v3209 = vrot.slane %v3159, 5
      %v3210 = vrot.slane %v3159, 6
      %v3211 = vrot.slane %v3159, 7
      %v3212 = vrot.slane %v3160, 1
      %v3213 = vrot.slane %v3160, 2
      %v3214 = vrot.slane %v3160, 3
      %v3215 = vrot.slane %v3160, 4
      %v3216 = vrot.slane %v3160, 5
      %v3217 = vrot.slane %v3160, 6
      %v3218 = vrot.slane %v3160, 7
      %v3219 = vrot.slane %v3161, 1
      %v3220 = vrot.slane %v3161, 2
      %v3221 = vrot.slane %v3161, 3
      %v3222 = vrot.slane %v3161, 4
      %v3223 = vrot.slane %v3161, 5
      %v3224 = vrot.slane %v3161, 6
      %v3225 = vrot.slane %v3161, 7
      %v3226 = vperm.slane %v3154, 0
      %v3227 = vperm.slane %v3170, 0
      %v3228 = vperm.slane %v3171, 0
      %v3229 = vperm.slane %v3172, 0
      %v3230 = vperm.slane %v3173, 0
      %v3231 = vperm.slane %v3174, 0
      %v3232 = vperm.slane %v3175, 0
      %v3233 = vperm.slane %v3176, 0
      %v3234 = vperm.slane %v3155, 0
      %v3235 = vperm.slane %v3177, 0
      %v3236 = vperm.slane %v3178, 0
      %v3237 = vperm.slane %v3179, 0
      %v3238 = vperm.slane %v3180, 0
      %v3239 = vperm.slane %v3181, 0
      %v3240 = vperm.slane %v3182, 0
      %v3241 = vperm.slane %v3183, 0
      %v3242 = vperm.slane %v3156, 0
      %v3243 = vperm.slane %v3184, 0
      %v3244 = vperm.slane %v3185, 0
      %v3245 = vperm.slane %v3186, 0
      %v3246 = vperm.slane %v3187, 0
      %v3247 = vperm.slane %v3188, 0
      %v3248 = vperm.slane %v3189, 0
      %v3249 = vperm.slane %v3190, 0
      %v3250 = vperm.slane %v3157, 0
      %v3251 = vperm.slane %v3191, 0
      %v3252 = vperm.slane %v3192, 0
      %v3253 = vperm.slane %v3193, 0
      %v3254 = vperm.slane %v3194, 0
      %v3255 = vperm.slane %v3195, 0
      %v3256 = vperm.slane %v3196, 0
      %v3257 = vperm.slane %v3197, 0
      %v3258 = vperm.slane %v3158, 0
      %v3259 = vperm.slane %v3198, 0
      %v3260 = vperm.slane %v3199, 0
      %v3261 = vperm.slane %v3200, 0
      %v3262 = vperm.slane %v3201, 0
      %v3263 = vperm.slane %v3202, 0
      %v3264 = vperm.slane %v3203, 0
      %v3265 = vperm.slane %v3204, 0
      %v3266 = vperm.slane %v3159, 0
      %v3267 = vperm.slane %v3205, 0
      %v3268 = vperm.slane %v3206, 0
      %v3269 = vperm.slane %v3207, 0
      %v3270 = vperm.slane %v3208, 0
      %v3271 = vperm.slane %v3209, 0
      %v3272 = vperm.slane %v3210, 0
      %v3273 = vperm.slane %v3211, 0
      %v3274 = vperm.slane %v3160, 0
      %v3275 = vperm.slane %v3212, 0
      %v3276 = vperm.slane %v3213, 0
      %v3277 = vperm.slane %v3214, 0
      %v3278 = vperm.slane %v3215, 0
      %v3279 = vperm.slane %v3216, 0
      %v3280 = vperm.slane %v3217, 0
      %v3281 = vperm.slane %v3218, 0
      %v3282 = vperm.slane %v3161, 0
      %v3283 = vperm.slane %v3219, 0
      %v3284 = vperm.slane %v3220, 0
      %v3285 = vperm.slane %v3221, 0
      %v3286 = vperm.slane %v3222, 0
      %v3287 = vperm.slane %v3223, 0
      %v3288 = vperm.slane %v3224, 0
      %v3289 = vperm.slane %v3225, 0
      %v3354 = vadd.f32 %v3226, %v3128
      %v3355 = vadd.f32 %v3226, %v3131
      %v3356 = vadd.f32 %v3227, %v3128
      %v3357 = vadd.f32 %v3227, %v3131
      %v3358 = vadd.f32 %v3228, %v3128
      %v3359 = vadd.f32 %v3228, %v3131
      %v3360 = vadd.f32 %v3229, %v3128
      %v3361 = vadd.f32 %v3229, %v3131
      %v3362 = vadd.f32 %v3230, %v3128
      %v3363 = vadd.f32 %v3230, %v3131
      %v3364 = vadd.f32 %v3231, %v3128
      %v3365 = vadd.f32 %v3231, %v3131
      %v3366 = vadd.f32 %v3232, %v3128
      %v3367 = vadd.f32 %v3232, %v3131
      %v3368 = vadd.f32 %v3233, %v3128
      %v3369 = vadd.f32 %v3233, %v3131
      %v3370 = vadd.f32 %v3234, %v3128
      %v3371 = vadd.f32 %v3234, %v3131
      %v3372 = vadd.f32 %v3235, %v3128
      %v3373 = vadd.f32 %v3235, %v3131
      %v3374 = vadd.f32 %v3236, %v3128
      %v3375 = vadd.f32 %v3236, %v3131
      %v3376 = vadd.f32 %v3237, %v3128
      %v3377 = vadd.f32 %v3237, %v3131
      %v3378 = vadd.f32 %v3238, %v3128
      %v3379 = vadd.f32 %v3238, %v3131
      %v3380 = vadd.f32 %v3239, %v3128
      %v3381 = vadd.f32 %v3239, %v3131
      %v3382 = vadd.f32 %v3240, %v3128
      %v3383 = vadd.f32 %v3240, %v3131
      %v3384 = vadd.f32 %v3241, %v3128
      %v3385 = vadd.f32 %v3241, %v3131
      %v3386 = vadd.f32 %v3242, %v3134
      %v3387 = vadd.f32 %v3242, %v3137
      %v3388 = vadd.f32 %v3243, %v3134
      %v3389 = vadd.f32 %v3243, %v3137
      %v3390 = vadd.f32 %v3244, %v3134
      %v3391 = vadd.f32 %v3244, %v3137
      %v3392 = vadd.f32 %v3245, %v3134
      %v3393 = vadd.f32 %v3245, %v3137
      %v3394 = vadd.f32 %v3246, %v3134
      %v3395 = vadd.f32 %v3246, %v3137
      %v3396 = vadd.f32 %v3247, %v3134
      %v3397 = vadd.f32 %v3247, %v3137
      %v3398 = vadd.f32 %v3248, %v3134
      %v3399 = vadd.f32 %v3248, %v3137
      %v3400 = vadd.f32 %v3249, %v3134
      %v3401 = vadd.f32 %v3249, %v3137
      %v3402 = vadd.f32 %v3250, %v3134
      %v3403 = vadd.f32 %v3250, %v3137
      %v3404 = vadd.f32 %v3251, %v3134
      %v3405 = vadd.f32 %v3251, %v3137
      %v3406 = vadd.f32 %v3252, %v3134
      %v3407 = vadd.f32 %v3252, %v3137
      %v3408 = vadd.f32 %v3253, %v3134
      %v3409 = vadd.f32 %v3253, %v3137
      %v3410 = vadd.f32 %v3254, %v3134
      %v3411 = vadd.f32 %v3254, %v3137
      %v3412 = vadd.f32 %v3255, %v3134
      %v3413 = vadd.f32 %v3255, %v3137
      %v3414 = vadd.f32 %v3256, %v3134
      %v3415 = vadd.f32 %v3256, %v3137
      %v3416 = vadd.f32 %v3257, %v3134
      %v3417 = vadd.f32 %v3257, %v3137
      %v3418 = vadd.f32 %v3258, %v3140
      %v3419 = vadd.f32 %v3258, %v3143
      %v3420 = vadd.f32 %v3259, %v3140
      %v3421 = vadd.f32 %v3259, %v3143
      %v3422 = vadd.f32 %v3260, %v3140
      %v3423 = vadd.f32 %v3260, %v3143
      %v3424 = vadd.f32 %v3261, %v3140
      %v3425 = vadd.f32 %v3261, %v3143
      %v3426 = vadd.f32 %v3262, %v3140
      %v3427 = vadd.f32 %v3262, %v3143
      %v3428 = vadd.f32 %v3263, %v3140
      %v3429 = vadd.f32 %v3263, %v3143
      %v3430 = vadd.f32 %v3264, %v3140
      %v3431 = vadd.f32 %v3264, %v3143
      %v3432 = vadd.f32 %v3265, %v3140
      %v3433 = vadd.f32 %v3265, %v3143
      %v3434 = vadd.f32 %v3266, %v3140
      %v3435 = vadd.f32 %v3266, %v3143
      %v3436 = vadd.f32 %v3267, %v3140
      %v3437 = vadd.f32 %v3267, %v3143
      %v3438 = vadd.f32 %v3268, %v3140
      %v3439 = vadd.f32 %v3268, %v3143
      %v3440 = vadd.f32 %v3269, %v3140
      %v3441 = vadd.f32 %v3269, %v3143
      %v3442 = vadd.f32 %v3270, %v3140
      %v3443 = vadd.f32 %v3270, %v3143
      %v3444 = vadd.f32 %v3271, %v3140
      %v3445 = vadd.f32 %v3271, %v3143
      %v3446 = vadd.f32 %v3272, %v3140
      %v3447 = vadd.f32 %v3272, %v3143
      %v3448 = vadd.f32 %v3273, %v3140
      %v3449 = vadd.f32 %v3273, %v3143
      %v3450 = vadd.f32 %v3274, %v3146
      %v3451 = vadd.f32 %v3274, %v3149
      %v3452 = vadd.f32 %v3275, %v3146
      %v3453 = vadd.f32 %v3275, %v3149
      %v3454 = vadd.f32 %v3276, %v3146
      %v3455 = vadd.f32 %v3276, %v3149
      %v3456 = vadd.f32 %v3277, %v3146
      %v3457 = vadd.f32 %v3277, %v3149
      %v3458 = vadd.f32 %v3278, %v3146
      %v3459 = vadd.f32 %v3278, %v3149
      %v3460 = vadd.f32 %v3279, %v3146
      %v3461 = vadd.f32 %v3279, %v3149
      %v3462 = vadd.f32 %v3280, %v3146
      %v3463 = vadd.f32 %v3280, %v3149
      %v3464 = vadd.f32 %v3281, %v3146
      %v3465 = vadd.f32 %v3281, %v3149
      %v3466 = vadd.f32 %v3282, %v3146
      %v3467 = vadd.f32 %v3282, %v3149
      %v3468 = vadd.f32 %v3283, %v3146
      %v3469 = vadd.f32 %v3283, %v3149
      %v3470 = vadd.f32 %v3284, %v3146
      %v3471 = vadd.f32 %v3284, %v3149
      %v3472 = vadd.f32 %v3285, %v3146
      %v3473 = vadd.f32 %v3285, %v3149
      %v3474 = vadd.f32 %v3286, %v3146
      %v3475 = vadd.f32 %v3286, %v3149
      %v3476 = vadd.f32 %v3287, %v3146
      %v3477 = vadd.f32 %v3287, %v3149
      %v3478 = vadd.f32 %v3288, %v3146
      %v3479 = vadd.f32 %v3288, %v3149
      %v3480 = vadd.f32 %v3289, %v3146
      %v3481 = vadd.f32 %v3289, %v3149
      %v3482 = vmax.f32 %v3354, 0.0
      %v3483 = vmax.f32 %v3355, 0.0
      %v3484 = vmax.f32 %v3356, 0.0
      %v3485 = vmax.f32 %v3357, 0.0
      %v3486 = vmax.f32 %v3358, 0.0
      %v3487 = vmax.f32 %v3359, 0.0
      %v3488 = vmax.f32 %v3360, 0.0
      %v3489 = vmax.f32 %v3361, 0.0
      %v3490 = vmax.f32 %v3362, 0.0
      %v3491 = vmax.f32 %v3363, 0.0
      %v3492 = vmax.f32 %v3364, 0.0
      %v3493 = vmax.f32 %v3365, 0.0
      %v3494 = vmax.f32 %v3366, 0.0
      %v3495 = vmax.f32 %v3367, 0.0
      %v3496 = vmax.f32 %v3368, 0.0
      %v3497 = vmax.f32 %v3369, 0.0
      %v3498 = vmax.f32 %v3370, 0.0
      %v3499 = vmax.f32 %v3371, 0.0
      %v3500 = vmax.f32 %v3372, 0.0
      %v3501 = vmax.f32 %v3373, 0.0
      %v3502 = vmax.f32 %v3374, 0.0
      %v3503 = vmax.f32 %v3375, 0.0
      %v3504 = vmax.f32 %v3376, 0.0
      %v3505 = vmax.f32 %v3377, 0.0
      %v3506 = vmax.f32 %v3378, 0.0
      %v3507 = vmax.f32 %v3379, 0.0
      %v3508 = vmax.f32 %v3380, 0.0
      %v3509 = vmax.f32 %v3381, 0.0
      %v3510 = vmax.f32 %v3382, 0.0
      %v3511 = vmax.f32 %v3383, 0.0
      %v3512 = vmax.f32 %v3384, 0.0
      %v3513 = vmax.f32 %v3385, 0.0
      %v3514 = vmax.f32 %v3386, 0.0
      %v3515 = vmax.f32 %v3387, 0.0
      %v3516 = vmax.f32 %v3388, 0.0
      %v3517 = vmax.f32 %v3389, 0.0
      %v3518 = vmax.f32 %v3390, 0.0
      %v3519 = vmax.f32 %v3391, 0.0
      %v3520 = vmax.f32 %v3392, 0.0
      %v3521 = vmax.f32 %v3393, 0.0
      %v3522 = vmax.f32 %v3394, 0.0
      %v3523 = vmax.f32 %v3395, 0.0
      %v3524 = vmax.f32 %v3396, 0.0
      %v3525 = vmax.f32 %v3397, 0.0
      %v3526 = vmax.f32 %v3398, 0.0
      %v3527 = vmax.f32 %v3399, 0.0
      %v3528 = vmax.f32 %v3400, 0.0
      %v3529 = vmax.f32 %v3401, 0.0
      %v3530 = vmax.f32 %v3402, 0.0
      %v3531 = vmax.f32 %v3403, 0.0
      %v3532 = vmax.f32 %v3404, 0.0
      %v3533 = vmax.f32 %v3405, 0.0
      %v3534 = vmax.f32 %v3406, 0.0
      %v3535 = vmax.f32 %v3407, 0.0
      %v3536 = vmax.f32 %v3408, 0.0
      %v3537 = vmax.f32 %v3409, 0.0
      %v3538 = vmax.f32 %v3410, 0.0
      %v3539 = vmax.f32 %v3411, 0.0
      %v3540 = vmax.f32 %v3412, 0.0
      %v3541 = vmax.f32 %v3413, 0.0
      %v3542 = vmax.f32 %v3414, 0.0
      %v3543 = vmax.f32 %v3415, 0.0
      %v3544 = vmax.f32 %v3416, 0.0
      %v3545 = vmax.f32 %v3417, 0.0
      %v3546 = vmax.f32 %v3418, 0.0
      %v3547 = vmax.f32 %v3419, 0.0
      %v3548 = vmax.f32 %v3420, 0.0
      %v3549 = vmax.f32 %v3421, 0.0
      %v3550 = vmax.f32 %v3422, 0.0
      %v3551 = vmax.f32 %v3423, 0.0
      %v3552 = vmax.f32 %v3424, 0.0
      %v3553 = vmax.f32 %v3425, 0.0
      %v3554 = vmax.f32 %v3426, 0.0
      %v3555 = vmax.f32 %v3427, 0.0
      %v3556 = vmax.f32 %v3428, 0.0
      %v3557 = vmax.f32 %v3429, 0.0
      %v3558 = vmax.f32 %v3430, 0.0
      %v3559 = vmax.f32 %v3431, 0.0
      %v3560 = vmax.f32 %v3432, 0.0
      %v3561 = vmax.f32 %v3433, 0.0
      %v3562 = vmax.f32 %v3434, 0.0
      %v3563 = vmax.f32 %v3435, 0.0
      %v3564 = vmax.f32 %v3436, 0.0
      %v3565 = vmax.f32 %v3437, 0.0
      %v3566 = vmax.f32 %v3438, 0.0
      %v3567 = vmax.f32 %v3439, 0.0
      %v3568 = vmax.f32 %v3440, 0.0
      %v3569 = vmax.f32 %v3441, 0.0
      %v3570 = vmax.f32 %v3442, 0.0
      %v3571 = vmax.f32 %v3443, 0.0
      %v3572 = vmax.f32 %v3444, 0.0
      %v3573 = vmax.f32 %v3445, 0.0
      %v3574 = vmax.f32 %v3446, 0.0
      %v3575 = vmax.f32 %v3447, 0.0
      %v3576 = vmax.f32 %v3448, 0.0
      %v3577 = vmax.f32 %v3449, 0.0
      %v3578 = vmax.f32 %v3450, 0.0
      %v3579 = vmax.f32 %v3451, 0.0
      %v3580 = vmax.f32 %v3452, 0.0
      %v3581 = vmax.f32 %v3453, 0.0
      %v3582 = vmax.f32 %v3454, 0.0
      %v3583 = vmax.f32 %v3455, 0.0
      %v3584 = vmax.f32 %v3456, 0.0
      %v3585 = vmax.f32 %v3457, 0.0
      %v3586 = vmax.f32 %v3458, 0.0
      %v3587 = vmax.f32 %v3459, 0.0
      %v3588 = vmax.f32 %v3460, 0.0
      %v3589 = vmax.f32 %v3461, 0.0
      %v3590 = vmax.f32 %v3462, 0.0
      %v3591 = vmax.f32 %v3463, 0.0
      %v3592 = vmax.f32 %v3464, 0.0
      %v3593 = vmax.f32 %v3465, 0.0
      %v3594 = vmax.f32 %v3466, 0.0
      %v3595 = vmax.f32 %v3467, 0.0
      %v3596 = vmax.f32 %v3468, 0.0
      %v3597 = vmax.f32 %v3469, 0.0
      %v3598 = vmax.f32 %v3470, 0.0
      %v3599 = vmax.f32 %v3471, 0.0
      %v3600 = vmax.f32 %v3472, 0.0
      %v3601 = vmax.f32 %v3473, 0.0
      %v3602 = vmax.f32 %v3474, 0.0
      %v3603 = vmax.f32 %v3475, 0.0
      %v3604 = vmax.f32 %v3476, 0.0
      %v3605 = vmax.f32 %v3477, 0.0
      %v3606 = vmax.f32 %v3478, 0.0
      %v3607 = vmax.f32 %v3479, 0.0
      %v3608 = vmax.f32 %v3480, 0.0
      %v3609 = vmax.f32 %v3481, 0.0
      %3610 = vmatpush.msra.mxu0 %v2875
      %3611 = vmatpush.msra.mxu0 %v2874
      %3612 = vmatpush.msra.mxu0 %v2873
      %3613 = vmatpush.msra.mxu0 %v2872
      %3614 = vmatpush.msra.mxu0 %v2871
      %3615 = vmatpush.msra.mxu0 %v2870
      %3616 = vmatpush.msra.mxu0 %v2869
      %3617 = vmatpush.msra.mxu0 %v2868
      %3618 = vmatpush.msra.mxu0 %v2867
      %3619 = vmatpush.msra.mxu0 %v2866
      %3620 = vmatpush.msra.mxu0 %v2865
      %3621 = vmatpush.msra.mxu0 %v2864
      %3622 = vmatpush.msra.mxu0 %v2863
      %3623 = vmatpush.msra.mxu0 %v2862
      %3624 = vmatpush.msra.mxu0 %v2861
      %3625 = vmatpush.msra.mxu0 %v2860
      %3626 = vmatmul.f32.gmra.mxu0 %v3482
      %v3627 = vpop.f32.mrf.mxu0
      %v3628 = vadd.f32 0.0, %v3627
      %3629 = vmatmul.f32.gmra.mxu0 %v3483
      %v3630 = vpop.f32.mrf.mxu0
      %v3631 = vadd.f32 0.0, %v3630
      %3632 = vmatmul.f32.gmra.mxu0 %v3484
      %v3633 = vpop.f32.mrf.mxu0
      %v3634 = vadd.f32 0.0, %v3633
      %3635 = vmatmul.f32.gmra.mxu0 %v3485
      %v3636 = vpop.f32.mrf.mxu0
      %v3637 = vadd.f32 0.0, %v3636
      %3638 = vmatmul.f32.gmra.mxu0 %v3486
      %v3639 = vpop.f32.mrf.mxu0
      %v3640 = vadd.f32 0.0, %v3639
      %3641 = vmatmul.f32.gmra.mxu0 %v3487
      %v3642 = vpop.f32.mrf.mxu0
      %v3643 = vadd.f32 0.0, %v3642
      %3644 = vmatmul.f32.gmra.mxu0 %v3488
      %v3645 = vpop.f32.mrf.mxu0
      %v3646 = vadd.f32 0.0, %v3645
      %3647 = vmatmul.f32.gmra.mxu0 %v3489
      %v3648 = vpop.f32.mrf.mxu0
      %v3649 = vadd.f32 0.0, %v3648
      %3650 = vmatmul.f32.gmra.mxu0 %v3490
      %v3651 = vpop.f32.mrf.mxu0
      %v3652 = vadd.f32 0.0, %v3651
      %3653 = vmatmul.f32.gmra.mxu0 %v3491
      %v3654 = vpop.f32.mrf.mxu0
      %v3655 = vadd.f32 0.0, %v3654
      %3656 = vmatmul.f32.gmra.mxu0 %v3492
      %v3657 = vpop.f32.mrf.mxu0
      %v3658 = vadd.f32 0.0, %v3657
      %3659 = vmatmul.f32.gmra.mxu0 %v3493
      %v3660 = vpop.f32.mrf.mxu0
      %v3661 = vadd.f32 0.0, %v3660
      %3662 = vmatmul.f32.gmra.mxu0 %v3494
      %v3663 = vpop.f32.mrf.mxu0
      %v3664 = vadd.f32 0.0, %v3663
      %3665 = vmatmul.f32.gmra.mxu0 %v3495
      %v3666 = vpop.f32.mrf.mxu0
      %v3667 = vadd.f32 0.0, %v3666
      %3668 = vmatmul.f32.gmra.mxu0 %v3496
      %v3669 = vpop.f32.mrf.mxu0
      %v3670 = vadd.f32 0.0, %v3669
      %3671 = vmatmul.f32.gmra.mxu0 %v3497
      %v3672 = vpop.f32.mrf.mxu0
      %v3673 = vadd.f32 0.0, %v3672
      %3674 = vmatmul.f32.gmra.mxu0 %v3498
      %v3675 = vpop.f32.mrf.mxu0
      %v3676 = vadd.f32 0.0, %v3675
      %3677 = vmatmul.f32.gmra.mxu0 %v3499
      %v3678 = vpop.f32.mrf.mxu0
      %v3679 = vadd.f32 0.0, %v3678
      %3680 = vmatmul.f32.gmra.mxu0 %v3500
      %v3681 = vpop.f32.mrf.mxu0
      %v3682 = vadd.f32 0.0, %v3681
      %3683 = vmatmul.f32.gmra.mxu0 %v3501
      %v3684 = vpop.f32.mrf.mxu0
      %v3685 = vadd.f32 0.0, %v3684
      %3686 = vmatmul.f32.gmra.mxu0 %v3502
      %v3687 = vpop.f32.mrf.mxu0
      %v3688 = vadd.f32 0.0, %v3687
      %3689 = vmatmul.f32.gmra.mxu0 %v3503
      %v3690 = vpop.f32.mrf.mxu0
      %v3691 = vadd.f32 0.0, %v3690
      %3692 = vmatmul.f32.gmra.mxu0 %v3504
      %v3693 = vpop.f32.mrf.mxu0
      %v3694 = vadd.f32 0.0, %v3693
      %3695 = vmatmul.f32.gmra.mxu0 %v3505
      %v3696 = vpop.f32.mrf.mxu0
      %v3697 = vadd.f32 0.0, %v3696
      %3698 = vmatmul.f32.gmra.mxu0 %v3506
      %v3699 = vpop.f32.mrf.mxu0
      %v3700 = vadd.f32 0.0, %v3699
      %3701 = vmatmul.f32.gmra.mxu0 %v3507
      %v3702 = vpop.f32.mrf.mxu0
      %v3703 = vadd.f32 0.0, %v3702
      %3704 = vmatmul.f32.gmra.mxu0 %v3508
      %v3705 = vpop.f32.mrf.mxu0
      %v3706 = vadd.f32 0.0, %v3705
      %3707 = vmatmul.f32.gmra.mxu0 %v3509
      %v3708 = vpop.f32.mrf.mxu0
      %v3709 = vadd.f32 0.0, %v3708
      %3710 = vmatmul.f32.gmra.mxu0 %v3510
      %v3711 = vpop.f32.mrf.mxu0
      %v3712 = vadd.f32 0.0, %v3711
      %3713 = vmatmul.f32.gmra.mxu0 %v3511
      %v3714 = vpop.f32.mrf.mxu0
      %v3715 = vadd.f32 0.0, %v3714
      %3716 = vmatmul.f32.gmra.mxu0 %v3512
      %v3717 = vpop.f32.mrf.mxu0
      %v3718 = vadd.f32 0.0, %v3717
      %3719 = vmatmul.f32.gmra.mxu0 %v3513
      %v3720 = vpop.f32.mrf.mxu0
      %v3721 = vadd.f32 0.0, %v3720
      %3722 = vmatmul.f32.gmra.mxu0 %v3514
      %v3723 = vpop.f32.mrf.mxu0
      %v3724 = vadd.f32 0.0, %v3723
      %3725 = vmatmul.f32.gmra.mxu0 %v3515
      %v3726 = vpop.f32.mrf.mxu0
      %v3727 = vadd.f32 0.0, %v3726
      %3728 = vmatmul.f32.gmra.mxu0 %v3516
      %v3729 = vpop.f32.mrf.mxu0
      %v3730 = vadd.f32 0.0, %v3729
      %3731 = vmatmul.f32.gmra.mxu0 %v3517
      %v3732 = vpop.f32.mrf.mxu0
      %v3733 = vadd.f32 0.0, %v3732
      %3734 = vmatmul.f32.gmra.mxu0 %v3518
      %v3735 = vpop.f32.mrf.mxu0
      %v3736 = vadd.f32 0.0, %v3735
      %3737 = vmatmul.f32.gmra.mxu0 %v3519
      %v3738 = vpop.f32.mrf.mxu0
      %v3739 = vadd.f32 0.0, %v3738
      %3740 = vmatmul.f32.gmra.mxu0 %v3520
      %v3741 = vpop.f32.mrf.mxu0
      %v3742 = vadd.f32 0.0, %v3741
      %3743 = vmatmul.f32.gmra.mxu0 %v3521
      %v3744 = vpop.f32.mrf.mxu0
      %v3745 = vadd.f32 0.0, %v3744
      %3746 = vmatmul.f32.gmra.mxu0 %v3522
      %v3747 = vpop.f32.mrf.mxu0
      %v3748 = vadd.f32 0.0, %v3747
      %3749 = vmatmul.f32.gmra.mxu0 %v3523
      %v3750 = vpop.f32.mrf.mxu0
      %v3751 = vadd.f32 0.0, %v3750
      %3752 = vmatmul.f32.gmra.mxu0 %v3524
      %v3753 = vpop.f32.mrf.mxu0
      %v3754 = vadd.f32 0.0, %v3753
      %3755 = vmatmul.f32.gmra.mxu0 %v3525
      %v3756 = vpop.f32.mrf.mxu0
      %v3757 = vadd.f32 0.0, %v3756
      %3758 = vmatmul.f32.gmra.mxu0 %v3526
      %v3759 = vpop.f32.mrf.mxu0
      %v3760 = vadd.f32 0.0, %v3759
      %3761 = vmatmul.f32.gmra.mxu0 %v3527
      %v3762 = vpop.f32.mrf.mxu0
      %v3763 = vadd.f32 0.0, %v3762
      %3764 = vmatmul.f32.gmra.mxu0 %v3528
      %v3765 = vpop.f32.mrf.mxu0
      %v3766 = vadd.f32 0.0, %v3765
      %3767 = vmatmul.f32.gmra.mxu0 %v3529
      %v3768 = vpop.f32.mrf.mxu0
      %v3769 = vadd.f32 0.0, %v3768
      %3770 = vmatmul.f32.gmra.mxu0 %v3530
      %v3771 = vpop.f32.mrf.mxu0
      %v3772 = vadd.f32 0.0, %v3771
      %3773 = vmatmul.f32.gmra.mxu0 %v3531
      %v3774 = vpop.f32.mrf.mxu0
      %v3775 = vadd.f32 0.0, %v3774
      %3776 = vmatmul.f32.gmra.mxu0 %v3532
      %v3777 = vpop.f32.mrf.mxu0
      %v3778 = vadd.f32 0.0, %v3777
      %3779 = vmatmul.f32.gmra.mxu0 %v3533
      %v3780 = vpop.f32.mrf.mxu0
      %v3781 = vadd.f32 0.0, %v3780
      %3782 = vmatmul.f32.gmra.mxu0 %v3534
      %v3783 = vpop.f32.mrf.mxu0
      %v3784 = vadd.f32 0.0, %v3783
      %3785 = vmatmul.f32.gmra.mxu0 %v3535
      %v3786 = vpop.f32.mrf.mxu0
      %v3787 = vadd.f32 0.0, %v3786
      %3788 = vmatmul.f32.gmra.mxu0 %v3536
      %v3789 = vpop.f32.mrf.mxu0
      %v3790 = vadd.f32 0.0, %v3789
      %3791 = vmatmul.f32.gmra.mxu0 %v3537
      %v3792 = vpop.f32.mrf.mxu0
      %v3793 = vadd.f32 0.0, %v3792
      %3794 = vmatmul.f32.gmra.mxu0 %v3538
      %v3795 = vpop.f32.mrf.mxu0
      %v3796 = vadd.f32 0.0, %v3795
      %3797 = vmatmul.f32.gmra.mxu0 %v3539
      %v3798 = vpop.f32.mrf.mxu0
      %v3799 = vadd.f32 0.0, %v3798
      %3800 = vmatmul.f32.gmra.mxu0 %v3540
      %v3801 = vpop.f32.mrf.mxu0
      %v3802 = vadd.f32 0.0, %v3801
      %3803 = vmatmul.f32.gmra.mxu0 %v3541
      %v3804 = vpop.f32.mrf.mxu0
      %v3805 = vadd.f32 0.0, %v3804
      %3806 = vmatmul.f32.gmra.mxu0 %v3542
      %v3807 = vpop.f32.mrf.mxu0
      %v3808 = vadd.f32 0.0, %v3807
      %3809 = vmatmul.f32.gmra.mxu0 %v3543
      %v3810 = vpop.f32.mrf.mxu0
      %v3811 = vadd.f32 0.0, %v3810
      %3812 = vmatmul.f32.gmra.mxu0 %v3544
      %v3813 = vpop.f32.mrf.mxu0
      %v3814 = vadd.f32 0.0, %v3813
      %3815 = vmatmul.f32.gmra.mxu0 %v3545
      %v3816 = vpop.f32.mrf.mxu0
      %v3817 = vadd.f32 0.0, %v3816
      %3818 = vmatmul.f32.gmra.mxu0 %v3546
      %v3819 = vpop.f32.mrf.mxu0
      %v3820 = vadd.f32 0.0, %v3819
      %3821 = vmatmul.f32.gmra.mxu0 %v3547
      %v3822 = vpop.f32.mrf.mxu0
      %v3823 = vadd.f32 0.0, %v3822
      %3824 = vmatmul.f32.gmra.mxu0 %v3548
      %v3825 = vpop.f32.mrf.mxu0
      %v3826 = vadd.f32 0.0, %v3825
      %3827 = vmatmul.f32.gmra.mxu0 %v3549
      %v3828 = vpop.f32.mrf.mxu0
      %v3829 = vadd.f32 0.0, %v3828
      %3830 = vmatmul.f32.gmra.mxu0 %v3550
      %v3831 = vpop.f32.mrf.mxu0
      %v3832 = vadd.f32 0.0, %v3831
      %3833 = vmatmul.f32.gmra.mxu0 %v3551
      %v3834 = vpop.f32.mrf.mxu0
      %v3835 = vadd.f32 0.0, %v3834
      %3836 = vmatmul.f32.gmra.mxu0 %v3552
      %v3837 = vpop.f32.mrf.mxu0
      %v3838 = vadd.f32 0.0, %v3837
      %3839 = vmatmul.f32.gmra.mxu0 %v3553
      %v3840 = vpop.f32.mrf.mxu0
      %v3841 = vadd.f32 0.0, %v3840
      %3842 = vmatmul.f32.gmra.mxu0 %v3554
      %v3843 = vpop.f32.mrf.mxu0
      %v3844 = vadd.f32 0.0, %v3843
      %3845 = vmatmul.f32.gmra.mxu0 %v3555
      %v3846 = vpop.f32.mrf.mxu0
      %v3847 = vadd.f32 0.0, %v3846
      %3848 = vmatmul.f32.gmra.mxu0 %v3556
      %v3849 = vpop.f32.mrf.mxu0
      %v3850 = vadd.f32 0.0, %v3849
      %3851 = vmatmul.f32.gmra.mxu0 %v3557
      %v3852 = vpop.f32.mrf.mxu0
      %v3853 = vadd.f32 0.0, %v3852
      %3854 = vmatmul.f32.gmra.mxu0 %v3558
      %v3855 = vpop.f32.mrf.mxu0
      %v3856 = vadd.f32 0.0, %v3855
      %3857 = vmatmul.f32.gmra.mxu0 %v3559
      %v3858 = vpop.f32.mrf.mxu0
      %v3859 = vadd.f32 0.0, %v3858
      %3860 = vmatmul.f32.gmra.mxu0 %v3560
      %v3861 = vpop.f32.mrf.mxu0
      %v3862 = vadd.f32 0.0, %v3861
      %3863 = vmatmul.f32.gmra.mxu0 %v3561
      %v3864 = vpop.f32.mrf.mxu0
      %v3865 = vadd.f32 0.0, %v3864
      %3866 = vmatmul.f32.gmra.mxu0 %v3562
      %v3867 = vpop.f32.mrf.mxu0
      %v3868 = vadd.f32 0.0, %v3867
      %3869 = vmatmul.f32.gmra.mxu0 %v3563
      %v3870 = vpop.f32.mrf.mxu0
      %v3871 = vadd.f32 0.0, %v3870
      %3872 = vmatmul.f32.gmra.mxu0 %v3564
      %v3873 = vpop.f32.mrf.mxu0
      %v3874 = vadd.f32 0.0, %v3873
      %3875 = vmatmul.f32.gmra.mxu0 %v3565
      %v3876 = vpop.f32.mrf.mxu0
      %v3877 = vadd.f32 0.0, %v3876
      %3878 = vmatmul.f32.gmra.mxu0 %v3566
      %v3879 = vpop.f32.mrf.mxu0
      %v3880 = vadd.f32 0.0, %v3879
      %3881 = vmatmul.f32.gmra.mxu0 %v3567
      %v3882 = vpop.f32.mrf.mxu0
      %v3883 = vadd.f32 0.0, %v3882
      %3884 = vmatmul.f32.gmra.mxu0 %v3568
      %v3885 = vpop.f32.mrf.mxu0
      %v3886 = vadd.f32 0.0, %v3885
      %3887 = vmatmul.f32.gmra.mxu0 %v3569
      %v3888 = vpop.f32.mrf.mxu0
      %v3889 = vadd.f32 0.0, %v3888
      %3890 = vmatmul.f32.gmra.mxu0 %v3570
      %v3891 = vpop.f32.mrf.mxu0
      %v3892 = vadd.f32 0.0, %v3891
      %3893 = vmatmul.f32.gmra.mxu0 %v3571
      %v3894 = vpop.f32.mrf.mxu0
      %v3895 = vadd.f32 0.0, %v3894
      %3896 = vmatmul.f32.gmra.mxu0 %v3572
      %v3897 = vpop.f32.mrf.mxu0
      %v3898 = vadd.f32 0.0, %v3897
      %3899 = vmatmul.f32.gmra.mxu0 %v3573
      %v3900 = vpop.f32.mrf.mxu0
      %v3901 = vadd.f32 0.0, %v3900
      %3902 = vmatmul.f32.gmra.mxu0 %v3574
      %v3903 = vpop.f32.mrf.mxu0
      %v3904 = vadd.f32 0.0, %v3903
      %3905 = vmatmul.f32.gmra.mxu0 %v3575
      %v3906 = vpop.f32.mrf.mxu0
      %v3907 = vadd.f32 0.0, %v3906
      %3908 = vmatmul.f32.gmra.mxu0 %v3576
      %v3909 = vpop.f32.mrf.mxu0
      %v3910 = vadd.f32 0.0, %v3909
      %3911 = vmatmul.f32.gmra.mxu0 %v3577
      %v3912 = vpop.f32.mrf.mxu0
      %v3913 = vadd.f32 0.0, %v3912
      %3914 = vmatmul.f32.gmra.mxu0 %v3578
      %v3915 = vpop.f32.mrf.mxu0
      %v3916 = vadd.f32 0.0, %v3915
      %3917 = vmatmul.f32.gmra.mxu0 %v3579
      %v3918 = vpop.f32.mrf.mxu0
      %v3919 = vadd.f32 0.0, %v3918
      %3920 = vmatmul.f32.gmra.mxu0 %v3580
      %v3921 = vpop.f32.mrf.mxu0
      %v3922 = vadd.f32 0.0, %v3921
      %3923 = vmatmul.f32.gmra.mxu0 %v3581
      %v3924 = vpop.f32.mrf.mxu0
      %v3925 = vadd.f32 0.0, %v3924
      %3926 = vmatmul.f32.gmra.mxu0 %v3582
      %v3927 = vpop.f32.mrf.mxu0
      %v3928 = vadd.f32 0.0, %v3927
      %3929 = vmatmul.f32.gmra.mxu0 %v3583
      %v3930 = vpop.f32.mrf.mxu0
      %v3931 = vadd.f32 0.0, %v3930
      %3932 = vmatmul.f32.gmra.mxu0 %v3584
      %v3933 = vpop.f32.mrf.mxu0
      %v3934 = vadd.f32 0.0, %v3933
      %3935 = vmatmul.f32.gmra.mxu0 %v3585
      %v3936 = vpop.f32.mrf.mxu0
      %v3937 = vadd.f32 0.0, %v3936
      %3938 = vmatmul.f32.gmra.mxu0 %v3586
      %v3939 = vpop.f32.mrf.mxu0
      %v3940 = vadd.f32 0.0, %v3939
      %3941 = vmatmul.f32.gmra.mxu0 %v3587
      %v3942 = vpop.f32.mrf.mxu0
      %v3943 = vadd.f32 0.0, %v3942
      %3944 = vmatmul.f32.gmra.mxu0 %v3588
      %v3945 = vpop.f32.mrf.mxu0
      %v3946 = vadd.f32 0.0, %v3945
      %3947 = vmatmul.f32.gmra.mxu0 %v3589
      %v3948 = vpop.f32.mrf.mxu0
      %v3949 = vadd.f32 0.0, %v3948
      %3950 = vmatmul.f32.gmra.mxu0 %v3590
      %v3951 = vpop.f32.mrf.mxu0
      %v3952 = vadd.f32 0.0, %v3951
      %3953 = vmatmul.f32.gmra.mxu0 %v3591
      %v3954 = vpop.f32.mrf.mxu0
      %v3955 = vadd.f32 0.0, %v3954
      %3956 = vmatmul.f32.gmra.mxu0 %v3592
      %v3957 = vpop.f32.mrf.mxu0
      %v3958 = vadd.f32 0.0, %v3957
      %3959 = vmatmul.f32.gmra.mxu0 %v3593
      %v3960 = vpop.f32.mrf.mxu0
      %v3961 = vadd.f32 0.0, %v3960
      %3962 = vmatmul.f32.gmra.mxu0 %v3594
      %v3963 = vpop.f32.mrf.mxu0
      %v3964 = vadd.f32 0.0, %v3963
      %3965 = vmatmul.f32.gmra.mxu0 %v3595
      %v3966 = vpop.f32.mrf.mxu0
      %v3967 = vadd.f32 0.0, %v3966
      %3968 = vmatmul.f32.gmra.mxu0 %v3596
      %v3969 = vpop.f32.mrf.mxu0
      %v3970 = vadd.f32 0.0, %v3969
      %3971 = vmatmul.f32.gmra.mxu0 %v3597
      %v3972 = vpop.f32.mrf.mxu0
      %v3973 = vadd.f32 0.0, %v3972
      %3974 = vmatmul.f32.gmra.mxu0 %v3598
      %v3975 = vpop.f32.mrf.mxu0
      %v3976 = vadd.f32 0.0, %v3975
      %3977 = vmatmul.f32.gmra.mxu0 %v3599
      %v3978 = vpop.f32.mrf.mxu0
      %v3979 = vadd.f32 0.0, %v3978
      %3980 = vmatmul.f32.gmra.mxu0 %v3600
      %v3981 = vpop.f32.mrf.mxu0
      %v3982 = vadd.f32 0.0, %v3981
      %3983 = vmatmul.f32.gmra.mxu0 %v3601
      %v3984 = vpop.f32.mrf.mxu0
      %v3985 = vadd.f32 0.0, %v3984
      %3986 = vmatmul.f32.gmra.mxu0 %v3602
      %v3987 = vpop.f32.mrf.mxu0
      %v3988 = vadd.f32 0.0, %v3987
      %3989 = vmatmul.f32.gmra.mxu0 %v3603
      %v3990 = vpop.f32.mrf.mxu0
      %v3991 = vadd.f32 0.0, %v3990
      %3992 = vmatmul.f32.gmra.mxu0 %v3604
      %v3993 = vpop.f32.mrf.mxu0
      %v3994 = vadd.f32 0.0, %v3993
      %3995 = vmatmul.f32.gmra.mxu0 %v3605
      %v3996 = vpop.f32.mrf.mxu0
      %v3997 = vadd.f32 0.0, %v3996
      %3998 = vmatmul.f32.gmra.mxu0 %v3606
      %v3999 = vpop.f32.mrf.mxu0
      %v4000 = vadd.f32 0.0, %v3999
      %4001 = vmatmul.f32.gmra.mxu0 %v3607
      %v4002 = vpop.f32.mrf.mxu0
      %v4003 = vadd.f32 0.0, %v4002
      %4004 = vmatmul.f32.gmra.mxu0 %v3608
      %v4005 = vpop.f32.mrf.mxu0
      %v4006 = vadd.f32 0.0, %v4005
      %4007 = vmatmul.f32.gmra.mxu0 %v3609
      %v4008 = vpop.f32.mrf.mxu0
      %v4009 = vadd.f32 0.0, %v4008
      %4010 = vdwg.mxu0
      %v4011 = vadd.f32 %v3628, %v299
      %v4012 = vadd.f32 %v3631, %v305
      %v4013 = vadd.f32 %v3634, %v312
      %v4014 = vadd.f32 %v3637, %v318
      %v4015 = vadd.f32 %v3640, %v325
      %v4016 = vadd.f32 %v3643, %v331
      %v4017 = vadd.f32 %v3646, %v338
      %v4018 = vadd.f32 %v3649, %v344
      %v4019 = vadd.f32 %v3652, %v351
      %v4020 = vadd.f32 %v3655, %v357
      %v4021 = vadd.f32 %v3658, %v364
      %v4022 = vadd.f32 %v3661, %v370
      %v4023 = vadd.f32 %v3664, %v377
      %v4024 = vadd.f32 %v3667, %v383
      %v4025 = vadd.f32 %v3670, %v390
      %v4026 = vadd.f32 %v3673, %v396
      %v4027 = vadd.f32 %v3676, %v403
      %v4028 = vadd.f32 %v3679, %v409
      %v4029 = vadd.f32 %v3682, %v416
      %v4030 = vadd.f32 %v3685, %v422
      %v4031 = vadd.f32 %v3688, %v429
      %v4032 = vadd.f32 %v3691, %v435
      %v4033 = vadd.f32 %v3694, %v442
      %v4034 = vadd.f32 %v3697, %v448
      %v4035 = vadd.f32 %v3700, %v455
      %v4036 = vadd.f32 %v3703, %v461
      %v4037 = vadd.f32 %v3706, %v468
      %v4038 = vadd.f32 %v3709, %v474
      %v4039 = vadd.f32 %v3712, %v481
      %v4040 = vadd.f32 %v3715, %v487
      %v4041 = vadd.f32 %v3718, %v494
      %v4042 = vadd.f32 %v3721, %v500
      %v4043 = vadd.f32 %v3724, %v507
      %v4044 = vadd.f32 %v3727, %v513
      %v4045 = vadd.f32 %v3730, %v520
      %v4046 = vadd.f32 %v3733, %v526
      %v4047 = vadd.f32 %v3736, %v533
      %v4048 = vadd.f32 %v3739, %v539
      %v4049 = vadd.f32 %v3742, %v546
      %v4050 = vadd.f32 %v3745, %v552
      %v4051 = vadd.f32 %v3748, %v559
      %v4052 = vadd.f32 %v3751, %v565
      %v4053 = vadd.f32 %v3754, %v572
      %v4054 = vadd.f32 %v3757, %v578
      %v4055 = vadd.f32 %v3760, %v585
      %v4056 = vadd.f32 %v3763, %v591
      %v4057 = vadd.f32 %v3766, %v598
      %v4058 = vadd.f32 %v3769, %v604
      %v4059 = vadd.f32 %v3772, %v611
      %v4060 = vadd.f32 %v3775, %v617
      %v4061 = vadd.f32 %v3778, %v624
      %v4062 = vadd.f32 %v3781, %v630
      %v4063 = vadd.f32 %v3784, %v637
      %v4064 = vadd.f32 %v3787, %v643
      %v4065 = vadd.f32 %v3790, %v650
      %v4066 = vadd.f32 %v3793, %v656
      %v4067 = vadd.f32 %v3796, %v663
      %v4068 = vadd.f32 %v3799, %v669
      %v4069 = vadd.f32 %v3802, %v676
      %v4070 = vadd.f32 %v3805, %v682
      %v4071 = vadd.f32 %v3808, %v689
      %v4072 = vadd.f32 %v3811, %v695
      %v4073 = vadd.f32 %v3814, %v702
      %v4074 = vadd.f32 %v3817, %v708
      %v4075 = vadd.f32 %v3820, %v715
      %v4076 = vadd.f32 %v3823, %v721
      %v4077 = vadd.f32 %v3826, %v728
      %v4078 = vadd.f32 %v3829, %v734
      %v4079 = vadd.f32 %v3832, %v741
      %v4080 = vadd.f32 %v3835, %v747
      %v4081 = vadd.f32 %v3838, %v754
      %v4082 = vadd.f32 %v3841, %v760
      %v4083 = vadd.f32 %v3844, %v767
      %v4084 = vadd.f32 %v3847, %v773
      %v4085 = vadd.f32 %v3850, %v780
      %v4086 = vadd.f32 %v3853, %v786
      %v4087 = vadd.f32 %v3856, %v793
      %v4088 = vadd.f32 %v3859, %v799
      %v4089 = vadd.f32 %v3862, %v806
      %v4090 = vadd.f32 %v3865, %v812
      %v4091 = vadd.f32 %v3868, %v819
      %v4092 = vadd.f32 %v3871, %v825
      %v4093 = vadd.f32 %v3874, %v832
      %v4094 = vadd.f32 %v3877, %v838
      %v4095 = vadd.f32 %v3880, %v845
      %v4096 = vadd.f32 %v3883, %v851
      %v4097 = vadd.f32 %v3886, %v858
      %v4098 = vadd.f32 %v3889, %v864
      %v4099 = vadd.f32 %v3892, %v871
      %v4100 = vadd.f32 %v3895, %v877
      %v4101 = vadd.f32 %v3898, %v884
      %v4102 = vadd.f32 %v3901, %v890
      %v4103 = vadd.f32 %v3904, %v897
      %v4104 = vadd.f32 %v3907, %v903
      %v4105 = vadd.f32 %v3910, %v910
      %v4106 = vadd.f32 %v3913, %v916
      %v4107 = vadd.f32 %v3916, %v923
      %v4108 = vadd.f32 %v3919, %v929
      %v4109 = vadd.f32 %v3922, %v936
      %v4110 = vadd.f32 %v3925, %v942
      %v4111 = vadd.f32 %v3928, %v949
      %v4112 = vadd.f32 %v3931, %v955
      %v4113 = vadd.f32 %v3934, %v962
      %v4114 = vadd.f32 %v3937, %v968
      %v4115 = vadd.f32 %v3940, %v975
      %v4116 = vadd.f32 %v3943, %v981
      %v4117 = vadd.f32 %v3946, %v988
      %v4118 = vadd.f32 %v3949, %v994
      %v4119 = vadd.f32 %v3952, %v1001
      %v4120 = vadd.f32 %v3955, %v1007
      %v4121 = vadd.f32 %v3958, %v1014
      %v4122 = vadd.f32 %v3961, %v1020
      %v4123 = vadd.f32 %v3964, %v1027
      %v4124 = vadd.f32 %v3967, %v1033
      %v4125 = vadd.f32 %v3970, %v1040
      %v4126 = vadd.f32 %v3973, %v1046
      %v4127 = vadd.f32 %v3976, %v1053
      %v4128 = vadd.f32 %v3979, %v1059
      %v4129 = vadd.f32 %v3982, %v1066
      %v4130 = vadd.f32 %v3985, %v1072
      %v4131 = vadd.f32 %v3988, %v1079
      %v4132 = vadd.f32 %v3991, %v1085
      %v4133 = vadd.f32 %v3994, %v1092
      %v4134 = vadd.f32 %v3997, %v1098
      %v4135 = vadd.f32 %v4000, %v1105
      %v4136 = vadd.f32 %v4003, %v1111
      %v4137 = vadd.f32 %v4006, %v1118
      %v4138 = vadd.f32 %v4009, %v1124
      %v4139 = vmax.f32 %v4011, %v4012
      %v4140 = vrot.slane %v4139, 4
      %v4141 = vmax.f32 %v4139, %v4140
      %v4142 = vrot.slane %v4141, 2
      %v4143 = vmax.f32 %v4141, %v4142
      %v4144 = vrot.slane %v4143, 1
      %v4145 = vmax.f32 %v4143, %v4144
      %v4146 = vmax.f32 %v4013, %v4014
      %v4147 = vrot.slane %v4146, 4
      %v4148 = vmax.f32 %v4146, %v4147
      %v4149 = vrot.slane %v4148, 2
      %v4150 = vmax.f32 %v4148, %v4149
      %v4151 = vrot.slane %v4150, 1
      %v4152 = vmax.f32 %v4150, %v4151
      %v4153 = vmax.f32 %v4015, %v4016
      %v4154 = vrot.slane %v4153, 4
      %v4155 = vmax.f32 %v4153, %v4154
      %v4156 = vrot.slane %v4155, 2
      %v4157 = vmax.f32 %v4155, %v4156
      %v4158 = vrot.slane %v4157, 1
      %v4159 = vmax.f32 %v4157, %v4158
      %v4160 = vmax.f32 %v4017, %v4018
      %v4161 = vrot.slane %v4160, 4
      %v4162 = vmax.f32 %v4160, %v4161
      %v4163 = vrot.slane %v4162, 2
      %v4164 = vmax.f32 %v4162, %v4163
      %v4165 = vrot.slane %v4164, 1
      %v4166 = vmax.f32 %v4164, %v4165
      %v4167 = vmax.f32 %v4019, %v4020
      %v4168 = vrot.slane %v4167, 4
      %v4169 = vmax.f32 %v4167, %v4168
      %v4170 = vrot.slane %v4169, 2
      %v4171 = vmax.f32 %v4169, %v4170
      %v4172 = vrot.slane %v4171, 1
      %v4173 = vmax.f32 %v4171, %v4172
      %v4174 = vmax.f32 %v4021, %v4022
      %v4175 = vrot.slane %v4174, 4
      %v4176 = vmax.f32 %v4174, %v4175
      %v4177 = vrot.slane %v4176, 2
      %v4178 = vmax.f32 %v4176, %v4177
      %v4179 = vrot.slane %v4178, 1
      %v4180 = vmax.f32 %v4178, %v4179
      %v4181 = vmax.f32 %v4023, %v4024
      %v4182 = vrot.slane %v4181, 4
      %v4183 = vmax.f32 %v4181, %v4182
      %v4184 = vrot.slane %v4183, 2
      %v4185 = vmax.f32 %v4183, %v4184
      %v4186 = vrot.slane %v4185, 1
      %v4187 = vmax.f32 %v4185, %v4186
      %v4188 = vmax.f32 %v4025, %v4026
      %v4189 = vrot.slane %v4188, 4
      %v4190 = vmax.f32 %v4188, %v4189
      %v4191 = vrot.slane %v4190, 2
      %v4192 = vmax.f32 %v4190, %v4191
      %v4193 = vrot.slane %v4192, 1
      %v4194 = vmax.f32 %v4192, %v4193
      %v4195 = vmax.f32 %v4027, %v4028
      %v4196 = vrot.slane %v4195, 4
      %v4197 = vmax.f32 %v4195, %v4196
      %v4198 = vrot.slane %v4197, 2
      %v4199 = vmax.f32 %v4197, %v4198
      %v4200 = vrot.slane %v4199, 1
      %v4201 = vmax.f32 %v4199, %v4200
      %v4202 = vmax.f32 %v4029, %v4030
      %v4203 = vrot.slane %v4202, 4
      %v4204 = vmax.f32 %v4202, %v4203
      %v4205 = vrot.slane %v4204, 2
      %v4206 = vmax.f32 %v4204, %v4205
      %v4207 = vrot.slane %v4206, 1
      %v4208 = vmax.f32 %v4206, %v4207
      %v4209 = vmax.f32 %v4031, %v4032
      %v4210 = vrot.slane %v4209, 4
      %v4211 = vmax.f32 %v4209, %v4210
      %v4212 = vrot.slane %v4211, 2
      %v4213 = vmax.f32 %v4211, %v4212
      %v4214 = vrot.slane %v4213, 1
      %v4215 = vmax.f32 %v4213, %v4214
      %v4216 = vmax.f32 %v4033, %v4034
      %v4217 = vrot.slane %v4216, 4
      %v4218 = vmax.f32 %v4216, %v4217
      %v4219 = vrot.slane %v4218, 2
      %v4220 = vmax.f32 %v4218, %v4219
      %v4221 = vrot.slane %v4220, 1
      %v4222 = vmax.f32 %v4220, %v4221
      %v4223 = vmax.f32 %v4035, %v4036
      %v4224 = vrot.slane %v4223, 4
      %v4225 = vmax.f32 %v4223, %v4224
      %v4226 = vrot.slane %v4225, 2
      %v4227 = vmax.f32 %v4225, %v4226
      %v4228 = vrot.slane %v4227, 1
      %v4229 = vmax.f32 %v4227, %v4228
      %v4230 = vmax.f32 %v4037, %v4038
      %v4231 = vrot.slane %v4230, 4
      %v4232 = vmax.f32 %v4230, %v4231
      %v4233 = vrot.slane %v4232, 2
      %v4234 = vmax.f32 %v4232, %v4233
      %v4235 = vrot.slane %v4234, 1
      %v4236 = vmax.f32 %v4234, %v4235
      %v4237 = vmax.f32 %v4039, %v4040
      %v4238 = vrot.slane %v4237, 4
      %v4239 = vmax.f32 %v4237, %v4238
      %v4240 = vrot.slane %v4239, 2
      %v4241 = vmax.f32 %v4239, %v4240
      %v4242 = vrot.slane %v4241, 1
      %v4243 = vmax.f32 %v4241, %v4242
      %v4244 = vmax.f32 %v4041, %v4042
      %v4245 = vrot.slane %v4244, 4
      %v4246 = vmax.f32 %v4244, %v4245
      %v4247 = vrot.slane %v4246, 2
      %v4248 = vmax.f32 %v4246, %v4247
      %v4249 = vrot.slane %v4248, 1
      %v4250 = vmax.f32 %v4248, %v4249
      %v4251 = vmax.f32 %v4043, %v4044
      %v4252 = vrot.slane %v4251, 4
      %v4253 = vmax.f32 %v4251, %v4252
      %v4254 = vrot.slane %v4253, 2
      %v4255 = vmax.f32 %v4253, %v4254
      %v4256 = vrot.slane %v4255, 1
      %v4257 = vmax.f32 %v4255, %v4256
      %v4258 = vmax.f32 %v4045, %v4046
      %v4259 = vrot.slane %v4258, 4
      %v4260 = vmax.f32 %v4258, %v4259
      %v4261 = vrot.slane %v4260, 2
      %v4262 = vmax.f32 %v4260, %v4261
      %v4263 = vrot.slane %v4262, 1
      %v4264 = vmax.f32 %v4262, %v4263
      %v4265 = vmax.f32 %v4047, %v4048
      %v4266 = vrot.slane %v4265, 4
      %v4267 = vmax.f32 %v4265, %v4266
      %v4268 = vrot.slane %v4267, 2
      %v4269 = vmax.f32 %v4267, %v4268
      %v4270 = vrot.slane %v4269, 1
      %v4271 = vmax.f32 %v4269, %v4270
      %v4272 = vmax.f32 %v4049, %v4050
      %v4273 = vrot.slane %v4272, 4
      %v4274 = vmax.f32 %v4272, %v4273
      %v4275 = vrot.slane %v4274, 2
      %v4276 = vmax.f32 %v4274, %v4275
      %v4277 = vrot.slane %v4276, 1
      %v4278 = vmax.f32 %v4276, %v4277
      %v4279 = vmax.f32 %v4051, %v4052
      %v4280 = vrot.slane %v4279, 4
      %v4281 = vmax.f32 %v4279, %v4280
      %v4282 = vrot.slane %v4281, 2
      %v4283 = vmax.f32 %v4281, %v4282
      %v4284 = vrot.slane %v4283, 1
      %v4285 = vmax.f32 %v4283, %v4284
      %v4286 = vmax.f32 %v4053, %v4054
      %v4287 = vrot.slane %v4286, 4
      %v4288 = vmax.f32 %v4286, %v4287
      %v4289 = vrot.slane %v4288, 2
      %v4290 = vmax.f32 %v4288, %v4289
      %v4291 = vrot.slane %v4290, 1
      %v4292 = vmax.f32 %v4290, %v4291
      %v4293 = vmax.f32 %v4055, %v4056
      %v4294 = vrot.slane %v4293, 4
      %v4295 = vmax.f32 %v4293, %v4294
      %v4296 = vrot.slane %v4295, 2
      %v4297 = vmax.f32 %v4295, %v4296
      %v4298 = vrot.slane %v4297, 1
      %v4299 = vmax.f32 %v4297, %v4298
      %v4300 = vmax.f32 %v4057, %v4058
      %v4301 = vrot.slane %v4300, 4
      %v4302 = vmax.f32 %v4300, %v4301
      %v4303 = vrot.slane %v4302, 2
      %v4304 = vmax.f32 %v4302, %v4303
      %v4305 = vrot.slane %v4304, 1
      %v4306 = vmax.f32 %v4304, %v4305
      %v4307 = vmax.f32 %v4059, %v4060
      %v4308 = vrot.slane %v4307, 4
      %v4309 = vmax.f32 %v4307, %v4308
      %v4310 = vrot.slane %v4309, 2
      %v4311 = vmax.f32 %v4309, %v4310
      %v4312 = vrot.slane %v4311, 1
      %v4313 = vmax.f32 %v4311, %v4312
      %v4314 = vmax.f32 %v4061, %v4062
      %v4315 = vrot.slane %v4314, 4
      %v4316 = vmax.f32 %v4314, %v4315
      %v4317 = vrot.slane %v4316, 2
      %v4318 = vmax.f32 %v4316, %v4317
      %v4319 = vrot.slane %v4318, 1
      %v4320 = vmax.f32 %v4318, %v4319
      %v4321 = vmax.f32 %v4063, %v4064
      %v4322 = vrot.slane %v4321, 4
      %v4323 = vmax.f32 %v4321, %v4322
      %v4324 = vrot.slane %v4323, 2
      %v4325 = vmax.f32 %v4323, %v4324
      %v4326 = vrot.slane %v4325, 1
      %v4327 = vmax.f32 %v4325, %v4326
      %v4328 = vmax.f32 %v4065, %v4066
      %v4329 = vrot.slane %v4328, 4
      %v4330 = vmax.f32 %v4328, %v4329
      %v4331 = vrot.slane %v4330, 2
      %v4332 = vmax.f32 %v4330, %v4331
      %v4333 = vrot.slane %v4332, 1
      %v4334 = vmax.f32 %v4332, %v4333
      %v4335 = vmax.f32 %v4067, %v4068
      %v4336 = vrot.slane %v4335, 4
      %v4337 = vmax.f32 %v4335, %v4336
      %v4338 = vrot.slane %v4337, 2
      %v4339 = vmax.f32 %v4337, %v4338
      %v4340 = vrot.slane %v4339, 1
      %v4341 = vmax.f32 %v4339, %v4340
      %v4342 = vmax.f32 %v4069, %v4070
      %v4343 = vrot.slane %v4342, 4
      %v4344 = vmax.f32 %v4342, %v4343
      %v4345 = vrot.slane %v4344, 2
      %v4346 = vmax.f32 %v4344, %v4345
      %v4347 = vrot.slane %v4346, 1
      %v4348 = vmax.f32 %v4346, %v4347
      %v4349 = vmax.f32 %v4071, %v4072
      %v4350 = vrot.slane %v4349, 4
      %v4351 = vmax.f32 %v4349, %v4350
      %v4352 = vrot.slane %v4351, 2
      %v4353 = vmax.f32 %v4351, %v4352
      %v4354 = vrot.slane %v4353, 1
      %v4355 = vmax.f32 %v4353, %v4354
      %v4356 = vmax.f32 %v4073, %v4074
      %v4357 = vrot.slane %v4356, 4
      %v4358 = vmax.f32 %v4356, %v4357
      %v4359 = vrot.slane %v4358, 2
      %v4360 = vmax.f32 %v4358, %v4359
      %v4361 = vrot.slane %v4360, 1
      %v4362 = vmax.f32 %v4360, %v4361
      %v4363 = vmax.f32 %v4075, %v4076
      %v4364 = vrot.slane %v4363, 4
      %v4365 = vmax.f32 %v4363, %v4364
      %v4366 = vrot.slane %v4365, 2
      %v4367 = vmax.f32 %v4365, %v4366
      %v4368 = vrot.slane %v4367, 1
      %v4369 = vmax.f32 %v4367, %v4368
      %v4370 = vmax.f32 %v4077, %v4078
      %v4371 = vrot.slane %v4370, 4
      %v4372 = vmax.f32 %v4370, %v4371
      %v4373 = vrot.slane %v4372, 2
      %v4374 = vmax.f32 %v4372, %v4373
      %v4375 = vrot.slane %v4374, 1
      %v4376 = vmax.f32 %v4374, %v4375
      %v4377 = vmax.f32 %v4079, %v4080
      %v4378 = vrot.slane %v4377, 4
      %v4379 = vmax.f32 %v4377, %v4378
      %v4380 = vrot.slane %v4379, 2
      %v4381 = vmax.f32 %v4379, %v4380
      %v4382 = vrot.slane %v4381, 1
      %v4383 = vmax.f32 %v4381, %v4382
      %v4384 = vmax.f32 %v4081, %v4082
      %v4385 = vrot.slane %v4384, 4
      %v4386 = vmax.f32 %v4384, %v4385
      %v4387 = vrot.slane %v4386, 2
      %v4388 = vmax.f32 %v4386, %v4387
      %v4389 = vrot.slane %v4388, 1
      %v4390 = vmax.f32 %v4388, %v4389
      %v4391 = vmax.f32 %v4083, %v4084
      %v4392 = vrot.slane %v4391, 4
      %v4393 = vmax.f32 %v4391, %v4392
      %v4394 = vrot.slane %v4393, 2
      %v4395 = vmax.f32 %v4393, %v4394
      %v4396 = vrot.slane %v4395, 1
      %v4397 = vmax.f32 %v4395, %v4396
      %v4398 = vmax.f32 %v4085, %v4086
      %v4399 = vrot.slane %v4398, 4
      %v4400 = vmax.f32 %v4398, %v4399
      %v4401 = vrot.slane %v4400, 2
      %v4402 = vmax.f32 %v4400, %v4401
      %v4403 = vrot.slane %v4402, 1
      %v4404 = vmax.f32 %v4402, %v4403
      %v4405 = vmax.f32 %v4087, %v4088
      %v4406 = vrot.slane %v4405, 4
      %v4407 = vmax.f32 %v4405, %v4406
      %v4408 = vrot.slane %v4407, 2
      %v4409 = vmax.f32 %v4407, %v4408
      %v4410 = vrot.slane %v4409, 1
      %v4411 = vmax.f32 %v4409, %v4410
      %v4412 = vmax.f32 %v4089, %v4090
      %v4413 = vrot.slane %v4412, 4
      %v4414 = vmax.f32 %v4412, %v4413
      %v4415 = vrot.slane %v4414, 2
      %v4416 = vmax.f32 %v4414, %v4415
      %v4417 = vrot.slane %v4416, 1
      %v4418 = vmax.f32 %v4416, %v4417
      %v4419 = vmax.f32 %v4091, %v4092
      %v4420 = vrot.slane %v4419, 4
      %v4421 = vmax.f32 %v4419, %v4420
      %v4422 = vrot.slane %v4421, 2
      %v4423 = vmax.f32 %v4421, %v4422
      %v4424 = vrot.slane %v4423, 1
      %v4425 = vmax.f32 %v4423, %v4424
      %v4426 = vmax.f32 %v4093, %v4094
      %v4427 = vrot.slane %v4426, 4
      %v4428 = vmax.f32 %v4426, %v4427
      %v4429 = vrot.slane %v4428, 2
      %v4430 = vmax.f32 %v4428, %v4429
      %v4431 = vrot.slane %v4430, 1
      %v4432 = vmax.f32 %v4430, %v4431
      %v4433 = vmax.f32 %v4095, %v4096
      %v4434 = vrot.slane %v4433, 4
      %v4435 = vmax.f32 %v4433, %v4434
      %v4436 = vrot.slane %v4435, 2
      %v4437 = vmax.f32 %v4435, %v4436
      %v4438 = vrot.slane %v4437, 1
      %v4439 = vmax.f32 %v4437, %v4438
      %v4440 = vmax.f32 %v4097, %v4098
      %v4441 = vrot.slane %v4440, 4
      %v4442 = vmax.f32 %v4440, %v4441
      %v4443 = vrot.slane %v4442, 2
      %v4444 = vmax.f32 %v4442, %v4443
      %v4445 = vrot.slane %v4444, 1
      %v4446 = vmax.f32 %v4444, %v4445
      %v4447 = vmax.f32 %v4099, %v4100
      %v4448 = vrot.slane %v4447, 4
      %v4449 = vmax.f32 %v4447, %v4448
      %v4450 = vrot.slane %v4449, 2
      %v4451 = vmax.f32 %v4449, %v4450
      %v4452 = vrot.slane %v4451, 1
      %v4453 = vmax.f32 %v4451, %v4452
      %v4454 = vmax.f32 %v4101, %v4102
      %v4455 = vrot.slane %v4454, 4
      %v4456 = vmax.f32 %v4454, %v4455
      %v4457 = vrot.slane %v4456, 2
      %v4458 = vmax.f32 %v4456, %v4457
      %v4459 = vrot.slane %v4458, 1
      %v4460 = vmax.f32 %v4458, %v4459
      %v4461 = vmax.f32 %v4103, %v4104
      %v4462 = vrot.slane %v4461, 4
      %v4463 = vmax.f32 %v4461, %v4462
      %v4464 = vrot.slane %v4463, 2
      %v4465 = vmax.f32 %v4463, %v4464
      %v4466 = vrot.slane %v4465, 1
      %v4467 = vmax.f32 %v4465, %v4466
      %v4468 = vmax.f32 %v4105, %v4106
      %v4469 = vrot.slane %v4468, 4
      %v4470 = vmax.f32 %v4468, %v4469
      %v4471 = vrot.slane %v4470, 2
      %v4472 = vmax.f32 %v4470, %v4471
      %v4473 = vrot.slane %v4472, 1
      %v4474 = vmax.f32 %v4472, %v4473
      %v4475 = vmax.f32 %v4107, %v4108
      %v4476 = vrot.slane %v4475, 4
      %v4477 = vmax.f32 %v4475, %v4476
      %v4478 = vrot.slane %v4477, 2
      %v4479 = vmax.f32 %v4477, %v4478
      %v4480 = vrot.slane %v4479, 1
      %v4481 = vmax.f32 %v4479, %v4480
      %v4482 = vmax.f32 %v4109, %v4110
      %v4483 = vrot.slane %v4482, 4
      %v4484 = vmax.f32 %v4482, %v4483
      %v4485 = vrot.slane %v4484, 2
      %v4486 = vmax.f32 %v4484, %v4485
      %v4487 = vrot.slane %v4486, 1
      %v4488 = vmax.f32 %v4486, %v4487
      %v4489 = vmax.f32 %v4111, %v4112
      %v4490 = vrot.slane %v4489, 4
      %v4491 = vmax.f32 %v4489, %v4490
      %v4492 = vrot.slane %v4491, 2
      %v4493 = vmax.f32 %v4491, %v4492
      %v4494 = vrot.slane %v4493, 1
      %v4495 = vmax.f32 %v4493, %v4494
      %v4496 = vmax.f32 %v4113, %v4114
      %v4497 = vrot.slane %v4496, 4
      %v4498 = vmax.f32 %v4496, %v4497
      %v4499 = vrot.slane %v4498, 2
      %v4500 = vmax.f32 %v4498, %v4499
      %v4501 = vrot.slane %v4500, 1
      %v4502 = vmax.f32 %v4500, %v4501
      %v4503 = vmax.f32 %v4115, %v4116
      %v4504 = vrot.slane %v4503, 4
      %v4505 = vmax.f32 %v4503, %v4504
      %v4506 = vrot.slane %v4505, 2
      %v4507 = vmax.f32 %v4505, %v4506
      %v4508 = vrot.slane %v4507, 1
      %v4509 = vmax.f32 %v4507, %v4508
      %v4510 = vmax.f32 %v4117, %v4118
      %v4511 = vrot.slane %v4510, 4
      %v4512 = vmax.f32 %v4510, %v4511
      %v4513 = vrot.slane %v4512, 2
      %v4514 = vmax.f32 %v4512, %v4513
      %v4515 = vrot.slane %v4514, 1
      %v4516 = vmax.f32 %v4514, %v4515
      %v4517 = vmax.f32 %v4119, %v4120
      %v4518 = vrot.slane %v4517, 4
      %v4519 = vmax.f32 %v4517, %v4518
      %v4520 = vrot.slane %v4519, 2
      %v4521 = vmax.f32 %v4519, %v4520
      %v4522 = vrot.slane %v4521, 1
      %v4523 = vmax.f32 %v4521, %v4522
      %v4524 = vmax.f32 %v4121, %v4122
      %v4525 = vrot.slane %v4524, 4
      %v4526 = vmax.f32 %v4524, %v4525
      %v4527 = vrot.slane %v4526, 2
      %v4528 = vmax.f32 %v4526, %v4527
      %v4529 = vrot.slane %v4528, 1
      %v4530 = vmax.f32 %v4528, %v4529
      %v4531 = vmax.f32 %v4123, %v4124
      %v4532 = vrot.slane %v4531, 4
      %v4533 = vmax.f32 %v4531, %v4532
      %v4534 = vrot.slane %v4533, 2
      %v4535 = vmax.f32 %v4533, %v4534
      %v4536 = vrot.slane %v4535, 1
      %v4537 = vmax.f32 %v4535, %v4536
      %v4538 = vmax.f32 %v4125, %v4126
      %v4539 = vrot.slane %v4538, 4
      %v4540 = vmax.f32 %v4538, %v4539
      %v4541 = vrot.slane %v4540, 2
      %v4542 = vmax.f32 %v4540, %v4541
      %v4543 = vrot.slane %v4542, 1
      %v4544 = vmax.f32 %v4542, %v4543
      %v4545 = vmax.f32 %v4127, %v4128
      %v4546 = vrot.slane %v4545, 4
      %v4547 = vmax.f32 %v4545, %v4546
      %v4548 = vrot.slane %v4547, 2
      %v4549 = vmax.f32 %v4547, %v4548
      %v4550 = vrot.slane %v4549, 1
      %v4551 = vmax.f32 %v4549, %v4550
      %v4552 = vmax.f32 %v4129, %v4130
      %v4553 = vrot.slane %v4552, 4
      %v4554 = vmax.f32 %v4552, %v4553
      %v4555 = vrot.slane %v4554, 2
      %v4556 = vmax.f32 %v4554, %v4555
      %v4557 = vrot.slane %v4556, 1
      %v4558 = vmax.f32 %v4556, %v4557
      %v4559 = vmax.f32 %v4131, %v4132
      %v4560 = vrot.slane %v4559, 4
      %v4561 = vmax.f32 %v4559, %v4560
      %v4562 = vrot.slane %v4561, 2
      %v4563 = vmax.f32 %v4561, %v4562
      %v4564 = vrot.slane %v4563, 1
      %v4565 = vmax.f32 %v4563, %v4564
      %v4566 = vmax.f32 %v4133, %v4134
      %v4567 = vrot.slane %v4566, 4
      %v4568 = vmax.f32 %v4566, %v4567
      %v4569 = vrot.slane %v4568, 2
      %v4570 = vmax.f32 %v4568, %v4569
      %v4571 = vrot.slane %v4570, 1
      %v4572 = vmax.f32 %v4570, %v4571
      %v4573 = vmax.f32 %v4135, %v4136
      %v4574 = vrot.slane %v4573, 4
      %v4575 = vmax.f32 %v4573, %v4574
      %v4576 = vrot.slane %v4575, 2
      %v4577 = vmax.f32 %v4575, %v4576
      %v4578 = vrot.slane %v4577, 1
      %v4579 = vmax.f32 %v4577, %v4578
      %v4580 = vmax.f32 %v4137, %v4138
      %v4581 = vrot.slane %v4580, 4
      %v4582 = vmax.f32 %v4580, %v4581
      %v4583 = vrot.slane %v4582, 2
      %v4584 = vmax.f32 %v4582, %v4583
      %v4585 = vrot.slane %v4584, 1
      %v4586 = vmax.f32 %v4584, %v4585
      %v4588 = vperm.slane %v2877, 0
      %v4590 = vadd.f32 %v4145, %v4588
      %v4591 = vadd.f32 %v4152, %v4588
      %v4592 = vadd.f32 %v4159, %v4588
      %v4593 = vadd.f32 %v4166, %v4588
      %v4594 = vadd.f32 %v4173, %v4588
      %v4595 = vadd.f32 %v4180, %v4588
      %v4596 = vadd.f32 %v4187, %v4588
      %v4597 = vadd.f32 %v4194, %v4588
      %v4598 = vadd.f32 %v4201, %v4588
      %v4599 = vadd.f32 %v4208, %v4588
      %v4600 = vadd.f32 %v4215, %v4588
      %v4601 = vadd.f32 %v4222, %v4588
      %v4602 = vadd.f32 %v4229, %v4588
      %v4603 = vadd.f32 %v4236, %v4588
      %v4604 = vadd.f32 %v4243, %v4588
      %v4605 = vadd.f32 %v4250, %v4588
      %v4606 = vadd.f32 %v4257, %v4588
      %v4607 = vadd.f32 %v4264, %v4588
      %v4608 = vadd.f32 %v4271, %v4588
      %v4609 = vadd.f32 %v4278, %v4588
      %v4610 = vadd.f32 %v4285, %v4588
      %v4611 = vadd.f32 %v4292, %v4588
      %v4612 = vadd.f32 %v4299, %v4588
      %v4613 = vadd.f32 %v4306, %v4588
      %v4614 = vadd.f32 %v4313, %v4588
      %v4615 = vadd.f32 %v4320, %v4588
      %v4616 = vadd.f32 %v4327, %v4588
      %v4617 = vadd.f32 %v4334, %v4588
      %v4618 = vadd.f32 %v4341, %v4588
      %v4619 = vadd.f32 %v4348, %v4588
      %v4620 = vadd.f32 %v4355, %v4588
      %v4621 = vadd.f32 %v4362, %v4588
      %v4622 = vadd.f32 %v4369, %v4588
      %v4623 = vadd.f32 %v4376, %v4588
      %v4624 = vadd.f32 %v4383, %v4588
      %v4625 = vadd.f32 %v4390, %v4588
      %v4626 = vadd.f32 %v4397, %v4588
      %v4627 = vadd.f32 %v4404, %v4588
      %v4628 = vadd.f32 %v4411, %v4588
      %v4629 = vadd.f32 %v4418, %v4588
      %v4630 = vadd.f32 %v4425, %v4588
      %v4631 = vadd.f32 %v4432, %v4588
      %v4632 = vadd.f32 %v4439, %v4588
      %v4633 = vadd.f32 %v4446, %v4588
      %v4634 = vadd.f32 %v4453, %v4588
      %v4635 = vadd.f32 %v4460, %v4588
      %v4636 = vadd.f32 %v4467, %v4588
      %v4637 = vadd.f32 %v4474, %v4588
      %v4638 = vadd.f32 %v4481, %v4588
      %v4639 = vadd.f32 %v4488, %v4588
      %v4640 = vadd.f32 %v4495, %v4588
      %v4641 = vadd.f32 %v4502, %v4588
      %v4642 = vadd.f32 %v4509, %v4588
      %v4643 = vadd.f32 %v4516, %v4588
      %v4644 = vadd.f32 %v4523, %v4588
      %v4645 = vadd.f32 %v4530, %v4588
      %v4646 = vadd.f32 %v4537, %v4588
      %v4647 = vadd.f32 %v4544, %v4588
      %v4648 = vadd.f32 %v4551, %v4588
      %v4649 = vadd.f32 %v4558, %v4588
      %v4650 = vadd.f32 %v4565, %v4588
      %v4651 = vadd.f32 %v4572, %v4588
      %v4652 = vadd.f32 %v4579, %v4588
      %v4653 = vadd.f32 %v4586, %v4588
      %v4654 = vmax.f32 %v4590, 0.0
      %v4655 = vmax.f32 %v4591, 0.0
      %v4656 = vmax.f32 %v4592, 0.0
      %v4657 = vmax.f32 %v4593, 0.0
      %v4658 = vmax.f32 %v4594, 0.0
      %v4659 = vmax.f32 %v4595, 0.0
      %v4660 = vmax.f32 %v4596, 0.0
      %v4661 = vmax.f32 %v4597, 0.0
      %v4662 = vmax.f32 %v4598, 0.0
      %v4663 = vmax.f32 %v4599, 0.0
      %v4664 = vmax.f32 %v4600, 0.0
      %v4665 = vmax.f32 %v4601, 0.0
      %v4666 = vmax.f32 %v4602, 0.0
      %v4667 = vmax.f32 %v4603, 0.0
      %v4668 = vmax.f32 %v4604, 0.0
      %v4669 = vmax.f32 %v4605, 0.0
      %v4670 = vmax.f32 %v4606, 0.0
      %v4671 = vmax.f32 %v4607, 0.0
      %v4672 = vmax.f32 %v4608, 0.0
      %v4673 = vmax.f32 %v4609, 0.0
      %v4674 = vmax.f32 %v4610, 0.0
      %v4675 = vmax.f32 %v4611, 0.0
      %v4676 = vmax.f32 %v4612, 0.0
      %v4677 = vmax.f32 %v4613, 0.0
      %v4678 = vmax.f32 %v4614, 0.0
      %v4679 = vmax.f32 %v4615, 0.0
      %v4680 = vmax.f32 %v4616, 0.0
      %v4681 = vmax.f32 %v4617, 0.0
      %v4682 = vmax.f32 %v4618, 0.0
      %v4683 = vmax.f32 %v4619, 0.0
      %v4684 = vmax.f32 %v4620, 0.0
      %v4685 = vmax.f32 %v4621, 0.0
      %v4686 = vmax.f32 %v4622, 0.0
      %v4687 = vmax.f32 %v4623, 0.0
      %v4688 = vmax.f32 %v4624, 0.0
      %v4689 = vmax.f32 %v4625, 0.0
      %v4690 = vmax.f32 %v4626, 0.0
      %v4691 = vmax.f32 %v4627, 0.0
      %v4692 = vmax.f32 %v4628, 0.0
      %v4693 = vmax.f32 %v4629, 0.0
      %v4694 = vmax.f32 %v4630, 0.0
      %v4695 = vmax.f32 %v4631, 0.0
      %v4696 = vmax.f32 %v4632, 0.0
      %v4697 = vmax.f32 %v4633, 0.0
      %v4698 = vmax.f32 %v4634, 0.0
      %v4699 = vmax.f32 %v4635, 0.0
      %v4700 = vmax.f32 %v4636, 0.0
      %v4701 = vmax.f32 %v4637, 0.0
      %v4702 = vmax.f32 %v4638, 0.0
      %v4703 = vmax.f32 %v4639, 0.0
      %v4704 = vmax.f32 %v4640, 0.0
      %v4705 = vmax.f32 %v4641, 0.0
      %v4706 = vmax.f32 %v4642, 0.0
      %v4707 = vmax.f32 %v4643, 0.0
      %v4708 = vmax.f32 %v4644, 0.0
      %v4709 = vmax.f32 %v4645, 0.0
      %v4710 = vmax.f32 %v4646, 0.0
      %v4711 = vmax.f32 %v4647, 0.0
      %v4712 = vmax.f32 %v4648, 0.0
      %v4713 = vmax.f32 %v4649, 0.0
      %v4714 = vmax.f32 %v4650, 0.0
      %v4715 = vmax.f32 %v4651, 0.0
      %v4716 = vmax.f32 %v4652, 0.0
      %v4717 = vmax.f32 %v4653, 0.0
      %s4718 = scalar_lea.vmem %s2, 512
      %v4719 = vld [vmem:[%s4718] sm:$0xff]
      %v4720 = vld [vmem:[%s4718 + $0x8] sm:$0xff]
      %v4721 = vld [vmem:[%s4718 + $0x10] sm:$0xff]
      %v4722 = vld [vmem:[%s4718 + $0x18] sm:$0xff]
      %v4723 = vld [vmem:[%s4718 + $0x20] sm:$0xff]
      %v4724 = vld [vmem:[%s4718 + $0x28] sm:$0xff]
      %v4725 = vld [vmem:[%s4718 + $0x30] sm:$0xff]
      %v4726 = vld [vmem:[%s4718 + $0x38] sm:$0xff]
      %v4727 = vld [vmem:[%s4718 + $0x40] sm:$0xff]
      %v4728 = vld [vmem:[%s4718 + $0x48] sm:$0xff]
      %v4729 = vld [vmem:[%s4718 + $0x50] sm:$0xff]
      %v4730 = vld [vmem:[%s4718 + $0x58] sm:$0xff]
      %v4731 = vld [vmem:[%s4718 + $0x60] sm:$0xff]
      %v4732 = vld [vmem:[%s4718 + $0x68] sm:$0xff]
      %v4733 = vld [vmem:[%s4718 + $0x70] sm:$0xff]
      %v4734 = vld [vmem:[%s4718 + $0x78] sm:$0xff]
      %v4735 = vld [vmem:[%s4718 + $0x80] sm:$0xff]
      %v4736 = vld [vmem:[%s4718 + $0x88] sm:$0xff]
      %v4737 = vld [vmem:[%s4718 + $0x90] sm:$0xff]
      %v4738 = vld [vmem:[%s4718 + $0x98] sm:$0xff]
      %v4739 = vld [vmem:[%s4718 + $0xa0] sm:$0xff]
      %v4740 = vld [vmem:[%s4718 + $0xa8] sm:$0xff]
      %v4741 = vld [vmem:[%s4718 + $0xb0] sm:$0xff]
      %v4742 = vld [vmem:[%s4718 + $0xb8] sm:$0xff]
      %v4743 = vld [vmem:[%s4718 + $0xc0] sm:$0xff]
      %v4744 = vld [vmem:[%s4718 + $0xc8] sm:$0xff]
      %v4745 = vld [vmem:[%s4718 + $0xd0] sm:$0xff]
      %v4746 = vld [vmem:[%s4718 + $0xd8] sm:$0xff]
      %v4747 = vld [vmem:[%s4718 + $0xe0] sm:$0xff]
      %v4748 = vld [vmem:[%s4718 + $0xe8] sm:$0xff]
      %v4749 = vld [vmem:[%s4718 + $0xf0] sm:$0xff]
      %v4750 = vld [vmem:[%s4718 + $0xf8] sm:$0xff]
      %s4751 = scalar_lea.vmem %s3, 2
      %v4752 = vld [vmem:[%s4751] sm:$0x1]
      %s4753 = scalar_lea.vmem %s4, 256
      %v4754 = vld [vmem:[%s4753] sm:$0xff]
      %v4755 = vld [vmem:[%s4753 + $0x8] sm:$0xff]
      %v4756 = vld [vmem:[%s4753 + $0x10] sm:$0xff]
      %v4757 = vld [vmem:[%s4753 + $0x18] sm:$0xff]
      %v4758 = vld [vmem:[%s4753 + $0x20] sm:$0xff]
      %v4759 = vld [vmem:[%s4753 + $0x28] sm:$0xff]
      %v4760 = vld [vmem:[%s4753 + $0x30] sm:$0xff]
      %v4761 = vld [vmem:[%s4753 + $0x38] sm:$0xff]
      %v4762 = vld [vmem:[%s4753 + $0x40] sm:$0xff]
      %v4763 = vld [vmem:[%s4753 + $0x48] sm:$0xff]
      %v4764 = vld [vmem:[%s4753 + $0x50] sm:$0xff]
      %v4765 = vld [vmem:[%s4753 + $0x58] sm:$0xff]
      %v4766 = vld [vmem:[%s4753 + $0x60] sm:$0xff]
      %v4767 = vld [vmem:[%s4753 + $0x68] sm:$0xff]
      %v4768 = vld [vmem:[%s4753 + $0x70] sm:$0xff]
      %v4769 = vld [vmem:[%s4753 + $0x78] sm:$0xff]
      %s4770 = scalar_lea.vmem %s5, 2
      %v4771 = vld [vmem:[%s4770] sm:$0x1]
      %v4836 = vrot.slane %v4655, 7
      %v4837 = vsel %vm2943, %v4836, %v4654
      %v4838 = vrot.slane %v4656, 6
      %v4839 = vsel %vm2946, %v4838, %v4837
      %v4840 = vrot.slane %v4657, 5
      %v4841 = vsel %vm2949, %v4840, %v4839
      %v4842 = vrot.slane %v4658, 4
      %v4843 = vsel %vm2952, %v4842, %v4841
      %v4844 = vrot.slane %v4659, 3
      %v4845 = vsel %vm2955, %v4844, %v4843
      %v4846 = vrot.slane %v4660, 2
      %v4847 = vsel %vm2958, %v4846, %v4845
      %v4848 = vrot.slane %v4661, 1
      %v4849 = vsel %vm2961, %v4848, %v4847
      %v4850 = vrot.slane %v4663, 7
      %v4851 = vsel %vm2943, %v4850, %v4662
      %v4852 = vrot.slane %v4664, 6
      %v4853 = vsel %vm2946, %v4852, %v4851
      %v4854 = vrot.slane %v4665, 5
      %v4855 = vsel %vm2949, %v4854, %v4853
      %v4856 = vrot.slane %v4666, 4
      %v4857 = vsel %vm2952, %v4856, %v4855
      %v4858 = vrot.slane %v4667, 3
      %v4859 = vsel %vm2955, %v4858, %v4857
      %v4860 = vrot.slane %v4668, 2
      %v4861 = vsel %vm2958, %v4860, %v4859
      %v4862 = vrot.slane %v4669, 1
      %v4863 = vsel %vm2961, %v4862, %v4861
      %v4864 = vrot.slane %v4671, 7
      %v4865 = vsel %vm2943, %v4864, %v4670
      %v4866 = vrot.slane %v4672, 6
      %v4867 = vsel %vm2946, %v4866, %v4865
      %v4868 = vrot.slane %v4673, 5
      %v4869 = vsel %vm2949, %v4868, %v4867
      %v4870 = vrot.slane %v4674, 4
      %v4871 = vsel %vm2952, %v4870, %v4869
      %v4872 = vrot.slane %v4675, 3
      %v4873 = vsel %vm2955, %v4872, %v4871
      %v4874 = vrot.slane %v4676, 2
      %v4875 = vsel %vm2958, %v4874, %v4873
      %v4876 = vrot.slane %v4677, 1
      %v4877 = vsel %vm2961, %v4876, %v4875
      %v4878 = vrot.slane %v4679, 7
      %v4879 = vsel %vm2943, %v4878, %v4678
      %v4880 = vrot.slane %v4680, 6
      %v4881 = vsel %vm2946, %v4880, %v4879
      %v4882 = vrot.slane %v4681, 5
      %v4883 = vsel %vm2949, %v4882, %v4881
      %v4884 = vrot.slane %v4682, 4
      %v4885 = vsel %vm2952, %v4884, %v4883
      %v4886 = vrot.slane %v4683, 3
      %v4887 = vsel %vm2955, %v4886, %v4885
      %v4888 = vrot.slane %v4684, 2
      %v4889 = vsel %vm2958, %v4888, %v4887
      %v4890 = vrot.slane %v4685, 1
      %v4891 = vsel %vm2961, %v4890, %v4889
      %v4892 = vrot.slane %v4687, 7
      %v4893 = vsel %vm2943, %v4892, %v4686
      %v4894 = vrot.slane %v4688, 6
      %v4895 = vsel %vm2946, %v4894, %v4893
      %v4896 = vrot.slane %v4689, 5
      %v4897 = vsel %vm2949, %v4896, %v4895
      %v4898 = vrot.slane %v4690, 4
      %v4899 = vsel %vm2952, %v4898, %v4897
      %v4900 = vrot.slane %v4691, 3
      %v4901 = vsel %vm2955, %v4900, %v4899
      %v4902 = vrot.slane %v4692, 2
      %v4903 = vsel %vm2958, %v4902, %v4901
      %v4904 = vrot.slane %v4693, 1
      %v4905 = vsel %vm2961, %v4904, %v4903
      %v4906 = vrot.slane %v4695, 7
      %v4907 = vsel %vm2943, %v4906, %v4694
      %v4908 = vrot.slane %v4696, 6
      %v4909 = vsel %vm2946, %v4908, %v4907
      %v4910 = vrot.slane %v4697, 5
      %v4911 = vsel %vm2949, %v4910, %v4909
      %v4912 = vrot.slane %v4698, 4
      %v4913 = vsel %vm2952, %v4912, %v4911
      %v4914 = vrot.slane %v4699, 3
      %v4915 = vsel %vm2955, %v4914, %v4913
      %v4916 = vrot.slane %v4700, 2
      %v4917 = vsel %vm2958, %v4916, %v4915
      %v4918 = vrot.slane %v4701, 1
      %v4919 = vsel %vm2961, %v4918, %v4917
      %v4920 = vrot.slane %v4703, 7
      %v4921 = vsel %vm2943, %v4920, %v4702
      %v4922 = vrot.slane %v4704, 6
      %v4923 = vsel %vm2946, %v4922, %v4921
      %v4924 = vrot.slane %v4705, 5
      %v4925 = vsel %vm2949, %v4924, %v4923
      %v4926 = vrot.slane %v4706, 4
      %v4927 = vsel %vm2952, %v4926, %v4925
      %v4928 = vrot.slane %v4707, 3
      %v4929 = vsel %vm2955, %v4928, %v4927
      %v4930 = vrot.slane %v4708, 2
      %v4931 = vsel %vm2958, %v4930, %v4929
      %v4932 = vrot.slane %v4709, 1
      %v4933 = vsel %vm2961, %v4932, %v4931
      %v4934 = vrot.slane %v4711, 7
      %v4935 = vsel %vm2943, %v4934, %v4710
      %v4936 = vrot.slane %v4712, 6
      %v4937 = vsel %vm2946, %v4936, %v4935
      %v4938 = vrot.slane %v4713, 5
      %v4939 = vsel %vm2949, %v4938, %v4937
      %v4940 = vrot.slane %v4714, 4
      %v4941 = vsel %vm2952, %v4940, %v4939
      %v4942 = vrot.slane %v4715, 3
      %v4943 = vsel %vm2955, %v4942, %v4941
      %v4944 = vrot.slane %v4716, 2
      %v4945 = vsel %vm2958, %v4944, %v4943
      %v4946 = vrot.slane %v4717, 1
      %v4947 = vsel %vm2961, %v4946, %v4945
      %4956 = vmatpush.msra.mxu0 %v4749
      %4957 = vmatpush.msra.mxu0 %v4747
      %4958 = vmatpush.msra.mxu0 %v4745
      %4959 = vmatpush.msra.mxu0 %v4743
      %4960 = vmatpush.msra.mxu0 %v4741
      %4961 = vmatpush.msra.mxu0 %v4739
      %4962 = vmatpush.msra.mxu0 %v4737
      %4963 = vmatpush.msra.mxu0 %v4735
      %4964 = vmatpush.msra.mxu0 %v4733
      %4965 = vmatpush.msra.mxu0 %v4731
      %4966 = vmatpush.msra.mxu0 %v4729
      %4967 = vmatpush.msra.mxu0 %v4727
      %4968 = vmatpush.msra.mxu0 %v4725
      %4969 = vmatpush.msra.mxu0 %v4723
      %4970 = vmatpush.msra.mxu0 %v4721
      %4971 = vmatpush.msra.mxu0 %v4719
      %4972 = vmatmul.f32.gmra.mxu0 %v4849
      %v4973 = vpop.f32.mrf.mxu0
      %v4974 = vadd.f32 0.0, %v4973
      %4975 = vmatmul.f32.gmra.mxu0 %v4863
      %v4976 = vpop.f32.mrf.mxu0
      %v4977 = vadd.f32 0.0, %v4976
      %4978 = vmatmul.f32.gmra.mxu0 %v4877
      %v4979 = vpop.f32.mrf.mxu0
      %v4980 = vadd.f32 0.0, %v4979
      %4981 = vmatmul.f32.gmra.mxu0 %v4891
      %v4982 = vpop.f32.mrf.mxu0
      %v4983 = vadd.f32 0.0, %v4982
      %4984 = vmatmul.f32.gmra.mxu0 %v4905
      %v4985 = vpop.f32.mrf.mxu0
      %v4986 = vadd.f32 0.0, %v4985
      %4987 = vmatmul.f32.gmra.mxu0 %v4919
      %v4988 = vpop.f32.mrf.mxu0
      %v4989 = vadd.f32 0.0, %v4988
      %4990 = vmatmul.f32.gmra.mxu0 %v4933
      %v4991 = vpop.f32.mrf.mxu0
      %v4992 = vadd.f32 0.0, %v4991
      %4993 = vmatmul.f32.gmra.mxu0 %v4947
      %v4994 = vpop.f32.mrf.mxu0
      %v4995 = vadd.f32 0.0, %v4994
      %4996 = vdwg.mxu0
      %4997 = vmatpush.msra.mxu0 %v4750
      %4998 = vmatpush.msra.mxu0 %v4748
      %4999 = vmatpush.msra.mxu0 %v4746
      %5000 = vmatpush.msra.mxu0 %v4744
      %5001 = vmatpush.msra.mxu0 %v4742
      %5002 = vmatpush.msra.mxu0 %v4740
      %5003 = vmatpush.msra.mxu0 %v4738
      %5004 = vmatpush.msra.mxu0 %v4736
      %5005 = vmatpush.msra.mxu0 %v4734
      %5006 = vmatpush.msra.mxu0 %v4732
      %5007 = vmatpush.msra.mxu0 %v4730
      %5008 = vmatpush.msra.mxu0 %v4728
      %5009 = vmatpush.msra.mxu0 %v4726
      %5010 = vmatpush.msra.mxu0 %v4724
      %5011 = vmatpush.msra.mxu0 %v4722
      %5012 = vmatpush.msra.mxu0 %v4720
      %5013 = vmatmul.f32.gmra.mxu0 %v4849
      %v5014 = vpop.f32.mrf.mxu0
      %v5015 = vadd.f32 0.0, %v5014
      %5016 = vmatmul.f32.gmra.mxu0 %v4863
      %v5017 = vpop.f32.mrf.mxu0
      %v5018 = vadd.f32 0.0, %v5017
      %5019 = vmatmul.f32.gmra.mxu0 %v4877
      %v5020 = vpop.f32.mrf.mxu0
      %v5021 = vadd.f32 0.0, %v5020
      %5022 = vmatmul.f32.gmra.mxu0 %v4891
      %v5023 = vpop.f32.mrf.mxu0
      %v5024 = vadd.f32 0.0, %v5023
      %5025 = vmatmul.f32.gmra.mxu0 %v4905
      %v5026 = vpop.f32.mrf.mxu0
      %v5027 = vadd.f32 0.0, %v5026
      %5028 = vmatmul.f32.gmra.mxu0 %v4919
      %v5029 = vpop.f32.mrf.mxu0
      %v5030 = vadd.f32 0.0, %v5029
      %5031 = vmatmul.f32.gmra.mxu0 %v4933
      %v5032 = vpop.f32.mrf.mxu0
      %v5033 = vadd.f32 0.0, %v5032
      %5034 = vmatmul.f32.gmra.mxu0 %v4947
      %v5035 = vpop.f32.mrf.mxu0
      %v5036 = vadd.f32 0.0, %v5035
      %5037 = vdwg.mxu0
      %v5039 = vperm.slane %v4752, 0
      %v5041 = vadd.f32 %v4974, %v5039
      %v5042 = vadd.f32 %v4977, %v5039
      %v5043 = vadd.f32 %v4980, %v5039
      %v5044 = vadd.f32 %v4983, %v5039
      %v5045 = vadd.f32 %v4986, %v5039
      %v5046 = vadd.f32 %v4989, %v5039
      %v5047 = vadd.f32 %v4992, %v5039
      %v5048 = vadd.f32 %v4995, %v5039
      %v5057 = vrot.slane %v5041, 1
      %v5058 = vrot.slane %v5041, 2
      %v5059 = vrot.slane %v5041, 3
      %v5060 = vrot.slane %v5041, 4
      %v5061 = vrot.slane %v5041, 5
      %v5062 = vrot.slane %v5041, 6
      %v5063 = vrot.slane %v5041, 7
      %v5064 = vrot.slane %v5042, 1
      %v5065 = vrot.slane %v5042, 2
      %v5066 = vrot.slane %v5042, 3
      %v5067 = vrot.slane %v5042, 4
      %v5068 = vrot.slane %v5042, 5
      %v5069 = vrot.slane %v5042, 6
      %v5070 = vrot.slane %v5042, 7
      %v5071 = vrot.slane %v5043, 1
      %v5072 = vrot.slane %v5043, 2
      %v5073 = vrot.slane %v5043, 3
      %v5074 = vrot.slane %v5043, 4
      %v5075 = vrot.slane %v5043, 5
      %v5076 = vrot.slane %v5043, 6
      %v5077 = vrot.slane %v5043, 7
      %v5078 = vrot.slane %v5044, 1
      %v5079 = vrot.slane %v5044, 2
      %v5080 = vrot.slane %v5044, 3
      %v5081 = vrot.slane %v5044, 4
      %v5082 = vrot.slane %v5044, 5
      %v5083 = vrot.slane %v5044, 6
      %v5084 = vrot.slane %v5044, 7
      %v5085 = vrot.slane %v5045, 1
      %v5086 = vrot.slane %v5045, 2
      %v5087 = vrot.slane %v5045, 3
      %v5088 = vrot.slane %v5045, 4
      %v5089 = vrot.slane %v5045, 5
      %v5090 = vrot.slane %v5045, 6
      %v5091 = vrot.slane %v5045, 7
      %v5092 = vrot.slane %v5046, 1
      %v5093 = vrot.slane %v5046, 2
      %v5094 = vrot.slane %v5046, 3
      %v5095 = vrot.slane %v5046, 4
      %v5096 = vrot.slane %v5046, 5
      %v5097 = vrot.slane %v5046, 6
      %v5098 = vrot.slane %v5046, 7
      %v5099 = vrot.slane %v5047, 1
      %v5100 = vrot.slane %v5047, 2
      %v5101 = vrot.slane %v5047, 3
      %v5102 = vrot.slane %v5047, 4
      %v5103 = vrot.slane %v5047, 5
      %v5104 = vrot.slane %v5047, 6
      %v5105 = vrot.slane %v5047, 7
      %v5106 = vrot.slane %v5048, 1
      %v5107 = vrot.slane %v5048, 2
      %v5108 = vrot.slane %v5048, 3
      %v5109 = vrot.slane %v5048, 4
      %v5110 = vrot.slane %v5048, 5
      %v5111 = vrot.slane %v5048, 6
      %v5112 = vrot.slane %v5048, 7
      %v5113 = vperm.slane %v5041, 0
      %v5114 = vperm.slane %v5057, 0
      %v5115 = vperm.slane %v5058, 0
      %v5116 = vperm.slane %v5059, 0
      %v5117 = vperm.slane %v5060, 0
      %v5118 = vperm.slane %v5061, 0
      %v5119 = vperm.slane %v5062, 0
      %v5120 = vperm.slane %v5063, 0
      %v5121 = vperm.slane %v5042, 0
      %v5122 = vperm.slane %v5064, 0
      %v5123 = vperm.slane %v5065, 0
      %v5124 = vperm.slane %v5066, 0
      %v5125 = vperm.slane %v5067, 0
      %v5126 = vperm.slane %v5068, 0
      %v5127 = vperm.slane %v5069, 0
      %v5128 = vperm.slane %v5070, 0
      %v5129 = vperm.slane %v5043, 0
      %v5130 = vperm.slane %v5071, 0
      %v5131 = vperm.slane %v5072, 0
      %v5132 = vperm.slane %v5073, 0
      %v5133 = vperm.slane %v5074, 0
      %v5134 = vperm.slane %v5075, 0
      %v5135 = vperm.slane %v5076, 0
      %v5136 = vperm.slane %v5077, 0
      %v5137 = vperm.slane %v5044, 0
      %v5138 = vperm.slane %v5078, 0
      %v5139 = vperm.slane %v5079, 0
      %v5140 = vperm.slane %v5080, 0
      %v5141 = vperm.slane %v5081, 0
      %v5142 = vperm.slane %v5082, 0
      %v5143 = vperm.slane %v5083, 0
      %v5144 = vperm.slane %v5084, 0
      %v5145 = vperm.slane %v5045, 0
      %v5146 = vperm.slane %v5085, 0
      %v5147 = vperm.slane %v5086, 0
      %v5148 = vperm.slane %v5087, 0
      %v5149 = vperm.slane %v5088, 0
      %v5150 = vperm.slane %v5089, 0
      %v5151 = vperm.slane %v5090, 0
      %v5152 = vperm.slane %v5091, 0
      %v5153 = vperm.slane %v5046, 0
      %v5154 = vperm.slane %v5092, 0
      %v5155 = vperm.slane %v5093, 0
      %v5156 = vperm.slane %v5094, 0
      %v5157 = vperm.slane %v5095, 0
      %v5158 = vperm.slane %v5096, 0
      %v5159 = vperm.slane %v5097, 0
      %v5160 = vperm.slane %v5098, 0
      %v5161 = vperm.slane %v5047, 0
      %v5162 = vperm.slane %v5099, 0
      %v5163 = vperm.slane %v5100, 0
      %v5164 = vperm.slane %v5101, 0
      %v5165 = vperm.slane %v5102, 0
      %v5166 = vperm.slane %v5103, 0
      %v5167 = vperm.slane %v5104, 0
      %v5168 = vperm.slane %v5105, 0
      %v5169 = vperm.slane %v5048, 0
      %v5170 = vperm.slane %v5106, 0
      %v5171 = vperm.slane %v5107, 0
      %v5172 = vperm.slane %v5108, 0
      %v5173 = vperm.slane %v5109, 0
      %v5174 = vperm.slane %v5110, 0
      %v5175 = vperm.slane %v5111, 0
      %v5176 = vperm.slane %v5112, 0
      %v5241 = vadd.f32 %v5113, %v5015
      %v5242 = vadd.f32 %v5113, %v5018
      %v5243 = vadd.f32 %v5114, %v5015
      %v5244 = vadd.f32 %v5114, %v5018
      %v5245 = vadd.f32 %v5115, %v5015
      %v5246 = vadd.f32 %v5115, %v5018
      %v5247 = vadd.f32 %v5116, %v5015
      %v5248 = vadd.f32 %v5116, %v5018
      %v5249 = vadd.f32 %v5117, %v5015
      %v5250 = vadd.f32 %v5117, %v5018
      %v5251 = vadd.f32 %v5118, %v5015
      %v5252 = vadd.f32 %v5118, %v5018
      %v5253 = vadd.f32 %v5119, %v5015
      %v5254 = vadd.f32 %v5119, %v5018
      %v5255 = vadd.f32 %v5120, %v5015
      %v5256 = vadd.f32 %v5120, %v5018
      %v5257 = vadd.f32 %v5121, %v5015
      %v5258 = vadd.f32 %v5121, %v5018
      %v5259 = vadd.f32 %v5122, %v5015
      %v5260 = vadd.f32 %v5122, %v5018
      %v5261 = vadd.f32 %v5123, %v5015
      %v5262 = vadd.f32 %v5123, %v5018
      %v5263 = vadd.f32 %v5124, %v5015
      %v5264 = vadd.f32 %v5124, %v5018
      %v5265 = vadd.f32 %v5125, %v5015
      %v5266 = vadd.f32 %v5125, %v5018
      %v5267 = vadd.f32 %v5126, %v5015
      %v5268 = vadd.f32 %v5126, %v5018
      %v5269 = vadd.f32 %v5127, %v5015
      %v5270 = vadd.f32 %v5127, %v5018
      %v5271 = vadd.f32 %v5128, %v5015
      %v5272 = vadd.f32 %v5128, %v5018
      %v5273 = vadd.f32 %v5129, %v5021
      %v5274 = vadd.f32 %v5129, %v5024
      %v5275 = vadd.f32 %v5130, %v5021
      %v5276 = vadd.f32 %v5130, %v5024
      %v5277 = vadd.f32 %v5131, %v5021
      %v5278 = vadd.f32 %v5131, %v5024
      %v5279 = vadd.f32 %v5132, %v5021
      %v5280 = vadd.f32 %v5132, %v5024
      %v5281 = vadd.f32 %v5133, %v5021
      %v5282 = vadd.f32 %v5133, %v5024
      %v5283 = vadd.f32 %v5134, %v5021
      %v5284 = vadd.f32 %v5134, %v5024
      %v5285 = vadd.f32 %v5135, %v5021
      %v5286 = vadd.f32 %v5135, %v5024
      %v5287 = vadd.f32 %v5136, %v5021
      %v5288 = vadd.f32 %v5136, %v5024
      %v5289 = vadd.f32 %v5137, %v5021
      %v5290 = vadd.f32 %v5137, %v5024
      %v5291 = vadd.f32 %v5138, %v5021
      %v5292 = vadd.f32 %v5138, %v5024
      %v5293 = vadd.f32 %v5139, %v5021
      %v5294 = vadd.f32 %v5139, %v5024
      %v5295 = vadd.f32 %v5140, %v5021
      %v5296 = vadd.f32 %v5140, %v5024
      %v5297 = vadd.f32 %v5141, %v5021
      %v5298 = vadd.f32 %v5141, %v5024
      %v5299 = vadd.f32 %v5142, %v5021
      %v5300 = vadd.f32 %v5142, %v5024
      %v5301 = vadd.f32 %v5143, %v5021
      %v5302 = vadd.f32 %v5143, %v5024
      %v5303 = vadd.f32 %v5144, %v5021
      %v5304 = vadd.f32 %v5144, %v5024
      %v5305 = vadd.f32 %v5145, %v5027
      %v5306 = vadd.f32 %v5145, %v5030
      %v5307 = vadd.f32 %v5146, %v5027
      %v5308 = vadd.f32 %v5146, %v5030
      %v5309 = vadd.f32 %v5147, %v5027
      %v5310 = vadd.f32 %v5147, %v5030
      %v5311 = vadd.f32 %v5148, %v5027
      %v5312 = vadd.f32 %v5148, %v5030
      %v5313 = vadd.f32 %v5149, %v5027
      %v5314 = vadd.f32 %v5149, %v5030
      %v5315 = vadd.f32 %v5150, %v5027
      %v5316 = vadd.f32 %v5150, %v5030
      %v5317 = vadd.f32 %v5151, %v5027
      %v5318 = vadd.f32 %v5151, %v5030
      %v5319 = vadd.f32 %v5152, %v5027
      %v5320 = vadd.f32 %v5152, %v5030
      %v5321 = vadd.f32 %v5153, %v5027
      %v5322 = vadd.f32 %v5153, %v5030
      %v5323 = vadd.f32 %v5154, %v5027
      %v5324 = vadd.f32 %v5154, %v5030
      %v5325 = vadd.f32 %v5155, %v5027
      %v5326 = vadd.f32 %v5155, %v5030
      %v5327 = vadd.f32 %v5156, %v5027
      %v5328 = vadd.f32 %v5156, %v5030
      %v5329 = vadd.f32 %v5157, %v5027
      %v5330 = vadd.f32 %v5157, %v5030
      %v5331 = vadd.f32 %v5158, %v5027
      %v5332 = vadd.f32 %v5158, %v5030
      %v5333 = vadd.f32 %v5159, %v5027
      %v5334 = vadd.f32 %v5159, %v5030
      %v5335 = vadd.f32 %v5160, %v5027
      %v5336 = vadd.f32 %v5160, %v5030
      %v5337 = vadd.f32 %v5161, %v5033
      %v5338 = vadd.f32 %v5161, %v5036
      %v5339 = vadd.f32 %v5162, %v5033
      %v5340 = vadd.f32 %v5162, %v5036
      %v5341 = vadd.f32 %v5163, %v5033
      %v5342 = vadd.f32 %v5163, %v5036
      %v5343 = vadd.f32 %v5164, %v5033
      %v5344 = vadd.f32 %v5164, %v5036
      %v5345 = vadd.f32 %v5165, %v5033
      %v5346 = vadd.f32 %v5165, %v5036
      %v5347 = vadd.f32 %v5166, %v5033
      %v5348 = vadd.f32 %v5166, %v5036
      %v5349 = vadd.f32 %v5167, %v5033
      %v5350 = vadd.f32 %v5167, %v5036
      %v5351 = vadd.f32 %v5168, %v5033
      %v5352 = vadd.f32 %v5168, %v5036
      %v5353 = vadd.f32 %v5169, %v5033
      %v5354 = vadd.f32 %v5169, %v5036
      %v5355 = vadd.f32 %v5170, %v5033
      %v5356 = vadd.f32 %v5170, %v5036
      %v5357 = vadd.f32 %v5171, %v5033
      %v5358 = vadd.f32 %v5171, %v5036
      %v5359 = vadd.f32 %v5172, %v5033
      %v5360 = vadd.f32 %v5172, %v5036
      %v5361 = vadd.f32 %v5173, %v5033
      %v5362 = vadd.f32 %v5173, %v5036
      %v5363 = vadd.f32 %v5174, %v5033
      %v5364 = vadd.f32 %v5174, %v5036
      %v5365 = vadd.f32 %v5175, %v5033
      %v5366 = vadd.f32 %v5175, %v5036
      %v5367 = vadd.f32 %v5176, %v5033
      %v5368 = vadd.f32 %v5176, %v5036
      %v5369 = vmax.f32 %v5241, 0.0
      %v5370 = vmax.f32 %v5242, 0.0
      %v5371 = vmax.f32 %v5243, 0.0
      %v5372 = vmax.f32 %v5244, 0.0
      %v5373 = vmax.f32 %v5245, 0.0
      %v5374 = vmax.f32 %v5246, 0.0
      %v5375 = vmax.f32 %v5247, 0.0
      %v5376 = vmax.f32 %v5248, 0.0
      %v5377 = vmax.f32 %v5249, 0.0
      %v5378 = vmax.f32 %v5250, 0.0
      %v5379 = vmax.f32 %v5251, 0.0
      %v5380 = vmax.f32 %v5252, 0.0
      %v5381 = vmax.f32 %v5253, 0.0
      %v5382 = vmax.f32 %v5254, 0.0
      %v5383 = vmax.f32 %v5255, 0.0
      %v5384 = vmax.f32 %v5256, 0.0
      %v5385 = vmax.f32 %v5257, 0.0
      %v5386 = vmax.f32 %v5258, 0.0
      %v5387 = vmax.f32 %v5259, 0.0
      %v5388 = vmax.f32 %v5260, 0.0
      %v5389 = vmax.f32 %v5261, 0.0
      %v5390 = vmax.f32 %v5262, 0.0
      %v5391 = vmax.f32 %v5263, 0.0
      %v5392 = vmax.f32 %v5264, 0.0
      %v5393 = vmax.f32 %v5265, 0.0
      %v5394 = vmax.f32 %v5266, 0.0
      %v5395 = vmax.f32 %v5267, 0.0
      %v5396 = vmax.f32 %v5268, 0.0
      %v5397 = vmax.f32 %v5269, 0.0
      %v5398 = vmax.f32 %v5270, 0.0
      %v5399 = vmax.f32 %v5271, 0.0
      %v5400 = vmax.f32 %v5272, 0.0
      %v5401 = vmax.f32 %v5273, 0.0
      %v5402 = vmax.f32 %v5274, 0.0
      %v5403 = vmax.f32 %v5275, 0.0
      %v5404 = vmax.f32 %v5276, 0.0
      %v5405 = vmax.f32 %v5277, 0.0
      %v5406 = vmax.f32 %v5278, 0.0
      %v5407 = vmax.f32 %v5279, 0.0
      %v5408 = vmax.f32 %v5280, 0.0
      %v5409 = vmax.f32 %v5281, 0.0
      %v5410 = vmax.f32 %v5282, 0.0
      %v5411 = vmax.f32 %v5283, 0.0
      %v5412 = vmax.f32 %v5284, 0.0
      %v5413 = vmax.f32 %v5285, 0.0
      %v5414 = vmax.f32 %v5286, 0.0
      %v5415 = vmax.f32 %v5287, 0.0
      %v5416 = vmax.f32 %v5288, 0.0
      %v5417 = vmax.f32 %v5289, 0.0
      %v5418 = vmax.f32 %v5290, 0.0
      %v5419 = vmax.f32 %v5291, 0.0
      %v5420 = vmax.f32 %v5292, 0.0
      %v5421 = vmax.f32 %v5293, 0.0
      %v5422 = vmax.f32 %v5294, 0.0
      %v5423 = vmax.f32 %v5295, 0.0
      %v5424 = vmax.f32 %v5296, 0.0
      %v5425 = vmax.f32 %v5297, 0.0
      %v5426 = vmax.f32 %v5298, 0.0
      %v5427 = vmax.f32 %v5299, 0.0
      %v5428 = vmax.f32 %v5300, 0.0
      %v5429 = vmax.f32 %v5301, 0.0
      %v5430 = vmax.f32 %v5302, 0.0
      %v5431 = vmax.f32 %v5303, 0.0
      %v5432 = vmax.f32 %v5304, 0.0
      %v5433 = vmax.f32 %v5305, 0.0
      %v5434 = vmax.f32 %v5306, 0.0
      %v5435 = vmax.f32 %v5307, 0.0
      %v5436 = vmax.f32 %v5308, 0.0
      %v5437 = vmax.f32 %v5309, 0.0
      %v5438 = vmax.f32 %v5310, 0.0
      %v5439 = vmax.f32 %v5311, 0.0
      %v5440 = vmax.f32 %v5312, 0.0
      %v5441 = vmax.f32 %v5313, 0.0
      %v5442 = vmax.f32 %v5314, 0.0
      %v5443 = vmax.f32 %v5315, 0.0
      %v5444 = vmax.f32 %v5316, 0.0
      %v5445 = vmax.f32 %v5317, 0.0
      %v5446 = vmax.f32 %v5318, 0.0
      %v5447 = vmax.f32 %v5319, 0.0
      %v5448 = vmax.f32 %v5320, 0.0
      %v5449 = vmax.f32 %v5321, 0.0
      %v5450 = vmax.f32 %v5322, 0.0
      %v5451 = vmax.f32 %v5323, 0.0
      %v5452 = vmax.f32 %v5324, 0.0
      %v5453 = vmax.f32 %v5325, 0.0
      %v5454 = vmax.f32 %v5326, 0.0
      %v5455 = vmax.f32 %v5327, 0.0
      %v5456 = vmax.f32 %v5328, 0.0
      %v5457 = vmax.f32 %v5329, 0.0
      %v5458 = vmax.f32 %v5330, 0.0
      %v5459 = vmax.f32 %v5331, 0.0
      %v5460 = vmax.f32 %v5332, 0.0
      %v5461 = vmax.f32 %v5333, 0.0
      %v5462 = vmax.f32 %v5334, 0.0
      %v5463 = vmax.f32 %v5335, 0.0
      %v5464 = vmax.f32 %v5336, 0.0
      %v5465 = vmax.f32 %v5337, 0.0
      %v5466 = vmax.f32 %v5338, 0.0
      %v5467 = vmax.f32 %v5339, 0.0
      %v5468 = vmax.f32 %v5340, 0.0
      %v5469 = vmax.f32 %v5341, 0.0
      %v5470 = vmax.f32 %v5342, 0.0
      %v5471 = vmax.f32 %v5343, 0.0
      %v5472 = vmax.f32 %v5344, 0.0
      %v5473 = vmax.f32 %v5345, 0.0
      %v5474 = vmax.f32 %v5346, 0.0
      %v5475 = vmax.f32 %v5347, 0.0
      %v5476 = vmax.f32 %v5348, 0.0
      %v5477 = vmax.f32 %v5349, 0.0
      %v5478 = vmax.f32 %v5350, 0.0
      %v5479 = vmax.f32 %v5351, 0.0
      %v5480 = vmax.f32 %v5352, 0.0
      %v5481 = vmax.f32 %v5353, 0.0
      %v5482 = vmax.f32 %v5354, 0.0
      %v5483 = vmax.f32 %v5355, 0.0
      %v5484 = vmax.f32 %v5356, 0.0
      %v5485 = vmax.f32 %v5357, 0.0
      %v5486 = vmax.f32 %v5358, 0.0
      %v5487 = vmax.f32 %v5359, 0.0
      %v5488 = vmax.f32 %v5360, 0.0
      %v5489 = vmax.f32 %v5361, 0.0
      %v5490 = vmax.f32 %v5362, 0.0
      %v5491 = vmax.f32 %v5363, 0.0
      %v5492 = vmax.f32 %v5364, 0.0
      %v5493 = vmax.f32 %v5365, 0.0
      %v5494 = vmax.f32 %v5366, 0.0
      %v5495 = vmax.f32 %v5367, 0.0
      %v5496 = vmax.f32 %v5368, 0.0
      %5497 = vmatpush.msra.mxu0 %v4769
      %5498 = vmatpush.msra.mxu0 %v4768
      %5499 = vmatpush.msra.mxu0 %v4767
      %5500 = vmatpush.msra.mxu0 %v4766
      %5501 = vmatpush.msra.mxu0 %v4765
      %5502 = vmatpush.msra.mxu0 %v4764
      %5503 = vmatpush.msra.mxu0 %v4763
      %5504 = vmatpush.msra.mxu0 %v4762
      %5505 = vmatpush.msra.mxu0 %v4761
      %5506 = vmatpush.msra.mxu0 %v4760
      %5507 = vmatpush.msra.mxu0 %v4759
      %5508 = vmatpush.msra.mxu0 %v4758
      %5509 = vmatpush.msra.mxu0 %v4757
      %5510 = vmatpush.msra.mxu0 %v4756
      %5511 = vmatpush.msra.mxu0 %v4755
      %5512 = vmatpush.msra.mxu0 %v4754
      %5513 = vmatmul.f32.gmra.mxu0 %v5369
      %v5514 = vpop.f32.mrf.mxu0
      %v5515 = vadd.f32 0.0, %v5514
      %5516 = vmatmul.f32.gmra.mxu0 %v5370
      %v5517 = vpop.f32.mrf.mxu0
      %v5518 = vadd.f32 0.0, %v5517
      %5519 = vmatmul.f32.gmra.mxu0 %v5371
      %v5520 = vpop.f32.mrf.mxu0
      %v5521 = vadd.f32 0.0, %v5520
      %5522 = vmatmul.f32.gmra.mxu0 %v5372
      %v5523 = vpop.f32.mrf.mxu0
      %v5524 = vadd.f32 0.0, %v5523
      %5525 = vmatmul.f32.gmra.mxu0 %v5373
      %v5526 = vpop.f32.mrf.mxu0
      %v5527 = vadd.f32 0.0, %v5526
      %5528 = vmatmul.f32.gmra.mxu0 %v5374
      %v5529 = vpop.f32.mrf.mxu0
      %v5530 = vadd.f32 0.0, %v5529
      %5531 = vmatmul.f32.gmra.mxu0 %v5375
      %v5532 = vpop.f32.mrf.mxu0
      %v5533 = vadd.f32 0.0, %v5532
      %5534 = vmatmul.f32.gmra.mxu0 %v5376
      %v5535 = vpop.f32.mrf.mxu0
      %v5536 = vadd.f32 0.0, %v5535
      %5537 = vmatmul.f32.gmra.mxu0 %v5377
      %v5538 = vpop.f32.mrf.mxu0
      %v5539 = vadd.f32 0.0, %v5538
      %5540 = vmatmul.f32.gmra.mxu0 %v5378
      %v5541 = vpop.f32.mrf.mxu0
      %v5542 = vadd.f32 0.0, %v5541
      %5543 = vmatmul.f32.gmra.mxu0 %v5379
      %v5544 = vpop.f32.mrf.mxu0
      %v5545 = vadd.f32 0.0, %v5544
      %5546 = vmatmul.f32.gmra.mxu0 %v5380
      %v5547 = vpop.f32.mrf.mxu0
      %v5548 = vadd.f32 0.0, %v5547
      %5549 = vmatmul.f32.gmra.mxu0 %v5381
      %v5550 = vpop.f32.mrf.mxu0
      %v5551 = vadd.f32 0.0, %v5550
      %5552 = vmatmul.f32.gmra.mxu0 %v5382
      %v5553 = vpop.f32.mrf.mxu0
      %v5554 = vadd.f32 0.0, %v5553
      %5555 = vmatmul.f32.gmra.mxu0 %v5383
      %v5556 = vpop.f32.mrf.mxu0
      %v5557 = vadd.f32 0.0, %v5556
      %5558 = vmatmul.f32.gmra.mxu0 %v5384
      %v5559 = vpop.f32.mrf.mxu0
      %v5560 = vadd.f32 0.0, %v5559
      %5561 = vmatmul.f32.gmra.mxu0 %v5385
      %v5562 = vpop.f32.mrf.mxu0
      %v5563 = vadd.f32 0.0, %v5562
      %5564 = vmatmul.f32.gmra.mxu0 %v5386
      %v5565 = vpop.f32.mrf.mxu0
      %v5566 = vadd.f32 0.0, %v5565
      %5567 = vmatmul.f32.gmra.mxu0 %v5387
      %v5568 = vpop.f32.mrf.mxu0
      %v5569 = vadd.f32 0.0, %v5568
      %5570 = vmatmul.f32.gmra.mxu0 %v5388
      %v5571 = vpop.f32.mrf.mxu0
      %v5572 = vadd.f32 0.0, %v5571
      %5573 = vmatmul.f32.gmra.mxu0 %v5389
      %v5574 = vpop.f32.mrf.mxu0
      %v5575 = vadd.f32 0.0, %v5574
      %5576 = vmatmul.f32.gmra.mxu0 %v5390
      %v5577 = vpop.f32.mrf.mxu0
      %v5578 = vadd.f32 0.0, %v5577
      %5579 = vmatmul.f32.gmra.mxu0 %v5391
      %v5580 = vpop.f32.mrf.mxu0
      %v5581 = vadd.f32 0.0, %v5580
      %5582 = vmatmul.f32.gmra.mxu0 %v5392
      %v5583 = vpop.f32.mrf.mxu0
      %v5584 = vadd.f32 0.0, %v5583
      %5585 = vmatmul.f32.gmra.mxu0 %v5393
      %v5586 = vpop.f32.mrf.mxu0
      %v5587 = vadd.f32 0.0, %v5586
      %5588 = vmatmul.f32.gmra.mxu0 %v5394
      %v5589 = vpop.f32.mrf.mxu0
      %v5590 = vadd.f32 0.0, %v5589
      %5591 = vmatmul.f32.gmra.mxu0 %v5395
      %v5592 = vpop.f32.mrf.mxu0
      %v5593 = vadd.f32 0.0, %v5592
      %5594 = vmatmul.f32.gmra.mxu0 %v5396
      %v5595 = vpop.f32.mrf.mxu0
      %v5596 = vadd.f32 0.0, %v5595
      %5597 = vmatmul.f32.gmra.mxu0 %v5397
      %v5598 = vpop.f32.mrf.mxu0
      %v5599 = vadd.f32 0.0, %v5598
      %5600 = vmatmul.f32.gmra.mxu0 %v5398
      %v5601 = vpop.f32.mrf.mxu0
      %v5602 = vadd.f32 0.0, %v5601
      %5603 = vmatmul.f32.gmra.mxu0 %v5399
      %v5604 = vpop.f32.mrf.mxu0
      %v5605 = vadd.f32 0.0, %v5604
      %5606 = vmatmul.f32.gmra.mxu0 %v5400
      %v5607 = vpop.f32.mrf.mxu0
      %v5608 = vadd.f32 0.0, %v5607
      %5609 = vmatmul.f32.gmra.mxu0 %v5401
      %v5610 = vpop.f32.mrf.mxu0
      %v5611 = vadd.f32 0.0, %v5610
      %5612 = vmatmul.f32.gmra.mxu0 %v5402
      %v5613 = vpop.f32.mrf.mxu0
      %v5614 = vadd.f32 0.0, %v5613
      %5615 = vmatmul.f32.gmra.mxu0 %v5403
      %v5616 = vpop.f32.mrf.mxu0
      %v5617 = vadd.f32 0.0, %v5616
      %5618 = vmatmul.f32.gmra.mxu0 %v5404
      %v5619 = vpop.f32.mrf.mxu0
      %v5620 = vadd.f32 0.0, %v5619
      %5621 = vmatmul.f32.gmra.mxu0 %v5405
      %v5622 = vpop.f32.mrf.mxu0
      %v5623 = vadd.f32 0.0, %v5622
      %5624 = vmatmul.f32.gmra.mxu0 %v5406
      %v5625 = vpop.f32.mrf.mxu0
      %v5626 = vadd.f32 0.0, %v5625
      %5627 = vmatmul.f32.gmra.mxu0 %v5407
      %v5628 = vpop.f32.mrf.mxu0
      %v5629 = vadd.f32 0.0, %v5628
      %5630 = vmatmul.f32.gmra.mxu0 %v5408
      %v5631 = vpop.f32.mrf.mxu0
      %v5632 = vadd.f32 0.0, %v5631
      %5633 = vmatmul.f32.gmra.mxu0 %v5409
      %v5634 = vpop.f32.mrf.mxu0
      %v5635 = vadd.f32 0.0, %v5634
      %5636 = vmatmul.f32.gmra.mxu0 %v5410
      %v5637 = vpop.f32.mrf.mxu0
      %v5638 = vadd.f32 0.0, %v5637
      %5639 = vmatmul.f32.gmra.mxu0 %v5411
      %v5640 = vpop.f32.mrf.mxu0
      %v5641 = vadd.f32 0.0, %v5640
      %5642 = vmatmul.f32.gmra.mxu0 %v5412
      %v5643 = vpop.f32.mrf.mxu0
      %v5644 = vadd.f32 0.0, %v5643
      %5645 = vmatmul.f32.gmra.mxu0 %v5413
      %v5646 = vpop.f32.mrf.mxu0
      %v5647 = vadd.f32 0.0, %v5646
      %5648 = vmatmul.f32.gmra.mxu0 %v5414
      %v5649 = vpop.f32.mrf.mxu0
      %v5650 = vadd.f32 0.0, %v5649
      %5651 = vmatmul.f32.gmra.mxu0 %v5415
      %v5652 = vpop.f32.mrf.mxu0
      %v5653 = vadd.f32 0.0, %v5652
      %5654 = vmatmul.f32.gmra.mxu0 %v5416
      %v5655 = vpop.f32.mrf.mxu0
      %v5656 = vadd.f32 0.0, %v5655
      %5657 = vmatmul.f32.gmra.mxu0 %v5417
      %v5658 = vpop.f32.mrf.mxu0
      %v5659 = vadd.f32 0.0, %v5658
      %5660 = vmatmul.f32.gmra.mxu0 %v5418
      %v5661 = vpop.f32.mrf.mxu0
      %v5662 = vadd.f32 0.0, %v5661
      %5663 = vmatmul.f32.gmra.mxu0 %v5419
      %v5664 = vpop.f32.mrf.mxu0
      %v5665 = vadd.f32 0.0, %v5664
      %5666 = vmatmul.f32.gmra.mxu0 %v5420
      %v5667 = vpop.f32.mrf.mxu0
      %v5668 = vadd.f32 0.0, %v5667
      %5669 = vmatmul.f32.gmra.mxu0 %v5421
      %v5670 = vpop.f32.mrf.mxu0
      %v5671 = vadd.f32 0.0, %v5670
      %5672 = vmatmul.f32.gmra.mxu0 %v5422
      %v5673 = vpop.f32.mrf.mxu0
      %v5674 = vadd.f32 0.0, %v5673
      %5675 = vmatmul.f32.gmra.mxu0 %v5423
      %v5676 = vpop.f32.mrf.mxu0
      %v5677 = vadd.f32 0.0, %v5676
      %5678 = vmatmul.f32.gmra.mxu0 %v5424
      %v5679 = vpop.f32.mrf.mxu0
      %v5680 = vadd.f32 0.0, %v5679
      %5681 = vmatmul.f32.gmra.mxu0 %v5425
      %v5682 = vpop.f32.mrf.mxu0
      %v5683 = vadd.f32 0.0, %v5682
      %5684 = vmatmul.f32.gmra.mxu0 %v5426
      %v5685 = vpop.f32.mrf.mxu0
      %v5686 = vadd.f32 0.0, %v5685
      %5687 = vmatmul.f32.gmra.mxu0 %v5427
      %v5688 = vpop.f32.mrf.mxu0
      %v5689 = vadd.f32 0.0, %v5688
      %5690 = vmatmul.f32.gmra.mxu0 %v5428
      %v5691 = vpop.f32.mrf.mxu0
      %v5692 = vadd.f32 0.0, %v5691
      %5693 = vmatmul.f32.gmra.mxu0 %v5429
      %v5694 = vpop.f32.mrf.mxu0
      %v5695 = vadd.f32 0.0, %v5694
      %5696 = vmatmul.f32.gmra.mxu0 %v5430
      %v5697 = vpop.f32.mrf.mxu0
      %v5698 = vadd.f32 0.0, %v5697
      %5699 = vmatmul.f32.gmra.mxu0 %v5431
      %v5700 = vpop.f32.mrf.mxu0
      %v5701 = vadd.f32 0.0, %v5700
      %5702 = vmatmul.f32.gmra.mxu0 %v5432
      %v5703 = vpop.f32.mrf.mxu0
      %v5704 = vadd.f32 0.0, %v5703
      %5705 = vmatmul.f32.gmra.mxu0 %v5433
      %v5706 = vpop.f32.mrf.mxu0
      %v5707 = vadd.f32 0.0, %v5706
      %5708 = vmatmul.f32.gmra.mxu0 %v5434
      %v5709 = vpop.f32.mrf.mxu0
      %v5710 = vadd.f32 0.0, %v5709
      %5711 = vmatmul.f32.gmra.mxu0 %v5435
      %v5712 = vpop.f32.mrf.mxu0
      %v5713 = vadd.f32 0.0, %v5712
      %5714 = vmatmul.f32.gmra.mxu0 %v5436
      %v5715 = vpop.f32.mrf.mxu0
      %v5716 = vadd.f32 0.0, %v5715
      %5717 = vmatmul.f32.gmra.mxu0 %v5437
      %v5718 = vpop.f32.mrf.mxu0
      %v5719 = vadd.f32 0.0, %v5718
      %5720 = vmatmul.f32.gmra.mxu0 %v5438
      %v5721 = vpop.f32.mrf.mxu0
      %v5722 = vadd.f32 0.0, %v5721
      %5723 = vmatmul.f32.gmra.mxu0 %v5439
      %v5724 = vpop.f32.mrf.mxu0
      %v5725 = vadd.f32 0.0, %v5724
      %5726 = vmatmul.f32.gmra.mxu0 %v5440
      %v5727 = vpop.f32.mrf.mxu0
      %v5728 = vadd.f32 0.0, %v5727
      %5729 = vmatmul.f32.gmra.mxu0 %v5441
      %v5730 = vpop.f32.mrf.mxu0
      %v5731 = vadd.f32 0.0, %v5730
      %5732 = vmatmul.f32.gmra.mxu0 %v5442
      %v5733 = vpop.f32.mrf.mxu0
      %v5734 = vadd.f32 0.0, %v5733
      %5735 = vmatmul.f32.gmra.mxu0 %v5443
      %v5736 = vpop.f32.mrf.mxu0
      %v5737 = vadd.f32 0.0, %v5736
      %5738 = vmatmul.f32.gmra.mxu0 %v5444
      %v5739 = vpop.f32.mrf.mxu0
      %v5740 = vadd.f32 0.0, %v5739
      %5741 = vmatmul.f32.gmra.mxu0 %v5445
      %v5742 = vpop.f32.mrf.mxu0
      %v5743 = vadd.f32 0.0, %v5742
      %5744 = vmatmul.f32.gmra.mxu0 %v5446
      %v5745 = vpop.f32.mrf.mxu0
      %v5746 = vadd.f32 0.0, %v5745
      %5747 = vmatmul.f32.gmra.mxu0 %v5447
      %v5748 = vpop.f32.mrf.mxu0
      %v5749 = vadd.f32 0.0, %v5748
      %5750 = vmatmul.f32.gmra.mxu0 %v5448
      %v5751 = vpop.f32.mrf.mxu0
      %v5752 = vadd.f32 0.0, %v5751
      %5753 = vmatmul.f32.gmra.mxu0 %v5449
      %v5754 = vpop.f32.mrf.mxu0
      %v5755 = vadd.f32 0.0, %v5754
      %5756 = vmatmul.f32.gmra.mxu0 %v5450
      %v5757 = vpop.f32.mrf.mxu0
      %v5758 = vadd.f32 0.0, %v5757
      %5759 = vmatmul.f32.gmra.mxu0 %v5451
      %v5760 = vpop.f32.mrf.mxu0
      %v5761 = vadd.f32 0.0, %v5760
      %5762 = vmatmul.f32.gmra.mxu0 %v5452
      %v5763 = vpop.f32.mrf.mxu0
      %v5764 = vadd.f32 0.0, %v5763
      %5765 = vmatmul.f32.gmra.mxu0 %v5453
      %v5766 = vpop.f32.mrf.mxu0
      %v5767 = vadd.f32 0.0, %v5766
      %5768 = vmatmul.f32.gmra.mxu0 %v5454
      %v5769 = vpop.f32.mrf.mxu0
      %v5770 = vadd.f32 0.0, %v5769
      %5771 = vmatmul.f32.gmra.mxu0 %v5455
      %v5772 = vpop.f32.mrf.mxu0
      %v5773 = vadd.f32 0.0, %v5772
      %5774 = vmatmul.f32.gmra.mxu0 %v5456
      %v5775 = vpop.f32.mrf.mxu0
      %v5776 = vadd.f32 0.0, %v5775
      %5777 = vmatmul.f32.gmra.mxu0 %v5457
      %v5778 = vpop.f32.mrf.mxu0
      %v5779 = vadd.f32 0.0, %v5778
      %5780 = vmatmul.f32.gmra.mxu0 %v5458
      %v5781 = vpop.f32.mrf.mxu0
      %v5782 = vadd.f32 0.0, %v5781
      %5783 = vmatmul.f32.gmra.mxu0 %v5459
      %v5784 = vpop.f32.mrf.mxu0
      %v5785 = vadd.f32 0.0, %v5784
      %5786 = vmatmul.f32.gmra.mxu0 %v5460
      %v5787 = vpop.f32.mrf.mxu0
      %v5788 = vadd.f32 0.0, %v5787
      %5789 = vmatmul.f32.gmra.mxu0 %v5461
      %v5790 = vpop.f32.mrf.mxu0
      %v5791 = vadd.f32 0.0, %v5790
      %5792 = vmatmul.f32.gmra.mxu0 %v5462
      %v5793 = vpop.f32.mrf.mxu0
      %v5794 = vadd.f32 0.0, %v5793
      %5795 = vmatmul.f32.gmra.mxu0 %v5463
      %v5796 = vpop.f32.mrf.mxu0
      %v5797 = vadd.f32 0.0, %v5796
      %5798 = vmatmul.f32.gmra.mxu0 %v5464
      %v5799 = vpop.f32.mrf.mxu0
      %v5800 = vadd.f32 0.0, %v5799
      %5801 = vmatmul.f32.gmra.mxu0 %v5465
      %v5802 = vpop.f32.mrf.mxu0
      %v5803 = vadd.f32 0.0, %v5802
      %5804 = vmatmul.f32.gmra.mxu0 %v5466
      %v5805 = vpop.f32.mrf.mxu0
      %v5806 = vadd.f32 0.0, %v5805
      %5807 = vmatmul.f32.gmra.mxu0 %v5467
      %v5808 = vpop.f32.mrf.mxu0
      %v5809 = vadd.f32 0.0, %v5808
      %5810 = vmatmul.f32.gmra.mxu0 %v5468
      %v5811 = vpop.f32.mrf.mxu0
      %v5812 = vadd.f32 0.0, %v5811
      %5813 = vmatmul.f32.gmra.mxu0 %v5469
      %v5814 = vpop.f32.mrf.mxu0
      %v5815 = vadd.f32 0.0, %v5814
      %5816 = vmatmul.f32.gmra.mxu0 %v5470
      %v5817 = vpop.f32.mrf.mxu0
      %v5818 = vadd.f32 0.0, %v5817
      %5819 = vmatmul.f32.gmra.mxu0 %v5471
      %v5820 = vpop.f32.mrf.mxu0
      %v5821 = vadd.f32 0.0, %v5820
      %5822 = vmatmul.f32.gmra.mxu0 %v5472
      %v5823 = vpop.f32.mrf.mxu0
      %v5824 = vadd.f32 0.0, %v5823
      %5825 = vmatmul.f32.gmra.mxu0 %v5473
      %v5826 = vpop.f32.mrf.mxu0
      %v5827 = vadd.f32 0.0, %v5826
      %5828 = vmatmul.f32.gmra.mxu0 %v5474
      %v5829 = vpop.f32.mrf.mxu0
      %v5830 = vadd.f32 0.0, %v5829
      %5831 = vmatmul.f32.gmra.mxu0 %v5475
      %v5832 = vpop.f32.mrf.mxu0
      %v5833 = vadd.f32 0.0, %v5832
      %5834 = vmatmul.f32.gmra.mxu0 %v5476
      %v5835 = vpop.f32.mrf.mxu0
      %v5836 = vadd.f32 0.0, %v5835
      %5837 = vmatmul.f32.gmra.mxu0 %v5477
      %v5838 = vpop.f32.mrf.mxu0
      %v5839 = vadd.f32 0.0, %v5838
      %5840 = vmatmul.f32.gmra.mxu0 %v5478
      %v5841 = vpop.f32.mrf.mxu0
      %v5842 = vadd.f32 0.0, %v5841
      %5843 = vmatmul.f32.gmra.mxu0 %v5479
      %v5844 = vpop.f32.mrf.mxu0
      %v5845 = vadd.f32 0.0, %v5844
      %5846 = vmatmul.f32.gmra.mxu0 %v5480
      %v5847 = vpop.f32.mrf.mxu0
      %v5848 = vadd.f32 0.0, %v5847
      %5849 = vmatmul.f32.gmra.mxu0 %v5481
      %v5850 = vpop.f32.mrf.mxu0
      %v5851 = vadd.f32 0.0, %v5850
      %5852 = vmatmul.f32.gmra.mxu0 %v5482
      %v5853 = vpop.f32.mrf.mxu0
      %v5854 = vadd.f32 0.0, %v5853
      %5855 = vmatmul.f32.gmra.mxu0 %v5483
      %v5856 = vpop.f32.mrf.mxu0
      %v5857 = vadd.f32 0.0, %v5856
      %5858 = vmatmul.f32.gmra.mxu0 %v5484
      %v5859 = vpop.f32.mrf.mxu0
      %v5860 = vadd.f32 0.0, %v5859
      %5861 = vmatmul.f32.gmra.mxu0 %v5485
      %v5862 = vpop.f32.mrf.mxu0
      %v5863 = vadd.f32 0.0, %v5862
      %5864 = vmatmul.f32.gmra.mxu0 %v5486
      %v5865 = vpop.f32.mrf.mxu0
      %v5866 = vadd.f32 0.0, %v5865
      %5867 = vmatmul.f32.gmra.mxu0 %v5487
      %v5868 = vpop.f32.mrf.mxu0
      %v5869 = vadd.f32 0.0, %v5868
      %5870 = vmatmul.f32.gmra.mxu0 %v5488
      %v5871 = vpop.f32.mrf.mxu0
      %v5872 = vadd.f32 0.0, %v5871
      %5873 = vmatmul.f32.gmra.mxu0 %v5489
      %v5874 = vpop.f32.mrf.mxu0
      %v5875 = vadd.f32 0.0, %v5874
      %5876 = vmatmul.f32.gmra.mxu0 %v5490
      %v5877 = vpop.f32.mrf.mxu0
      %v5878 = vadd.f32 0.0, %v5877
      %5879 = vmatmul.f32.gmra.mxu0 %v5491
      %v5880 = vpop.f32.mrf.mxu0
      %v5881 = vadd.f32 0.0, %v5880
      %5882 = vmatmul.f32.gmra.mxu0 %v5492
      %v5883 = vpop.f32.mrf.mxu0
      %v5884 = vadd.f32 0.0, %v5883
      %5885 = vmatmul.f32.gmra.mxu0 %v5493
      %v5886 = vpop.f32.mrf.mxu0
      %v5887 = vadd.f32 0.0, %v5886
      %5888 = vmatmul.f32.gmra.mxu0 %v5494
      %v5889 = vpop.f32.mrf.mxu0
      %v5890 = vadd.f32 0.0, %v5889
      %5891 = vmatmul.f32.gmra.mxu0 %v5495
      %v5892 = vpop.f32.mrf.mxu0
      %v5893 = vadd.f32 0.0, %v5892
      %5894 = vmatmul.f32.gmra.mxu0 %v5496
      %v5895 = vpop.f32.mrf.mxu0
      %v5896 = vadd.f32 0.0, %v5895
      %5897 = vdwg.mxu0
      %v5898 = vadd.f32 %v5515, %v299
      %v5899 = vadd.f32 %v5518, %v305
      %v5900 = vadd.f32 %v5521, %v312
      %v5901 = vadd.f32 %v5524, %v318
      %v5902 = vadd.f32 %v5527, %v325
      %v5903 = vadd.f32 %v5530, %v331
      %v5904 = vadd.f32 %v5533, %v338
      %v5905 = vadd.f32 %v5536, %v344
      %v5906 = vadd.f32 %v5539, %v351
      %v5907 = vadd.f32 %v5542, %v357
      %v5908 = vadd.f32 %v5545, %v364
      %v5909 = vadd.f32 %v5548, %v370
      %v5910 = vadd.f32 %v5551, %v377
      %v5911 = vadd.f32 %v5554, %v383
      %v5912 = vadd.f32 %v5557, %v390
      %v5913 = vadd.f32 %v5560, %v396
      %v5914 = vadd.f32 %v5563, %v403
      %v5915 = vadd.f32 %v5566, %v409
      %v5916 = vadd.f32 %v5569, %v416
      %v5917 = vadd.f32 %v5572, %v422
      %v5918 = vadd.f32 %v5575, %v429
      %v5919 = vadd.f32 %v5578, %v435
      %v5920 = vadd.f32 %v5581, %v442
      %v5921 = vadd.f32 %v5584, %v448
      %v5922 = vadd.f32 %v5587, %v455
      %v5923 = vadd.f32 %v5590, %v461
      %v5924 = vadd.f32 %v5593, %v468
      %v5925 = vadd.f32 %v5596, %v474
      %v5926 = vadd.f32 %v5599, %v481
      %v5927 = vadd.f32 %v5602, %v487
      %v5928 = vadd.f32 %v5605, %v494
      %v5929 = vadd.f32 %v5608, %v500
      %v5930 = vadd.f32 %v5611, %v507
      %v5931 = vadd.f32 %v5614, %v513
      %v5932 = vadd.f32 %v5617, %v520
      %v5933 = vadd.f32 %v5620, %v526
      %v5934 = vadd.f32 %v5623, %v533
      %v5935 = vadd.f32 %v5626, %v539
      %v5936 = vadd.f32 %v5629, %v546
      %v5937 = vadd.f32 %v5632, %v552
      %v5938 = vadd.f32 %v5635, %v559
      %v5939 = vadd.f32 %v5638, %v565
      %v5940 = vadd.f32 %v5641, %v572
      %v5941 = vadd.f32 %v5644, %v578
      %v5942 = vadd.f32 %v5647, %v585
      %v5943 = vadd.f32 %v5650, %v591
      %v5944 = vadd.f32 %v5653, %v598
      %v5945 = vadd.f32 %v5656, %v604
      %v5946 = vadd.f32 %v5659, %v611
      %v5947 = vadd.f32 %v5662, %v617
      %v5948 = vadd.f32 %v5665, %v624
      %v5949 = vadd.f32 %v5668, %v630
      %v5950 = vadd.f32 %v5671, %v637
      %v5951 = vadd.f32 %v5674, %v643
      %v5952 = vadd.f32 %v5677, %v650
      %v5953 = vadd.f32 %v5680, %v656
      %v5954 = vadd.f32 %v5683, %v663
      %v5955 = vadd.f32 %v5686, %v669
      %v5956 = vadd.f32 %v5689, %v676
      %v5957 = vadd.f32 %v5692, %v682
      %v5958 = vadd.f32 %v5695, %v689
      %v5959 = vadd.f32 %v5698, %v695
      %v5960 = vadd.f32 %v5701, %v702
      %v5961 = vadd.f32 %v5704, %v708
      %v5962 = vadd.f32 %v5707, %v715
      %v5963 = vadd.f32 %v5710, %v721
      %v5964 = vadd.f32 %v5713, %v728
      %v5965 = vadd.f32 %v5716, %v734
      %v5966 = vadd.f32 %v5719, %v741
      %v5967 = vadd.f32 %v5722, %v747
      %v5968 = vadd.f32 %v5725, %v754
      %v5969 = vadd.f32 %v5728, %v760
      %v5970 = vadd.f32 %v5731, %v767
      %v5971 = vadd.f32 %v5734, %v773
      %v5972 = vadd.f32 %v5737, %v780
      %v5973 = vadd.f32 %v5740, %v786
      %v5974 = vadd.f32 %v5743, %v793
      %v5975 = vadd.f32 %v5746, %v799
      %v5976 = vadd.f32 %v5749, %v806
      %v5977 = vadd.f32 %v5752, %v812
      %v5978 = vadd.f32 %v5755, %v819
      %v5979 = vadd.f32 %v5758, %v825
      %v5980 = vadd.f32 %v5761, %v832
      %v5981 = vadd.f32 %v5764, %v838
      %v5982 = vadd.f32 %v5767, %v845
      %v5983 = vadd.f32 %v5770, %v851
      %v5984 = vadd.f32 %v5773, %v858
      %v5985 = vadd.f32 %v5776, %v864
      %v5986 = vadd.f32 %v5779, %v871
      %v5987 = vadd.f32 %v5782, %v877
      %v5988 = vadd.f32 %v5785, %v884
      %v5989 = vadd.f32 %v5788, %v890
      %v5990 = vadd.f32 %v5791, %v897
      %v5991 = vadd.f32 %v5794, %v903
      %v5992 = vadd.f32 %v5797, %v910
      %v5993 = vadd.f32 %v5800, %v916
      %v5994 = vadd.f32 %v5803, %v923
      %v5995 = vadd.f32 %v5806, %v929
      %v5996 = vadd.f32 %v5809, %v936
      %v5997 = vadd.f32 %v5812, %v942
      %v5998 = vadd.f32 %v5815, %v949
      %v5999 = vadd.f32 %v5818, %v955
      %v6000 = vadd.f32 %v5821, %v962
      %v6001 = vadd.f32 %v5824, %v968
      %v6002 = vadd.f32 %v5827, %v975
      %v6003 = vadd.f32 %v5830, %v981
      %v6004 = vadd.f32 %v5833, %v988
      %v6005 = vadd.f32 %v5836, %v994
      %v6006 = vadd.f32 %v5839, %v1001
      %v6007 = vadd.f32 %v5842, %v1007
      %v6008 = vadd.f32 %v5845, %v1014
      %v6009 = vadd.f32 %v5848, %v1020
      %v6010 = vadd.f32 %v5851, %v1027
      %v6011 = vadd.f32 %v5854, %v1033
      %v6012 = vadd.f32 %v5857, %v1040
      %v6013 = vadd.f32 %v5860, %v1046
      %v6014 = vadd.f32 %v5863, %v1053
      %v6015 = vadd.f32 %v5866, %v1059
      %v6016 = vadd.f32 %v5869, %v1066
      %v6017 = vadd.f32 %v5872, %v1072
      %v6018 = vadd.f32 %v5875, %v1079
      %v6019 = vadd.f32 %v5878, %v1085
      %v6020 = vadd.f32 %v5881, %v1092
      %v6021 = vadd.f32 %v5884, %v1098
      %v6022 = vadd.f32 %v5887, %v1105
      %v6023 = vadd.f32 %v5890, %v1111
      %v6024 = vadd.f32 %v5893, %v1118
      %v6025 = vadd.f32 %v5896, %v1124
      %v6026 = vmax.f32 %v5898, %v5899
      %v6027 = vrot.slane %v6026, 4
      %v6028 = vmax.f32 %v6026, %v6027
      %v6029 = vrot.slane %v6028, 2
      %v6030 = vmax.f32 %v6028, %v6029
      %v6031 = vrot.slane %v6030, 1
      %v6032 = vmax.f32 %v6030, %v6031
      %v6033 = vmax.f32 %v5900, %v5901
      %v6034 = vrot.slane %v6033, 4
      %v6035 = vmax.f32 %v6033, %v6034
      %v6036 = vrot.slane %v6035, 2
      %v6037 = vmax.f32 %v6035, %v6036
      %v6038 = vrot.slane %v6037, 1
      %v6039 = vmax.f32 %v6037, %v6038
      %v6040 = vmax.f32 %v5902, %v5903
      %v6041 = vrot.slane %v6040, 4
      %v6042 = vmax.f32 %v6040, %v6041
      %v6043 = vrot.slane %v6042, 2
      %v6044 = vmax.f32 %v6042, %v6043
      %v6045 = vrot.slane %v6044, 1
      %v6046 = vmax.f32 %v6044, %v6045
      %v6047 = vmax.f32 %v5904, %v5905
      %v6048 = vrot.slane %v6047, 4
      %v6049 = vmax.f32 %v6047, %v6048
      %v6050 = vrot.slane %v6049, 2
      %v6051 = vmax.f32 %v6049, %v6050
      %v6052 = vrot.slane %v6051, 1
      %v6053 = vmax.f32 %v6051, %v6052
      %v6054 = vmax.f32 %v5906, %v5907
      %v6055 = vrot.slane %v6054, 4
      %v6056 = vmax.f32 %v6054, %v6055
      %v6057 = vrot.slane %v6056, 2
      %v6058 = vmax.f32 %v6056, %v6057
      %v6059 = vrot.slane %v6058, 1
      %v6060 = vmax.f32 %v6058, %v6059
      %v6061 = vmax.f32 %v5908, %v5909
      %v6062 = vrot.slane %v6061, 4
      %v6063 = vmax.f32 %v6061, %v6062
      %v6064 = vrot.slane %v6063, 2
      %v6065 = vmax.f32 %v6063, %v6064
      %v6066 = vrot.slane %v6065, 1
      %v6067 = vmax.f32 %v6065, %v6066
      %v6068 = vmax.f32 %v5910, %v5911
      %v6069 = vrot.slane %v6068, 4
      %v6070 = vmax.f32 %v6068, %v6069
      %v6071 = vrot.slane %v6070, 2
      %v6072 = vmax.f32 %v6070, %v6071
      %v6073 = vrot.slane %v6072, 1
      %v6074 = vmax.f32 %v6072, %v6073
      %v6075 = vmax.f32 %v5912, %v5913
      %v6076 = vrot.slane %v6075, 4
      %v6077 = vmax.f32 %v6075, %v6076
      %v6078 = vrot.slane %v6077, 2
      %v6079 = vmax.f32 %v6077, %v6078
      %v6080 = vrot.slane %v6079, 1
      %v6081 = vmax.f32 %v6079, %v6080
      %v6082 = vmax.f32 %v5914, %v5915
      %v6083 = vrot.slane %v6082, 4
      %v6084 = vmax.f32 %v6082, %v6083
      %v6085 = vrot.slane %v6084, 2
      %v6086 = vmax.f32 %v6084, %v6085
      %v6087 = vrot.slane %v6086, 1
      %v6088 = vmax.f32 %v6086, %v6087
      %v6089 = vmax.f32 %v5916, %v5917
      %v6090 = vrot.slane %v6089, 4
      %v6091 = vmax.f32 %v6089, %v6090
      %v6092 = vrot.slane %v6091, 2
      %v6093 = vmax.f32 %v6091, %v6092
      %v6094 = vrot.slane %v6093, 1
      %v6095 = vmax.f32 %v6093, %v6094
      %v6096 = vmax.f32 %v5918, %v5919
      %v6097 = vrot.slane %v6096, 4
      %v6098 = vmax.f32 %v6096, %v6097
      %v6099 = vrot.slane %v6098, 2
      %v6100 = vmax.f32 %v6098, %v6099
      %v6101 = vrot.slane %v6100, 1
      %v6102 = vmax.f32 %v6100, %v6101
      %v6103 = vmax.f32 %v5920, %v5921
      %v6104 = vrot.slane %v6103, 4
      %v6105 = vmax.f32 %v6103, %v6104
      %v6106 = vrot.slane %v6105, 2
      %v6107 = vmax.f32 %v6105, %v6106
      %v6108 = vrot.slane %v6107, 1
      %v6109 = vmax.f32 %v6107, %v6108
      %v6110 = vmax.f32 %v5922, %v5923
      %v6111 = vrot.slane %v6110, 4
      %v6112 = vmax.f32 %v6110, %v6111
      %v6113 = vrot.slane %v6112, 2
      %v6114 = vmax.f32 %v6112, %v6113
      %v6115 = vrot.slane %v6114, 1
      %v6116 = vmax.f32 %v6114, %v6115
      %v6117 = vmax.f32 %v5924, %v5925
      %v6118 = vrot.slane %v6117, 4
      %v6119 = vmax.f32 %v6117, %v6118
      %v6120 = vrot.slane %v6119, 2
      %v6121 = vmax.f32 %v6119, %v6120
      %v6122 = vrot.slane %v6121, 1
      %v6123 = vmax.f32 %v6121, %v6122
      %v6124 = vmax.f32 %v5926, %v5927
      %v6125 = vrot.slane %v6124, 4
      %v6126 = vmax.f32 %v6124, %v6125
      %v6127 = vrot.slane %v6126, 2
      %v6128 = vmax.f32 %v6126, %v6127
      %v6129 = vrot.slane %v6128, 1
      %v6130 = vmax.f32 %v6128, %v6129
      %v6131 = vmax.f32 %v5928, %v5929
      %v6132 = vrot.slane %v6131, 4
      %v6133 = vmax.f32 %v6131, %v6132
      %v6134 = vrot.slane %v6133, 2
      %v6135 = vmax.f32 %v6133, %v6134
      %v6136 = vrot.slane %v6135, 1
      %v6137 = vmax.f32 %v6135, %v6136
      %v6138 = vmax.f32 %v5930, %v5931
      %v6139 = vrot.slane %v6138, 4
      %v6140 = vmax.f32 %v6138, %v6139
      %v6141 = vrot.slane %v6140, 2
      %v6142 = vmax.f32 %v6140, %v6141
      %v6143 = vrot.slane %v6142, 1
      %v6144 = vmax.f32 %v6142, %v6143
      %v6145 = vmax.f32 %v5932, %v5933
      %v6146 = vrot.slane %v6145, 4
      %v6147 = vmax.f32 %v6145, %v6146
      %v6148 = vrot.slane %v6147, 2
      %v6149 = vmax.f32 %v6147, %v6148
      %v6150 = vrot.slane %v6149, 1
      %v6151 = vmax.f32 %v6149, %v6150
      %v6152 = vmax.f32 %v5934, %v5935
      %v6153 = vrot.slane %v6152, 4
      %v6154 = vmax.f32 %v6152, %v6153
      %v6155 = vrot.slane %v6154, 2
      %v6156 = vmax.f32 %v6154, %v6155
      %v6157 = vrot.slane %v6156, 1
      %v6158 = vmax.f32 %v6156, %v6157
      %v6159 = vmax.f32 %v5936, %v5937
      %v6160 = vrot.slane %v6159, 4
      %v6161 = vmax.f32 %v6159, %v6160
      %v6162 = vrot.slane %v6161, 2
      %v6163 = vmax.f32 %v6161, %v6162
      %v6164 = vrot.slane %v6163, 1
      %v6165 = vmax.f32 %v6163, %v6164
      %v6166 = vmax.f32 %v5938, %v5939
      %v6167 = vrot.slane %v6166, 4
      %v6168 = vmax.f32 %v6166, %v6167
      %v6169 = vrot.slane %v6168, 2
      %v6170 = vmax.f32 %v6168, %v6169
      %v6171 = vrot.slane %v6170, 1
      %v6172 = vmax.f32 %v6170, %v6171
      %v6173 = vmax.f32 %v5940, %v5941
      %v6174 = vrot.slane %v6173, 4
      %v6175 = vmax.f32 %v6173, %v6174
      %v6176 = vrot.slane %v6175, 2
      %v6177 = vmax.f32 %v6175, %v6176
      %v6178 = vrot.slane %v6177, 1
      %v6179 = vmax.f32 %v6177, %v6178
      %v6180 = vmax.f32 %v5942, %v5943
      %v6181 = vrot.slane %v6180, 4
      %v6182 = vmax.f32 %v6180, %v6181
      %v6183 = vrot.slane %v6182, 2
      %v6184 = vmax.f32 %v6182, %v6183
      %v6185 = vrot.slane %v6184, 1
      %v6186 = vmax.f32 %v6184, %v6185
      %v6187 = vmax.f32 %v5944, %v5945
      %v6188 = vrot.slane %v6187, 4
      %v6189 = vmax.f32 %v6187, %v6188
      %v6190 = vrot.slane %v6189, 2
      %v6191 = vmax.f32 %v6189, %v6190
      %v6192 = vrot.slane %v6191, 1
      %v6193 = vmax.f32 %v6191, %v6192
      %v6194 = vmax.f32 %v5946, %v5947
      %v6195 = vrot.slane %v6194, 4
      %v6196 = vmax.f32 %v6194, %v6195
      %v6197 = vrot.slane %v6196, 2
      %v6198 = vmax.f32 %v6196, %v6197
      %v6199 = vrot.slane %v6198, 1
      %v6200 = vmax.f32 %v6198, %v6199
      %v6201 = vmax.f32 %v5948, %v5949
      %v6202 = vrot.slane %v6201, 4
      %v6203 = vmax.f32 %v6201, %v6202
      %v6204 = vrot.slane %v6203, 2
      %v6205 = vmax.f32 %v6203, %v6204
      %v6206 = vrot.slane %v6205, 1
      %v6207 = vmax.f32 %v6205, %v6206
      %v6208 = vmax.f32 %v5950, %v5951
      %v6209 = vrot.slane %v6208, 4
      %v6210 = vmax.f32 %v6208, %v6209
      %v6211 = vrot.slane %v6210, 2
      %v6212 = vmax.f32 %v6210, %v6211
      %v6213 = vrot.slane %v6212, 1
      %v6214 = vmax.f32 %v6212, %v6213
      %v6215 = vmax.f32 %v5952, %v5953
      %v6216 = vrot.slane %v6215, 4
      %v6217 = vmax.f32 %v6215, %v6216
      %v6218 = vrot.slane %v6217, 2
      %v6219 = vmax.f32 %v6217, %v6218
      %v6220 = vrot.slane %v6219, 1
      %v6221 = vmax.f32 %v6219, %v6220
      %v6222 = vmax.f32 %v5954, %v5955
      %v6223 = vrot.slane %v6222, 4
      %v6224 = vmax.f32 %v6222, %v6223
      %v6225 = vrot.slane %v6224, 2
      %v6226 = vmax.f32 %v6224, %v6225
      %v6227 = vrot.slane %v6226, 1
      %v6228 = vmax.f32 %v6226, %v6227
      %v6229 = vmax.f32 %v5956, %v5957
      %v6230 = vrot.slane %v6229, 4
      %v6231 = vmax.f32 %v6229, %v6230
      %v6232 = vrot.slane %v6231, 2
      %v6233 = vmax.f32 %v6231, %v6232
      %v6234 = vrot.slane %v6233, 1
      %v6235 = vmax.f32 %v6233, %v6234
      %v6236 = vmax.f32 %v5958, %v5959
      %v6237 = vrot.slane %v6236, 4
      %v6238 = vmax.f32 %v6236, %v6237
      %v6239 = vrot.slane %v6238, 2
      %v6240 = vmax.f32 %v6238, %v6239
      %v6241 = vrot.slane %v6240, 1
      %v6242 = vmax.f32 %v6240, %v6241
      %v6243 = vmax.f32 %v5960, %v5961
      %v6244 = vrot.slane %v6243, 4
      %v6245 = vmax.f32 %v6243, %v6244
      %v6246 = vrot.slane %v6245, 2
      %v6247 = vmax.f32 %v6245, %v6246
      %v6248 = vrot.slane %v6247, 1
      %v6249 = vmax.f32 %v6247, %v6248
      %v6250 = vmax.f32 %v5962, %v5963
      %v6251 = vrot.slane %v6250, 4
      %v6252 = vmax.f32 %v6250, %v6251
      %v6253 = vrot.slane %v6252, 2
      %v6254 = vmax.f32 %v6252, %v6253
      %v6255 = vrot.slane %v6254, 1
      %v6256 = vmax.f32 %v6254, %v6255
      %v6257 = vmax.f32 %v5964, %v5965
      %v6258 = vrot.slane %v6257, 4
      %v6259 = vmax.f32 %v6257, %v6258
      %v6260 = vrot.slane %v6259, 2
      %v6261 = vmax.f32 %v6259, %v6260
      %v6262 = vrot.slane %v6261, 1
      %v6263 = vmax.f32 %v6261, %v6262
      %v6264 = vmax.f32 %v5966, %v5967
      %v6265 = vrot.slane %v6264, 4
      %v6266 = vmax.f32 %v6264, %v6265
      %v6267 = vrot.slane %v6266, 2
      %v6268 = vmax.f32 %v6266, %v6267
      %v6269 = vrot.slane %v6268, 1
      %v6270 = vmax.f32 %v6268, %v6269
      %v6271 = vmax.f32 %v5968, %v5969
      %v6272 = vrot.slane %v6271, 4
      %v6273 = vmax.f32 %v6271, %v6272
      %v6274 = vrot.slane %v6273, 2
      %v6275 = vmax.f32 %v6273, %v6274
      %v6276 = vrot.slane %v6275, 1
      %v6277 = vmax.f32 %v6275, %v6276
      %v6278 = vmax.f32 %v5970, %v5971
      %v6279 = vrot.slane %v6278, 4
      %v6280 = vmax.f32 %v6278, %v6279
      %v6281 = vrot.slane %v6280, 2
      %v6282 = vmax.f32 %v6280, %v6281
      %v6283 = vrot.slane %v6282, 1
      %v6284 = vmax.f32 %v6282, %v6283
      %v6285 = vmax.f32 %v5972, %v5973
      %v6286 = vrot.slane %v6285, 4
      %v6287 = vmax.f32 %v6285, %v6286
      %v6288 = vrot.slane %v6287, 2
      %v6289 = vmax.f32 %v6287, %v6288
      %v6290 = vrot.slane %v6289, 1
      %v6291 = vmax.f32 %v6289, %v6290
      %v6292 = vmax.f32 %v5974, %v5975
      %v6293 = vrot.slane %v6292, 4
      %v6294 = vmax.f32 %v6292, %v6293
      %v6295 = vrot.slane %v6294, 2
      %v6296 = vmax.f32 %v6294, %v6295
      %v6297 = vrot.slane %v6296, 1
      %v6298 = vmax.f32 %v6296, %v6297
      %v6299 = vmax.f32 %v5976, %v5977
      %v6300 = vrot.slane %v6299, 4
      %v6301 = vmax.f32 %v6299, %v6300
      %v6302 = vrot.slane %v6301, 2
      %v6303 = vmax.f32 %v6301, %v6302
      %v6304 = vrot.slane %v6303, 1
      %v6305 = vmax.f32 %v6303, %v6304
      %v6306 = vmax.f32 %v5978, %v5979
      %v6307 = vrot.slane %v6306, 4
      %v6308 = vmax.f32 %v6306, %v6307
      %v6309 = vrot.slane %v6308, 2
      %v6310 = vmax.f32 %v6308, %v6309
      %v6311 = vrot.slane %v6310, 1
      %v6312 = vmax.f32 %v6310, %v6311
      %v6313 = vmax.f32 %v5980, %v5981
      %v6314 = vrot.slane %v6313, 4
      %v6315 = vmax.f32 %v6313, %v6314
      %v6316 = vrot.slane %v6315, 2
      %v6317 = vmax.f32 %v6315, %v6316
      %v6318 = vrot.slane %v6317, 1
      %v6319 = vmax.f32 %v6317, %v6318
      %v6320 = vmax.f32 %v5982, %v5983
      %v6321 = vrot.slane %v6320, 4
      %v6322 = vmax.f32 %v6320, %v6321
      %v6323 = vrot.slane %v6322, 2
      %v6324 = vmax.f32 %v6322, %v6323
      %v6325 = vrot.slane %v6324, 1
      %v6326 = vmax.f32 %v6324, %v6325
      %v6327 = vmax.f32 %v5984, %v5985
      %v6328 = vrot.slane %v6327, 4
      %v6329 = vmax.f32 %v6327, %v6328
      %v6330 = vrot.slane %v6329, 2
      %v6331 = vmax.f32 %v6329, %v6330
      %v6332 = vrot.slane %v6331, 1
      %v6333 = vmax.f32 %v6331, %v6332
      %v6334 = vmax.f32 %v5986, %v5987
      %v6335 = vrot.slane %v6334, 4
      %v6336 = vmax.f32 %v6334, %v6335
      %v6337 = vrot.slane %v6336, 2
      %v6338 = vmax.f32 %v6336, %v6337
      %v6339 = vrot.slane %v6338, 1
      %v6340 = vmax.f32 %v6338, %v6339
      %v6341 = vmax.f32 %v5988, %v5989
      %v6342 = vrot.slane %v6341, 4
      %v6343 = vmax.f32 %v6341, %v6342
      %v6344 = vrot.slane %v6343, 2
      %v6345 = vmax.f32 %v6343, %v6344
      %v6346 = vrot.slane %v6345, 1
      %v6347 = vmax.f32 %v6345, %v6346
      %v6348 = vmax.f32 %v5990, %v5991
      %v6349 = vrot.slane %v6348, 4
      %v6350 = vmax.f32 %v6348, %v6349
      %v6351 = vrot.slane %v6350, 2
      %v6352 = vmax.f32 %v6350, %v6351
      %v6353 = vrot.slane %v6352, 1
      %v6354 = vmax.f32 %v6352, %v6353
      %v6355 = vmax.f32 %v5992, %v5993
      %v6356 = vrot.slane %v6355, 4
      %v6357 = vmax.f32 %v6355, %v6356
      %v6358 = vrot.slane %v6357, 2
      %v6359 = vmax.f32 %v6357, %v6358
      %v6360 = vrot.slane %v6359, 1
      %v6361 = vmax.f32 %v6359, %v6360
      %v6362 = vmax.f32 %v5994, %v5995
      %v6363 = vrot.slane %v6362, 4
      %v6364 = vmax.f32 %v6362, %v6363
      %v6365 = vrot.slane %v6364, 2
      %v6366 = vmax.f32 %v6364, %v6365
      %v6367 = vrot.slane %v6366, 1
      %v6368 = vmax.f32 %v6366, %v6367
      %v6369 = vmax.f32 %v5996, %v5997
      %v6370 = vrot.slane %v6369, 4
      %v6371 = vmax.f32 %v6369, %v6370
      %v6372 = vrot.slane %v6371, 2
      %v6373 = vmax.f32 %v6371, %v6372
      %v6374 = vrot.slane %v6373, 1
      %v6375 = vmax.f32 %v6373, %v6374
      %v6376 = vmax.f32 %v5998, %v5999
      %v6377 = vrot.slane %v6376, 4
      %v6378 = vmax.f32 %v6376, %v6377
      %v6379 = vrot.slane %v6378, 2
      %v6380 = vmax.f32 %v6378, %v6379
      %v6381 = vrot.slane %v6380, 1
      %v6382 = vmax.f32 %v6380, %v6381
      %v6383 = vmax.f32 %v6000, %v6001
      %v6384 = vrot.slane %v6383, 4
      %v6385 = vmax.f32 %v6383, %v6384
      %v6386 = vrot.slane %v6385, 2
      %v6387 = vmax.f32 %v6385, %v6386
      %v6388 = vrot.slane %v6387, 1
      %v6389 = vmax.f32 %v6387, %v6388
      %v6390 = vmax.f32 %v6002, %v6003
      %v6391 = vrot.slane %v6390, 4
      %v6392 = vmax.f32 %v6390, %v6391
      %v6393 = vrot.slane %v6392, 2
      %v6394 = vmax.f32 %v6392, %v6393
      %v6395 = vrot.slane %v6394, 1
      %v6396 = vmax.f32 %v6394, %v6395
      %v6397 = vmax.f32 %v6004, %v6005
      %v6398 = vrot.slane %v6397, 4
      %v6399 = vmax.f32 %v6397, %v6398
      %v6400 = vrot.slane %v6399, 2
      %v6401 = vmax.f32 %v6399, %v6400
      %v6402 = vrot.slane %v6401, 1
      %v6403 = vmax.f32 %v6401, %v6402
      %v6404 = vmax.f32 %v6006, %v6007
      %v6405 = vrot.slane %v6404, 4
      %v6406 = vmax.f32 %v6404, %v6405
      %v6407 = vrot.slane %v6406, 2
      %v6408 = vmax.f32 %v6406, %v6407
      %v6409 = vrot.slane %v6408, 1
      %v6410 = vmax.f32 %v6408, %v6409
      %v6411 = vmax.f32 %v6008, %v6009
      %v6412 = vrot.slane %v6411, 4
      %v6413 = vmax.f32 %v6411, %v6412
      %v6414 = vrot.slane %v6413, 2
      %v6415 = vmax.f32 %v6413, %v6414
      %v6416 = vrot.slane %v6415, 1
      %v6417 = vmax.f32 %v6415, %v6416
      %v6418 = vmax.f32 %v6010, %v6011
      %v6419 = vrot.slane %v6418, 4
      %v6420 = vmax.f32 %v6418, %v6419
      %v6421 = vrot.slane %v6420, 2
      %v6422 = vmax.f32 %v6420, %v6421
      %v6423 = vrot.slane %v6422, 1
      %v6424 = vmax.f32 %v6422, %v6423
      %v6425 = vmax.f32 %v6012, %v6013
      %v6426 = vrot.slane %v6425, 4
      %v6427 = vmax.f32 %v6425, %v6426
      %v6428 = vrot.slane %v6427, 2
      %v6429 = vmax.f32 %v6427, %v6428
      %v6430 = vrot.slane %v6429, 1
      %v6431 = vmax.f32 %v6429, %v6430
      %v6432 = vmax.f32 %v6014, %v6015
      %v6433 = vrot.slane %v6432, 4
      %v6434 = vmax.f32 %v6432, %v6433
      %v6435 = vrot.slane %v6434, 2
      %v6436 = vmax.f32 %v6434, %v6435
      %v6437 = vrot.slane %v6436, 1
      %v6438 = vmax.f32 %v6436, %v6437
      %v6439 = vmax.f32 %v6016, %v6017
      %v6440 = vrot.slane %v6439, 4
      %v6441 = vmax.f32 %v6439, %v6440
      %v6442 = vrot.slane %v6441, 2
      %v6443 = vmax.f32 %v6441, %v6442
      %v6444 = vrot.slane %v6443, 1
      %v6445 = vmax.f32 %v6443, %v6444
      %v6446 = vmax.f32 %v6018, %v6019
      %v6447 = vrot.slane %v6446, 4
      %v6448 = vmax.f32 %v6446, %v6447
      %v6449 = vrot.slane %v6448, 2
      %v6450 = vmax.f32 %v6448, %v6449
      %v6451 = vrot.slane %v6450, 1
      %v6452 = vmax.f32 %v6450, %v6451
      %v6453 = vmax.f32 %v6020, %v6021
      %v6454 = vrot.slane %v6453, 4
      %v6455 = vmax.f32 %v6453, %v6454
      %v6456 = vrot.slane %v6455, 2
      %v6457 = vmax.f32 %v6455, %v6456
      %v6458 = vrot.slane %v6457, 1
      %v6459 = vmax.f32 %v6457, %v6458
      %v6460 = vmax.f32 %v6022, %v6023
      %v6461 = vrot.slane %v6460, 4
      %v6462 = vmax.f32 %v6460, %v6461
      %v6463 = vrot.slane %v6462, 2
      %v6464 = vmax.f32 %v6462, %v6463
      %v6465 = vrot.slane %v6464, 1
      %v6466 = vmax.f32 %v6464, %v6465
      %v6467 = vmax.f32 %v6024, %v6025
      %v6468 = vrot.slane %v6467, 4
      %v6469 = vmax.f32 %v6467, %v6468
      %v6470 = vrot.slane %v6469, 2
      %v6471 = vmax.f32 %v6469, %v6470
      %v6472 = vrot.slane %v6471, 1
      %v6473 = vmax.f32 %v6471, %v6472
      %v6475 = vperm.slane %v4771, 0
      %v6477 = vadd.f32 %v6032, %v6475
      %v6478 = vadd.f32 %v6039, %v6475
      %v6479 = vadd.f32 %v6046, %v6475
      %v6480 = vadd.f32 %v6053, %v6475
      %v6481 = vadd.f32 %v6060, %v6475
      %v6482 = vadd.f32 %v6067, %v6475
      %v6483 = vadd.f32 %v6074, %v6475
      %v6484 = vadd.f32 %v6081, %v6475
      %v6485 = vadd.f32 %v6088, %v6475
      %v6486 = vadd.f32 %v6095, %v6475
      %v6487 = vadd.f32 %v6102, %v6475
      %v6488 = vadd.f32 %v6109, %v6475
      %v6489 = vadd.f32 %v6116, %v6475
      %v6490 = vadd.f32 %v6123, %v6475
      %v6491 = vadd.f32 %v6130, %v6475
      %v6492 = vadd.f32 %v6137, %v6475
      %v6493 = vadd.f32 %v6144, %v6475
      %v6494 = vadd.f32 %v6151, %v6475
      %v6495 = vadd.f32 %v6158, %v6475
      %v6496 = vadd.f32 %v6165, %v6475
      %v6497 = vadd.f32 %v6172, %v6475
      %v6498 = vadd.f32 %v6179, %v6475
      %v6499 = vadd.f32 %v6186, %v6475
      %v6500 = vadd.f32 %v6193, %v6475
      %v6501 = vadd.f32 %v6200, %v6475
      %v6502 = vadd.f32 %v6207, %v6475
      %v6503 = vadd.f32 %v6214, %v6475
      %v6504 = vadd.f32 %v6221, %v6475
      %v6505 = vadd.f32 %v6228, %v6475
      %v6506 = vadd.f32 %v6235, %v6475
      %v6507 = vadd.f32 %v6242, %v6475
      %v6508 = vadd.f32 %v6249, %v6475
      %v6509 = vadd.f32 %v6256, %v6475
      %v6510 = vadd.f32 %v6263, %v6475
      %v6511 = vadd.f32 %v6270, %v6475
      %v6512 = vadd.f32 %v6277, %v6475
      %v6513 = vadd.f32 %v6284, %v6475
      %v6514 = vadd.f32 %v6291, %v6475
      %v6515 = vadd.f32 %v6298, %v6475
      %v6516 = vadd.f32 %v6305, %v6475
      %v6517 = vadd.f32 %v6312, %v6475
      %v6518 = vadd.f32 %v6319, %v6475
      %v6519 = vadd.f32 %v6326, %v6475
      %v6520 = vadd.f32 %v6333, %v6475
      %v6521 = vadd.f32 %v6340, %v6475
      %v6522 = vadd.f32 %v6347, %v6475
      %v6523 = vadd.f32 %v6354, %v6475
      %v6524 = vadd.f32 %v6361, %v6475
      %v6525 = vadd.f32 %v6368, %v6475
      %v6526 = vadd.f32 %v6375, %v6475
      %v6527 = vadd.f32 %v6382, %v6475
      %v6528 = vadd.f32 %v6389, %v6475
      %v6529 = vadd.f32 %v6396, %v6475
      %v6530 = vadd.f32 %v6403, %v6475
      %v6531 = vadd.f32 %v6410, %v6475
      %v6532 = vadd.f32 %v6417, %v6475
      %v6533 = vadd.f32 %v6424, %v6475
      %v6534 = vadd.f32 %v6431, %v6475
      %v6535 = vadd.f32 %v6438, %v6475
      %v6536 = vadd.f32 %v6445, %v6475
      %v6537 = vadd.f32 %v6452, %v6475
      %v6538 = vadd.f32 %v6459, %v6475
      %v6539 = vadd.f32 %v6466, %v6475
      %v6540 = vadd.f32 %v6473, %v6475
      %v6541 = vmax.f32 %v6477, 0.0
      %v6542 = vmax.f32 %v6478, 0.0
      %v6543 = vmax.f32 %v6479, 0.0
      %v6544 = vmax.f32 %v6480, 0.0
      %v6545 = vmax.f32 %v6481, 0.0
      %v6546 = vmax.f32 %v6482, 0.0
      %v6547 = vmax.f32 %v6483, 0.0
      %v6548 = vmax.f32 %v6484, 0.0
      %v6549 = vmax.f32 %v6485, 0.0
      %v6550 = vmax.f32 %v6486, 0.0
      %v6551 = vmax.f32 %v6487, 0.0
      %v6552 = vmax.f32 %v6488, 0.0
      %v6553 = vmax.f32 %v6489, 0.0
      %v6554 = vmax.f32 %v6490, 0.0
      %v6555 = vmax.f32 %v6491, 0.0
      %v6556 = vmax.f32 %v6492, 0.0
      %v6557 = vmax.f32 %v6493, 0.0
      %v6558 = vmax.f32 %v6494, 0.0
      %v6559 = vmax.f32 %v6495, 0.0
      %v6560 = vmax.f32 %v6496, 0.0
      %v6561 = vmax.f32 %v6497, 0.0
      %v6562 = vmax.f32 %v6498, 0.0
      %v6563 = vmax.f32 %v6499, 0.0
      %v6564 = vmax.f32 %v6500, 0.0
      %v6565 = vmax.f32 %v6501, 0.0
      %v6566 = vmax.f32 %v6502, 0.0
      %v6567 = vmax.f32 %v6503, 0.0
      %v6568 = vmax.f32 %v6504, 0.0
      %v6569 = vmax.f32 %v6505, 0.0
      %v6570 = vmax.f32 %v6506, 0.0
      %v6571 = vmax.f32 %v6507, 0.0
      %v6572 = vmax.f32 %v6508, 0.0
      %v6573 = vmax.f32 %v6509, 0.0
      %v6574 = vmax.f32 %v6510, 0.0
      %v6575 = vmax.f32 %v6511, 0.0
      %v6576 = vmax.f32 %v6512, 0.0
      %v6577 = vmax.f32 %v6513, 0.0
      %v6578 = vmax.f32 %v6514, 0.0
      %v6579 = vmax.f32 %v6515, 0.0
      %v6580 = vmax.f32 %v6516, 0.0
      %v6581 = vmax.f32 %v6517, 0.0
      %v6582 = vmax.f32 %v6518, 0.0
      %v6583 = vmax.f32 %v6519, 0.0
      %v6584 = vmax.f32 %v6520, 0.0
      %v6585 = vmax.f32 %v6521, 0.0
      %v6586 = vmax.f32 %v6522, 0.0
      %v6587 = vmax.f32 %v6523, 0.0
      %v6588 = vmax.f32 %v6524, 0.0
      %v6589 = vmax.f32 %v6525, 0.0
      %v6590 = vmax.f32 %v6526, 0.0
      %v6591 = vmax.f32 %v6527, 0.0
      %v6592 = vmax.f32 %v6528, 0.0
      %v6593 = vmax.f32 %v6529, 0.0
      %v6594 = vmax.f32 %v6530, 0.0
      %v6595 = vmax.f32 %v6531, 0.0
      %v6596 = vmax.f32 %v6532, 0.0
      %v6597 = vmax.f32 %v6533, 0.0
      %v6598 = vmax.f32 %v6534, 0.0
      %v6599 = vmax.f32 %v6535, 0.0
      %v6600 = vmax.f32 %v6536, 0.0
      %v6601 = vmax.f32 %v6537, 0.0
      %v6602 = vmax.f32 %v6538, 0.0
      %v6603 = vmax.f32 %v6539, 0.0
      %v6604 = vmax.f32 %v6540, 0.0
      %s6605 = scalar_lea.vmem %s2, 768
      %v6606 = vld [vmem:[%s6605] sm:$0xff]
      %v6607 = vld [vmem:[%s6605 + $0x8] sm:$0xff]
      %v6608 = vld [vmem:[%s6605 + $0x10] sm:$0xff]
      %v6609 = vld [vmem:[%s6605 + $0x18] sm:$0xff]
      %v6610 = vld [vmem:[%s6605 + $0x20] sm:$0xff]
      %v6611 = vld [vmem:[%s6605 + $0x28] sm:$0xff]
      %v6612 = vld [vmem:[%s6605 + $0x30] sm:$0xff]
      %v6613 = vld [vmem:[%s6605 + $0x38] sm:$0xff]
      %v6614 = vld [vmem:[%s6605 + $0x40] sm:$0xff]
      %v6615 = vld [vmem:[%s6605 + $0x48] sm:$0xff]
      %v6616 = vld [vmem:[%s6605 + $0x50] sm:$0xff]
      %v6617 = vld [vmem:[%s6605 + $0x58] sm:$0xff]
      %v6618 = vld [vmem:[%s6605 + $0x60] sm:$0xff]
      %v6619 = vld [vmem:[%s6605 + $0x68] sm:$0xff]
      %v6620 = vld [vmem:[%s6605 + $0x70] sm:$0xff]
      %v6621 = vld [vmem:[%s6605 + $0x78] sm:$0xff]
      %v6622 = vld [vmem:[%s6605 + $0x80] sm:$0xff]
      %v6623 = vld [vmem:[%s6605 + $0x88] sm:$0xff]
      %v6624 = vld [vmem:[%s6605 + $0x90] sm:$0xff]
      %v6625 = vld [vmem:[%s6605 + $0x98] sm:$0xff]
      %v6626 = vld [vmem:[%s6605 + $0xa0] sm:$0xff]
      %v6627 = vld [vmem:[%s6605 + $0xa8] sm:$0xff]
      %v6628 = vld [vmem:[%s6605 + $0xb0] sm:$0xff]
      %v6629 = vld [vmem:[%s6605 + $0xb8] sm:$0xff]
      %v6630 = vld [vmem:[%s6605 + $0xc0] sm:$0xff]
      %v6631 = vld [vmem:[%s6605 + $0xc8] sm:$0xff]
      %v6632 = vld [vmem:[%s6605 + $0xd0] sm:$0xff]
      %v6633 = vld [vmem:[%s6605 + $0xd8] sm:$0xff]
      %v6634 = vld [vmem:[%s6605 + $0xe0] sm:$0xff]
      %v6635 = vld [vmem:[%s6605 + $0xe8] sm:$0xff]
      %v6636 = vld [vmem:[%s6605 + $0xf0] sm:$0xff]
      %v6637 = vld [vmem:[%s6605 + $0xf8] sm:$0xff]
      %s6638 = scalar_lea.vmem %s3, 3
      %v6639 = vld [vmem:[%s6638] sm:$0x1]
      %s6640 = scalar_lea.vmem %s4, 384
      %v6641 = vld [vmem:[%s6640] sm:$0xff]
      %v6642 = vld [vmem:[%s6640 + $0x8] sm:$0xff]
      %v6643 = vld [vmem:[%s6640 + $0x10] sm:$0xff]
      %v6644 = vld [vmem:[%s6640 + $0x18] sm:$0xff]
      %v6645 = vld [vmem:[%s6640 + $0x20] sm:$0xff]
      %v6646 = vld [vmem:[%s6640 + $0x28] sm:$0xff]
      %v6647 = vld [vmem:[%s6640 + $0x30] sm:$0xff]
      %v6648 = vld [vmem:[%s6640 + $0x38] sm:$0xff]
      %v6649 = vld [vmem:[%s6640 + $0x40] sm:$0xff]
      %v6650 = vld [vmem:[%s6640 + $0x48] sm:$0xff]
      %v6651 = vld [vmem:[%s6640 + $0x50] sm:$0xff]
      %v6652 = vld [vmem:[%s6640 + $0x58] sm:$0xff]
      %v6653 = vld [vmem:[%s6640 + $0x60] sm:$0xff]
      %v6654 = vld [vmem:[%s6640 + $0x68] sm:$0xff]
      %v6655 = vld [vmem:[%s6640 + $0x70] sm:$0xff]
      %v6656 = vld [vmem:[%s6640 + $0x78] sm:$0xff]
      %s6657 = scalar_lea.vmem %s5, 3
      %v6658 = vld [vmem:[%s6657] sm:$0x1]
      %v6723 = vrot.slane %v6542, 7
      %v6724 = vsel %vm2943, %v6723, %v6541
      %v6725 = vrot.slane %v6543, 6
      %v6726 = vsel %vm2946, %v6725, %v6724
      %v6727 = vrot.slane %v6544, 5
      %v6728 = vsel %vm2949, %v6727, %v6726
      %v6729 = vrot.slane %v6545, 4
      %v6730 = vsel %vm2952, %v6729, %v6728
      %v6731 = vrot.slane %v6546, 3
      %v6732 = vsel %vm2955, %v6731, %v6730
      %v6733 = vrot.slane %v6547, 2
      %v6734 = vsel %vm2958, %v6733, %v6732
      %v6735 = vrot.slane %v6548, 1
      %v6736 = vsel %vm2961, %v6735, %v6734
      %v6737 = vrot.slane %v6550, 7
      %v6738 = vsel %vm2943, %v6737, %v6549
      %v6739 = vrot.slane %v6551, 6
      %v6740 = vsel %vm2946, %v6739, %v6738
      %v6741 = vrot.slane %v6552, 5
      %v6742 = vsel %vm2949, %v6741, %v6740
      %v6743 = vrot.slane %v6553, 4
      %v6744 = vsel %vm2952, %v6743, %v6742
      %v6745 = vrot.slane %v6554, 3
      %v6746 = vsel %vm2955, %v6745, %v6744
      %v6747 = vrot.slane %v6555, 2
      %v6748 = vsel %vm2958, %v6747, %v6746
      %v6749 = vrot.slane %v6556, 1
      %v6750 = vsel %vm2961, %v6749, %v6748
      %v6751 = vrot.slane %v6558, 7
      %v6752 = vsel %vm2943, %v6751, %v6557
      %v6753 = vrot.slane %v6559, 6
      %v6754 = vsel %vm2946, %v6753, %v6752
      %v6755 = vrot.slane %v6560, 5
      %v6756 = vsel %vm2949, %v6755, %v6754
      %v6757 = vrot.slane %v6561, 4
      %v6758 = vsel %vm2952, %v6757, %v6756
      %v6759 = vrot.slane %v6562, 3
      %v6760 = vsel %vm2955, %v6759, %v6758
      %v6761 = vrot.slane %v6563, 2
      %v6762 = vsel %vm2958, %v6761, %v6760
      %v6763 = vrot.slane %v6564, 1
      %v6764 = vsel %vm2961, %v6763, %v6762
      %v6765 = vrot.slane %v6566, 7
      %v6766 = vsel %vm2943, %v6765, %v6565
      %v6767 = vrot.slane %v6567, 6
      %v6768 = vsel %vm2946, %v6767, %v6766
      %v6769 = vrot.slane %v6568, 5
      %v6770 = vsel %vm2949, %v6769, %v6768
      %v6771 = vrot.slane %v6569, 4
      %v6772 = vsel %vm2952, %v6771, %v6770
      %v6773 = vrot.slane %v6570, 3
      %v6774 = vsel %vm2955, %v6773, %v6772
      %v6775 = vrot.slane %v6571, 2
      %v6776 = vsel %vm2958, %v6775, %v6774
      %v6777 = vrot.slane %v6572, 1
      %v6778 = vsel %vm2961, %v6777, %v6776
      %v6779 = vrot.slane %v6574, 7
      %v6780 = vsel %vm2943, %v6779, %v6573
      %v6781 = vrot.slane %v6575, 6
      %v6782 = vsel %vm2946, %v6781, %v6780
      %v6783 = vrot.slane %v6576, 5
      %v6784 = vsel %vm2949, %v6783, %v6782
      %v6785 = vrot.slane %v6577, 4
      %v6786 = vsel %vm2952, %v6785, %v6784
      %v6787 = vrot.slane %v6578, 3
      %v6788 = vsel %vm2955, %v6787, %v6786
      %v6789 = vrot.slane %v6579, 2
      %v6790 = vsel %vm2958, %v6789, %v6788
      %v6791 = vrot.slane %v6580, 1
      %v6792 = vsel %vm2961, %v6791, %v6790
      %v6793 = vrot.slane %v6582, 7
      %v6794 = vsel %vm2943, %v6793, %v6581
      %v6795 = vrot.slane %v6583, 6
      %v6796 = vsel %vm2946, %v6795, %v6794
      %v6797 = vrot.slane %v6584, 5
      %v6798 = vsel %vm2949, %v6797, %v6796
      %v6799 = vrot.slane %v6585, 4
      %v6800 = vsel %vm2952, %v6799, %v6798
      %v6801 = vrot.slane %v6586, 3
      %v6802 = vsel %vm2955, %v6801, %v6800
      %v6803 = vrot.slane %v6587, 2
      %v6804 = vsel %vm2958, %v6803, %v6802
      %v6805 = vrot.slane %v6588, 1
      %v6806 = vsel %vm2961, %v6805, %v6804
      %v6807 = vrot.slane %v6590, 7
      %v6808 = vsel %vm2943, %v6807, %v6589
      %v6809 = vrot.slane %v6591, 6
      %v6810 = vsel %vm2946, %v6809, %v6808
      %v6811 = vrot.slane %v6592, 5
      %v6812 = vsel %vm2949, %v6811, %v6810
      %v6813 = vrot.slane %v6593, 4
      %v6814 = vsel %vm2952, %v6813, %v6812
      %v6815 = vrot.slane %v6594, 3
      %v6816 = vsel %vm2955, %v6815, %v6814
      %v6817 = vrot.slane %v6595, 2
      %v6818 = vsel %vm2958, %v6817, %v6816
      %v6819 = vrot.slane %v6596, 1
      %v6820 = vsel %vm2961, %v6819, %v6818
      %v6821 = vrot.slane %v6598, 7
      %v6822 = vsel %vm2943, %v6821, %v6597
      %v6823 = vrot.slane %v6599, 6
      %v6824 = vsel %vm2946, %v6823, %v6822
      %v6825 = vrot.slane %v6600, 5
      %v6826 = vsel %vm2949, %v6825, %v6824
      %v6827 = vrot.slane %v6601, 4
      %v6828 = vsel %vm2952, %v6827, %v6826
      %v6829 = vrot.slane %v6602, 3
      %v6830 = vsel %vm2955, %v6829, %v6828
      %v6831 = vrot.slane %v6603, 2
      %v6832 = vsel %vm2958, %v6831, %v6830
      %v6833 = vrot.slane %v6604, 1
      %v6834 = vsel %vm2961, %v6833, %v6832
      %6843 = vmatpush.msra.mxu0 %v6636
      %6844 = vmatpush.msra.mxu0 %v6634
      %6845 = vmatpush.msra.mxu0 %v6632
      %6846 = vmatpush.msra.mxu0 %v6630
      %6847 = vmatpush.msra.mxu0 %v6628
      %6848 = vmatpush.msra.mxu0 %v6626
      %6849 = vmatpush.msra.mxu0 %v6624
      %6850 = vmatpush.msra.mxu0 %v6622
      %6851 = vmatpush.msra.mxu0 %v6620
      %6852 = vmatpush.msra.mxu0 %v6618
      %6853 = vmatpush.msra.mxu0 %v6616
      %6854 = vmatpush.msra.mxu0 %v6614
      %6855 = vmatpush.msra.mxu0 %v6612
      %6856 = vmatpush.msra.mxu0 %v6610
      %6857 = vmatpush.msra.mxu0 %v6608
      %6858 = vmatpush.msra.mxu0 %v6606
      %6859 = vmatmul.f32.gmra.mxu0 %v6736
      %v6860 = vpop.f32.mrf.mxu0
      %v6861 = vadd.f32 0.0, %v6860
      %6862 = vmatmul.f32.gmra.mxu0 %v6750
      %v6863 = vpop.f32.mrf.mxu0
      %v6864 = vadd.f32 0.0, %v6863
      %6865 = vmatmul.f32.gmra.mxu0 %v6764
      %v6866 = vpop.f32.mrf.mxu0
      %v6867 = vadd.f32 0.0, %v6866
      %6868 = vmatmul.f32.gmra.mxu0 %v6778
      %v6869 = vpop.f32.mrf.mxu0
      %v6870 = vadd.f32 0.0, %v6869
      %6871 = vmatmul.f32.gmra.mxu0 %v6792
      %v6872 = vpop.f32.mrf.mxu0
      %v6873 = vadd.f32 0.0, %v6872
      %6874 = vmatmul.f32.gmra.mxu0 %v6806
      %v6875 = vpop.f32.mrf.mxu0
      %v6876 = vadd.f32 0.0, %v6875
      %6877 = vmatmul.f32.gmra.mxu0 %v6820
      %v6878 = vpop.f32.mrf.mxu0
      %v6879 = vadd.f32 0.0, %v6878
      %6880 = vmatmul.f32.gmra.mxu0 %v6834
      %v6881 = vpop.f32.mrf.mxu0
      %v6882 = vadd.f32 0.0, %v6881
      %6883 = vdwg.mxu0
      %6884 = vmatpush.msra.mxu0 %v6637
      %6885 = vmatpush.msra.mxu0 %v6635
      %6886 = vmatpush.msra.mxu0 %v6633
      %6887 = vmatpush.msra.mxu0 %v6631
      %6888 = vmatpush.msra.mxu0 %v6629
      %6889 = vmatpush.msra.mxu0 %v6627
      %6890 = vmatpush.msra.mxu0 %v6625
      %6891 = vmatpush.msra.mxu0 %v6623
      %6892 = vmatpush.msra.mxu0 %v6621
      %6893 = vmatpush.msra.mxu0 %v6619
      %6894 = vmatpush.msra.mxu0 %v6617
      %6895 = vmatpush.msra.mxu0 %v6615
      %6896 = vmatpush.msra.mxu0 %v6613
      %6897 = vmatpush.msra.mxu0 %v6611
      %6898 = vmatpush.msra.mxu0 %v6609
      %6899 = vmatpush.msra.mxu0 %v6607
      %6900 = vmatmul.f32.gmra.mxu0 %v6736
      %v6901 = vpop.f32.mrf.mxu0
      %v6902 = vadd.f32 0.0, %v6901
      %6903 = vmatmul.f32.gmra.mxu0 %v6750
      %v6904 = vpop.f32.mrf.mxu0
      %v6905 = vadd.f32 0.0, %v6904
      %6906 = vmatmul.f32.gmra.mxu0 %v6764
      %v6907 = vpop.f32.mrf.mxu0
      %v6908 = vadd.f32 0.0, %v6907
      %6909 = vmatmul.f32.gmra.mxu0 %v6778
      %v6910 = vpop.f32.mrf.mxu0
      %v6911 = vadd.f32 0.0, %v6910
      %6912 = vmatmul.f32.gmra.mxu0 %v6792
      %v6913 = vpop.f32.mrf.mxu0
      %v6914 = vadd.f32 0.0, %v6913
      %6915 = vmatmul.f32.gmra.mxu0 %v6806
      %v6916 = vpop.f32.mrf.mxu0
      %v6917 = vadd.f32 0.0, %v6916
      %6918 = vmatmul.f32.gmra.mxu0 %v6820
      %v6919 = vpop.f32.mrf.mxu0
      %v6920 = vadd.f32 0.0, %v6919
      %6921 = vmatmul.f32.gmra.mxu0 %v6834
      %v6922 = vpop.f32.mrf.mxu0
      %v6923 = vadd.f32 0.0, %v6922
      %6924 = vdwg.mxu0
      %v6926 = vperm.slane %v6639, 0
      %v6928 = vadd.f32 %v6861, %v6926
      %v6929 = vadd.f32 %v6864, %v6926
      %v6930 = vadd.f32 %v6867, %v6926
      %v6931 = vadd.f32 %v6870, %v6926
      %v6932 = vadd.f32 %v6873, %v6926
      %v6933 = vadd.f32 %v6876, %v6926
      %v6934 = vadd.f32 %v6879, %v6926
      %v6935 = vadd.f32 %v6882, %v6926
      %v6944 = vrot.slane %v6928, 1
      %v6945 = vrot.slane %v6928, 2
      %v6946 = vrot.slane %v6928, 3
      %v6947 = vrot.slane %v6928, 4
      %v6948 = vrot.slane %v6928, 5
      %v6949 = vrot.slane %v6928, 6
      %v6950 = vrot.slane %v6928, 7
      %v6951 = vrot.slane %v6929, 1
      %v6952 = vrot.slane %v6929, 2
      %v6953 = vrot.slane %v6929, 3
      %v6954 = vrot.slane %v6929, 4
      %v6955 = vrot.slane %v6929, 5
      %v6956 = vrot.slane %v6929, 6
      %v6957 = vrot.slane %v6929, 7
      %v6958 = vrot.slane %v6930, 1
      %v6959 = vrot.slane %v6930, 2
      %v6960 = vrot.slane %v6930, 3
      %v6961 = vrot.slane %v6930, 4
      %v6962 = vrot.slane %v6930, 5
      %v6963 = vrot.slane %v6930, 6
      %v6964 = vrot.slane %v6930, 7
      %v6965 = vrot.slane %v6931, 1
      %v6966 = vrot.slane %v6931, 2
      %v6967 = vrot.slane %v6931, 3
      %v6968 = vrot.slane %v6931, 4
      %v6969 = vrot.slane %v6931, 5
      %v6970 = vrot.slane %v6931, 6
      %v6971 = vrot.slane %v6931, 7
      %v6972 = vrot.slane %v6932, 1
      %v6973 = vrot.slane %v6932, 2
      %v6974 = vrot.slane %v6932, 3
      %v6975 = vrot.slane %v6932, 4
      %v6976 = vrot.slane %v6932, 5
      %v6977 = vrot.slane %v6932, 6
      %v6978 = vrot.slane %v6932, 7
      %v6979 = vrot.slane %v6933, 1
      %v6980 = vrot.slane %v6933, 2
      %v6981 = vrot.slane %v6933, 3
      %v6982 = vrot.slane %v6933, 4
      %v6983 = vrot.slane %v6933, 5
      %v6984 = vrot.slane %v6933, 6
      %v6985 = vrot.slane %v6933, 7
      %v6986 = vrot.slane %v6934, 1
      %v6987 = vrot.slane %v6934, 2
      %v6988 = vrot.slane %v6934, 3
      %v6989 = vrot.slane %v6934, 4
      %v6990 = vrot.slane %v6934, 5
      %v6991 = vrot.slane %v6934, 6
      %v6992 = vrot.slane %v6934, 7
      %v6993 = vrot.slane %v6935, 1
      %v6994 = vrot.slane %v6935, 2
      %v6995 = vrot.slane %v6935, 3
      %v6996 = vrot.slane %v6935, 4
      %v6997 = vrot.slane %v6935, 5
      %v6998 = vrot.slane %v6935, 6
      %v6999 = vrot.slane %v6935, 7
      %v7000 = vperm.slane %v6928, 0
      %v7001 = vperm.slane %v6944, 0
      %v7002 = vperm.slane %v6945, 0
      %v7003 = vperm.slane %v6946, 0
      %v7004 = vperm.slane %v6947, 0
      %v7005 = vperm.slane %v6948, 0
      %v7006 = vperm.slane %v6949, 0
      %v7007 = vperm.slane %v6950, 0
      %v7008 = vperm.slane %v6929, 0
      %v7009 = vperm.slane %v6951, 0
      %v7010 = vperm.slane %v6952, 0
      %v7011 = vperm.slane %v6953, 0
      %v7012 = vperm.slane %v6954, 0
      %v7013 = vperm.slane %v6955, 0
      %v7014 = vperm.slane %v6956, 0
      %v7015 = vperm.slane %v6957, 0
      %v7016 = vperm.slane %v6930, 0
      %v7017 = vperm.slane %v6958, 0
      %v7018 = vperm.slane %v6959, 0
      %v7019 = vperm.slane %v6960, 0
      %v7020 = vperm.slane %v6961, 0
      %v7021 = vperm.slane %v6962, 0
      %v7022 = vperm.slane %v6963, 0
      %v7023 = vperm.slane %v6964, 0
      %v7024 = vperm.slane %v6931, 0
      %v7025 = vperm.slane %v6965, 0
      %v7026 = vperm.slane %v6966, 0
      %v7027 = vperm.slane %v6967, 0
      %v7028 = vperm.slane %v6968, 0
      %v7029 = vperm.slane %v6969, 0
      %v7030 = vperm.slane %v6970, 0
      %v7031 = vperm.slane %v6971, 0
      %v7032 = vperm.slane %v6932, 0
      %v7033 = vperm.slane %v6972, 0
      %v7034 = vperm.slane %v6973, 0
      %v7035 = vperm.slane %v6974, 0
      %v7036 = vperm.slane %v6975, 0
      %v7037 = vperm.slane %v6976, 0
      %v7038 = vperm.slane %v6977, 0
      %v7039 = vperm.slane %v6978, 0
      %v7040 = vperm.slane %v6933, 0
      %v7041 = vperm.slane %v6979, 0
      %v7042 = vperm.slane %v6980, 0
      %v7043 = vperm.slane %v6981, 0
      %v7044 = vperm.slane %v6982, 0
      %v7045 = vperm.slane %v6983, 0
      %v7046 = vperm.slane %v6984, 0
      %v7047 = vperm.slane %v6985, 0
      %v7048 = vperm.slane %v6934, 0
      %v7049 = vperm.slane %v6986, 0
      %v7050 = vperm.slane %v6987, 0
      %v7051 = vperm.slane %v6988, 0
      %v7052 = vperm.slane %v6989, 0
      %v7053 = vperm.slane %v6990, 0
      %v7054 = vperm.slane %v6991, 0
      %v7055 = vperm.slane %v6992, 0
      %v7056 = vperm.slane %v6935, 0
      %v7057 = vperm.slane %v6993, 0
      %v7058 = vperm.slane %v6994, 0
      %v7059 = vperm.slane %v6995, 0
      %v7060 = vperm.slane %v6996, 0
      %v7061 = vperm.slane %v6997, 0
      %v7062 = vperm.slane %v6998, 0
      %v7063 = vperm.slane %v6999, 0
      %v7128 = vadd.f32 %v7000, %v6902
      %v7129 = vadd.f32 %v7000, %v6905
      %v7130 = vadd.f32 %v7001, %v6902
      %v7131 = vadd.f32 %v7001, %v6905
      %v7132 = vadd.f32 %v7002, %v6902
      %v7133 = vadd.f32 %v7002, %v6905
      %v7134 = vadd.f32 %v7003, %v6902
      %v7135 = vadd.f32 %v7003, %v6905
      %v7136 = vadd.f32 %v7004, %v6902
      %v7137 = vadd.f32 %v7004, %v6905
      %v7138 = vadd.f32 %v7005, %v6902
      %v7139 = vadd.f32 %v7005, %v6905
      %v7140 = vadd.f32 %v7006, %v6902
      %v7141 = vadd.f32 %v7006, %v6905
      %v7142 = vadd.f32 %v7007, %v6902
      %v7143 = vadd.f32 %v7007, %v6905
      %v7144 = vadd.f32 %v7008, %v6902
      %v7145 = vadd.f32 %v7008, %v6905
      %v7146 = vadd.f32 %v7009, %v6902
      %v7147 = vadd.f32 %v7009, %v6905
      %v7148 = vadd.f32 %v7010, %v6902
      %v7149 = vadd.f32 %v7010, %v6905
      %v7150 = vadd.f32 %v7011, %v6902
      %v7151 = vadd.f32 %v7011, %v6905
      %v7152 = vadd.f32 %v7012, %v6902
      %v7153 = vadd.f32 %v7012, %v6905
      %v7154 = vadd.f32 %v7013, %v6902
      %v7155 = vadd.f32 %v7013, %v6905
      %v7156 = vadd.f32 %v7014, %v6902
      %v7157 = vadd.f32 %v7014, %v6905
      %v7158 = vadd.f32 %v7015, %v6902
      %v7159 = vadd.f32 %v7015, %v6905
      %v7160 = vadd.f32 %v7016, %v6908
      %v7161 = vadd.f32 %v7016, %v6911
      %v7162 = vadd.f32 %v7017, %v6908
      %v7163 = vadd.f32 %v7017, %v6911
      %v7164 = vadd.f32 %v7018, %v6908
      %v7165 = vadd.f32 %v7018, %v6911
      %v7166 = vadd.f32 %v7019, %v6908
      %v7167 = vadd.f32 %v7019, %v6911
      %v7168 = vadd.f32 %v7020, %v6908
      %v7169 = vadd.f32 %v7020, %v6911
      %v7170 = vadd.f32 %v7021, %v6908
      %v7171 = vadd.f32 %v7021, %v6911
      %v7172 = vadd.f32 %v7022, %v6908
      %v7173 = vadd.f32 %v7022, %v6911
      %v7174 = vadd.f32 %v7023, %v6908
      %v7175 = vadd.f32 %v7023, %v6911
      %v7176 = vadd.f32 %v7024, %v6908
      %v7177 = vadd.f32 %v7024, %v6911
      %v7178 = vadd.f32 %v7025, %v6908
      %v7179 = vadd.f32 %v7025, %v6911
      %v7180 = vadd.f32 %v7026, %v6908
      %v7181 = vadd.f32 %v7026, %v6911
      %v7182 = vadd.f32 %v7027, %v6908
      %v7183 = vadd.f32 %v7027, %v6911
      %v7184 = vadd.f32 %v7028, %v6908
      %v7185 = vadd.f32 %v7028, %v6911
      %v7186 = vadd.f32 %v7029, %v6908
      %v7187 = vadd.f32 %v7029, %v6911
      %v7188 = vadd.f32 %v7030, %v6908
      %v7189 = vadd.f32 %v7030, %v6911
      %v7190 = vadd.f32 %v7031, %v6908
      %v7191 = vadd.f32 %v7031, %v6911
      %v7192 = vadd.f32 %v7032, %v6914
      %v7193 = vadd.f32 %v7032, %v6917
      %v7194 = vadd.f32 %v7033, %v6914
      %v7195 = vadd.f32 %v7033, %v6917
      %v7196 = vadd.f32 %v7034, %v6914
      %v7197 = vadd.f32 %v7034, %v6917
      %v7198 = vadd.f32 %v7035, %v6914
      %v7199 = vadd.f32 %v7035, %v6917
      %v7200 = vadd.f32 %v7036, %v6914
      %v7201 = vadd.f32 %v7036, %v6917
      %v7202 = vadd.f32 %v7037, %v6914
      %v7203 = vadd.f32 %v7037, %v6917
      %v7204 = vadd.f32 %v7038, %v6914
      %v7205 = vadd.f32 %v7038, %v6917
      %v7206 = vadd.f32 %v7039, %v6914
      %v7207 = vadd.f32 %v7039, %v6917
      %v7208 = vadd.f32 %v7040, %v6914
      %v7209 = vadd.f32 %v7040, %v6917
      %v7210 = vadd.f32 %v7041, %v6914
      %v7211 = vadd.f32 %v7041, %v6917
      %v7212 = vadd.f32 %v7042, %v6914
      %v7213 = vadd.f32 %v7042, %v6917
      %v7214 = vadd.f32 %v7043, %v6914
      %v7215 = vadd.f32 %v7043, %v6917
      %v7216 = vadd.f32 %v7044, %v6914
      %v7217 = vadd.f32 %v7044, %v6917
      %v7218 = vadd.f32 %v7045, %v6914
      %v7219 = vadd.f32 %v7045, %v6917
      %v7220 = vadd.f32 %v7046, %v6914
      %v7221 = vadd.f32 %v7046, %v6917
      %v7222 = vadd.f32 %v7047, %v6914
      %v7223 = vadd.f32 %v7047, %v6917
      %v7224 = vadd.f32 %v7048, %v6920
      %v7225 = vadd.f32 %v7048, %v6923
      %v7226 = vadd.f32 %v7049, %v6920
      %v7227 = vadd.f32 %v7049, %v6923
      %v7228 = vadd.f32 %v7050, %v6920
      %v7229 = vadd.f32 %v7050, %v6923
      %v7230 = vadd.f32 %v7051, %v6920
      %v7231 = vadd.f32 %v7051, %v6923
      %v7232 = vadd.f32 %v7052, %v6920
      %v7233 = vadd.f32 %v7052, %v6923
      %v7234 = vadd.f32 %v7053, %v6920
      %v7235 = vadd.f32 %v7053, %v6923
      %v7236 = vadd.f32 %v7054, %v6920
      %v7237 = vadd.f32 %v7054, %v6923
      %v7238 = vadd.f32 %v7055, %v6920
      %v7239 = vadd.f32 %v7055, %v6923
      %v7240 = vadd.f32 %v7056, %v6920
      %v7241 = vadd.f32 %v7056, %v6923
      %v7242 = vadd.f32 %v7057, %v6920
      %v7243 = vadd.f32 %v7057, %v6923
      %v7244 = vadd.f32 %v7058, %v6920
      %v7245 = vadd.f32 %v7058, %v6923
      %v7246 = vadd.f32 %v7059, %v6920
      %v7247 = vadd.f32 %v7059, %v6923
      %v7248 = vadd.f32 %v7060, %v6920
      %v7249 = vadd.f32 %v7060, %v6923
      %v7250 = vadd.f32 %v7061, %v6920
      %v7251 = vadd.f32 %v7061, %v6923
      %v7252 = vadd.f32 %v7062, %v6920
      %v7253 = vadd.f32 %v7062, %v6923
      %v7254 = vadd.f32 %v7063, %v6920
      %v7255 = vadd.f32 %v7063, %v6923
      %v7256 = vmax.f32 %v7128, 0.0
      %v7257 = vmax.f32 %v7129, 0.0
      %v7258 = vmax.f32 %v7130, 0.0
      %v7259 = vmax.f32 %v7131, 0.0
      %v7260 = vmax.f32 %v7132, 0.0
      %v7261 = vmax.f32 %v7133, 0.0
      %v7262 = vmax.f32 %v7134, 0.0
      %v7263 = vmax.f32 %v7135, 0.0
      %v7264 = vmax.f32 %v7136, 0.0
      %v7265 = vmax.f32 %v7137, 0.0
      %v7266 = vmax.f32 %v7138, 0.0
      %v7267 = vmax.f32 %v7139, 0.0
      %v7268 = vmax.f32 %v7140, 0.0
      %v7269 = vmax.f32 %v7141, 0.0
      %v7270 = vmax.f32 %v7142, 0.0
      %v7271 = vmax.f32 %v7143, 0.0
      %v7272 = vmax.f32 %v7144, 0.0
      %v7273 = vmax.f32 %v7145, 0.0
      %v7274 = vmax.f32 %v7146, 0.0
      %v7275 = vmax.f32 %v7147, 0.0
      %v7276 = vmax.f32 %v7148, 0.0
      %v7277 = vmax.f32 %v7149, 0.0
      %v7278 = vmax.f32 %v7150, 0.0
      %v7279 = vmax.f32 %v7151, 0.0
      %v7280 = vmax.f32 %v7152, 0.0
      %v7281 = vmax.f32 %v7153, 0.0
      %v7282 = vmax.f32 %v7154, 0.0
      %v7283 = vmax.f32 %v7155, 0.0
      %v7284 = vmax.f32 %v7156, 0.0
      %v7285 = vmax.f32 %v7157, 0.0
      %v7286 = vmax.f32 %v7158, 0.0
      %v7287 = vmax.f32 %v7159, 0.0
      %v7288 = vmax.f32 %v7160, 0.0
      %v7289 = vmax.f32 %v7161, 0.0
      %v7290 = vmax.f32 %v7162, 0.0
      %v7291 = vmax.f32 %v7163, 0.0
      %v7292 = vmax.f32 %v7164, 0.0
      %v7293 = vmax.f32 %v7165, 0.0
      %v7294 = vmax.f32 %v7166, 0.0
      %v7295 = vmax.f32 %v7167, 0.0
      %v7296 = vmax.f32 %v7168, 0.0
      %v7297 = vmax.f32 %v7169, 0.0
      %v7298 = vmax.f32 %v7170, 0.0
      %v7299 = vmax.f32 %v7171, 0.0
      %v7300 = vmax.f32 %v7172, 0.0
      %v7301 = vmax.f32 %v7173, 0.0
      %v7302 = vmax.f32 %v7174, 0.0
      %v7303 = vmax.f32 %v7175, 0.0
      %v7304 = vmax.f32 %v7176, 0.0
      %v7305 = vmax.f32 %v7177, 0.0
      %v7306 = vmax.f32 %v7178, 0.0
      %v7307 = vmax.f32 %v7179, 0.0
      %v7308 = vmax.f32 %v7180, 0.0
      %v7309 = vmax.f32 %v7181, 0.0
      %v7310 = vmax.f32 %v7182, 0.0
      %v7311 = vmax.f32 %v7183, 0.0
      %v7312 = vmax.f32 %v7184, 0.0
      %v7313 = vmax.f32 %v7185, 0.0
      %v7314 = vmax.f32 %v7186, 0.0
      %v7315 = vmax.f32 %v7187, 0.0
      %v7316 = vmax.f32 %v7188, 0.0
      %v7317 = vmax.f32 %v7189, 0.0
      %v7318 = vmax.f32 %v7190, 0.0
      %v7319 = vmax.f32 %v7191, 0.0
      %v7320 = vmax.f32 %v7192, 0.0
      %v7321 = vmax.f32 %v7193, 0.0
      %v7322 = vmax.f32 %v7194, 0.0
      %v7323 = vmax.f32 %v7195, 0.0
      %v7324 = vmax.f32 %v7196, 0.0
      %v7325 = vmax.f32 %v7197, 0.0
      %v7326 = vmax.f32 %v7198, 0.0
      %v7327 = vmax.f32 %v7199, 0.0
      %v7328 = vmax.f32 %v7200, 0.0
      %v7329 = vmax.f32 %v7201, 0.0
      %v7330 = vmax.f32 %v7202, 0.0
      %v7331 = vmax.f32 %v7203, 0.0
      %v7332 = vmax.f32 %v7204, 0.0
      %v7333 = vmax.f32 %v7205, 0.0
      %v7334 = vmax.f32 %v7206, 0.0
      %v7335 = vmax.f32 %v7207, 0.0
      %v7336 = vmax.f32 %v7208, 0.0
      %v7337 = vmax.f32 %v7209, 0.0
      %v7338 = vmax.f32 %v7210, 0.0
      %v7339 = vmax.f32 %v7211, 0.0
      %v7340 = vmax.f32 %v7212, 0.0
      %v7341 = vmax.f32 %v7213, 0.0
      %v7342 = vmax.f32 %v7214, 0.0
      %v7343 = vmax.f32 %v7215, 0.0
      %v7344 = vmax.f32 %v7216, 0.0
      %v7345 = vmax.f32 %v7217, 0.0
      %v7346 = vmax.f32 %v7218, 0.0
      %v7347 = vmax.f32 %v7219, 0.0
      %v7348 = vmax.f32 %v7220, 0.0
      %v7349 = vmax.f32 %v7221, 0.0
      %v7350 = vmax.f32 %v7222, 0.0
      %v7351 = vmax.f32 %v7223, 0.0
      %v7352 = vmax.f32 %v7224, 0.0
      %v7353 = vmax.f32 %v7225, 0.0
      %v7354 = vmax.f32 %v7226, 0.0
      %v7355 = vmax.f32 %v7227, 0.0
      %v7356 = vmax.f32 %v7228, 0.0
      %v7357 = vmax.f32 %v7229, 0.0
      %v7358 = vmax.f32 %v7230, 0.0
      %v7359 = vmax.f32 %v7231, 0.0
      %v7360 = vmax.f32 %v7232, 0.0
      %v7361 = vmax.f32 %v7233, 0.0
      %v7362 = vmax.f32 %v7234, 0.0
      %v7363 = vmax.f32 %v7235, 0.0
      %v7364 = vmax.f32 %v7236, 0.0
      %v7365 = vmax.f32 %v7237, 0.0
      %v7366 = vmax.f32 %v7238, 0.0
      %v7367 = vmax.f32 %v7239, 0.0
      %v7368 = vmax.f32 %v7240, 0.0
      %v7369 = vmax.f32 %v7241, 0.0
      %v7370 = vmax.f32 %v7242, 0.0
      %v7371 = vmax.f32 %v7243, 0.0
      %v7372 = vmax.f32 %v7244, 0.0
      %v7373 = vmax.f32 %v7245, 0.0
      %v7374 = vmax.f32 %v7246, 0.0
      %v7375 = vmax.f32 %v7247, 0.0
      %v7376 = vmax.f32 %v7248, 0.0
      %v7377 = vmax.f32 %v7249, 0.0
      %v7378 = vmax.f32 %v7250, 0.0
      %v7379 = vmax.f32 %v7251, 0.0
      %v7380 = vmax.f32 %v7252, 0.0
      %v7381 = vmax.f32 %v7253, 0.0
      %v7382 = vmax.f32 %v7254, 0.0
      %v7383 = vmax.f32 %v7255, 0.0
      %7384 = vmatpush.msra.mxu0 %v6656
      %7385 = vmatpush.msra.mxu0 %v6655
      %7386 = vmatpush.msra.mxu0 %v6654
      %7387 = vmatpush.msra.mxu0 %v6653
      %7388 = vmatpush.msra.mxu0 %v6652
      %7389 = vmatpush.msra.mxu0 %v6651
      %7390 = vmatpush.msra.mxu0 %v6650
      %7391 = vmatpush.msra.mxu0 %v6649
      %7392 = vmatpush.msra.mxu0 %v6648
      %7393 = vmatpush.msra.mxu0 %v6647
      %7394 = vmatpush.msra.mxu0 %v6646
      %7395 = vmatpush.msra.mxu0 %v6645
      %7396 = vmatpush.msra.mxu0 %v6644
      %7397 = vmatpush.msra.mxu0 %v6643
      %7398 = vmatpush.msra.mxu0 %v6642
      %7399 = vmatpush.msra.mxu0 %v6641
      %7400 = vmatmul.f32.gmra.mxu0 %v7256
      %v7401 = vpop.f32.mrf.mxu0
      %v7402 = vadd.f32 0.0, %v7401
      %7403 = vmatmul.f32.gmra.mxu0 %v7257
      %v7404 = vpop.f32.mrf.mxu0
      %v7405 = vadd.f32 0.0, %v7404
      %7406 = vmatmul.f32.gmra.mxu0 %v7258
      %v7407 = vpop.f32.mrf.mxu0
      %v7408 = vadd.f32 0.0, %v7407
      %7409 = vmatmul.f32.gmra.mxu0 %v7259
      %v7410 = vpop.f32.mrf.mxu0
      %v7411 = vadd.f32 0.0, %v7410
      %7412 = vmatmul.f32.gmra.mxu0 %v7260
      %v7413 = vpop.f32.mrf.mxu0
      %v7414 = vadd.f32 0.0, %v7413
      %7415 = vmatmul.f32.gmra.mxu0 %v7261
      %v7416 = vpop.f32.mrf.mxu0
      %v7417 = vadd.f32 0.0, %v7416
      %7418 = vmatmul.f32.gmra.mxu0 %v7262
      %v7419 = vpop.f32.mrf.mxu0
      %v7420 = vadd.f32 0.0, %v7419
      %7421 = vmatmul.f32.gmra.mxu0 %v7263
      %v7422 = vpop.f32.mrf.mxu0
      %v7423 = vadd.f32 0.0, %v7422
      %7424 = vmatmul.f32.gmra.mxu0 %v7264
      %v7425 = vpop.f32.mrf.mxu0
      %v7426 = vadd.f32 0.0, %v7425
      %7427 = vmatmul.f32.gmra.mxu0 %v7265
      %v7428 = vpop.f32.mrf.mxu0
      %v7429 = vadd.f32 0.0, %v7428
      %7430 = vmatmul.f32.gmra.mxu0 %v7266
      %v7431 = vpop.f32.mrf.mxu0
      %v7432 = vadd.f32 0.0, %v7431
      %7433 = vmatmul.f32.gmra.mxu0 %v7267
      %v7434 = vpop.f32.mrf.mxu0
      %v7435 = vadd.f32 0.0, %v7434
      %7436 = vmatmul.f32.gmra.mxu0 %v7268
      %v7437 = vpop.f32.mrf.mxu0
      %v7438 = vadd.f32 0.0, %v7437
      %7439 = vmatmul.f32.gmra.mxu0 %v7269
      %v7440 = vpop.f32.mrf.mxu0
      %v7441 = vadd.f32 0.0, %v7440
      %7442 = vmatmul.f32.gmra.mxu0 %v7270
      %v7443 = vpop.f32.mrf.mxu0
      %v7444 = vadd.f32 0.0, %v7443
      %7445 = vmatmul.f32.gmra.mxu0 %v7271
      %v7446 = vpop.f32.mrf.mxu0
      %v7447 = vadd.f32 0.0, %v7446
      %7448 = vmatmul.f32.gmra.mxu0 %v7272
      %v7449 = vpop.f32.mrf.mxu0
      %v7450 = vadd.f32 0.0, %v7449
      %7451 = vmatmul.f32.gmra.mxu0 %v7273
      %v7452 = vpop.f32.mrf.mxu0
      %v7453 = vadd.f32 0.0, %v7452
      %7454 = vmatmul.f32.gmra.mxu0 %v7274
      %v7455 = vpop.f32.mrf.mxu0
      %v7456 = vadd.f32 0.0, %v7455
      %7457 = vmatmul.f32.gmra.mxu0 %v7275
      %v7458 = vpop.f32.mrf.mxu0
      %v7459 = vadd.f32 0.0, %v7458
      %7460 = vmatmul.f32.gmra.mxu0 %v7276
      %v7461 = vpop.f32.mrf.mxu0
      %v7462 = vadd.f32 0.0, %v7461
      %7463 = vmatmul.f32.gmra.mxu0 %v7277
      %v7464 = vpop.f32.mrf.mxu0
      %v7465 = vadd.f32 0.0, %v7464
      %7466 = vmatmul.f32.gmra.mxu0 %v7278
      %v7467 = vpop.f32.mrf.mxu0
      %v7468 = vadd.f32 0.0, %v7467
      %7469 = vmatmul.f32.gmra.mxu0 %v7279
      %v7470 = vpop.f32.mrf.mxu0
      %v7471 = vadd.f32 0.0, %v7470
      %7472 = vmatmul.f32.gmra.mxu0 %v7280
      %v7473 = vpop.f32.mrf.mxu0
      %v7474 = vadd.f32 0.0, %v7473
      %7475 = vmatmul.f32.gmra.mxu0 %v7281
      %v7476 = vpop.f32.mrf.mxu0
      %v7477 = vadd.f32 0.0, %v7476
      %7478 = vmatmul.f32.gmra.mxu0 %v7282
      %v7479 = vpop.f32.mrf.mxu0
      %v7480 = vadd.f32 0.0, %v7479
      %7481 = vmatmul.f32.gmra.mxu0 %v7283
      %v7482 = vpop.f32.mrf.mxu0
      %v7483 = vadd.f32 0.0, %v7482
      %7484 = vmatmul.f32.gmra.mxu0 %v7284
      %v7485 = vpop.f32.mrf.mxu0
      %v7486 = vadd.f32 0.0, %v7485
      %7487 = vmatmul.f32.gmra.mxu0 %v7285
      %v7488 = vpop.f32.mrf.mxu0
      %v7489 = vadd.f32 0.0, %v7488
      %7490 = vmatmul.f32.gmra.mxu0 %v7286
      %v7491 = vpop.f32.mrf.mxu0
      %v7492 = vadd.f32 0.0, %v7491
      %7493 = vmatmul.f32.gmra.mxu0 %v7287
      %v7494 = vpop.f32.mrf.mxu0
      %v7495 = vadd.f32 0.0, %v7494
      %7496 = vmatmul.f32.gmra.mxu0 %v7288
      %v7497 = vpop.f32.mrf.mxu0
      %v7498 = vadd.f32 0.0, %v7497
      %7499 = vmatmul.f32.gmra.mxu0 %v7289
      %v7500 = vpop.f32.mrf.mxu0
      %v7501 = vadd.f32 0.0, %v7500
      %7502 = vmatmul.f32.gmra.mxu0 %v7290
      %v7503 = vpop.f32.mrf.mxu0
      %v7504 = vadd.f32 0.0, %v7503
      %7505 = vmatmul.f32.gmra.mxu0 %v7291
      %v7506 = vpop.f32.mrf.mxu0
      %v7507 = vadd.f32 0.0, %v7506
      %7508 = vmatmul.f32.gmra.mxu0 %v7292
      %v7509 = vpop.f32.mrf.mxu0
      %v7510 = vadd.f32 0.0, %v7509
      %7511 = vmatmul.f32.gmra.mxu0 %v7293
      %v7512 = vpop.f32.mrf.mxu0
      %v7513 = vadd.f32 0.0, %v7512
      %7514 = vmatmul.f32.gmra.mxu0 %v7294
      %v7515 = vpop.f32.mrf.mxu0
      %v7516 = vadd.f32 0.0, %v7515
      %7517 = vmatmul.f32.gmra.mxu0 %v7295
      %v7518 = vpop.f32.mrf.mxu0
      %v7519 = vadd.f32 0.0, %v7518
      %7520 = vmatmul.f32.gmra.mxu0 %v7296
      %v7521 = vpop.f32.mrf.mxu0
      %v7522 = vadd.f32 0.0, %v7521
      %7523 = vmatmul.f32.gmra.mxu0 %v7297
      %v7524 = vpop.f32.mrf.mxu0
      %v7525 = vadd.f32 0.0, %v7524
      %7526 = vmatmul.f32.gmra.mxu0 %v7298
      %v7527 = vpop.f32.mrf.mxu0
      %v7528 = vadd.f32 0.0, %v7527
      %7529 = vmatmul.f32.gmra.mxu0 %v7299
      %v7530 = vpop.f32.mrf.mxu0
      %v7531 = vadd.f32 0.0, %v7530
      %7532 = vmatmul.f32.gmra.mxu0 %v7300
      %v7533 = vpop.f32.mrf.mxu0
      %v7534 = vadd.f32 0.0, %v7533
      %7535 = vmatmul.f32.gmra.mxu0 %v7301
      %v7536 = vpop.f32.mrf.mxu0
      %v7537 = vadd.f32 0.0, %v7536
      %7538 = vmatmul.f32.gmra.mxu0 %v7302
      %v7539 = vpop.f32.mrf.mxu0
      %v7540 = vadd.f32 0.0, %v7539
      %7541 = vmatmul.f32.gmra.mxu0 %v7303
      %v7542 = vpop.f32.mrf.mxu0
      %v7543 = vadd.f32 0.0, %v7542
      %7544 = vmatmul.f32.gmra.mxu0 %v7304
      %v7545 = vpop.f32.mrf.mxu0
      %v7546 = vadd.f32 0.0, %v7545
      %7547 = vmatmul.f32.gmra.mxu0 %v7305
      %v7548 = vpop.f32.mrf.mxu0
      %v7549 = vadd.f32 0.0, %v7548
      %7550 = vmatmul.f32.gmra.mxu0 %v7306
      %v7551 = vpop.f32.mrf.mxu0
      %v7552 = vadd.f32 0.0, %v7551
      %7553 = vmatmul.f32.gmra.mxu0 %v7307
      %v7554 = vpop.f32.mrf.mxu0
      %v7555 = vadd.f32 0.0, %v7554
      %7556 = vmatmul.f32.gmra.mxu0 %v7308
      %v7557 = vpop.f32.mrf.mxu0
      %v7558 = vadd.f32 0.0, %v7557
      %7559 = vmatmul.f32.gmra.mxu0 %v7309
      %v7560 = vpop.f32.mrf.mxu0
      %v7561 = vadd.f32 0.0, %v7560
      %7562 = vmatmul.f32.gmra.mxu0 %v7310
      %v7563 = vpop.f32.mrf.mxu0
      %v7564 = vadd.f32 0.0, %v7563
      %7565 = vmatmul.f32.gmra.mxu0 %v7311
      %v7566 = vpop.f32.mrf.mxu0
      %v7567 = vadd.f32 0.0, %v7566
      %7568 = vmatmul.f32.gmra.mxu0 %v7312
      %v7569 = vpop.f32.mrf.mxu0
      %v7570 = vadd.f32 0.0, %v7569
      %7571 = vmatmul.f32.gmra.mxu0 %v7313
      %v7572 = vpop.f32.mrf.mxu0
      %v7573 = vadd.f32 0.0, %v7572
      %7574 = vmatmul.f32.gmra.mxu0 %v7314
      %v7575 = vpop.f32.mrf.mxu0
      %v7576 = vadd.f32 0.0, %v7575
      %7577 = vmatmul.f32.gmra.mxu0 %v7315
      %v7578 = vpop.f32.mrf.mxu0
      %v7579 = vadd.f32 0.0, %v7578
      %7580 = vmatmul.f32.gmra.mxu0 %v7316
      %v7581 = vpop.f32.mrf.mxu0
      %v7582 = vadd.f32 0.0, %v7581
      %7583 = vmatmul.f32.gmra.mxu0 %v7317
      %v7584 = vpop.f32.mrf.mxu0
      %v7585 = vadd.f32 0.0, %v7584
      %7586 = vmatmul.f32.gmra.mxu0 %v7318
      %v7587 = vpop.f32.mrf.mxu0
      %v7588 = vadd.f32 0.0, %v7587
      %7589 = vmatmul.f32.gmra.mxu0 %v7319
      %v7590 = vpop.f32.mrf.mxu0
      %v7591 = vadd.f32 0.0, %v7590
      %7592 = vmatmul.f32.gmra.mxu0 %v7320
      %v7593 = vpop.f32.mrf.mxu0
      %v7594 = vadd.f32 0.0, %v7593
      %7595 = vmatmul.f32.gmra.mxu0 %v7321
      %v7596 = vpop.f32.mrf.mxu0
      %v7597 = vadd.f32 0.0, %v7596
      %7598 = vmatmul.f32.gmra.mxu0 %v7322
      %v7599 = vpop.f32.mrf.mxu0
      %v7600 = vadd.f32 0.0, %v7599
      %7601 = vmatmul.f32.gmra.mxu0 %v7323
      %v7602 = vpop.f32.mrf.mxu0
      %v7603 = vadd.f32 0.0, %v7602
      %7604 = vmatmul.f32.gmra.mxu0 %v7324
      %v7605 = vpop.f32.mrf.mxu0
      %v7606 = vadd.f32 0.0, %v7605
      %7607 = vmatmul.f32.gmra.mxu0 %v7325
      %v7608 = vpop.f32.mrf.mxu0
      %v7609 = vadd.f32 0.0, %v7608
      %7610 = vmatmul.f32.gmra.mxu0 %v7326
      %v7611 = vpop.f32.mrf.mxu0
      %v7612 = vadd.f32 0.0, %v7611
      %7613 = vmatmul.f32.gmra.mxu0 %v7327
      %v7614 = vpop.f32.mrf.mxu0
      %v7615 = vadd.f32 0.0, %v7614
      %7616 = vmatmul.f32.gmra.mxu0 %v7328
      %v7617 = vpop.f32.mrf.mxu0
      %v7618 = vadd.f32 0.0, %v7617
      %7619 = vmatmul.f32.gmra.mxu0 %v7329
      %v7620 = vpop.f32.mrf.mxu0
      %v7621 = vadd.f32 0.0, %v7620
      %7622 = vmatmul.f32.gmra.mxu0 %v7330
      %v7623 = vpop.f32.mrf.mxu0
      %v7624 = vadd.f32 0.0, %v7623
      %7625 = vmatmul.f32.gmra.mxu0 %v7331
      %v7626 = vpop.f32.mrf.mxu0
      %v7627 = vadd.f32 0.0, %v7626
      %7628 = vmatmul.f32.gmra.mxu0 %v7332
      %v7629 = vpop.f32.mrf.mxu0
      %v7630 = vadd.f32 0.0, %v7629
      %7631 = vmatmul.f32.gmra.mxu0 %v7333
      %v7632 = vpop.f32.mrf.mxu0
      %v7633 = vadd.f32 0.0, %v7632
      %7634 = vmatmul.f32.gmra.mxu0 %v7334
      %v7635 = vpop.f32.mrf.mxu0
      %v7636 = vadd.f32 0.0, %v7635
      %7637 = vmatmul.f32.gmra.mxu0 %v7335
      %v7638 = vpop.f32.mrf.mxu0
      %v7639 = vadd.f32 0.0, %v7638
      %7640 = vmatmul.f32.gmra.mxu0 %v7336
      %v7641 = vpop.f32.mrf.mxu0
      %v7642 = vadd.f32 0.0, %v7641
      %7643 = vmatmul.f32.gmra.mxu0 %v7337
      %v7644 = vpop.f32.mrf.mxu0
      %v7645 = vadd.f32 0.0, %v7644
      %7646 = vmatmul.f32.gmra.mxu0 %v7338
      %v7647 = vpop.f32.mrf.mxu0
      %v7648 = vadd.f32 0.0, %v7647
      %7649 = vmatmul.f32.gmra.mxu0 %v7339
      %v7650 = vpop.f32.mrf.mxu0
      %v7651 = vadd.f32 0.0, %v7650
      %7652 = vmatmul.f32.gmra.mxu0 %v7340
      %v7653 = vpop.f32.mrf.mxu0
      %v7654 = vadd.f32 0.0, %v7653
      %7655 = vmatmul.f32.gmra.mxu0 %v7341
      %v7656 = vpop.f32.mrf.mxu0
      %v7657 = vadd.f32 0.0, %v7656
      %7658 = vmatmul.f32.gmra.mxu0 %v7342
      %v7659 = vpop.f32.mrf.mxu0
      %v7660 = vadd.f32 0.0, %v7659
      %7661 = vmatmul.f32.gmra.mxu0 %v7343
      %v7662 = vpop.f32.mrf.mxu0
      %v7663 = vadd.f32 0.0, %v7662
      %7664 = vmatmul.f32.gmra.mxu0 %v7344
      %v7665 = vpop.f32.mrf.mxu0
      %v7666 = vadd.f32 0.0, %v7665
      %7667 = vmatmul.f32.gmra.mxu0 %v7345
      %v7668 = vpop.f32.mrf.mxu0
      %v7669 = vadd.f32 0.0, %v7668
      %7670 = vmatmul.f32.gmra.mxu0 %v7346
      %v7671 = vpop.f32.mrf.mxu0
      %v7672 = vadd.f32 0.0, %v7671
      %7673 = vmatmul.f32.gmra.mxu0 %v7347
      %v7674 = vpop.f32.mrf.mxu0
      %v7675 = vadd.f32 0.0, %v7674
      %7676 = vmatmul.f32.gmra.mxu0 %v7348
      %v7677 = vpop.f32.mrf.mxu0
      %v7678 = vadd.f32 0.0, %v7677
      %7679 = vmatmul.f32.gmra.mxu0 %v7349
      %v7680 = vpop.f32.mrf.mxu0
      %v7681 = vadd.f32 0.0, %v7680
      %7682 = vmatmul.f32.gmra.mxu0 %v7350
      %v7683 = vpop.f32.mrf.mxu0
      %v7684 = vadd.f32 0.0, %v7683
      %7685 = vmatmul.f32.gmra.mxu0 %v7351
      %v7686 = vpop.f32.mrf.mxu0
      %v7687 = vadd.f32 0.0, %v7686
      %7688 = vmatmul.f32.gmra.mxu0 %v7352
      %v7689 = vpop.f32.mrf.mxu0
      %v7690 = vadd.f32 0.0, %v7689
      %7691 = vmatmul.f32.gmra.mxu0 %v7353
      %v7692 = vpop.f32.mrf.mxu0
      %v7693 = vadd.f32 0.0, %v7692
      %7694 = vmatmul.f32.gmra.mxu0 %v7354
      %v7695 = vpop.f32.mrf.mxu0
      %v7696 = vadd.f32 0.0, %v7695
      %7697 = vmatmul.f32.gmra.mxu0 %v7355
      %v7698 = vpop.f32.mrf.mxu0
      %v7699 = vadd.f32 0.0, %v7698
      %7700 = vmatmul.f32.gmra.mxu0 %v7356
      %v7701 = vpop.f32.mrf.mxu0
      %v7702 = vadd.f32 0.0, %v7701
      %7703 = vmatmul.f32.gmra.mxu0 %v7357
      %v7704 = vpop.f32.mrf.mxu0
      %v7705 = vadd.f32 0.0, %v7704
      %7706 = vmatmul.f32.gmra.mxu0 %v7358
      %v7707 = vpop.f32.mrf.mxu0
      %v7708 = vadd.f32 0.0, %v7707
      %7709 = vmatmul.f32.gmra.mxu0 %v7359
      %v7710 = vpop.f32.mrf.mxu0
      %v7711 = vadd.f32 0.0, %v7710
      %7712 = vmatmul.f32.gmra.mxu0 %v7360
      %v7713 = vpop.f32.mrf.mxu0
      %v7714 = vadd.f32 0.0, %v7713
      %7715 = vmatmul.f32.gmra.mxu0 %v7361
      %v7716 = vpop.f32.mrf.mxu0
      %v7717 = vadd.f32 0.0, %v7716
      %7718 = vmatmul.f32.gmra.mxu0 %v7362
      %v7719 = vpop.f32.mrf.mxu0
      %v7720 = vadd.f32 0.0, %v7719
      %7721 = vmatmul.f32.gmra.mxu0 %v7363
      %v7722 = vpop.f32.mrf.mxu0
      %v7723 = vadd.f32 0.0, %v7722
      %7724 = vmatmul.f32.gmra.mxu0 %v7364
      %v7725 = vpop.f32.mrf.mxu0
      %v7726 = vadd.f32 0.0, %v7725
      %7727 = vmatmul.f32.gmra.mxu0 %v7365
      %v7728 = vpop.f32.mrf.mxu0
      %v7729 = vadd.f32 0.0, %v7728
      %7730 = vmatmul.f32.gmra.mxu0 %v7366
      %v7731 = vpop.f32.mrf.mxu0
      %v7732 = vadd.f32 0.0, %v7731
      %7733 = vmatmul.f32.gmra.mxu0 %v7367
      %v7734 = vpop.f32.mrf.mxu0
      %v7735 = vadd.f32 0.0, %v7734
      %7736 = vmatmul.f32.gmra.mxu0 %v7368
      %v7737 = vpop.f32.mrf.mxu0
      %v7738 = vadd.f32 0.0, %v7737
      %7739 = vmatmul.f32.gmra.mxu0 %v7369
      %v7740 = vpop.f32.mrf.mxu0
      %v7741 = vadd.f32 0.0, %v7740
      %7742 = vmatmul.f32.gmra.mxu0 %v7370
      %v7743 = vpop.f32.mrf.mxu0
      %v7744 = vadd.f32 0.0, %v7743
      %7745 = vmatmul.f32.gmra.mxu0 %v7371
      %v7746 = vpop.f32.mrf.mxu0
      %v7747 = vadd.f32 0.0, %v7746
      %7748 = vmatmul.f32.gmra.mxu0 %v7372
      %v7749 = vpop.f32.mrf.mxu0
      %v7750 = vadd.f32 0.0, %v7749
      %7751 = vmatmul.f32.gmra.mxu0 %v7373
      %v7752 = vpop.f32.mrf.mxu0
      %v7753 = vadd.f32 0.0, %v7752
      %7754 = vmatmul.f32.gmra.mxu0 %v7374
      %v7755 = vpop.f32.mrf.mxu0
      %v7756 = vadd.f32 0.0, %v7755
      %7757 = vmatmul.f32.gmra.mxu0 %v7375
      %v7758 = vpop.f32.mrf.mxu0
      %v7759 = vadd.f32 0.0, %v7758
      %7760 = vmatmul.f32.gmra.mxu0 %v7376
      %v7761 = vpop.f32.mrf.mxu0
      %v7762 = vadd.f32 0.0, %v7761
      %7763 = vmatmul.f32.gmra.mxu0 %v7377
      %v7764 = vpop.f32.mrf.mxu0
      %v7765 = vadd.f32 0.0, %v7764
      %7766 = vmatmul.f32.gmra.mxu0 %v7378
      %v7767 = vpop.f32.mrf.mxu0
      %v7768 = vadd.f32 0.0, %v7767
      %7769 = vmatmul.f32.gmra.mxu0 %v7379
      %v7770 = vpop.f32.mrf.mxu0
      %v7771 = vadd.f32 0.0, %v7770
      %7772 = vmatmul.f32.gmra.mxu0 %v7380
      %v7773 = vpop.f32.mrf.mxu0
      %v7774 = vadd.f32 0.0, %v7773
      %7775 = vmatmul.f32.gmra.mxu0 %v7381
      %v7776 = vpop.f32.mrf.mxu0
      %v7777 = vadd.f32 0.0, %v7776
      %7778 = vmatmul.f32.gmra.mxu0 %v7382
      %v7779 = vpop.f32.mrf.mxu0
      %v7780 = vadd.f32 0.0, %v7779
      %7781 = vmatmul.f32.gmra.mxu0 %v7383
      %v7782 = vpop.f32.mrf.mxu0
      %v7783 = vadd.f32 0.0, %v7782
      %7784 = vdwg.mxu0
      %v7785 = vadd.f32 %v7402, %v299
      %v7786 = vadd.f32 %v7405, %v305
      %v7787 = vadd.f32 %v7408, %v312
      %v7788 = vadd.f32 %v7411, %v318
      %v7789 = vadd.f32 %v7414, %v325
      %v7790 = vadd.f32 %v7417, %v331
      %v7791 = vadd.f32 %v7420, %v338
      %v7792 = vadd.f32 %v7423, %v344
      %v7793 = vadd.f32 %v7426, %v351
      %v7794 = vadd.f32 %v7429, %v357
      %v7795 = vadd.f32 %v7432, %v364
      %v7796 = vadd.f32 %v7435, %v370
      %v7797 = vadd.f32 %v7438, %v377
      %v7798 = vadd.f32 %v7441, %v383
      %v7799 = vadd.f32 %v7444, %v390
      %v7800 = vadd.f32 %v7447, %v396
      %v7801 = vadd.f32 %v7450, %v403
      %v7802 = vadd.f32 %v7453, %v409
      %v7803 = vadd.f32 %v7456, %v416
      %v7804 = vadd.f32 %v7459, %v422
      %v7805 = vadd.f32 %v7462, %v429
      %v7806 = vadd.f32 %v7465, %v435
      %v7807 = vadd.f32 %v7468, %v442
      %v7808 = vadd.f32 %v7471, %v448
      %v7809 = vadd.f32 %v7474, %v455
      %v7810 = vadd.f32 %v7477, %v461
      %v7811 = vadd.f32 %v7480, %v468
      %v7812 = vadd.f32 %v7483, %v474
      %v7813 = vadd.f32 %v7486, %v481
      %v7814 = vadd.f32 %v7489, %v487
      %v7815 = vadd.f32 %v7492, %v494
      %v7816 = vadd.f32 %v7495, %v500
      %v7817 = vadd.f32 %v7498, %v507
      %v7818 = vadd.f32 %v7501, %v513
      %v7819 = vadd.f32 %v7504, %v520
      %v7820 = vadd.f32 %v7507, %v526
      %v7821 = vadd.f32 %v7510, %v533
      %v7822 = vadd.f32 %v7513, %v539
      %v7823 = vadd.f32 %v7516, %v546
      %v7824 = vadd.f32 %v7519, %v552
      %v7825 = vadd.f32 %v7522, %v559
      %v7826 = vadd.f32 %v7525, %v565
      %v7827 = vadd.f32 %v7528, %v572
      %v7828 = vadd.f32 %v7531, %v578
      %v7829 = vadd.f32 %v7534, %v585
      %v7830 = vadd.f32 %v7537, %v591
      %v7831 = vadd.f32 %v7540, %v598
      %v7832 = vadd.f32 %v7543, %v604
      %v7833 = vadd.f32 %v7546, %v611
      %v7834 = vadd.f32 %v7549, %v617
      %v7835 = vadd.f32 %v7552, %v624
      %v7836 = vadd.f32 %v7555, %v630
      %v7837 = vadd.f32 %v7558, %v637
      %v7838 = vadd.f32 %v7561, %v643
      %v7839 = vadd.f32 %v7564, %v650
      %v7840 = vadd.f32 %v7567, %v656
      %v7841 = vadd.f32 %v7570, %v663
      %v7842 = vadd.f32 %v7573, %v669
      %v7843 = vadd.f32 %v7576, %v676
      %v7844 = vadd.f32 %v7579, %v682
      %v7845 = vadd.f32 %v7582, %v689
      %v7846 = vadd.f32 %v7585, %v695
      %v7847 = vadd.f32 %v7588, %v702
      %v7848 = vadd.f32 %v7591, %v708
      %v7849 = vadd.f32 %v7594, %v715
      %v7850 = vadd.f32 %v7597, %v721
      %v7851 = vadd.f32 %v7600, %v728
      %v7852 = vadd.f32 %v7603, %v734
      %v7853 = vadd.f32 %v7606, %v741
      %v7854 = vadd.f32 %v7609, %v747
      %v7855 = vadd.f32 %v7612, %v754
      %v7856 = vadd.f32 %v7615, %v760
      %v7857 = vadd.f32 %v7618, %v767
      %v7858 = vadd.f32 %v7621, %v773
      %v7859 = vadd.f32 %v7624, %v780
      %v7860 = vadd.f32 %v7627, %v786
      %v7861 = vadd.f32 %v7630, %v793
      %v7862 = vadd.f32 %v7633, %v799
      %v7863 = vadd.f32 %v7636, %v806
      %v7864 = vadd.f32 %v7639, %v812
      %v7865 = vadd.f32 %v7642, %v819
      %v7866 = vadd.f32 %v7645, %v825
      %v7867 = vadd.f32 %v7648, %v832
      %v7868 = vadd.f32 %v7651, %v838
      %v7869 = vadd.f32 %v7654, %v845
      %v7870 = vadd.f32 %v7657, %v851
      %v7871 = vadd.f32 %v7660, %v858
      %v7872 = vadd.f32 %v7663, %v864
      %v7873 = vadd.f32 %v7666, %v871
      %v7874 = vadd.f32 %v7669, %v877
      %v7875 = vadd.f32 %v7672, %v884
      %v7876 = vadd.f32 %v7675, %v890
      %v7877 = vadd.f32 %v7678, %v897
      %v7878 = vadd.f32 %v7681, %v903
      %v7879 = vadd.f32 %v7684, %v910
      %v7880 = vadd.f32 %v7687, %v916
      %v7881 = vadd.f32 %v7690, %v923
      %v7882 = vadd.f32 %v7693, %v929
      %v7883 = vadd.f32 %v7696, %v936
      %v7884 = vadd.f32 %v7699, %v942
      %v7885 = vadd.f32 %v7702, %v949
      %v7886 = vadd.f32 %v7705, %v955
      %v7887 = vadd.f32 %v7708, %v962
      %v7888 = vadd.f32 %v7711, %v968
      %v7889 = vadd.f32 %v7714, %v975
      %v7890 = vadd.f32 %v7717, %v981
      %v7891 = vadd.f32 %v7720, %v988
      %v7892 = vadd.f32 %v7723, %v994
      %v7893 = vadd.f32 %v7726, %v1001
      %v7894 = vadd.f32 %v7729, %v1007
      %v7895 = vadd.f32 %v7732, %v1014
      %v7896 = vadd.f32 %v7735, %v1020
      %v7897 = vadd.f32 %v7738, %v1027
      %v7898 = vadd.f32 %v7741, %v1033
      %v7899 = vadd.f32 %v7744, %v1040
      %v7900 = vadd.f32 %v7747, %v1046
      %v7901 = vadd.f32 %v7750, %v1053
      %v7902 = vadd.f32 %v7753, %v1059
      %v7903 = vadd.f32 %v7756, %v1066
      %v7904 = vadd.f32 %v7759, %v1072
      %v7905 = vadd.f32 %v7762, %v1079
      %v7906 = vadd.f32 %v7765, %v1085
      %v7907 = vadd.f32 %v7768, %v1092
      %v7908 = vadd.f32 %v7771, %v1098
      %v7909 = vadd.f32 %v7774, %v1105
      %v7910 = vadd.f32 %v7777, %v1111
      %v7911 = vadd.f32 %v7780, %v1118
      %v7912 = vadd.f32 %v7783, %v1124
      %v7913 = vmax.f32 %v7785, %v7786
      %v7914 = vrot.slane %v7913, 4
      %v7915 = vmax.f32 %v7913, %v7914
      %v7916 = vrot.slane %v7915, 2
      %v7917 = vmax.f32 %v7915, %v7916
      %v7918 = vrot.slane %v7917, 1
      %v7919 = vmax.f32 %v7917, %v7918
      %v7920 = vmax.f32 %v7787, %v7788
      %v7921 = vrot.slane %v7920, 4
      %v7922 = vmax.f32 %v7920, %v7921
      %v7923 = vrot.slane %v7922, 2
      %v7924 = vmax.f32 %v7922, %v7923
      %v7925 = vrot.slane %v7924, 1
      %v7926 = vmax.f32 %v7924, %v7925
      %v7927 = vmax.f32 %v7789, %v7790
      %v7928 = vrot.slane %v7927, 4
      %v7929 = vmax.f32 %v7927, %v7928
      %v7930 = vrot.slane %v7929, 2
      %v7931 = vmax.f32 %v7929, %v7930
      %v7932 = vrot.slane %v7931, 1
      %v7933 = vmax.f32 %v7931, %v7932
      %v7934 = vmax.f32 %v7791, %v7792
      %v7935 = vrot.slane %v7934, 4
      %v7936 = vmax.f32 %v7934, %v7935
      %v7937 = vrot.slane %v7936, 2
      %v7938 = vmax.f32 %v7936, %v7937
      %v7939 = vrot.slane %v7938, 1
      %v7940 = vmax.f32 %v7938, %v7939
      %v7941 = vmax.f32 %v7793, %v7794
      %v7942 = vrot.slane %v7941, 4
      %v7943 = vmax.f32 %v7941, %v7942
      %v7944 = vrot.slane %v7943, 2
      %v7945 = vmax.f32 %v7943, %v7944
      %v7946 = vrot.slane %v7945, 1
      %v7947 = vmax.f32 %v7945, %v7946
      %v7948 = vmax.f32 %v7795, %v7796
      %v7949 = vrot.slane %v7948, 4
      %v7950 = vmax.f32 %v7948, %v7949
      %v7951 = vrot.slane %v7950, 2
      %v7952 = vmax.f32 %v7950, %v7951
      %v7953 = vrot.slane %v7952, 1
      %v7954 = vmax.f32 %v7952, %v7953
      %v7955 = vmax.f32 %v7797, %v7798
      %v7956 = vrot.slane %v7955, 4
      %v7957 = vmax.f32 %v7955, %v7956
      %v7958 = vrot.slane %v7957, 2
      %v7959 = vmax.f32 %v7957, %v7958
      %v7960 = vrot.slane %v7959, 1
      %v7961 = vmax.f32 %v7959, %v7960
      %v7962 = vmax.f32 %v7799, %v7800
      %v7963 = vrot.slane %v7962, 4
      %v7964 = vmax.f32 %v7962, %v7963
      %v7965 = vrot.slane %v7964, 2
      %v7966 = vmax.f32 %v7964, %v7965
      %v7967 = vrot.slane %v7966, 1
      %v7968 = vmax.f32 %v7966, %v7967
      %v7969 = vmax.f32 %v7801, %v7802
      %v7970 = vrot.slane %v7969, 4
      %v7971 = vmax.f32 %v7969, %v7970
      %v7972 = vrot.slane %v7971, 2
      %v7973 = vmax.f32 %v7971, %v7972
      %v7974 = vrot.slane %v7973, 1
      %v7975 = vmax.f32 %v7973, %v7974
      %v7976 = vmax.f32 %v7803, %v7804
      %v7977 = vrot.slane %v7976, 4
      %v7978 = vmax.f32 %v7976, %v7977
      %v7979 = vrot.slane %v7978, 2
      %v7980 = vmax.f32 %v7978, %v7979
      %v7981 = vrot.slane %v7980, 1
      %v7982 = vmax.f32 %v7980, %v7981
      %v7983 = vmax.f32 %v7805, %v7806
      %v7984 = vrot.slane %v7983, 4
      %v7985 = vmax.f32 %v7983, %v7984
      %v7986 = vrot.slane %v7985, 2
      %v7987 = vmax.f32 %v7985, %v7986
      %v7988 = vrot.slane %v7987, 1
      %v7989 = vmax.f32 %v7987, %v7988
      %v7990 = vmax.f32 %v7807, %v7808
      %v7991 = vrot.slane %v7990, 4
      %v7992 = vmax.f32 %v7990, %v7991
      %v7993 = vrot.slane %v7992, 2
      %v7994 = vmax.f32 %v7992, %v7993
      %v7995 = vrot.slane %v7994, 1
      %v7996 = vmax.f32 %v7994, %v7995
      %v7997 = vmax.f32 %v7809, %v7810
      %v7998 = vrot.slane %v7997, 4
      %v7999 = vmax.f32 %v7997, %v7998
      %v8000 = vrot.slane %v7999, 2
      %v8001 = vmax.f32 %v7999, %v8000
      %v8002 = vrot.slane %v8001, 1
      %v8003 = vmax.f32 %v8001, %v8002
      %v8004 = vmax.f32 %v7811, %v7812
      %v8005 = vrot.slane %v8004, 4
      %v8006 = vmax.f32 %v8004, %v8005
      %v8007 = vrot.slane %v8006, 2
      %v8008 = vmax.f32 %v8006, %v8007
      %v8009 = vrot.slane %v8008, 1
      %v8010 = vmax.f32 %v8008, %v8009
      %v8011 = vmax.f32 %v7813, %v7814
      %v8012 = vrot.slane %v8011, 4
      %v8013 = vmax.f32 %v8011, %v8012
      %v8014 = vrot.slane %v8013, 2
      %v8015 = vmax.f32 %v8013, %v8014
      %v8016 = vrot.slane %v8015, 1
      %v8017 = vmax.f32 %v8015, %v8016
      %v8018 = vmax.f32 %v7815, %v7816
      %v8019 = vrot.slane %v8018, 4
      %v8020 = vmax.f32 %v8018, %v8019
      %v8021 = vrot.slane %v8020, 2
      %v8022 = vmax.f32 %v8020, %v8021
      %v8023 = vrot.slane %v8022, 1
      %v8024 = vmax.f32 %v8022, %v8023
      %v8025 = vmax.f32 %v7817, %v7818
      %v8026 = vrot.slane %v8025, 4
      %v8027 = vmax.f32 %v8025, %v8026
      %v8028 = vrot.slane %v8027, 2
      %v8029 = vmax.f32 %v8027, %v8028
      %v8030 = vrot.slane %v8029, 1
      %v8031 = vmax.f32 %v8029, %v8030
      %v8032 = vmax.f32 %v7819, %v7820
      %v8033 = vrot.slane %v8032, 4
      %v8034 = vmax.f32 %v8032, %v8033
      %v8035 = vrot.slane %v8034, 2
      %v8036 = vmax.f32 %v8034, %v8035
      %v8037 = vrot.slane %v8036, 1
      %v8038 = vmax.f32 %v8036, %v8037
      %v8039 = vmax.f32 %v7821, %v7822
      %v8040 = vrot.slane %v8039, 4
      %v8041 = vmax.f32 %v8039, %v8040
      %v8042 = vrot.slane %v8041, 2
      %v8043 = vmax.f32 %v8041, %v8042
      %v8044 = vrot.slane %v8043, 1
      %v8045 = vmax.f32 %v8043, %v8044
      %v8046 = vmax.f32 %v7823, %v7824
      %v8047 = vrot.slane %v8046, 4
      %v8048 = vmax.f32 %v8046, %v8047
      %v8049 = vrot.slane %v8048, 2
      %v8050 = vmax.f32 %v8048, %v8049
      %v8051 = vrot.slane %v8050, 1
      %v8052 = vmax.f32 %v8050, %v8051
      %v8053 = vmax.f32 %v7825, %v7826
      %v8054 = vrot.slane %v8053, 4
      %v8055 = vmax.f32 %v8053, %v8054
      %v8056 = vrot.slane %v8055, 2
      %v8057 = vmax.f32 %v8055, %v8056
      %v8058 = vrot.slane %v8057, 1
      %v8059 = vmax.f32 %v8057, %v8058
      %v8060 = vmax.f32 %v7827, %v7828
      %v8061 = vrot.slane %v8060, 4
      %v8062 = vmax.f32 %v8060, %v8061
      %v8063 = vrot.slane %v8062, 2
      %v8064 = vmax.f32 %v8062, %v8063
      %v8065 = vrot.slane %v8064, 1
      %v8066 = vmax.f32 %v8064, %v8065
      %v8067 = vmax.f32 %v7829, %v7830
      %v8068 = vrot.slane %v8067, 4
      %v8069 = vmax.f32 %v8067, %v8068
      %v8070 = vrot.slane %v8069, 2
      %v8071 = vmax.f32 %v8069, %v8070
      %v8072 = vrot.slane %v8071, 1
      %v8073 = vmax.f32 %v8071, %v8072
      %v8074 = vmax.f32 %v7831, %v7832
      %v8075 = vrot.slane %v8074, 4
      %v8076 = vmax.f32 %v8074, %v8075
      %v8077 = vrot.slane %v8076, 2
      %v8078 = vmax.f32 %v8076, %v8077
      %v8079 = vrot.slane %v8078, 1
      %v8080 = vmax.f32 %v8078, %v8079
      %v8081 = vmax.f32 %v7833, %v7834
      %v8082 = vrot.slane %v8081, 4
      %v8083 = vmax.f32 %v8081, %v8082
      %v8084 = vrot.slane %v8083, 2
      %v8085 = vmax.f32 %v8083, %v8084
      %v8086 = vrot.slane %v8085, 1
      %v8087 = vmax.f32 %v8085, %v8086
      %v8088 = vmax.f32 %v7835, %v7836
      %v8089 = vrot.slane %v8088, 4
      %v8090 = vmax.f32 %v8088, %v8089
      %v8091 = vrot.slane %v8090, 2
      %v8092 = vmax.f32 %v8090, %v8091
      %v8093 = vrot.slane %v8092, 1
      %v8094 = vmax.f32 %v8092, %v8093
      %v8095 = vmax.f32 %v7837, %v7838
      %v8096 = vrot.slane %v8095, 4
      %v8097 = vmax.f32 %v8095, %v8096
      %v8098 = vrot.slane %v8097, 2
      %v8099 = vmax.f32 %v8097, %v8098
      %v8100 = vrot.slane %v8099, 1
      %v8101 = vmax.f32 %v8099, %v8100
      %v8102 = vmax.f32 %v7839, %v7840
      %v8103 = vrot.slane %v8102, 4
      %v8104 = vmax.f32 %v8102, %v8103
      %v8105 = vrot.slane %v8104, 2
      %v8106 = vmax.f32 %v8104, %v8105
      %v8107 = vrot.slane %v8106, 1
      %v8108 = vmax.f32 %v8106, %v8107
      %v8109 = vmax.f32 %v7841, %v7842
      %v8110 = vrot.slane %v8109, 4
      %v8111 = vmax.f32 %v8109, %v8110
      %v8112 = vrot.slane %v8111, 2
      %v8113 = vmax.f32 %v8111, %v8112
      %v8114 = vrot.slane %v8113, 1
      %v8115 = vmax.f32 %v8113, %v8114
      %v8116 = vmax.f32 %v7843, %v7844
      %v8117 = vrot.slane %v8116, 4
      %v8118 = vmax.f32 %v8116, %v8117
      %v8119 = vrot.slane %v8118, 2
      %v8120 = vmax.f32 %v8118, %v8119
      %v8121 = vrot.slane %v8120, 1
      %v8122 = vmax.f32 %v8120, %v8121
      %v8123 = vmax.f32 %v7845, %v7846
      %v8124 = vrot.slane %v8123, 4
      %v8125 = vmax.f32 %v8123, %v8124
      %v8126 = vrot.slane %v8125, 2
      %v8127 = vmax.f32 %v8125, %v8126
      %v8128 = vrot.slane %v8127, 1
      %v8129 = vmax.f32 %v8127, %v8128
      %v8130 = vmax.f32 %v7847, %v7848
      %v8131 = vrot.slane %v8130, 4
      %v8132 = vmax.f32 %v8130, %v8131
      %v8133 = vrot.slane %v8132, 2
      %v8134 = vmax.f32 %v8132, %v8133
      %v8135 = vrot.slane %v8134, 1
      %v8136 = vmax.f32 %v8134, %v8135
      %v8137 = vmax.f32 %v7849, %v7850
      %v8138 = vrot.slane %v8137, 4
      %v8139 = vmax.f32 %v8137, %v8138
      %v8140 = vrot.slane %v8139, 2
      %v8141 = vmax.f32 %v8139, %v8140
      %v8142 = vrot.slane %v8141, 1
      %v8143 = vmax.f32 %v8141, %v8142
      %v8144 = vmax.f32 %v7851, %v7852
      %v8145 = vrot.slane %v8144, 4
      %v8146 = vmax.f32 %v8144, %v8145
      %v8147 = vrot.slane %v8146, 2
      %v8148 = vmax.f32 %v8146, %v8147
      %v8149 = vrot.slane %v8148, 1
      %v8150 = vmax.f32 %v8148, %v8149
      %v8151 = vmax.f32 %v7853, %v7854
      %v8152 = vrot.slane %v8151, 4
      %v8153 = vmax.f32 %v8151, %v8152
      %v8154 = vrot.slane %v8153, 2
      %v8155 = vmax.f32 %v8153, %v8154
      %v8156 = vrot.slane %v8155, 1
      %v8157 = vmax.f32 %v8155, %v8156
      %v8158 = vmax.f32 %v7855, %v7856
      %v8159 = vrot.slane %v8158, 4
      %v8160 = vmax.f32 %v8158, %v8159
      %v8161 = vrot.slane %v8160, 2
      %v8162 = vmax.f32 %v8160, %v8161
      %v8163 = vrot.slane %v8162, 1
      %v8164 = vmax.f32 %v8162, %v8163
      %v8165 = vmax.f32 %v7857, %v7858
      %v8166 = vrot.slane %v8165, 4
      %v8167 = vmax.f32 %v8165, %v8166
      %v8168 = vrot.slane %v8167, 2
      %v8169 = vmax.f32 %v8167, %v8168
      %v8170 = vrot.slane %v8169, 1
      %v8171 = vmax.f32 %v8169, %v8170
      %v8172 = vmax.f32 %v7859, %v7860
      %v8173 = vrot.slane %v8172, 4
      %v8174 = vmax.f32 %v8172, %v8173
      %v8175 = vrot.slane %v8174, 2
      %v8176 = vmax.f32 %v8174, %v8175
      %v8177 = vrot.slane %v8176, 1
      %v8178 = vmax.f32 %v8176, %v8177
      %v8179 = vmax.f32 %v7861, %v7862
      %v8180 = vrot.slane %v8179, 4
      %v8181 = vmax.f32 %v8179, %v8180
      %v8182 = vrot.slane %v8181, 2
      %v8183 = vmax.f32 %v8181, %v8182
      %v8184 = vrot.slane %v8183, 1
      %v8185 = vmax.f32 %v8183, %v8184
      %v8186 = vmax.f32 %v7863, %v7864
      %v8187 = vrot.slane %v8186, 4
      %v8188 = vmax.f32 %v8186, %v8187
      %v8189 = vrot.slane %v8188, 2
      %v8190 = vmax.f32 %v8188, %v8189
      %v8191 = vrot.slane %v8190, 1
      %v8192 = vmax.f32 %v8190, %v8191
      %v8193 = vmax.f32 %v7865, %v7866
      %v8194 = vrot.slane %v8193, 4
      %v8195 = vmax.f32 %v8193, %v8194
      %v8196 = vrot.slane %v8195, 2
      %v8197 = vmax.f32 %v8195, %v8196
      %v8198 = vrot.slane %v8197, 1
      %v8199 = vmax.f32 %v8197, %v8198
      %v8200 = vmax.f32 %v7867, %v7868
      %v8201 = vrot.slane %v8200, 4
      %v8202 = vmax.f32 %v8200, %v8201
      %v8203 = vrot.slane %v8202, 2
      %v8204 = vmax.f32 %v8202, %v8203
      %v8205 = vrot.slane %v8204, 1
      %v8206 = vmax.f32 %v8204, %v8205
      %v8207 = vmax.f32 %v7869, %v7870
      %v8208 = vrot.slane %v8207, 4
      %v8209 = vmax.f32 %v8207, %v8208
      %v8210 = vrot.slane %v8209, 2
      %v8211 = vmax.f32 %v8209, %v8210
      %v8212 = vrot.slane %v8211, 1
      %v8213 = vmax.f32 %v8211, %v8212
      %v8214 = vmax.f32 %v7871, %v7872
      %v8215 = vrot.slane %v8214, 4
      %v8216 = vmax.f32 %v8214, %v8215
      %v8217 = vrot.slane %v8216, 2
      %v8218 = vmax.f32 %v8216, %v8217
      %v8219 = vrot.slane %v8218, 1
      %v8220 = vmax.f32 %v8218, %v8219
      %v8221 = vmax.f32 %v7873, %v7874
      %v8222 = vrot.slane %v8221, 4
      %v8223 = vmax.f32 %v8221, %v8222
      %v8224 = vrot.slane %v8223, 2
      %v8225 = vmax.f32 %v8223, %v8224
      %v8226 = vrot.slane %v8225, 1
      %v8227 = vmax.f32 %v8225, %v8226
      %v8228 = vmax.f32 %v7875, %v7876
      %v8229 = vrot.slane %v8228, 4
      %v8230 = vmax.f32 %v8228, %v8229
      %v8231 = vrot.slane %v8230, 2
      %v8232 = vmax.f32 %v8230, %v8231
      %v8233 = vrot.slane %v8232, 1
      %v8234 = vmax.f32 %v8232, %v8233
      %v8235 = vmax.f32 %v7877, %v7878
      %v8236 = vrot.slane %v8235, 4
      %v8237 = vmax.f32 %v8235, %v8236
      %v8238 = vrot.slane %v8237, 2
      %v8239 = vmax.f32 %v8237, %v8238
      %v8240 = vrot.slane %v8239, 1
      %v8241 = vmax.f32 %v8239, %v8240
      %v8242 = vmax.f32 %v7879, %v7880
      %v8243 = vrot.slane %v8242, 4
      %v8244 = vmax.f32 %v8242, %v8243
      %v8245 = vrot.slane %v8244, 2
      %v8246 = vmax.f32 %v8244, %v8245
      %v8247 = vrot.slane %v8246, 1
      %v8248 = vmax.f32 %v8246, %v8247
      %v8249 = vmax.f32 %v7881, %v7882
      %v8250 = vrot.slane %v8249, 4
      %v8251 = vmax.f32 %v8249, %v8250
      %v8252 = vrot.slane %v8251, 2
      %v8253 = vmax.f32 %v8251, %v8252
      %v8254 = vrot.slane %v8253, 1
      %v8255 = vmax.f32 %v8253, %v8254
      %v8256 = vmax.f32 %v7883, %v7884
      %v8257 = vrot.slane %v8256, 4
      %v8258 = vmax.f32 %v8256, %v8257
      %v8259 = vrot.slane %v8258, 2
      %v8260 = vmax.f32 %v8258, %v8259
      %v8261 = vrot.slane %v8260, 1
      %v8262 = vmax.f32 %v8260, %v8261
      %v8263 = vmax.f32 %v7885, %v7886
      %v8264 = vrot.slane %v8263, 4
      %v8265 = vmax.f32 %v8263, %v8264
      %v8266 = vrot.slane %v8265, 2
      %v8267 = vmax.f32 %v8265, %v8266
      %v8268 = vrot.slane %v8267, 1
      %v8269 = vmax.f32 %v8267, %v8268
      %v8270 = vmax.f32 %v7887, %v7888
      %v8271 = vrot.slane %v8270, 4
      %v8272 = vmax.f32 %v8270, %v8271
      %v8273 = vrot.slane %v8272, 2
      %v8274 = vmax.f32 %v8272, %v8273
      %v8275 = vrot.slane %v8274, 1
      %v8276 = vmax.f32 %v8274, %v8275
      %v8277 = vmax.f32 %v7889, %v7890
      %v8278 = vrot.slane %v8277, 4
      %v8279 = vmax.f32 %v8277, %v8278
      %v8280 = vrot.slane %v8279, 2
      %v8281 = vmax.f32 %v8279, %v8280
      %v8282 = vrot.slane %v8281, 1
      %v8283 = vmax.f32 %v8281, %v8282
      %v8284 = vmax.f32 %v7891, %v7892
      %v8285 = vrot.slane %v8284, 4
      %v8286 = vmax.f32 %v8284, %v8285
      %v8287 = vrot.slane %v8286, 2
      %v8288 = vmax.f32 %v8286, %v8287
      %v8289 = vrot.slane %v8288, 1
      %v8290 = vmax.f32 %v8288, %v8289
      %v8291 = vmax.f32 %v7893, %v7894
      %v8292 = vrot.slane %v8291, 4
      %v8293 = vmax.f32 %v8291, %v8292
      %v8294 = vrot.slane %v8293, 2
      %v8295 = vmax.f32 %v8293, %v8294
      %v8296 = vrot.slane %v8295, 1
      %v8297 = vmax.f32 %v8295, %v8296
      %v8298 = vmax.f32 %v7895, %v7896
      %v8299 = vrot.slane %v8298, 4
      %v8300 = vmax.f32 %v8298, %v8299
      %v8301 = vrot.slane %v8300, 2
      %v8302 = vmax.f32 %v8300, %v8301
      %v8303 = vrot.slane %v8302, 1
      %v8304 = vmax.f32 %v8302, %v8303
      %v8305 = vmax.f32 %v7897, %v7898
      %v8306 = vrot.slane %v8305, 4
      %v8307 = vmax.f32 %v8305, %v8306
      %v8308 = vrot.slane %v8307, 2
      %v8309 = vmax.f32 %v8307, %v8308
      %v8310 = vrot.slane %v8309, 1
      %v8311 = vmax.f32 %v8309, %v8310
      %v8312 = vmax.f32 %v7899, %v7900
      %v8313 = vrot.slane %v8312, 4
      %v8314 = vmax.f32 %v8312, %v8313
      %v8315 = vrot.slane %v8314, 2
      %v8316 = vmax.f32 %v8314, %v8315
      %v8317 = vrot.slane %v8316, 1
      %v8318 = vmax.f32 %v8316, %v8317
      %v8319 = vmax.f32 %v7901, %v7902
      %v8320 = vrot.slane %v8319, 4
      %v8321 = vmax.f32 %v8319, %v8320
      %v8322 = vrot.slane %v8321, 2
      %v8323 = vmax.f32 %v8321, %v8322
      %v8324 = vrot.slane %v8323, 1
      %v8325 = vmax.f32 %v8323, %v8324
      %v8326 = vmax.f32 %v7903, %v7904
      %v8327 = vrot.slane %v8326, 4
      %v8328 = vmax.f32 %v8326, %v8327
      %v8329 = vrot.slane %v8328, 2
      %v8330 = vmax.f32 %v8328, %v8329
      %v8331 = vrot.slane %v8330, 1
      %v8332 = vmax.f32 %v8330, %v8331
      %v8333 = vmax.f32 %v7905, %v7906
      %v8334 = vrot.slane %v8333, 4
      %v8335 = vmax.f32 %v8333, %v8334
      %v8336 = vrot.slane %v8335, 2
      %v8337 = vmax.f32 %v8335, %v8336
      %v8338 = vrot.slane %v8337, 1
      %v8339 = vmax.f32 %v8337, %v8338
      %v8340 = vmax.f32 %v7907, %v7908
      %v8341 = vrot.slane %v8340, 4
      %v8342 = vmax.f32 %v8340, %v8341
      %v8343 = vrot.slane %v8342, 2
      %v8344 = vmax.f32 %v8342, %v8343
      %v8345 = vrot.slane %v8344, 1
      %v8346 = vmax.f32 %v8344, %v8345
      %v8347 = vmax.f32 %v7909, %v7910
      %v8348 = vrot.slane %v8347, 4
      %v8349 = vmax.f32 %v8347, %v8348
      %v8350 = vrot.slane %v8349, 2
      %v8351 = vmax.f32 %v8349, %v8350
      %v8352 = vrot.slane %v8351, 1
      %v8353 = vmax.f32 %v8351, %v8352
      %v8354 = vmax.f32 %v7911, %v7912
      %v8355 = vrot.slane %v8354, 4
      %v8356 = vmax.f32 %v8354, %v8355
      %v8357 = vrot.slane %v8356, 2
      %v8358 = vmax.f32 %v8356, %v8357
      %v8359 = vrot.slane %v8358, 1
      %v8360 = vmax.f32 %v8358, %v8359
      %v8362 = vperm.slane %v6658, 0
      %v8364 = vadd.f32 %v7919, %v8362
      %v8365 = vadd.f32 %v7926, %v8362
      %v8366 = vadd.f32 %v7933, %v8362
      %v8367 = vadd.f32 %v7940, %v8362
      %v8368 = vadd.f32 %v7947, %v8362
      %v8369 = vadd.f32 %v7954, %v8362
      %v8370 = vadd.f32 %v7961, %v8362
      %v8371 = vadd.f32 %v7968, %v8362
      %v8372 = vadd.f32 %v7975, %v8362
      %v8373 = vadd.f32 %v7982, %v8362
      %v8374 = vadd.f32 %v7989, %v8362
      %v8375 = vadd.f32 %v7996, %v8362
      %v8376 = vadd.f32 %v8003, %v8362
      %v8377 = vadd.f32 %v8010, %v8362
      %v8378 = vadd.f32 %v8017, %v8362
      %v8379 = vadd.f32 %v8024, %v8362
      %v8380 = vadd.f32 %v8031, %v8362
      %v8381 = vadd.f32 %v8038, %v8362
      %v8382 = vadd.f32 %v8045, %v8362
      %v8383 = vadd.f32 %v8052, %v8362
      %v8384 = vadd.f32 %v8059, %v8362
      %v8385 = vadd.f32 %v8066, %v8362
      %v8386 = vadd.f32 %v8073, %v8362
      %v8387 = vadd.f32 %v8080, %v8362
      %v8388 = vadd.f32 %v8087, %v8362
      %v8389 = vadd.f32 %v8094, %v8362
      %v8390 = vadd.f32 %v8101, %v8362
      %v8391 = vadd.f32 %v8108, %v8362
      %v8392 = vadd.f32 %v8115, %v8362
      %v8393 = vadd.f32 %v8122, %v8362
      %v8394 = vadd.f32 %v8129, %v8362
      %v8395 = vadd.f32 %v8136, %v8362
      %v8396 = vadd.f32 %v8143, %v8362
      %v8397 = vadd.f32 %v8150, %v8362
      %v8398 = vadd.f32 %v8157, %v8362
      %v8399 = vadd.f32 %v8164, %v8362
      %v8400 = vadd.f32 %v8171, %v8362
      %v8401 = vadd.f32 %v8178, %v8362
      %v8402 = vadd.f32 %v8185, %v8362
      %v8403 = vadd.f32 %v8192, %v8362
      %v8404 = vadd.f32 %v8199, %v8362
      %v8405 = vadd.f32 %v8206, %v8362
      %v8406 = vadd.f32 %v8213, %v8362
      %v8407 = vadd.f32 %v8220, %v8362
      %v8408 = vadd.f32 %v8227, %v8362
      %v8409 = vadd.f32 %v8234, %v8362
      %v8410 = vadd.f32 %v8241, %v8362
      %v8411 = vadd.f32 %v8248, %v8362
      %v8412 = vadd.f32 %v8255, %v8362
      %v8413 = vadd.f32 %v8262, %v8362
      %v8414 = vadd.f32 %v8269, %v8362
      %v8415 = vadd.f32 %v8276, %v8362
      %v8416 = vadd.f32 %v8283, %v8362
      %v8417 = vadd.f32 %v8290, %v8362
      %v8418 = vadd.f32 %v8297, %v8362
      %v8419 = vadd.f32 %v8304, %v8362
      %v8420 = vadd.f32 %v8311, %v8362
      %v8421 = vadd.f32 %v8318, %v8362
      %v8422 = vadd.f32 %v8325, %v8362
      %v8423 = vadd.f32 %v8332, %v8362
      %v8424 = vadd.f32 %v8339, %v8362
      %v8425 = vadd.f32 %v8346, %v8362
      %v8426 = vadd.f32 %v8353, %v8362
      %v8427 = vadd.f32 %v8360, %v8362
      %v8428 = vmax.f32 %v8364, 0.0
      %v8429 = vmax.f32 %v8365, 0.0
      %v8430 = vmax.f32 %v8366, 0.0
      %v8431 = vmax.f32 %v8367, 0.0
      %v8432 = vmax.f32 %v8368, 0.0
      %v8433 = vmax.f32 %v8369, 0.0
      %v8434 = vmax.f32 %v8370, 0.0
      %v8435 = vmax.f32 %v8371, 0.0
      %v8436 = vmax.f32 %v8372, 0.0
      %v8437 = vmax.f32 %v8373, 0.0
      %v8438 = vmax.f32 %v8374, 0.0
      %v8439 = vmax.f32 %v8375, 0.0
      %v8440 = vmax.f32 %v8376, 0.0
      %v8441 = vmax.f32 %v8377, 0.0
      %v8442 = vmax.f32 %v8378, 0.0
      %v8443 = vmax.f32 %v8379, 0.0
      %v8444 = vmax.f32 %v8380, 0.0
      %v8445 = vmax.f32 %v8381, 0.0
      %v8446 = vmax.f32 %v8382, 0.0
      %v8447 = vmax.f32 %v8383, 0.0
      %v8448 = vmax.f32 %v8384, 0.0
      %v8449 = vmax.f32 %v8385, 0.0
      %v8450 = vmax.f32 %v8386, 0.0
      %v8451 = vmax.f32 %v8387, 0.0
      %v8452 = vmax.f32 %v8388, 0.0
      %v8453 = vmax.f32 %v8389, 0.0
      %v8454 = vmax.f32 %v8390, 0.0
      %v8455 = vmax.f32 %v8391, 0.0
      %v8456 = vmax.f32 %v8392, 0.0
      %v8457 = vmax.f32 %v8393, 0.0
      %v8458 = vmax.f32 %v8394, 0.0
      %v8459 = vmax.f32 %v8395, 0.0
      %v8460 = vmax.f32 %v8396, 0.0
      %v8461 = vmax.f32 %v8397, 0.0
      %v8462 = vmax.f32 %v8398, 0.0
      %v8463 = vmax.f32 %v8399, 0.0
      %v8464 = vmax.f32 %v8400, 0.0
      %v8465 = vmax.f32 %v8401, 0.0
      %v8466 = vmax.f32 %v8402, 0.0
      %v8467 = vmax.f32 %v8403, 0.0
      %v8468 = vmax.f32 %v8404, 0.0
      %v8469 = vmax.f32 %v8405, 0.0
      %v8470 = vmax.f32 %v8406, 0.0
      %v8471 = vmax.f32 %v8407, 0.0
      %v8472 = vmax.f32 %v8408, 0.0
      %v8473 = vmax.f32 %v8409, 0.0
      %v8474 = vmax.f32 %v8410, 0.0
      %v8475 = vmax.f32 %v8411, 0.0
      %v8476 = vmax.f32 %v8412, 0.0
      %v8477 = vmax.f32 %v8413, 0.0
      %v8478 = vmax.f32 %v8414, 0.0
      %v8479 = vmax.f32 %v8415, 0.0
      %v8480 = vmax.f32 %v8416, 0.0
      %v8481 = vmax.f32 %v8417, 0.0
      %v8482 = vmax.f32 %v8418, 0.0
      %v8483 = vmax.f32 %v8419, 0.0
      %v8484 = vmax.f32 %v8420, 0.0
      %v8485 = vmax.f32 %v8421, 0.0
      %v8486 = vmax.f32 %v8422, 0.0
      %v8487 = vmax.f32 %v8423, 0.0
      %v8488 = vmax.f32 %v8424, 0.0
      %v8489 = vmax.f32 %v8425, 0.0
      %v8490 = vmax.f32 %v8426, 0.0
      %v8491 = vmax.f32 %v8427, 0.0
      %v8556 = vrot.slane %v8429, 7
      %v8557 = vsel %vm2943, %v8556, %v8428
      %v8558 = vrot.slane %v8430, 6
      %v8559 = vsel %vm2946, %v8558, %v8557
      %v8560 = vrot.slane %v8431, 5
      %v8561 = vsel %vm2949, %v8560, %v8559
      %v8562 = vrot.slane %v8432, 4
      %v8563 = vsel %vm2952, %v8562, %v8561
      %v8564 = vrot.slane %v8433, 3
      %v8565 = vsel %vm2955, %v8564, %v8563
      %v8566 = vrot.slane %v8434, 2
      %v8567 = vsel %vm2958, %v8566, %v8565
      %v8568 = vrot.slane %v8435, 1
      %v8569 = vsel %vm2961, %v8568, %v8567
      %v8570 = vrot.slane %v8437, 7
      %v8571 = vsel %vm2943, %v8570, %v8436
      %v8572 = vrot.slane %v8438, 6
      %v8573 = vsel %vm2946, %v8572, %v8571
      %v8574 = vrot.slane %v8439, 5
      %v8575 = vsel %vm2949, %v8574, %v8573
      %v8576 = vrot.slane %v8440, 4
      %v8577 = vsel %vm2952, %v8576, %v8575
      %v8578 = vrot.slane %v8441, 3
      %v8579 = vsel %vm2955, %v8578, %v8577
      %v8580 = vrot.slane %v8442, 2
      %v8581 = vsel %vm2958, %v8580, %v8579
      %v8582 = vrot.slane %v8443, 1
      %v8583 = vsel %vm2961, %v8582, %v8581
      %v8584 = vrot.slane %v8445, 7
      %v8585 = vsel %vm2943, %v8584, %v8444
      %v8586 = vrot.slane %v8446, 6
      %v8587 = vsel %vm2946, %v8586, %v8585
      %v8588 = vrot.slane %v8447, 5
      %v8589 = vsel %vm2949, %v8588, %v8587
      %v8590 = vrot.slane %v8448, 4
      %v8591 = vsel %vm2952, %v8590, %v8589
      %v8592 = vrot.slane %v8449, 3
      %v8593 = vsel %vm2955, %v8592, %v8591
      %v8594 = vrot.slane %v8450, 2
      %v8595 = vsel %vm2958, %v8594, %v8593
      %v8596 = vrot.slane %v8451, 1
      %v8597 = vsel %vm2961, %v8596, %v8595
      %v8598 = vrot.slane %v8453, 7
      %v8599 = vsel %vm2943, %v8598, %v8452
      %v8600 = vrot.slane %v8454, 6
      %v8601 = vsel %vm2946, %v8600, %v8599
      %v8602 = vrot.slane %v8455, 5
      %v8603 = vsel %vm2949, %v8602, %v8601
      %v8604 = vrot.slane %v8456, 4
      %v8605 = vsel %vm2952, %v8604, %v8603
      %v8606 = vrot.slane %v8457, 3
      %v8607 = vsel %vm2955, %v8606, %v8605
      %v8608 = vrot.slane %v8458, 2
      %v8609 = vsel %vm2958, %v8608, %v8607
      %v8610 = vrot.slane %v8459, 1
      %v8611 = vsel %vm2961, %v8610, %v8609
      %v8612 = vrot.slane %v8461, 7
      %v8613 = vsel %vm2943, %v8612, %v8460
      %v8614 = vrot.slane %v8462, 6
      %v8615 = vsel %vm2946, %v8614, %v8613
      %v8616 = vrot.slane %v8463, 5
      %v8617 = vsel %vm2949, %v8616, %v8615
      %v8618 = vrot.slane %v8464, 4
      %v8619 = vsel %vm2952, %v8618, %v8617
      %v8620 = vrot.slane %v8465, 3
      %v8621 = vsel %vm2955, %v8620, %v8619
      %v8622 = vrot.slane %v8466, 2
      %v8623 = vsel %vm2958, %v8622, %v8621
      %v8624 = vrot.slane %v8467, 1
      %v8625 = vsel %vm2961, %v8624, %v8623
      %v8626 = vrot.slane %v8469, 7
      %v8627 = vsel %vm2943, %v8626, %v8468
      %v8628 = vrot.slane %v8470, 6
      %v8629 = vsel %vm2946, %v8628, %v8627
      %v8630 = vrot.slane %v8471, 5
      %v8631 = vsel %vm2949, %v8630, %v8629
      %v8632 = vrot.slane %v8472, 4
      %v8633 = vsel %vm2952, %v8632, %v8631
      %v8634 = vrot.slane %v8473, 3
      %v8635 = vsel %vm2955, %v8634, %v8633
      %v8636 = vrot.slane %v8474, 2
      %v8637 = vsel %vm2958, %v8636, %v8635
      %v8638 = vrot.slane %v8475, 1
      %v8639 = vsel %vm2961, %v8638, %v8637
      %v8640 = vrot.slane %v8477, 7
      %v8641 = vsel %vm2943, %v8640, %v8476
      %v8642 = vrot.slane %v8478, 6
      %v8643 = vsel %vm2946, %v8642, %v8641
      %v8644 = vrot.slane %v8479, 5
      %v8645 = vsel %vm2949, %v8644, %v8643
      %v8646 = vrot.slane %v8480, 4
      %v8647 = vsel %vm2952, %v8646, %v8645
      %v8648 = vrot.slane %v8481, 3
      %v8649 = vsel %vm2955, %v8648, %v8647
      %v8650 = vrot.slane %v8482, 2
      %v8651 = vsel %vm2958, %v8650, %v8649
      %v8652 = vrot.slane %v8483, 1
      %v8653 = vsel %vm2961, %v8652, %v8651
      %v8654 = vrot.slane %v8485, 7
      %v8655 = vsel %vm2943, %v8654, %v8484
      %v8656 = vrot.slane %v8486, 6
      %v8657 = vsel %vm2946, %v8656, %v8655
      %v8658 = vrot.slane %v8487, 5
      %v8659 = vsel %vm2949, %v8658, %v8657
      %v8660 = vrot.slane %v8488, 4
      %v8661 = vsel %vm2952, %v8660, %v8659
      %v8662 = vrot.slane %v8489, 3
      %v8663 = vsel %vm2955, %v8662, %v8661
      %v8664 = vrot.slane %v8490, 2
      %v8665 = vsel %vm2958, %v8664, %v8663
      %v8666 = vrot.slane %v8491, 1
      %v8667 = vsel %vm2961, %v8666, %v8665
      %8676 = vst [vmem:[%s275] sm:$0xff] %v8569
      %8677 = vst [vmem:[%s275 + $0x8] sm:$0xff] %v8583
      %8678 = vst [vmem:[%s275 + $0x10] sm:$0xff] %v8597
      %8679 = vst [vmem:[%s275 + $0x18] sm:$0xff] %v8611
      %8680 = vst [vmem:[%s275 + $0x20] sm:$0xff] %v8625
      %8681 = vst [vmem:[%s275 + $0x28] sm:$0xff] %v8639
      %8682 = vst [vmem:[%s275 + $0x30] sm:$0xff] %v8653
      %8683 = vst [vmem:[%s275 + $0x38] sm:$0xff] %v8667
      %s8684 = smul.u32 8, %s17
      %p8685 = scmp.lt.s32.totalorder %s8684, 15
      %s8686 = scalar_select %p8685, %s8684, 15
      %s8687 = smul.addr %s8686, 8
      %s8688 = scalar_lea.vmem %s6, %s8687
      // Predicated region
      $region45: #{jet_autoencoder_forward.1} parent=43 // pred_check
        %p8689 = pneg %p171
      $region46: #{jet_autoencoder_forward.1} parent=43 // pred_check_branch
        %8691 = sbr.rel (%p8689) target = $region48
      $region47: #{jet_autoencoder_forward.1} parent=43 // pred_region
        %s8692 = smul.u32 8, %s17
      $region48: #{jet_autoencoder_forward.1} parent=43 // pred_fallthru
        _
    $region44: #{jet_autoencoder_forward.1} parent=5 // pred_fallthru
      _
    %p8693 = scmp.le.s32.totalorder 2, %s12
    // Predicated region
    $region49: #{jet_autoencoder_forward.1} parent=5 // pred_check
      %p8694 = pneg %p8693
    $region50: #{jet_autoencoder_forward.1} parent=5 // pred_check_branch
      %8696 = sbr.rel (%p8694) target = $region52
    $region51: #{jet_autoencoder_forward.1} parent=5 // pred_region
      %s8697 = ssub.s32 %s12, 2
      // Predicated region
      $region53: #{jet_autoencoder_forward.1} parent=51 // pred_check
        %p8698 = pneg %p177
      $region54: #{jet_autoencoder_forward.1} parent=51 // pred_check_branch
        %8700 = sbr.rel (%p8698) target = $region56
      $region55: #{jet_autoencoder_forward.1} parent=51 // pred_region
        %s8701 = smul.u32 8, %s18
        %p8702 = scmp.lt.s32.totalorder %s8701, 15
        %s8703 = scalar_select %p8702, %s8701, 15
        %s8704 = smul.addr %s8703, 8
        %s8705 = scalar_lea.vmem %s6, %s8704
      $region56: #{jet_autoencoder_forward.1} parent=51 // pred_fallthru
        _
    $region52: #{jet_autoencoder_forward.1} parent=5 // pred_fallthru
      _
  $region6: #{jet_autoencoder_forward.1} parent=0 // loop_footer
    %s16 = sadd.s32 1, %s12
  $region7: #{jet_autoencoder_forward.1} parent=0 // loop_footer_branch
    %11 = sbr.rel target = $region3
  $region8: #{jet_autoencoder_forward.1} parent=0 // loop_exit
    _

</llo_original>
